<compile_context>
chip_gen: v6e
topology: v6e:2x2x1
jax: 0.10.0
libtpu: 0.0.40
codegen_flags: <defaults>
</compile_context>

<pallas_src>
import math

import jax
import jax.numpy as jnp
import numpy as np
from jax.experimental import pallas as pl
from jax.experimental.pallas import tpu as pltpu


def _make_kernel(NB, H, W, cin, cout, channels_first_out):
    """Builds the fused relu -> conv1+bn1+relu -> conv2+bn2 -> +shortcut kernel."""
    HW = H * W

    def fill_im2col(col_ref, act, C):
        """Write the 3x3/pad-1 im2col of `act` (NB,H,W,C) into col_ref (NB,H,W,9C).

        Built with 9 shifted stores straight from the live value; only the
        border strips that correspond to padding are zeroed (tiny).  The
        scratch persists across grid steps, so every tap column is fully
        overwritten every step (do NOT hoist the zeroing to a one-time init).
        """
        act = act.astype(col_ref.dtype)
        for ky in range(3):
            dy = ky - 1
            y0, hs = max(0, -dy), H - abs(dy)
            for kx in range(3):
                dx = kx - 1
                x0, ws = max(0, -dx), W - abs(dx)
                c0 = (ky * 3 + kx) * C
                if dy != 0:
                    yz = H - 1 if dy > 0 else 0
                    col_ref[:, yz:yz + 1, :, c0:c0 + C] = jnp.zeros(
                        (NB, 1, W, C), col_ref.dtype)
                if dx != 0:
                    xz = W - 1 if dx > 0 else 0
                    col_ref[:, :, xz:xz + 1, c0:c0 + C] = jnp.zeros(
                        (NB, H, 1, C), col_ref.dtype)
                col_ref[:, y0:y0 + hs, x0:x0 + ws, c0:c0 + C] = (
                    act[:, y0 + dy:y0 + dy + hs, x0 + dx:x0 + dx + ws, :])
        return col_ref[...].reshape(NB * HW, 9 * C)

    def kernel(x_ref, w1_ref, b1_ref, w2_ref, b2_ref, o_ref, col1_ref, col2_ref):
        # relu(x): f32 value kept live for the identity shortcut.
        xr = jnp.maximum(x_ref[...], 0.0)                      # (NB,H,W,Cin) f32

        # ---- conv1 + bn1 + relu: single MXU matmul, K = 9*Cin, f32 acc ------
        col1 = fill_im2col(col1_ref, xr, cin)                  # (NB*HW, 9*Cin) bf16
        h1 = jnp.dot(col1, w1_ref[...], preferred_element_type=jnp.float32)
        h1 = jnp.maximum(h1 + b1_ref[...], 0.0)                # (NB*HW, Cout) f32

        # ---- conv2 + bn2: single MXU matmul, K = 9*Cout ----------------------
        col2 = fill_im2col(col2_ref, h1.reshape(NB, H, W, cout), cout)
        out = jnp.dot(col2, w2_ref[...], preferred_element_type=jnp.float32)
        out = out + b2_ref[...] + xr.reshape(NB * HW, cin)     # identity shortcut

        if channels_first_out:
            # Cout < 128: store channels-first so the minor dim is H*W
            # (lane-dense, unmasked vst); the transpose is only Cout rows.
            for nb in range(NB):
                o_ref[nb] = out[nb * HW:(nb + 1) * HW, :].T.astype(o_ref.dtype)
        else:
            # Cout >= 128: already lane-dense -- no transpose at all.
            o_ref[...] = out.reshape(NB, HW, cout).astype(o_ref.dtype)

    return kernel


def _round_up(v, m):
    return (v + m - 1) // m * m


def _padded_vmem_bytes(shape, dtype):
    """Rough (sublane,128)-tiled VMEM footprint of one buffer."""
    itemsize = jnp.dtype(dtype).itemsize
    shape = tuple(shape)
    if len(shape) < 2:
        shape = (1,) + shape
    lead = 1
    for d in shape[:-2]:
        lead *= d
    sub = max(1, 32 // itemsize)            # 8 for f32, 16 for bf16
    return lead * _round_up(shape[-2], sub) * _round_up(shape[-1], 128) * itemsize


def pallas_basic_block(x_nhwc, params):
    """Runs the fused block kernel; returns (block_output, channels_first flag)."""
    N, H, W, cin = x_nhwc.shape
    cout = params["w2"].shape[-1]
    assert cin == cout, "identity shortcut requires in_planes == planes"
    HW = H * W

    # Fold eval-mode BN scale into the conv weights and flatten the (3,3,C,Co)
    # taps into a single (9*C, Co) im2col weight; bf16 MXU operands, f32 bias.
    w1f = (params["w1"] * params["s1"][None, None, None, :]
           ).reshape(9 * cin, cout).astype(jnp.bfloat16)
    w2f = (params["w2"] * params["s2"][None, None, None, :]
           ).reshape(9 * cout, cout).astype(jnp.bfloat16)
    b1 = params["b1"].reshape(1, cout).astype(jnp.float32)
    b2 = params["b2"].reshape(1, cout).astype(jnp.float32)

    # Batch block: fold as many images as comfortably fit (~8 MiB of live
    # per-step activations) into one grid step so the matmul M dim is NB*HW.
    per_img = HW * (9 * (cin + cout) * 2 + (cin + 3 * cout) * 4)
    NB = N if N * per_img <= (8 << 20) else 1
    if N % NB:
        NB = 1
    grid = (N // NB,)
    # TODO(synk): for large feature maps add a spatial (row-block) grid axis
    #             with a 1-row halo to bound accumulator liveness / VMEM and
    #             give v7x's two TensorCores more parallel steps.

    channels_first_out = cout < 128
    if channels_first_out:
        out_block = (NB, cout, HW)
        out_shape = jax.ShapeDtypeStruct((N, cout, HW), jnp.float32)
        out_spec = pl.BlockSpec(out_block, lambda i: (i, 0, 0))
    else:
        out_block = (NB, HW, cout)
        out_shape = jax.ShapeDtypeStruct((N, HW, cout), jnp.float32)
        out_spec = pl.BlockSpec(out_block, lambda i: (i, 0, 0))

    scratch_shapes = [
        pltpu.VMEM((NB, H, W, 9 * cin), jnp.bfloat16),   # im2col of relu(x)
        pltpu.VMEM((NB, H, W, 9 * cout), jnp.bfloat16),  # im2col of conv1 act
    ]

    # VMEM budget: 2x (double-buffered) blocked operands + im2col scratch +
    # slack, clamped so the request never exceeds v7x's 64 MiB physical VMEM.
    # (Weights are small here; for big Cout they could be Buffered(1).)
    est = 2 * sum(_padded_vmem_bytes(s, d) for s, d in [
        ((NB, H, W, cin), jnp.float32),
        ((9 * cin, cout), jnp.bfloat16),
        ((1, cout), jnp.float32),
        ((9 * cout, cout), jnp.bfloat16),
        ((1, cout), jnp.float32),
        (out_block, jnp.float32),
    ]) + sum(_padded_vmem_bytes(s, jnp.bfloat16) for s in
             [(NB, H, W, 9 * cin), (NB, H, W, 9 * cout)]) + (4 << 20)
    vmem_limit = int(min(64 << 20, max(32 << 20, est)))

    out = pl.pallas_call(
        _make_kernel(NB, H, W, cin, cout, channels_first_out),
        out_shape=out_shape,
        grid=grid,
        in_specs=[
            pl.BlockSpec((NB, H, W, cin), lambda i: (i, 0, 0, 0)),
            pl.BlockSpec((9 * cin, cout), lambda i: (0, 0)),
            pl.BlockSpec((1, cout), lambda i: (0, 0)),
            pl.BlockSpec((9 * cout, cout), lambda i: (0, 0)),
            pl.BlockSpec((1, cout), lambda i: (0, 0)),
        ],
        out_specs=out_spec,
        scratch_shapes=scratch_shapes,
        compiler_params=pltpu.CompilerParams(
            dimension_semantics=("parallel",),
            vmem_limit_bytes=vmem_limit),
    )(x_nhwc, w1f, b1, w2f, b2)
    return out, channels_first_out


def basic_block_abs_double_shortcut_forward(inp, params):
    """Mirrors BasicBlockAbsDoubleShortcut.forward for the full-precision path."""
    x_nchw, i_layer, feature_layers_to_extract, features, cut_network = inp
    if cut_network:
        if i_layer > cut_network:
            return inp
        # TODO(synk): mid-block cut_network early-exit (cut == i_layer + 1) would
        #             require returning the conv1/bn1 intermediate.

    N, _, H, W = x_nchw.shape
    x_nhwc = jnp.transpose(x_nchw, (0, 2, 3, 1))
    out_blk, channels_first = pallas_basic_block(x_nhwc, params)
    if channels_first:
        out = out_blk.reshape(N, -1, H, W)                       # free reshape
    else:
        out = jnp.transpose(out_blk.reshape(N, H, W, -1), (0, 3, 1, 2))

    i_layer += 2
    if feature_layers_to_extract:
        if i_layer in feature_layers_to_extract:
            features[i_layer] = jax.lax.stop_gradient(out)
    return [out, i_layer, feature_layers_to_extract, features, cut_network]


def init_params(key, in_planes, planes, eps=1e-5):
    """Deterministic synthetic parameters (conv weights + folded eval-mode BN)."""
    ks = jax.random.split(key, 10)
    w1 = jax.random.normal(ks[0], (3, 3, in_planes, planes), jnp.float32) / math.sqrt(9 * in_planes)
    w2 = jax.random.normal(ks[1], (3, 3, planes, planes), jnp.float32) / math.sqrt(9 * planes)
    g1 = 1.0 + 0.1 * jax.random.normal(ks[2], (planes,), jnp.float32)
    be1 = 0.1 * jax.random.normal(ks[3], (planes,), jnp.float32)
    m1 = 0.1 * jax.random.normal(ks[4], (planes,), jnp.float32)
    v1 = jax.random.uniform(ks[5], (planes,), jnp.float32, 0.5, 1.5)
    g2 = 1.0 + 0.1 * jax.random.normal(ks[6], (planes,), jnp.float32)
    be2 = 0.1 * jax.random.normal(ks[7], (planes,), jnp.float32)
    m2 = 0.1 * jax.random.normal(ks[8], (planes,), jnp.float32)
    v2 = jax.random.uniform(ks[9], (planes,), jnp.float32, 0.5, 1.5)
    s1 = g1 / jnp.sqrt(v1 + eps)
    b1 = be1 - m1 * s1
    s2 = g2 / jnp.sqrt(v2 + eps)
    b2 = be2 - m2 * s2
    return dict(w1=w1, w2=w2, s1=s1, b1=b1, s2=s2, b2=b2,
                # defined for parity with the module; only used on the
                # (untranslated) binarized path.
                move_average_factor=jnp.float32(1.0))


def _ref_forward(x_nchw, params):
    """Pure-JAX f32 reference (XLA conv) of the same full-precision block."""
    def conv(x, w_hwio):
        return jax.lax.conv_general_dilated(
            x, w_hwio, window_strides=(1, 1), padding="SAME",
            dimension_numbers=("NCHW", "HWIO", "NCHW"))
    x = jnp.maximum(x_nchw, 0.0)
    h = conv(x, params["w1"]) * params["s1"][None, :, None, None] + params["b1"][None, :, None, None]
    h = jnp.maximum(h, 0.0)
    o = conv(h, params["w2"]) * params["s2"][None, :, None, None] + params["b2"][None, :, None, None]
    return o + x


if __name__ == "__main__":
    key = jax.random.PRNGKey(0)
    kx, kp = jax.random.split(key)

    N, in_planes, planes, H, W = 2, 4, 4, 16, 16
    x = jax.random.normal(kx, (N, in_planes, H, W), jnp.float32)
    params = init_params(kp, in_planes, planes)

    inp = [x, 0, None, {}, None]   # [x, i_layer, layers_to_extract, features, cut_network]
    out, i_layer, _, _, _ = basic_block_abs_double_shortcut_forward(inp, params)
    out = jax.block_until_ready(out)

    ref = jax.block_until_ready(_ref_forward(x, params))
    # bf16 MXU operands with f32 accumulation vs f32 XLA reference.
    np.testing.assert_allclose(np.asarray(out), np.asarray(ref), rtol=5e-2, atol=5e-2)
    assert out.shape == (N, planes, H, W)
    assert i_layer == 2

    print("KERNEL_OK")
</pallas_src>

<mosaic_0001>
module attributes {stable_mosaic.version = 11 : i64} {
  func.func @kernel(%arg0: i32, %arg1: memref<2x16x16x4xf32, #tpu.memory_space<vmem>>, %arg2: memref<36x4xbf16, #tpu.memory_space<vmem>>, %arg3: memref<1x4xf32, #tpu.memory_space<vmem>>, %arg4: memref<36x4xbf16, #tpu.memory_space<vmem>>, %arg5: memref<1x4xf32, #tpu.memory_space<vmem>>, %arg6: memref<2x4x256xf32, #tpu.memory_space<vmem>>, %arg7: memref<2x16x16x36xbf16, #tpu.memory_space<vmem>>, %arg8: memref<2x16x16x36xbf16, #tpu.memory_space<vmem>>) attributes {dimension_semantics = [#tpu.dimension_semantics<parallel>], iteration_bounds = array<i64: 1>, scalar_prefetch = 0 : i64, scratch_operands = 2 : i64, tpu.core_type = #tpu.core_type<tc>, window_params = [{transform_indices = @transform_0, window_bounds = array<i64: 2, 16, 16, 4>}, {pipeline_mode = #tpu.pipeline_mode<synchronous>, transform_indices = @transform_1, window_bounds = array<i64: 36, 4>}, {pipeline_mode = #tpu.pipeline_mode<synchronous>, transform_indices = @transform_2, window_bounds = array<i64: 1, 4>}, {pipeline_mode = #tpu.pipeline_mode<synchronous>, transform_indices = @transform_3, window_bounds = array<i64: 36, 4>}, {pipeline_mode = #tpu.pipeline_mode<synchronous>, transform_indices = @transform_4, window_bounds = array<i64: 1, 4>}, {transform_indices = @transform_5, window_bounds = array<i64: 2, 4, 256>}]} {
    %c0 = arith.constant 0 : index
    %c0_0 = arith.constant 0 : index
    %c0_1 = arith.constant 0 : index
    %c0_2 = arith.constant 0 : index
    %0 = vector.load %arg1[%c0, %c0_0, %c0_1, %c0_2] : memref<2x16x16x4xf32, #tpu.memory_space<vmem>>, vector<2x16x16x4xf32>
    %cst = arith.constant 0.000000e+00 : f32
    %1 = vector.broadcast %cst : f32 to vector<2x16x16x4xf32>
    %2 = arith.maximumf %0, %1 : vector<2x16x16x4xf32>
    %3 = arith.truncf %2 : vector<2x16x16x4xf32> to vector<2x16x16x4xbf16>
    %cst_3 = arith.constant 0.000000e+00 : bf16
    %4 = vector.broadcast %cst_3 : bf16 to vector<2x1x16x4xbf16>
    %c0_4 = arith.constant 0 : index
    %c0_5 = arith.constant 0 : index
    %c0_6 = arith.constant 0 : index
    %c0_7 = arith.constant 0 : index
    %5 = vector.load %arg7[%c0_4, %c0_5, %c0_6, %c0_7] : memref<2x16x16x36xbf16, #tpu.memory_space<vmem>>, vector<2x1x16x4xbf16>
    tpu.vector_store %arg7[%c0_4, %c0_5, %c0_6, %c0_7], %4 {strides = array<i32>} : memref<2x16x16x36xbf16, #tpu.memory_space<vmem>>, vector<2x1x16x4xbf16>,
    %cst_8 = arith.constant 0.000000e+00 : bf16
    %6 = vector.broadcast %cst_8 : bf16 to vector<2x16x1x4xbf16>
    %c0_9 = arith.constant 0 : index
    %c0_10 = arith.constant 0 : index
    %c0_11 = arith.constant 0 : index
    %c0_12 = arith.constant 0 : index
    %7 = vector.load %arg7[%c0_9, %c0_10, %c0_11, %c0_12] : memref<2x16x16x36xbf16, #tpu.memory_space<vmem>>, vector<2x16x1x4xbf16>
    tpu.vector_store %arg7[%c0_9, %c0_10, %c0_11, %c0_12], %6 {strides = array<i32>} : memref<2x16x16x36xbf16, #tpu.memory_space<vmem>>, vector<2x16x1x4xbf16>,
    %8 = vector.extract_strided_slice %3 {offsets = [0, 0, 0, 0], sizes = [2, 15, 15, 4], strides = [1, 1, 1, 1]} : vector<2x16x16x4xbf16> to vector<2x15x15x4xbf16>
    %c0_13 = arith.constant 0 : index
    %c1 = arith.constant 1 : index
    %c1_14 = arith.constant 1 : index
    %c0_15 = arith.constant 0 : index
    %9 = vector.load %arg7[%c0_13, %c1, %c1_14, %c0_15] : memref<2x16x16x36xbf16, #tpu.memory_space<vmem>>, vector<2x15x15x4xbf16>
    tpu.vector_store %arg7[%c0_13, %c1, %c1_14, %c0_15], %8 {strides = array<i32>} : memref<2x16x16x36xbf16, #tpu.memory_space<vmem>>, vector<2x15x15x4xbf16>,
    %cst_16 = arith.constant 0.000000e+00 : bf16
    %10 = vector.broadcast %cst_16 : bf16 to vector<2x1x16x4xbf16>
    %c0_17 = arith.constant 0 : index
    %c0_18 = arith.constant 0 : index
    %c0_19 = arith.constant 0 : index
    %c4 = arith.constant 4 : index
    %11 = vector.load %arg7[%c0_17, %c0_18, %c0_19, %c4] : memref<2x16x16x36xbf16, #tpu.memory_space<vmem>>, vector<2x1x16x4xbf16>
    tpu.vector_store %arg7[%c0_17, %c0_18, %c0_19, %c4], %10 {strides = array<i32>} : memref<2x16x16x36xbf16, #tpu.memory_space<vmem>>, vector<2x1x16x4xbf16>,
    %12 = vector.extract_strided_slice %3 {offsets = [0, 0, 0, 0], sizes = [2, 15, 16, 4], strides = [1, 1, 1, 1]} : vector<2x16x16x4xbf16> to vector<2x15x16x4xbf16>
    %c0_20 = arith.constant 0 : index
    %c1_21 = arith.constant 1 : index
    %c0_22 = arith.constant 0 : index
    %c4_23 = arith.constant 4 : index
    %13 = vector.load %arg7[%c0_20, %c1_21, %c0_22, %c4_23] : memref<2x16x16x36xbf16, #tpu.memory_space<vmem>>, vector<2x15x16x4xbf16>
    tpu.vector_store %arg7[%c0_20, %c1_21, %c0_22, %c4_23], %12 {strides = array<i32>} : memref<2x16x16x36xbf16, #tpu.memory_space<vmem>>, vector<2x15x16x4xbf16>,
    %cst_24 = arith.constant 0.000000e+00 : bf16
    %14 = vector.broadcast %cst_24 : bf16 to vector<2x1x16x4xbf16>
    %c0_25 = arith.constant 0 : index
    %c0_26 = arith.constant 0 : index
    %c0_27 = arith.constant 0 : index
    %c8 = arith.constant 8 : index
    %15 = vector.load %arg7[%c0_25, %c0_26, %c0_27, %c8] : memref<2x16x16x36xbf16, #tpu.memory_space<vmem>>, vector<2x1x16x4xbf16>
    tpu.vector_store %arg7[%c0_25, %c0_26, %c0_27, %c8], %14 {strides = array<i32>} : memref<2x16x16x36xbf16, #tpu.memory_space<vmem>>, vector<2x1x16x4xbf16>,
    %cst_28 = arith.constant 0.000000e+00 : bf16
    %16 = vector.broadcast %cst_28 : bf16 to vector<2x16x1x4xbf16>
    %c0_29 = arith.constant 0 : index
    %c0_30 = arith.constant 0 : index
    %c15 = arith.constant 15 : index
    %c8_31 = arith.constant 8 : index
    %17 = vector.load %arg7[%c0_29, %c0_30, %c15, %c8_31] : memref<2x16x16x36xbf16, #tpu.memory_space<vmem>>, vector<2x16x1x4xbf16>
    tpu.vector_store %arg7[%c0_29, %c0_30, %c15, %c8_31], %16 {strides = array<i32>} : memref<2x16x16x36xbf16, #tpu.memory_space<vmem>>, vector<2x16x1x4xbf16>,
    %18 = vector.extract_strided_slice %3 {offsets = [0, 0, 1, 0], sizes = [2, 15, 15, 4], strides = [1, 1, 1, 1]} : vector<2x16x16x4xbf16> to vector<2x15x15x4xbf16>
    %c0_32 = arith.constant 0 : index
    %c1_33 = arith.constant 1 : index
    %c0_34 = arith.constant 0 : index
    %c8_35 = arith.constant 8 : index
    %19 = vector.load %arg7[%c0_32, %c1_33, %c0_34, %c8_35] : memref<2x16x16x36xbf16, #tpu.memory_space<vmem>>, vector<2x15x15x4xbf16>
    tpu.vector_store %arg7[%c0_32, %c1_33, %c0_34, %c8_35], %18 {strides = array<i32>} : memref<2x16x16x36xbf16, #tpu.memory_space<vmem>>, vector<2x15x15x4xbf16>,
    %cst_36 = arith.constant 0.000000e+00 : bf16
    %20 = vector.broadcast %cst_36 : bf16 to vector<2x16x1x4xbf16>
    %c0_37 = arith.constant 0 : index
    %c0_38 = arith.constant 0 : index
    %c0_39 = arith.constant 0 : index
    %c12 = arith.constant 12 : index
    %21 = vector.load %arg7[%c0_37, %c0_38, %c0_39, %c12] : memref<2x16x16x36xbf16, #tpu.memory_space<vmem>>, vector<2x16x1x4xbf16>
    tpu.vector_store %arg7[%c0_37, %c0_38, %c0_39, %c12], %20 {strides = array<i32>} : memref<2x16x16x36xbf16, #tpu.memory_space<vmem>>, vector<2x16x1x4xbf16>,
    %22 = vector.extract_strided_slice %3 {offsets = [0, 0, 0, 0], sizes = [2, 16, 15, 4], strides = [1, 1, 1, 1]} : vector<2x16x16x4xbf16> to vector<2x16x15x4xbf16>
    %c0_40 = arith.constant 0 : index
    %c0_41 = arith.constant 0 : index
    %c1_42 = arith.constant 1 : index
    %c12_43 = arith.constant 12 : index
    %23 = vector.load %arg7[%c0_40, %c0_41, %c1_42, %c12_43] : memref<2x16x16x36xbf16, #tpu.memory_space<vmem>>, vector<2x16x15x4xbf16>
    tpu.vector_store %arg7[%c0_40, %c0_41, %c1_42, %c12_43], %22 {strides = array<i32>} : memref<2x16x16x36xbf16, #tpu.memory_space<vmem>>, vector<2x16x15x4xbf16>,
    %c0_44 = arith.constant 0 : index
    %c0_45 = arith.constant 0 : index
    %c0_46 = arith.constant 0 : index
    %c16 = arith.constant 16 : index
    %24 = vector.load %arg7[%c0_44, %c0_45, %c0_46, %c16] : memref<2x16x16x36xbf16, #tpu.memory_space<vmem>>, vector<2x16x16x4xbf16>
    tpu.vector_store %arg7[%c0_44, %c0_45, %c0_46, %c16], %3 {strides = array<i32>} : memref<2x16x16x36xbf16, #tpu.memory_space<vmem>>, vector<2x16x16x4xbf16>,
    %cst_47 = arith.constant 0.000000e+00 : bf16
    %25 = vector.broadcast %cst_47 : bf16 to vector<2x16x1x4xbf16>
    %c0_48 = arith.constant 0 : index
    %c0_49 = arith.constant 0 : index
    %c15_50 = arith.constant 15 : index
    %c20 = arith.constant 20 : index
    %26 = vector.load %arg7[%c0_48, %c0_49, %c15_50, %c20] : memref<2x16x16x36xbf16, #tpu.memory_space<vmem>>, vector<2x16x1x4xbf16>
    tpu.vector_store %arg7[%c0_48, %c0_49, %c15_50, %c20], %25 {strides = array<i32>} : memref<2x16x16x36xbf16, #tpu.memory_space<vmem>>, vector<2x16x1x4xbf16>,
    %27 = vector.extract_strided_slice %3 {offsets = [0, 0, 1, 0], sizes = [2, 16, 15, 4], strides = [1, 1, 1, 1]} : vector<2x16x16x4xbf16> to vector<2x16x15x4xbf16>
    %c0_51 = arith.constant 0 : index
    %c0_52 = arith.constant 0 : index
    %c0_53 = arith.constant 0 : index
    %c20_54 = arith.constant 20 : index
    %28 = vector.load %arg7[%c0_51, %c0_52, %c0_53, %c20_54] : memref<2x16x16x36xbf16, #tpu.memory_space<vmem>>, vector<2x16x15x4xbf16>
    tpu.vector_store %arg7[%c0_51, %c0_52, %c0_53, %c20_54], %27 {strides = array<i32>} : memref<2x16x16x36xbf16, #tpu.memory_space<vmem>>, vector<2x16x15x4xbf16>,
    %cst_55 = arith.constant 0.000000e+00 : bf16
    %29 = vector.broadcast %cst_55 : bf16 to vector<2x1x16x4xbf16>
    %c0_56 = arith.constant 0 : index
    %c15_57 = arith.constant 15 : index
    %c0_58 = arith.constant 0 : index
    %c24 = arith.constant 24 : index
    %30 = vector.load %arg7[%c0_56, %c15_57, %c0_58, %c24] : memref<2x16x16x36xbf16, #tpu.memory_space<vmem>>, vector<2x1x16x4xbf16>
    tpu.vector_store %arg7[%c0_56, %c15_57, %c0_58, %c24], %29 {strides = array<i32>} : memref<2x16x16x36xbf16, #tpu.memory_space<vmem>>, vector<2x1x16x4xbf16>,
    %cst_59 = arith.constant 0.000000e+00 : bf16
    %31 = vector.broadcast %cst_59 : bf16 to vector<2x16x1x4xbf16>
    %c0_60 = arith.constant 0 : index
    %c0_61 = arith.constant 0 : index
    %c0_62 = arith.constant 0 : index
    %c24_63 = arith.constant 24 : index
    %32 = vector.load %arg7[%c0_60, %c0_61, %c0_62, %c24_63] : memref<2x16x16x36xbf16, #tpu.memory_space<vmem>>, vector<2x16x1x4xbf16>
    tpu.vector_store %arg7[%c0_60, %c0_61, %c0_62, %c24_63], %31 {strides = array<i32>} : memref<2x16x16x36xbf16, #tpu.memory_space<vmem>>, vector<2x16x1x4xbf16>,
    %33 = vector.extract_strided_slice %3 {offsets = [0, 1, 0, 0], sizes = [2, 15, 15, 4], strides = [1, 1, 1, 1]} : vector<2x16x16x4xbf16> to vector<2x15x15x4xbf16>
    %c0_64 = arith.constant 0 : index
    %c0_65 = arith.constant 0 : index
    %c1_66 = arith.constant 1 : index
    %c24_67 = arith.constant 24 : index
    %34 = vector.load %arg7[%c0_64, %c0_65, %c1_66, %c24_67] : memref<2x16x16x36xbf16, #tpu.memory_space<vmem>>, vector<2x15x15x4xbf16>
    tpu.vector_store %arg7[%c0_64, %c0_65, %c1_66, %c24_67], %33 {strides = array<i32>} : memref<2x16x16x36xbf16, #tpu.memory_space<vmem>>, vector<2x15x15x4xbf16>,
    %cst_68 = arith.constant 0.000000e+00 : bf16
    %35 = vector.broadcast %cst_68 : bf16 to vector<2x1x16x4xbf16>
    %c0_69 = arith.constant 0 : index
    %c15_70 = arith.constant 15 : index
    %c0_71 = arith.constant 0 : index
    %c28 = arith.constant 28 : index
    %36 = vector.load %arg7[%c0_69, %c15_70, %c0_71, %c28] : memref<2x16x16x36xbf16, #tpu.memory_space<vmem>>, vector<2x1x16x4xbf16>
    tpu.vector_store %arg7[%c0_69, %c15_70, %c0_71, %c28], %35 {strides = array<i32>} : memref<2x16x16x36xbf16, #tpu.memory_space<vmem>>, vector<2x1x16x4xbf16>,
    %37 = vector.extract_strided_slice %3 {offsets = [0, 1, 0, 0], sizes = [2, 15, 16, 4], strides = [1, 1, 1, 1]} : vector<2x16x16x4xbf16> to vector<2x15x16x4xbf16>
    %c0_72 = arith.constant 0 : index
    %c0_73 = arith.constant 0 : index
    %c0_74 = arith.constant 0 : index
    %c28_75 = arith.constant 28 : index
    %38 = vector.load %arg7[%c0_72, %c0_73, %c0_74, %c28_75] : memref<2x16x16x36xbf16, #tpu.memory_space<vmem>>, vector<2x15x16x4xbf16>
    tpu.vector_store %arg7[%c0_72, %c0_73, %c0_74, %c28_75], %37 {strides = array<i32>} : memref<2x16x16x36xbf16, #tpu.memory_space<vmem>>, vector<2x15x16x4xbf16>,
    %cst_76 = arith.constant 0.000000e+00 : bf16
    %39 = vector.broadcast %cst_76 : bf16 to vector<2x1x16x4xbf16>
    %c0_77 = arith.constant 0 : index
    %c15_78 = arith.constant 15 : index
    %c0_79 = arith.constant 0 : index
    %c32 = arith.constant 32 : index
    %40 = vector.load %arg7[%c0_77, %c15_78, %c0_79, %c32] : memref<2x16x16x36xbf16, #tpu.memory_space<vmem>>, vector<2x1x16x4xbf16>
    tpu.vector_store %arg7[%c0_77, %c15_78, %c0_79, %c32], %39 {strides = array<i32>} : memref<2x16x16x36xbf16, #tpu.memory_space<vmem>>, vector<2x1x16x4xbf16>,
    %cst_80 = arith.constant 0.000000e+00 : bf16
    %41 = vector.broadcast %cst_80 : bf16 to vector<2x16x1x4xbf16>
    %c0_81 = arith.constant 0 : index
    %c0_82 = arith.constant 0 : index
    %c15_83 = arith.constant 15 : index
    %c32_84 = arith.constant 32 : index
    %42 = vector.load %arg7[%c0_81, %c0_82, %c15_83, %c32_84] : memref<2x16x16x36xbf16, #tpu.memory_space<vmem>>, vector<2x16x1x4xbf16>
    tpu.vector_store %arg7[%c0_81, %c0_82, %c15_83, %c32_84], %41 {strides = array<i32>} : memref<2x16x16x36xbf16, #tpu.memory_space<vmem>>, vector<2x16x1x4xbf16>,
    %43 = vector.extract_strided_slice %3 {offsets = [0, 1, 1, 0], sizes = [2, 15, 15, 4], strides = [1, 1, 1, 1]} : vector<2x16x16x4xbf16> to vector<2x15x15x4xbf16>
    %c0_85 = arith.constant 0 : index
    %c0_86 = arith.constant 0 : index
    %c0_87 = arith.constant 0 : index
    %c32_88 = arith.constant 32 : index
    %44 = vector.load %arg7[%c0_85, %c0_86, %c0_87, %c32_88] : memref<2x16x16x36xbf16, #tpu.memory_space<vmem>>, vector<2x15x15x4xbf16>
    tpu.vector_store %arg7[%c0_85, %c0_86, %c0_87, %c32_88], %43 {strides = array<i32>} : memref<2x16x16x36xbf16, #tpu.memory_space<vmem>>, vector<2x15x15x4xbf16>,
    %c0_89 = arith.constant 0 : index
    %c0_90 = arith.constant 0 : index
    %c0_91 = arith.constant 0 : index
    %c0_92 = arith.constant 0 : index
    %45 = vector.load %arg7[%c0_89, %c0_90, %c0_91, %c0_92] : memref<2x16x16x36xbf16, #tpu.memory_space<vmem>>, vector<2x16x16x36xbf16>
    %46 = vector.shape_cast %45 : vector<2x16x16x36xbf16> to vector<512x36xbf16>
    %c0_93 = arith.constant 0 : index
    %c0_94 = arith.constant 0 : index
    %47 = vector.load %arg2[%c0_93, %c0_94] : memref<36x4xbf16, #tpu.memory_space<vmem>>, vector<36x4xbf16>
    %cst_95 = arith.constant dense<0.000000e+00> : vector<512x4xf32>
    %48 = tpu.matmul %46, %47, %cst_95 {dimension_numbers = #tpu.dot_dimension_numbers<[1], [0], [0], [1], [0, 0, 1, 1], [], []>} : vector<512x36xbf16>, vector<36x4xbf16>, vector<512x4xf32> -> vector<512x4xf32>
    %c0_96 = arith.constant 0 : index
    %c0_97 = arith.constant 0 : index
    %49 = vector.load %arg3[%c0_96, %c0_97] : memref<1x4xf32, #tpu.memory_space<vmem>>, vector<1x4xf32>
    %50 = vector.broadcast %49 : vector<1x4xf32> to vector<512x4xf32>
    %51 = arith.addf %48, %50 : vector<512x4xf32>
    %cst_98 = arith.constant 0.000000e+00 : f32
    %52 = vector.broadcast %cst_98 : f32 to vector<512x4xf32>
    %53 = arith.maximumf %51, %52 : vector<512x4xf32>
    %54 = vector.shape_cast %53 : vector<512x4xf32> to vector<2x16x16x4xf32>
    %55 = arith.truncf %54 : vector<2x16x16x4xf32> to vector<2x16x16x4xbf16>
    %cst_99 = arith.constant 0.000000e+00 : bf16
    %56 = vector.broadcast %cst_99 : bf16 to vector<2x1x16x4xbf16>
    %c0_100 = arith.constant 0 : index
    %c0_101 = arith.constant 0 : index
    %c0_102 = arith.constant 0 : index
    %c0_103 = arith.constant 0 : index
    %57 = vector.load %arg8[%c0_100, %c0_101, %c0_102, %c0_103] : memref<2x16x16x36xbf16, #tpu.memory_space<vmem>>, vector<2x1x16x4xbf16>
    tpu.vector_store %arg8[%c0_100, %c0_101, %c0_102, %c0_103], %56 {strides = array<i32>} : memref<2x16x16x36xbf16, #tpu.memory_space<vmem>>, vector<2x1x16x4xbf16>,
    %cst_104 = arith.constant 0.000000e+00 : bf16
    %58 = vector.broadcast %cst_104 : bf16 to vector<2x16x1x4xbf16>
    %c0_105 = arith.constant 0 : index
    %c0_106 = arith.constant 0 : index
    %c0_107 = arith.constant 0 : index
    %c0_108 = arith.constant 0 : index
    %59 = vector.load %arg8[%c0_105, %c0_106, %c0_107, %c0_108] : memref<2x16x16x36xbf16, #tpu.memory_space<vmem>>, vector<2x16x1x4xbf16>
    tpu.vector_store %arg8[%c0_105, %c0_106, %c0_107, %c0_108], %58 {strides = array<i32>} : memref<2x16x16x36xbf16, #tpu.memory_space<vmem>>, vector<2x16x1x4xbf16>,
    %60 = vector.extract_strided_slice %55 {offsets = [0, 0, 0, 0], sizes = [2, 15, 15, 4], strides = [1, 1, 1, 1]} : vector<2x16x16x4xbf16> to vector<2x15x15x4xbf16>
    %c0_109 = arith.constant 0 : index
    %c1_110 = arith.constant 1 : index
    %c1_111 = arith.constant 1 : index
    %c0_112 = arith.constant 0 : index
    %61 = vector.load %arg8[%c0_109, %c1_110, %c1_111, %c0_112] : memref<2x16x16x36xbf16, #tpu.memory_space<vmem>>, vector<2x15x15x4xbf16>
    tpu.vector_store %arg8[%c0_109, %c1_110, %c1_111, %c0_112], %60 {strides = array<i32>} : memref<2x16x16x36xbf16, #tpu.memory_space<vmem>>, vector<2x15x15x4xbf16>,
    %cst_113 = arith.constant 0.000000e+00 : bf16
    %62 = vector.broadcast %cst_113 : bf16 to vector<2x1x16x4xbf16>
    %c0_114 = arith.constant 0 : index
    %c0_115 = arith.constant 0 : index
    %c0_116 = arith.constant 0 : index
    %c4_117 = arith.constant 4 : index
    %63 = vector.load %arg8[%c0_114, %c0_115, %c0_116, %c4_117] : memref<2x16x16x36xbf16, #tpu.memory_space<vmem>>, vector<2x1x16x4xbf16>
    tpu.vector_store %arg8[%c0_114, %c0_115, %c0_116, %c4_117], %62 {strides = array<i32>} : memref<2x16x16x36xbf16, #tpu.memory_space<vmem>>, vector<2x1x16x4xbf16>,
    %64 = vector.extract_strided_slice %55 {offsets = [0, 0, 0, 0], sizes = [2, 15, 16, 4], strides = [1, 1, 1, 1]} : vector<2x16x16x4xbf16> to vector<2x15x16x4xbf16>
    %c0_118 = arith.constant 0 : index
    %c1_119 = arith.constant 1 : index
    %c0_120 = arith.constant 0 : index
    %c4_121 = arith.constant 4 : index
    %65 = vector.load %arg8[%c0_118, %c1_119, %c0_120, %c4_121] : memref<2x16x16x36xbf16, #tpu.memory_space<vmem>>, vector<2x15x16x4xbf16>
    tpu.vector_store %arg8[%c0_118, %c1_119, %c0_120, %c4_121], %64 {strides = array<i32>} : memref<2x16x16x36xbf16, #tpu.memory_space<vmem>>, vector<2x15x16x4xbf16>,
    %cst_122 = arith.constant 0.000000e+00 : bf16
    %66 = vector.broadcast %cst_122 : bf16 to vector<2x1x16x4xbf16>
    %c0_123 = arith.constant 0 : index
    %c0_124 = arith.constant 0 : index
    %c0_125 = arith.constant 0 : index
    %c8_126 = arith.constant 8 : index
    %67 = vector.load %arg8[%c0_123, %c0_124, %c0_125, %c8_126] : memref<2x16x16x36xbf16, #tpu.memory_space<vmem>>, vector<2x1x16x4xbf16>
    tpu.vector_store %arg8[%c0_123, %c0_124, %c0_125, %c8_126], %66 {strides = array<i32>} : memref<2x16x16x36xbf16, #tpu.memory_space<vmem>>, vector<2x1x16x4xbf16>,
    %cst_127 = arith.constant 0.000000e+00 : bf16
    %68 = vector.broadcast %cst_127 : bf16 to vector<2x16x1x4xbf16>
    %c0_128 = arith.constant 0 : index
    %c0_129 = arith.constant 0 : index
    %c15_130 = arith.constant 15 : index
    %c8_131 = arith.constant 8 : index
    %69 = vector.load %arg8[%c0_128, %c0_129, %c15_130, %c8_131] : memref<2x16x16x36xbf16, #tpu.memory_space<vmem>>, vector<2x16x1x4xbf16>
    tpu.vector_store %arg8[%c0_128, %c0_129, %c15_130, %c8_131], %68 {strides = array<i32>} : memref<2x16x16x36xbf16, #tpu.memory_space<vmem>>, vector<2x16x1x4xbf16>,
    %70 = vector.extract_strided_slice %55 {offsets = [0, 0, 1, 0], sizes = [2, 15, 15, 4], strides = [1, 1, 1, 1]} : vector<2x16x16x4xbf16> to vector<2x15x15x4xbf16>
    %c0_132 = arith.constant 0 : index
    %c1_133 = arith.constant 1 : index
    %c0_134 = arith.constant 0 : index
    %c8_135 = arith.constant 8 : index
    %71 = vector.load %arg8[%c0_132, %c1_133, %c0_134, %c8_135] : memref<2x16x16x36xbf16, #tpu.memory_space<vmem>>, vector<2x15x15x4xbf16>
    tpu.vector_store %arg8[%c0_132, %c1_133, %c0_134, %c8_135], %70 {strides = array<i32>} : memref<2x16x16x36xbf16, #tpu.memory_space<vmem>>, vector<2x15x15x4xbf16>,
    %cst_136 = arith.constant 0.000000e+00 : bf16
    %72 = vector.broadcast %cst_136 : bf16 to vector<2x16x1x4xbf16>
    %c0_137 = arith.constant 0 : index
    %c0_138 = arith.constant 0 : index
    %c0_139 = arith.constant 0 : index
    %c12_140 = arith.constant 12 : index
    %73 = vector.load %arg8[%c0_137, %c0_138, %c0_139, %c12_140] : memref<2x16x16x36xbf16, #tpu.memory_space<vmem>>, vector<2x16x1x4xbf16>
    tpu.vector_store %arg8[%c0_137, %c0_138, %c0_139, %c12_140], %72 {strides = array<i32>} : memref<2x16x16x36xbf16, #tpu.memory_space<vmem>>, vector<2x16x1x4xbf16>,
    %74 = vector.extract_strided_slice %55 {offsets = [0, 0, 0, 0], sizes = [2, 16, 15, 4], strides = [1, 1, 1, 1]} : vector<2x16x16x4xbf16> to vector<2x16x15x4xbf16>
    %c0_141 = arith.constant 0 : index
    %c0_142 = arith.constant 0 : index
    %c1_143 = arith.constant 1 : index
    %c12_144 = arith.constant 12 : index
    %75 = vector.load %arg8[%c0_141, %c0_142, %c1_143, %c12_144] : memref<2x16x16x36xbf16, #tpu.memory_space<vmem>>, vector<2x16x15x4xbf16>
    tpu.vector_store %arg8[%c0_141, %c0_142, %c1_143, %c12_144], %74 {strides = array<i32>} : memref<2x16x16x36xbf16, #tpu.memory_space<vmem>>, vector<2x16x15x4xbf16>,
    %c0_145 = arith.constant 0 : index
    %c0_146 = arith.constant 0 : index
    %c0_147 = arith.constant 0 : index
    %c16_148 = arith.constant 16 : index
    %76 = vector.load %arg8[%c0_145, %c0_146, %c0_147, %c16_148] : memref<2x16x16x36xbf16, #tpu.memory_space<vmem>>, vector<2x16x16x4xbf16>
    tpu.vector_store %arg8[%c0_145, %c0_146, %c0_147, %c16_148], %55 {strides = array<i32>} : memref<2x16x16x36xbf16, #tpu.memory_space<vmem>>, vector<2x16x16x4xbf16>,
    %cst_149 = arith.constant 0.000000e+00 : bf16
    %77 = vector.broadcast %cst_149 : bf16 to vector<2x16x1x4xbf16>
    %c0_150 = arith.constant 0 : index
    %c0_151 = arith.constant 0 : index
    %c15_152 = arith.constant 15 : index
    %c20_153 = arith.constant 20 : index
    %78 = vector.load %arg8[%c0_150, %c0_151, %c15_152, %c20_153] : memref<2x16x16x36xbf16, #tpu.memory_space<vmem>>, vector<2x16x1x4xbf16>
    tpu.vector_store %arg8[%c0_150, %c0_151, %c15_152, %c20_153], %77 {strides = array<i32>} : memref<2x16x16x36xbf16, #tpu.memory_space<vmem>>, vector<2x16x1x4xbf16>,
    %79 = vector.extract_strided_slice %55 {offsets = [0, 0, 1, 0], sizes = [2, 16, 15, 4], strides = [1, 1, 1, 1]} : vector<2x16x16x4xbf16> to vector<2x16x15x4xbf16>
    %c0_154 = arith.constant 0 : index
    %c0_155 = arith.constant 0 : index
    %c0_156 = arith.constant 0 : index
    %c20_157 = arith.constant 20 : index
    %80 = vector.load %arg8[%c0_154, %c0_155, %c0_156, %c20_157] : memref<2x16x16x36xbf16, #tpu.memory_space<vmem>>, vector<2x16x15x4xbf16>
    tpu.vector_store %arg8[%c0_154, %c0_155, %c0_156, %c20_157], %79 {strides = array<i32>} : memref<2x16x16x36xbf16, #tpu.memory_space<vmem>>, vector<2x16x15x4xbf16>,
    %cst_158 = arith.constant 0.000000e+00 : bf16
    %81 = vector.broadcast %cst_158 : bf16 to vector<2x1x16x4xbf16>
    %c0_159 = arith.constant 0 : index
    %c15_160 = arith.constant 15 : index
    %c0_161 = arith.constant 0 : index
    %c24_162 = arith.constant 24 : index
    %82 = vector.load %arg8[%c0_159, %c15_160, %c0_161, %c24_162] : memref<2x16x16x36xbf16, #tpu.memory_space<vmem>>, vector<2x1x16x4xbf16>
    tpu.vector_store %arg8[%c0_159, %c15_160, %c0_161, %c24_162], %81 {strides = array<i32>} : memref<2x16x16x36xbf16, #tpu.memory_space<vmem>>, vector<2x1x16x4xbf16>,
    %cst_163 = arith.constant 0.000000e+00 : bf16
    %83 = vector.broadcast %cst_163 : bf16 to vector<2x16x1x4xbf16>
    %c0_164 = arith.constant 0 : index
    %c0_165 = arith.constant 0 : index
    %c0_166 = arith.constant 0 : index
    %c24_167 = arith.constant 24 : index
    %84 = vector.load %arg8[%c0_164, %c0_165, %c0_166, %c24_167] : memref<2x16x16x36xbf16, #tpu.memory_space<vmem>>, vector<2x16x1x4xbf16>
    tpu.vector_store %arg8[%c0_164, %c0_165, %c0_166, %c24_167], %83 {strides = array<i32>} : memref<2x16x16x36xbf16, #tpu.memory_space<vmem>>, vector<2x16x1x4xbf16>,
    %85 = vector.extract_strided_slice %55 {offsets = [0, 1, 0, 0], sizes = [2, 15, 15, 4], strides = [1, 1, 1, 1]} : vector<2x16x16x4xbf16> to vector<2x15x15x4xbf16>
    %c0_168 = arith.constant 0 : index
    %c0_169 = arith.constant 0 : index
    %c1_170 = arith.constant 1 : index
    %c24_171 = arith.constant 24 : index
    %86 = vector.load %arg8[%c0_168, %c0_169, %c1_170, %c24_171] : memref<2x16x16x36xbf16, #tpu.memory_space<vmem>>, vector<2x15x15x4xbf16>
    tpu.vector_store %arg8[%c0_168, %c0_169, %c1_170, %c24_171], %85 {strides = array<i32>} : memref<2x16x16x36xbf16, #tpu.memory_space<vmem>>, vector<2x15x15x4xbf16>,
    %cst_172 = arith.constant 0.000000e+00 : bf16
    %87 = vector.broadcast %cst_172 : bf16 to vector<2x1x16x4xbf16>
    %c0_173 = arith.constant 0 : index
    %c15_174 = arith.constant 15 : index
    %c0_175 = arith.constant 0 : index
    %c28_176 = arith.constant 28 : index
    %88 = vector.load %arg8[%c0_173, %c15_174, %c0_175, %c28_176] : memref<2x16x16x36xbf16, #tpu.memory_space<vmem>>, vector<2x1x16x4xbf16>
    tpu.vector_store %arg8[%c0_173, %c15_174, %c0_175, %c28_176], %87 {strides = array<i32>} : memref<2x16x16x36xbf16, #tpu.memory_space<vmem>>, vector<2x1x16x4xbf16>,
    %89 = vector.extract_strided_slice %55 {offsets = [0, 1, 0, 0], sizes = [2, 15, 16, 4], strides = [1, 1, 1, 1]} : vector<2x16x16x4xbf16> to vector<2x15x16x4xbf16>
    %c0_177 = arith.constant 0 : index
    %c0_178 = arith.constant 0 : index
    %c0_179 = arith.constant 0 : index
    %c28_180 = arith.constant 28 : index
    %90 = vector.load %arg8[%c0_177, %c0_178, %c0_179, %c28_180] : memref<2x16x16x36xbf16, #tpu.memory_space<vmem>>, vector<2x15x16x4xbf16>
    tpu.vector_store %arg8[%c0_177, %c0_178, %c0_179, %c28_180], %89 {strides = array<i32>} : memref<2x16x16x36xbf16, #tpu.memory_space<vmem>>, vector<2x15x16x4xbf16>,
    %cst_181 = arith.constant 0.000000e+00 : bf16
    %91 = vector.broadcast %cst_181 : bf16 to vector<2x1x16x4xbf16>
    %c0_182 = arith.constant 0 : index
    %c15_183 = arith.constant 15 : index
    %c0_184 = arith.constant 0 : index
    %c32_185 = arith.constant 32 : index
    %92 = vector.load %arg8[%c0_182, %c15_183, %c0_184, %c32_185] : memref<2x16x16x36xbf16, #tpu.memory_space<vmem>>, vector<2x1x16x4xbf16>
    tpu.vector_store %arg8[%c0_182, %c15_183, %c0_184, %c32_185], %91 {strides = array<i32>} : memref<2x16x16x36xbf16, #tpu.memory_space<vmem>>, vector<2x1x16x4xbf16>,
    %cst_186 = arith.constant 0.000000e+00 : bf16
    %93 = vector.broadcast %cst_186 : bf16 to vector<2x16x1x4xbf16>
    %c0_187 = arith.constant 0 : index
    %c0_188 = arith.constant 0 : index
    %c15_189 = arith.constant 15 : index
    %c32_190 = arith.constant 32 : index
    %94 = vector.load %arg8[%c0_187, %c0_188, %c15_189, %c32_190] : memref<2x16x16x36xbf16, #tpu.memory_space<vmem>>, vector<2x16x1x4xbf16>
    tpu.vector_store %arg8[%c0_187, %c0_188, %c15_189, %c32_190], %93 {strides = array<i32>} : memref<2x16x16x36xbf16, #tpu.memory_space<vmem>>, vector<2x16x1x4xbf16>,
    %95 = vector.extract_strided_slice %55 {offsets = [0, 1, 1, 0], sizes = [2, 15, 15, 4], strides = [1, 1, 1, 1]} : vector<2x16x16x4xbf16> to vector<2x15x15x4xbf16>
    %c0_191 = arith.constant 0 : index
    %c0_192 = arith.constant 0 : index
    %c0_193 = arith.constant 0 : index
    %c32_194 = arith.constant 32 : index
    %96 = vector.load %arg8[%c0_191, %c0_192, %c0_193, %c32_194] : memref<2x16x16x36xbf16, #tpu.memory_space<vmem>>, vector<2x15x15x4xbf16>
    tpu.vector_store %arg8[%c0_191, %c0_192, %c0_193, %c32_194], %95 {strides = array<i32>} : memref<2x16x16x36xbf16, #tpu.memory_space<vmem>>, vector<2x15x15x4xbf16>,
    %c0_195 = arith.constant 0 : index
    %c0_196 = arith.constant 0 : index
    %c0_197 = arith.constant 0 : index
    %c0_198 = arith.constant 0 : index
    %97 = vector.load %arg8[%c0_195, %c0_196, %c0_197, %c0_198] : memref<2x16x16x36xbf16, #tpu.memory_space<vmem>>, vector<2x16x16x36xbf16>
    %98 = vector.shape_cast %97 : vector<2x16x16x36xbf16> to vector<512x36xbf16>
    %c0_199 = arith.constant 0 : index
    %c0_200 = arith.constant 0 : index
    %99 = vector.load %arg4[%c0_199, %c0_200] : memref<36x4xbf16, #tpu.memory_space<vmem>>, vector<36x4xbf16>
    %cst_201 = arith.constant dense<0.000000e+00> : vector<512x4xf32>
    %100 = tpu.matmul %98, %99, %cst_201 {dimension_numbers = #tpu.dot_dimension_numbers<[1], [0], [0], [1], [0, 0, 1, 1], [], []>} : vector<512x36xbf16>, vector<36x4xbf16>, vector<512x4xf32> -> vector<512x4xf32>
    %c0_202 = arith.constant 0 : index
    %c0_203 = arith.constant 0 : index
    %101 = vector.load %arg5[%c0_202, %c0_203] : memref<1x4xf32, #tpu.memory_space<vmem>>, vector<1x4xf32>
    %102 = vector.broadcast %101 : vector<1x4xf32> to vector<512x4xf32>
    %103 = arith.addf %100, %102 : vector<512x4xf32>
    %104 = vector.shape_cast %2 : vector<2x16x16x4xf32> to vector<512x4xf32>
    %105 = arith.addf %103, %104 : vector<512x4xf32>
    %106 = vector.extract_strided_slice %105 {offsets = [0, 0], sizes = [256, 4], strides = [1, 1]} : vector<512x4xf32> to vector<256x4xf32>
    %107 = tpu.transpose %106, [1, 0] : vector<256x4xf32> -> vector<4x256xf32>
    %c0_204 = arith.constant 0 : index
    %c0_205 = arith.constant 0 : index
    %c0_206 = arith.constant 0 : index
    %108 = vector.load %arg6[%c0_204, %c0_205, %c0_206] : memref<2x4x256xf32, #tpu.memory_space<vmem>>, vector<1x4x256xf32>
    %109 = vector.shape_cast %108 : vector<1x4x256xf32> to vector<4x256xf32>
    %110 = vector.shape_cast %107 : vector<4x256xf32> to vector<1x4x256xf32>
    tpu.vector_store %arg6[%c0_204, %c0_205, %c0_206], %110 {strides = array<i32>} : memref<2x4x256xf32, #tpu.memory_space<vmem>>, vector<1x4x256xf32>,
    %111 = vector.extract_strided_slice %105 {offsets = [256, 0], sizes = [256, 4], strides = [1, 1]} : vector<512x4xf32> to vector<256x4xf32>
    %112 = tpu.transpose %111, [1, 0] : vector<256x4xf32> -> vector<4x256xf32>
    %c1_207 = arith.constant 1 : index
    %c0_208 = arith.constant 0 : index
    %c0_209 = arith.constant 0 : index
    %113 = vector.load %arg6[%c1_207, %c0_208, %c0_209] : memref<2x4x256xf32, #tpu.memory_space<vmem>>, vector<1x4x256xf32>
    %114 = vector.shape_cast %113 : vector<1x4x256xf32> to vector<4x256xf32>
    %115 = vector.shape_cast %112 : vector<4x256xf32> to vector<1x4x256xf32>
    tpu.vector_store %arg6[%c1_207, %c0_208, %c0_209], %115 {strides = array<i32>} : memref<2x4x256xf32, #tpu.memory_space<vmem>>, vector<1x4x256xf32>,
    return
  }
  func.func @transform_0(%arg0: i32) -> (i32, i32, i32, i32) {
    %c0_i32 = arith.constant 0 : i32
    %c0_i32_0 = arith.constant 0 : i32
    %c0_i32_1 = arith.constant 0 : i32
    %c0_i32_2 = arith.constant 0 : i32
    return %arg0, %c0_i32, %c0_i32_0, %c0_i32_1 : i32, i32, i32, i32
  }
  func.func @transform_1(%arg0: i32) -> (i32, i32) {
    %c0_i32 = arith.constant 0 : i32
    %c0_i32_0 = arith.constant 0 : i32
    %c0_i32_1 = arith.constant 0 : i32
    return %c0_i32, %c0_i32_0 : i32, i32
  }
  func.func @transform_2(%arg0: i32) -> (i32, i32) {
    %c0_i32 = arith.constant 0 : i32
    %c0_i32_0 = arith.constant 0 : i32
    %c0_i32_1 = arith.constant 0 : i32
    return %c0_i32, %c0_i32_0 : i32, i32
  }
  func.func @transform_3(%arg0: i32) -> (i32, i32) {
    %c0_i32 = arith.constant 0 : i32
    %c0_i32_0 = arith.constant 0 : i32
    %c0_i32_1 = arith.constant 0 : i32
    return %c0_i32, %c0_i32_0 : i32, i32
  }
  func.func @transform_4(%arg0: i32) -> (i32, i32) {
    %c0_i32 = arith.constant 0 : i32
    %c0_i32_0 = arith.constant 0 : i32
    %c0_i32_1 = arith.constant 0 : i32
    return %c0_i32, %c0_i32_0 : i32, i32
  }
  func.func @transform_5(%arg0: i32) -> (i32, i32, i32) {
    %c0_i32 = arith.constant 0 : i32
    %c0_i32_0 = arith.constant 0 : i32
    %c0_i32_1 = arith.constant 0 : i32
    return %arg0, %c0_i32, %c0_i32_0 : i32, i32, i32
  }
}

</mosaic_0001>

<llo_original>
// kernel: tpu_custom_call.1
$region0: #{tpu_custom_call.1}
  #allocation0 [shape = 'u32[]', space=smem, size = 0x4, offset = 0x4, fixed_abs, tag = 'smem constant byte address 0x4 - core index']
  #allocation1 [shape = 'u32[144,128]{1,0:T(1,128)}', space=vmem, size = 0x12000, scoped, tag = 'internal scratch']
  #allocation2 [shape = 'bf16[2,16,16,36]{3,2,1,0:T(8,128)(2,1)}', space=vmem, size = 0x20000, scoped, tag = 'scratch operand']
  #allocation3 [shape = 'bf16[2,16,16,36]{3,2,1,0:T(8,128)(2,1)}', space=vmem, size = 0x20000, scoped, tag = 'scratch operand']
  %s0 = inlined_call_operand.vmem [shape: f32[2,16,16,4], index: 0, kind: input, shape index: {}]
  %s1 = inlined_call_operand.vmem [shape: bf16[36,4], index: 1, kind: input, shape index: {}]
  %s2 = inlined_call_operand.vmem [shape: f32[1,4], index: 2, kind: input, shape index: {}]
  %s3 = inlined_call_operand.vmem [shape: bf16[36,4], index: 3, kind: input, shape index: {}]
  %s4 = inlined_call_operand.vmem [shape: f32[1,4], index: 4, kind: input, shape index: {}]
  %s5 = inlined_call_operand.hbm [shape: f32[2,4,256], index: 5, kind: output, shape index: {}]
  %s6 = sld [smem:[#allocation0]]
  $region30: #{tpu_custom_call.1} parent=0
    _
  %s8 = ssub.s32 1, %s6
  %s9 = scalar_select 0, %s8, %s6
  $region1: #{tpu_custom_call.1} parent=0
    #allocation4 [shape = 'u8[8192]{0}', space=vmem, size = 0x2000, scoped, tag = 'output window, operand 0, single buffered']
    #allocation5 [shape = 's32[1]{0}', space=sflag, size = 0x4, scoped, tag = 'scoped memory for tpu_custom_call.1']
    %10 = vsyncpa [#allocation5], 0
    // Predicated region
    $region2: #{tpu_custom_call.1} parent=1 // pred_check
      _
    $region3: #{tpu_custom_call.1} parent=1 // pred_check_branch
      %12 = sbr.rel (0) target = $region5
    $region4: #{tpu_custom_call.1} parent=1 // pred_region
      _
    $region5: #{tpu_custom_call.1} parent=1 // pred_fallthru
      _
    // Predicated region
    $region6: #{tpu_custom_call.1} parent=1 // pred_check
      _
    $region7: #{tpu_custom_call.1} parent=1 // pred_check_branch
      %14 = sbr.rel (0) target = $region9
    $region8: #{tpu_custom_call.1} parent=1 // pred_region
      _
    $region9: #{tpu_custom_call.1} parent=1 // pred_fallthru
      _
    // Predicated region
    $region10: #{tpu_custom_call.1} parent=1 // pred_check
      _
    $region11: #{tpu_custom_call.1} parent=1 // pred_check_branch
      %16 = sbr.rel (0) target = $region13
    $region12: #{tpu_custom_call.1} parent=1 // pred_region
      _
    $region13: #{tpu_custom_call.1} parent=1 // pred_fallthru
      _
    // Predicated region
    $region14: #{tpu_custom_call.1} parent=1 // pred_check
      _
    $region15: #{tpu_custom_call.1} parent=1 // pred_check_branch
      %18 = sbr.rel (0) target = $region17
    $region16: #{tpu_custom_call.1} parent=1 // pred_region
      _
    $region17: #{tpu_custom_call.1} parent=1 // pred_fallthru
      _
    // Predicated region
    $region18: #{tpu_custom_call.1} parent=1 // pred_check
      _
    $region19: #{tpu_custom_call.1} parent=1 // pred_check_branch
      %20 = sbr.rel (0) target = $region21
    $region20: #{tpu_custom_call.1} parent=1 // pred_region
      _
    $region21: #{tpu_custom_call.1} parent=1 // pred_fallthru
      _
    %v22 = vld [vmem:[%s0] sm:$0xff]
    %v23 = vld [vmem:[%s0 + $0x8] sm:$0xff]
    %v24 = vld [vmem:[%s0 + $0x10] sm:$0xff]
    %v25 = vld [vmem:[%s0 + $0x18] sm:$0xff]
    %v26 = vld [vmem:[%s0 + $0x20] sm:$0xff]
    %v27 = vld [vmem:[%s0 + $0x28] sm:$0xff]
    %v28 = vld [vmem:[%s0 + $0x30] sm:$0xff]
    %v29 = vld [vmem:[%s0 + $0x38] sm:$0xff]
    %v30 = vld [vmem:[%s0 + $0x40] sm:$0xff]
    %v31 = vld [vmem:[%s0 + $0x48] sm:$0xff]
    %v32 = vld [vmem:[%s0 + $0x50] sm:$0xff]
    %v33 = vld [vmem:[%s0 + $0x58] sm:$0xff]
    %v34 = vld [vmem:[%s0 + $0x60] sm:$0xff]
    %v35 = vld [vmem:[%s0 + $0x68] sm:$0xff]
    %v36 = vld [vmem:[%s0 + $0x70] sm:$0xff]
    %v37 = vld [vmem:[%s0 + $0x78] sm:$0xff]
    %v38 = vld [vmem:[%s0 + $0x80] sm:$0xff]
    %v39 = vld [vmem:[%s0 + $0x88] sm:$0xff]
    %v40 = vld [vmem:[%s0 + $0x90] sm:$0xff]
    %v41 = vld [vmem:[%s0 + $0x98] sm:$0xff]
    %v42 = vld [vmem:[%s0 + $0xa0] sm:$0xff]
    %v43 = vld [vmem:[%s0 + $0xa8] sm:$0xff]
    %v44 = vld [vmem:[%s0 + $0xb0] sm:$0xff]
    %v45 = vld [vmem:[%s0 + $0xb8] sm:$0xff]
    %v46 = vld [vmem:[%s0 + $0xc0] sm:$0xff]
    %v47 = vld [vmem:[%s0 + $0xc8] sm:$0xff]
    %v48 = vld [vmem:[%s0 + $0xd0] sm:$0xff]
    %v49 = vld [vmem:[%s0 + $0xd8] sm:$0xff]
    %v50 = vld [vmem:[%s0 + $0xe0] sm:$0xff]
    %v51 = vld [vmem:[%s0 + $0xe8] sm:$0xff]
    %v52 = vld [vmem:[%s0 + $0xf0] sm:$0xff]
    %v53 = vld [vmem:[%s0 + $0xf8] sm:$0xff]
    %v54 = vld [vmem:[%s0 + $0x100] sm:$0xff]
    %v55 = vld [vmem:[%s0 + $0x108] sm:$0xff]
    %v56 = vld [vmem:[%s0 + $0x110] sm:$0xff]
    %v57 = vld [vmem:[%s0 + $0x118] sm:$0xff]
    %v58 = vld [vmem:[%s0 + $0x120] sm:$0xff]
    %v59 = vld [vmem:[%s0 + $0x128] sm:$0xff]
    %v60 = vld [vmem:[%s0 + $0x130] sm:$0xff]
    %v61 = vld [vmem:[%s0 + $0x138] sm:$0xff]
    %v62 = vld [vmem:[%s0 + $0x140] sm:$0xff]
    %v63 = vld [vmem:[%s0 + $0x148] sm:$0xff]
    %v64 = vld [vmem:[%s0 + $0x150] sm:$0xff]
    %v65 = vld [vmem:[%s0 + $0x158] sm:$0xff]
    %v66 = vld [vmem:[%s0 + $0x160] sm:$0xff]
    %v67 = vld [vmem:[%s0 + $0x168] sm:$0xff]
    %v68 = vld [vmem:[%s0 + $0x170] sm:$0xff]
    %v69 = vld [vmem:[%s0 + $0x178] sm:$0xff]
    %v70 = vld [vmem:[%s0 + $0x180] sm:$0xff]
    %v71 = vld [vmem:[%s0 + $0x188] sm:$0xff]
    %v72 = vld [vmem:[%s0 + $0x190] sm:$0xff]
    %v73 = vld [vmem:[%s0 + $0x198] sm:$0xff]
    %v74 = vld [vmem:[%s0 + $0x1a0] sm:$0xff]
    %v75 = vld [vmem:[%s0 + $0x1a8] sm:$0xff]
    %v76 = vld [vmem:[%s0 + $0x1b0] sm:$0xff]
    %v77 = vld [vmem:[%s0 + $0x1b8] sm:$0xff]
    %v78 = vld [vmem:[%s0 + $0x1c0] sm:$0xff]
    %v79 = vld [vmem:[%s0 + $0x1c8] sm:$0xff]
    %v80 = vld [vmem:[%s0 + $0x1d0] sm:$0xff]
    %v81 = vld [vmem:[%s0 + $0x1d8] sm:$0xff]
    %v82 = vld [vmem:[%s0 + $0x1e0] sm:$0xff]
    %v83 = vld [vmem:[%s0 + $0x1e8] sm:$0xff]
    %v84 = vld [vmem:[%s0 + $0x1f0] sm:$0xff]
    %v85 = vld [vmem:[%s0 + $0x1f8] sm:$0xff]
    %v86 = vmax.f32 %v22, 0.0
    %v87 = vmax.f32 %v23, 0.0
    %v88 = vmax.f32 %v24, 0.0
    %v89 = vmax.f32 %v25, 0.0
    %v90 = vmax.f32 %v26, 0.0
    %v91 = vmax.f32 %v27, 0.0
    %v92 = vmax.f32 %v28, 0.0
    %v93 = vmax.f32 %v29, 0.0
    %v94 = vmax.f32 %v30, 0.0
    %v95 = vmax.f32 %v31, 0.0
    %v96 = vmax.f32 %v32, 0.0
    %v97 = vmax.f32 %v33, 0.0
    %v98 = vmax.f32 %v34, 0.0
    %v99 = vmax.f32 %v35, 0.0
    %v100 = vmax.f32 %v36, 0.0
    %v101 = vmax.f32 %v37, 0.0
    %v102 = vmax.f32 %v38, 0.0
    %v103 = vmax.f32 %v39, 0.0
    %v104 = vmax.f32 %v40, 0.0
    %v105 = vmax.f32 %v41, 0.0
    %v106 = vmax.f32 %v42, 0.0
    %v107 = vmax.f32 %v43, 0.0
    %v108 = vmax.f32 %v44, 0.0
    %v109 = vmax.f32 %v45, 0.0
    %v110 = vmax.f32 %v46, 0.0
    %v111 = vmax.f32 %v47, 0.0
    %v112 = vmax.f32 %v48, 0.0
    %v113 = vmax.f32 %v49, 0.0
    %v114 = vmax.f32 %v50, 0.0
    %v115 = vmax.f32 %v51, 0.0
    %v116 = vmax.f32 %v52, 0.0
    %v117 = vmax.f32 %v53, 0.0
    %v118 = vmax.f32 %v54, 0.0
    %v119 = vmax.f32 %v55, 0.0
    %v120 = vmax.f32 %v56, 0.0
    %v121 = vmax.f32 %v57, 0.0
    %v122 = vmax.f32 %v58, 0.0
    %v123 = vmax.f32 %v59, 0.0
    %v124 = vmax.f32 %v60, 0.0
    %v125 = vmax.f32 %v61, 0.0
    %v126 = vmax.f32 %v62, 0.0
    %v127 = vmax.f32 %v63, 0.0
    %v128 = vmax.f32 %v64, 0.0
    %v129 = vmax.f32 %v65, 0.0
    %v130 = vmax.f32 %v66, 0.0
    %v131 = vmax.f32 %v67, 0.0
    %v132 = vmax.f32 %v68, 0.0
    %v133 = vmax.f32 %v69, 0.0
    %v134 = vmax.f32 %v70, 0.0
    %v135 = vmax.f32 %v71, 0.0
    %v136 = vmax.f32 %v72, 0.0
    %v137 = vmax.f32 %v73, 0.0
    %v138 = vmax.f32 %v74, 0.0
    %v139 = vmax.f32 %v75, 0.0
    %v140 = vmax.f32 %v76, 0.0
    %v141 = vmax.f32 %v77, 0.0
    %v142 = vmax.f32 %v78, 0.0
    %v143 = vmax.f32 %v79, 0.0
    %v144 = vmax.f32 %v80, 0.0
    %v145 = vmax.f32 %v81, 0.0
    %v146 = vmax.f32 %v82, 0.0
    %v147 = vmax.f32 %v83, 0.0
    %v148 = vmax.f32 %v84, 0.0
    %v149 = vmax.f32 %v85, 0.0
    %v150 = vpack.c.bf16 %v87, %v86
    %v151 = vpack.c.bf16 %v89, %v88
    %v152 = vpack.c.bf16 %v91, %v90
    %v153 = vpack.c.bf16 %v93, %v92
    %v154 = vpack.c.bf16 %v95, %v94
    %v155 = vpack.c.bf16 %v97, %v96
    %v156 = vpack.c.bf16 %v99, %v98
    %v157 = vpack.c.bf16 %v101, %v100
    %v158 = vpack.c.bf16 %v103, %v102
    %v159 = vpack.c.bf16 %v105, %v104
    %v160 = vpack.c.bf16 %v107, %v106
    %v161 = vpack.c.bf16 %v109, %v108
    %v162 = vpack.c.bf16 %v111, %v110
    %v163 = vpack.c.bf16 %v113, %v112
    %v164 = vpack.c.bf16 %v115, %v114
    %v165 = vpack.c.bf16 %v117, %v116
    %v166 = vpack.c.bf16 %v119, %v118
    %v167 = vpack.c.bf16 %v121, %v120
    %v168 = vpack.c.bf16 %v123, %v122
    %v169 = vpack.c.bf16 %v125, %v124
    %v170 = vpack.c.bf16 %v127, %v126
    %v171 = vpack.c.bf16 %v129, %v128
    %v172 = vpack.c.bf16 %v131, %v130
    %v173 = vpack.c.bf16 %v133, %v132
    %v174 = vpack.c.bf16 %v135, %v134
    %v175 = vpack.c.bf16 %v137, %v136
    %v176 = vpack.c.bf16 %v139, %v138
    %v177 = vpack.c.bf16 %v141, %v140
    %v178 = vpack.c.bf16 %v143, %v142
    %v179 = vpack.c.bf16 %v145, %v144
    %v180 = vpack.c.bf16 %v147, %v146
    %v181 = vpack.c.bf16 %v149, %v148
    %vm182 = vcmask 27648
    %183 = vst.msk [vmem:[#allocation2] sm:$0xf] %vm182, 0
    %184 = vst.msk [vmem:[#allocation2 + $0x4] sm:$0xf] %vm182, 0
    %185 = vst.msk [vmem:[#allocation2 + $0x80] sm:$0xf] %vm182, 0
    %186 = vst.msk [vmem:[#allocation2 + $0x84] sm:$0xf] %vm182, 0
    %vm187 = vcmask 24576
    %vm188 = vsmask.f32 256
    %vm189 = vmand %vm187, %vm188
    %v190 = vld [vmem:[#allocation2] sm:$0x1]
    %v191 = vsel %vm189, 0, %v190
    %192 = vst [vmem:[#allocation2] sm:$0x1] %v191
    %v193 = vld [vmem:[#allocation2 + $0x8] sm:$0x1]
    %v194 = vsel %vm189, 0, %v193
    %195 = vst [vmem:[#allocation2 + $0x8] sm:$0x1] %v194
    %v196 = vld [vmem:[#allocation2 + $0x10] sm:$0x1]
    %v197 = vsel %vm189, 0, %v196
    %198 = vst [vmem:[#allocation2 + $0x10] sm:$0x1] %v197
    %v199 = vld [vmem:[#allocation2 + $0x18] sm:$0x1]
    %v200 = vsel %vm189, 0, %v199
    %201 = vst [vmem:[#allocation2 + $0x18] sm:$0x1] %v200
    %v202 = vld [vmem:[#allocation2 + $0x20] sm:$0x1]
    %v203 = vsel %vm189, 0, %v202
    %204 = vst [vmem:[#allocation2 + $0x20] sm:$0x1] %v203
    %v205 = vld [vmem:[#allocation2 + $0x28] sm:$0x1]
    %v206 = vsel %vm189, 0, %v205
    %207 = vst [vmem:[#allocation2 + $0x28] sm:$0x1] %v206
    %v208 = vld [vmem:[#allocation2 + $0x30] sm:$0x1]
    %v209 = vsel %vm189, 0, %v208
    %210 = vst [vmem:[#allocation2 + $0x30] sm:$0x1] %v209
    %v211 = vld [vmem:[#allocation2 + $0x38] sm:$0x1]
    %v212 = vsel %vm189, 0, %v211
    %213 = vst [vmem:[#allocation2 + $0x38] sm:$0x1] %v212
    %v214 = vld [vmem:[#allocation2 + $0x40] sm:$0x1]
    %v215 = vsel %vm189, 0, %v214
    %216 = vst [vmem:[#allocation2 + $0x40] sm:$0x1] %v215
    %v217 = vld [vmem:[#allocation2 + $0x48] sm:$0x1]
    %v218 = vsel %vm189, 0, %v217
    %219 = vst [vmem:[#allocation2 + $0x48] sm:$0x1] %v218
    %v220 = vld [vmem:[#allocation2 + $0x50] sm:$0x1]
    %v221 = vsel %vm189, 0, %v220
    %222 = vst [vmem:[#allocation2 + $0x50] sm:$0x1] %v221
    %v223 = vld [vmem:[#allocation2 + $0x58] sm:$0x1]
    %v224 = vsel %vm189, 0, %v223
    %225 = vst [vmem:[#allocation2 + $0x58] sm:$0x1] %v224
    %v226 = vld [vmem:[#allocation2 + $0x60] sm:$0x1]
    %v227 = vsel %vm189, 0, %v226
    %228 = vst [vmem:[#allocation2 + $0x60] sm:$0x1] %v227
    %v229 = vld [vmem:[#allocation2 + $0x68] sm:$0x1]
    %v230 = vsel %vm189, 0, %v229
    %231 = vst [vmem:[#allocation2 + $0x68] sm:$0x1] %v230
    %v232 = vld [vmem:[#allocation2 + $0x70] sm:$0x1]
    %v233 = vsel %vm189, 0, %v232
    %234 = vst [vmem:[#allocation2 + $0x70] sm:$0x1] %v233
    %v235 = vld [vmem:[#allocation2 + $0x78] sm:$0x1]
    %v236 = vsel %vm189, 0, %v235
    %237 = vst [vmem:[#allocation2 + $0x78] sm:$0x1] %v236
    %v238 = vld [vmem:[#allocation2 + $0x80] sm:$0x1]
    %v239 = vsel %vm189, 0, %v238
    %240 = vst [vmem:[#allocation2 + $0x80] sm:$0x1] %v239
    %v241 = vld [vmem:[#allocation2 + $0x88] sm:$0x1]
    %v242 = vsel %vm189, 0, %v241
    %243 = vst [vmem:[#allocation2 + $0x88] sm:$0x1] %v242
    %v244 = vld [vmem:[#allocation2 + $0x90] sm:$0x1]
    %v245 = vsel %vm189, 0, %v244
    %246 = vst [vmem:[#allocation2 + $0x90] sm:$0x1] %v245
    %v247 = vld [vmem:[#allocation2 + $0x98] sm:$0x1]
    %v248 = vsel %vm189, 0, %v247
    %249 = vst [vmem:[#allocation2 + $0x98] sm:$0x1] %v248
    %v250 = vld [vmem:[#allocation2 + $0xa0] sm:$0x1]
    %v251 = vsel %vm189, 0, %v250
    %252 = vst [vmem:[#allocation2 + $0xa0] sm:$0x1] %v251
    %v253 = vld [vmem:[#allocation2 + $0xa8] sm:$0x1]
    %v254 = vsel %vm189, 0, %v253
    %255 = vst [vmem:[#allocation2 + $0xa8] sm:$0x1] %v254
    %v256 = vld [vmem:[#allocation2 + $0xb0] sm:$0x1]
    %v257 = vsel %vm189, 0, %v256
    %258 = vst [vmem:[#allocation2 + $0xb0] sm:$0x1] %v257
    %v259 = vld [vmem:[#allocation2 + $0xb8] sm:$0x1]
    %v260 = vsel %vm189, 0, %v259
    %261 = vst [vmem:[#allocation2 + $0xb8] sm:$0x1] %v260
    %v262 = vld [vmem:[#allocation2 + $0xc0] sm:$0x1]
    %v263 = vsel %vm189, 0, %v262
    %264 = vst [vmem:[#allocation2 + $0xc0] sm:$0x1] %v263
    %v265 = vld [vmem:[#allocation2 + $0xc8] sm:$0x1]
    %v266 = vsel %vm189, 0, %v265
    %267 = vst [vmem:[#allocation2 + $0xc8] sm:$0x1] %v266
    %v268 = vld [vmem:[#allocation2 + $0xd0] sm:$0x1]
    %v269 = vsel %vm189, 0, %v268
    %270 = vst [vmem:[#allocation2 + $0xd0] sm:$0x1] %v269
    %v271 = vld [vmem:[#allocation2 + $0xd8] sm:$0x1]
    %v272 = vsel %vm189, 0, %v271
    %273 = vst [vmem:[#allocation2 + $0xd8] sm:$0x1] %v272
    %v274 = vld [vmem:[#allocation2 + $0xe0] sm:$0x1]
    %v275 = vsel %vm189, 0, %v274
    %276 = vst [vmem:[#allocation2 + $0xe0] sm:$0x1] %v275
    %v277 = vld [vmem:[#allocation2 + $0xe8] sm:$0x1]
    %v278 = vsel %vm189, 0, %v277
    %279 = vst [vmem:[#allocation2 + $0xe8] sm:$0x1] %v278
    %v280 = vld [vmem:[#allocation2 + $0xf0] sm:$0x1]
    %v281 = vsel %vm189, 0, %v280
    %282 = vst [vmem:[#allocation2 + $0xf0] sm:$0x1] %v281
    %v283 = vld [vmem:[#allocation2 + $0xf8] sm:$0x1]
    %v284 = vsel %vm189, 0, %v283
    %285 = vst [vmem:[#allocation2 + $0xf8] sm:$0x1] %v284
    %v316 = vunpack.c.l.b16 %v150
    %v317 = vunpack.c.h.b16 %v150
    %v318 = vunpack.c.l.b16 %v151
    %v319 = vunpack.c.h.b16 %v151
    %v320 = vunpack.c.l.b16 %v152
    %v321 = vunpack.c.h.b16 %v152
    %v322 = vunpack.c.l.b16 %v153
    %v323 = vunpack.c.h.b16 %v153
    %v324 = vunpack.c.l.b16 %v154
    %v325 = vunpack.c.h.b16 %v154
    %v326 = vunpack.c.l.b16 %v155
    %v327 = vunpack.c.h.b16 %v155
    %v328 = vunpack.c.l.b16 %v156
    %v329 = vunpack.c.h.b16 %v156
    %v330 = vunpack.c.l.b16 %v157
    %v331 = vunpack.c.h.b16 %v157
    %v332 = vunpack.c.l.b16 %v158
    %v333 = vunpack.c.h.b16 %v158
    %v334 = vunpack.c.l.b16 %v159
    %v335 = vunpack.c.h.b16 %v159
    %v336 = vunpack.c.l.b16 %v160
    %v337 = vunpack.c.h.b16 %v160
    %v338 = vunpack.c.l.b16 %v161
    %v339 = vunpack.c.h.b16 %v161
    %v340 = vunpack.c.l.b16 %v162
    %v341 = vunpack.c.h.b16 %v162
    %v342 = vunpack.c.l.b16 %v163
    %v343 = vunpack.c.h.b16 %v163
    %v344 = vunpack.c.l.b16 %v164
    %v345 = vunpack.c.h.b16 %v164
    %v346 = vunpack.c.l.b16 %v166
    %v347 = vunpack.c.h.b16 %v166
    %v348 = vunpack.c.l.b16 %v167
    %v349 = vunpack.c.h.b16 %v167
    %v350 = vunpack.c.l.b16 %v168
    %v351 = vunpack.c.h.b16 %v168
    %v352 = vunpack.c.l.b16 %v169
    %v353 = vunpack.c.h.b16 %v169
    %v354 = vunpack.c.l.b16 %v170
    %v355 = vunpack.c.h.b16 %v170
    %v356 = vunpack.c.l.b16 %v171
    %v357 = vunpack.c.h.b16 %v171
    %v358 = vunpack.c.l.b16 %v172
    %v359 = vunpack.c.h.b16 %v172
    %v360 = vunpack.c.l.b16 %v173
    %v361 = vunpack.c.h.b16 %v173
    %v362 = vunpack.c.l.b16 %v174
    %v363 = vunpack.c.h.b16 %v174
    %v364 = vunpack.c.l.b16 %v175
    %v365 = vunpack.c.h.b16 %v175
    %v366 = vunpack.c.l.b16 %v176
    %v367 = vunpack.c.h.b16 %v176
    %v368 = vunpack.c.l.b16 %v177
    %v369 = vunpack.c.h.b16 %v177
    %v370 = vunpack.c.l.b16 %v178
    %v371 = vunpack.c.h.b16 %v178
    %v372 = vunpack.c.l.b16 %v179
    %v373 = vunpack.c.h.b16 %v179
    %v374 = vunpack.c.l.b16 %v180
    %v375 = vunpack.c.h.b16 %v180
    %v376 = vpack.c.b16 %v316, %v316
    %v377 = vpack.c.b16 %v317, %v317
    %v378 = vpack.c.b16 %v318, %v318
    %v379 = vpack.c.b16 %v319, %v319
    %v380 = vpack.c.b16 %v320, %v320
    %v381 = vpack.c.b16 %v321, %v321
    %v382 = vpack.c.b16 %v322, %v322
    %v383 = vpack.c.b16 %v323, %v323
    %v384 = vpack.c.b16 %v324, %v324
    %v385 = vpack.c.b16 %v325, %v325
    %v386 = vpack.c.b16 %v326, %v326
    %v387 = vpack.c.b16 %v327, %v327
    %v388 = vpack.c.b16 %v328, %v328
    %v389 = vpack.c.b16 %v329, %v329
    %v390 = vpack.c.b16 %v330, %v330
    %v391 = vpack.c.b16 %v331, %v331
    %v392 = vpack.c.b16 %v332, %v332
    %v393 = vpack.c.b16 %v333, %v333
    %v394 = vpack.c.b16 %v334, %v334
    %v395 = vpack.c.b16 %v335, %v335
    %v396 = vpack.c.b16 %v336, %v336
    %v397 = vpack.c.b16 %v337, %v337
    %v398 = vpack.c.b16 %v338, %v338
    %v399 = vpack.c.b16 %v339, %v339
    %v400 = vpack.c.b16 %v340, %v340
    %v401 = vpack.c.b16 %v341, %v341
    %v402 = vpack.c.b16 %v342, %v342
    %v403 = vpack.c.b16 %v343, %v343
    %v404 = vpack.c.b16 %v344, %v344
    %v405 = vpack.c.b16 %v345, %v345
    %v406 = vpack.c.b16 %v346, %v346
    %v407 = vpack.c.b16 %v347, %v347
    %v408 = vpack.c.b16 %v348, %v348
    %v409 = vpack.c.b16 %v349, %v349
    %v410 = vpack.c.b16 %v350, %v350
    %v411 = vpack.c.b16 %v351, %v351
    %v412 = vpack.c.b16 %v352, %v352
    %v413 = vpack.c.b16 %v353, %v353
    %v414 = vpack.c.b16 %v354, %v354
    %v415 = vpack.c.b16 %v355, %v355
    %v416 = vpack.c.b16 %v356, %v356
    %v417 = vpack.c.b16 %v357, %v357
    %v418 = vpack.c.b16 %v358, %v358
    %v419 = vpack.c.b16 %v359, %v359
    %v420 = vpack.c.b16 %v360, %v360
    %v421 = vpack.c.b16 %v361, %v361
    %v422 = vpack.c.b16 %v362, %v362
    %v423 = vpack.c.b16 %v363, %v363
    %v424 = vpack.c.b16 %v364, %v364
    %v425 = vpack.c.b16 %v365, %v365
    %v426 = vpack.c.b16 %v366, %v366
    %v427 = vpack.c.b16 %v367, %v367
    %v428 = vpack.c.b16 %v368, %v368
    %v429 = vpack.c.b16 %v369, %v369
    %v430 = vpack.c.b16 %v370, %v370
    %v431 = vpack.c.b16 %v371, %v371
    %v432 = vpack.c.b16 %v372, %v372
    %v433 = vpack.c.b16 %v373, %v373
    %v434 = vpack.c.b16 %v374, %v374
    %v435 = vpack.c.b16 %v375, %v375
    %vm436 = vsmask.f32 4368
    %vm437 = vmor %vm188, %vm436
    %v439 = vshrl.u32 %v376, 16
    %v441 = vrot.slane %v439, 7
    %v442 = vshll.u32 %v376, 16
    %v444 = vor.u32 %v441, %v442
    %v445 = vrot.slane %v441, 4
    %v447 = vshrl.u32 %v377, 16
    %v449 = vrot.slane %v447, 7
    %v450 = vshll.u32 %v377, 16
    %v452 = vor.u32 %v449, %v450
    %v453 = vsel %vm437, %v445, %v452
    %v455 = vshrl.u32 %v378, 16
    %v457 = vrot.slane %v455, 7
    %v458 = vshll.u32 %v378, 16
    %v460 = vor.u32 %v457, %v458
    %v461 = vrot.slane %v457, 4
    %v463 = vshrl.u32 %v379, 16
    %v465 = vrot.slane %v463, 7
    %v466 = vshll.u32 %v379, 16
    %v468 = vor.u32 %v465, %v466
    %v469 = vsel %vm437, %v461, %v468
    %v471 = vshrl.u32 %v380, 16
    %v473 = vrot.slane %v471, 7
    %v474 = vshll.u32 %v380, 16
    %v476 = vor.u32 %v473, %v474
    %v477 = vrot.slane %v473, 4
    %v479 = vshrl.u32 %v381, 16
    %v481 = vrot.slane %v479, 7
    %v482 = vshll.u32 %v381, 16
    %v484 = vor.u32 %v481, %v482
    %v485 = vsel %vm437, %v477, %v484
    %v487 = vshrl.u32 %v382, 16
    %v489 = vrot.slane %v487, 7
    %v490 = vshll.u32 %v382, 16
    %v492 = vor.u32 %v489, %v490
    %v493 = vrot.slane %v489, 4
    %v495 = vshrl.u32 %v383, 16
    %v497 = vrot.slane %v495, 7
    %v498 = vshll.u32 %v383, 16
    %v500 = vor.u32 %v497, %v498
    %v501 = vsel %vm437, %v493, %v500
    %v503 = vshrl.u32 %v384, 16
    %v505 = vrot.slane %v503, 7
    %v506 = vshll.u32 %v384, 16
    %v508 = vor.u32 %v505, %v506
    %v509 = vrot.slane %v505, 4
    %v511 = vshrl.u32 %v385, 16
    %v513 = vrot.slane %v511, 7
    %v514 = vshll.u32 %v385, 16
    %v516 = vor.u32 %v513, %v514
    %v517 = vsel %vm437, %v509, %v516
    %v519 = vshrl.u32 %v386, 16
    %v521 = vrot.slane %v519, 7
    %v522 = vshll.u32 %v386, 16
    %v524 = vor.u32 %v521, %v522
    %v525 = vrot.slane %v521, 4
    %v527 = vshrl.u32 %v387, 16
    %v529 = vrot.slane %v527, 7
    %v530 = vshll.u32 %v387, 16
    %v532 = vor.u32 %v529, %v530
    %v533 = vsel %vm437, %v525, %v532
    %v535 = vshrl.u32 %v388, 16
    %v537 = vrot.slane %v535, 7
    %v538 = vshll.u32 %v388, 16
    %v540 = vor.u32 %v537, %v538
    %v541 = vrot.slane %v537, 4
    %v543 = vshrl.u32 %v389, 16
    %v545 = vrot.slane %v543, 7
    %v546 = vshll.u32 %v389, 16
    %v548 = vor.u32 %v545, %v546
    %v549 = vsel %vm437, %v541, %v548
    %v551 = vshrl.u32 %v390, 16
    %v553 = vrot.slane %v551, 7
    %v554 = vshll.u32 %v390, 16
    %v556 = vor.u32 %v553, %v554
    %v557 = vrot.slane %v553, 4
    %v559 = vshrl.u32 %v391, 16
    %v561 = vrot.slane %v559, 7
    %v562 = vshll.u32 %v391, 16
    %v564 = vor.u32 %v561, %v562
    %v565 = vsel %vm437, %v557, %v564
    %v567 = vshrl.u32 %v392, 16
    %v569 = vrot.slane %v567, 7
    %v570 = vshll.u32 %v392, 16
    %v572 = vor.u32 %v569, %v570
    %v573 = vrot.slane %v569, 4
    %v575 = vshrl.u32 %v393, 16
    %v577 = vrot.slane %v575, 7
    %v578 = vshll.u32 %v393, 16
    %v580 = vor.u32 %v577, %v578
    %v581 = vsel %vm437, %v573, %v580
    %v583 = vshrl.u32 %v394, 16
    %v585 = vrot.slane %v583, 7
    %v586 = vshll.u32 %v394, 16
    %v588 = vor.u32 %v585, %v586
    %v589 = vrot.slane %v585, 4
    %v591 = vshrl.u32 %v395, 16
    %v593 = vrot.slane %v591, 7
    %v594 = vshll.u32 %v395, 16
    %v596 = vor.u32 %v593, %v594
    %v597 = vsel %vm437, %v589, %v596
    %v599 = vshrl.u32 %v396, 16
    %v601 = vrot.slane %v599, 7
    %v602 = vshll.u32 %v396, 16
    %v604 = vor.u32 %v601, %v602
    %v605 = vrot.slane %v601, 4
    %v607 = vshrl.u32 %v397, 16
    %v609 = vrot.slane %v607, 7
    %v610 = vshll.u32 %v397, 16
    %v612 = vor.u32 %v609, %v610
    %v613 = vsel %vm437, %v605, %v612
    %v615 = vshrl.u32 %v398, 16
    %v617 = vrot.slane %v615, 7
    %v618 = vshll.u32 %v398, 16
    %v620 = vor.u32 %v617, %v618
    %v621 = vrot.slane %v617, 4
    %v623 = vshrl.u32 %v399, 16
    %v625 = vrot.slane %v623, 7
    %v626 = vshll.u32 %v399, 16
    %v628 = vor.u32 %v625, %v626
    %v629 = vsel %vm437, %v621, %v628
    %v631 = vshrl.u32 %v400, 16
    %v633 = vrot.slane %v631, 7
    %v634 = vshll.u32 %v400, 16
    %v636 = vor.u32 %v633, %v634
    %v637 = vrot.slane %v633, 4
    %v639 = vshrl.u32 %v401, 16
    %v641 = vrot.slane %v639, 7
    %v642 = vshll.u32 %v401, 16
    %v644 = vor.u32 %v641, %v642
    %v645 = vsel %vm437, %v637, %v644
    %v647 = vshrl.u32 %v402, 16
    %v649 = vrot.slane %v647, 7
    %v650 = vshll.u32 %v402, 16
    %v652 = vor.u32 %v649, %v650
    %v653 = vrot.slane %v649, 4
    %v655 = vshrl.u32 %v403, 16
    %v657 = vrot.slane %v655, 7
    %v658 = vshll.u32 %v403, 16
    %v660 = vor.u32 %v657, %v658
    %v661 = vsel %vm437, %v653, %v660
    %v663 = vshrl.u32 %v404, 16
    %v665 = vrot.slane %v663, 7
    %v666 = vshll.u32 %v404, 16
    %v668 = vor.u32 %v665, %v666
    %v669 = vrot.slane %v665, 4
    %v671 = vshrl.u32 %v405, 16
    %v673 = vrot.slane %v671, 7
    %v674 = vshll.u32 %v405, 16
    %v676 = vor.u32 %v673, %v674
    %v677 = vsel %vm437, %v669, %v676
    %v679 = vshrl.u32 %v406, 16
    %v681 = vrot.slane %v679, 7
    %v682 = vshll.u32 %v406, 16
    %v684 = vor.u32 %v681, %v682
    %v685 = vrot.slane %v681, 4
    %v687 = vshrl.u32 %v407, 16
    %v689 = vrot.slane %v687, 7
    %v690 = vshll.u32 %v407, 16
    %v692 = vor.u32 %v689, %v690
    %v693 = vsel %vm437, %v685, %v692
    %v695 = vshrl.u32 %v408, 16
    %v697 = vrot.slane %v695, 7
    %v698 = vshll.u32 %v408, 16
    %v700 = vor.u32 %v697, %v698
    %v701 = vrot.slane %v697, 4
    %v703 = vshrl.u32 %v409, 16
    %v705 = vrot.slane %v703, 7
    %v706 = vshll.u32 %v409, 16
    %v708 = vor.u32 %v705, %v706
    %v709 = vsel %vm437, %v701, %v708
    %v711 = vshrl.u32 %v410, 16
    %v713 = vrot.slane %v711, 7
    %v714 = vshll.u32 %v410, 16
    %v716 = vor.u32 %v713, %v714
    %v717 = vrot.slane %v713, 4
    %v719 = vshrl.u32 %v411, 16
    %v721 = vrot.slane %v719, 7
    %v722 = vshll.u32 %v411, 16
    %v724 = vor.u32 %v721, %v722
    %v725 = vsel %vm437, %v717, %v724
    %v727 = vshrl.u32 %v412, 16
    %v729 = vrot.slane %v727, 7
    %v730 = vshll.u32 %v412, 16
    %v732 = vor.u32 %v729, %v730
    %v733 = vrot.slane %v729, 4
    %v735 = vshrl.u32 %v413, 16
    %v737 = vrot.slane %v735, 7
    %v738 = vshll.u32 %v413, 16
    %v740 = vor.u32 %v737, %v738
    %v741 = vsel %vm437, %v733, %v740
    %v743 = vshrl.u32 %v414, 16
    %v745 = vrot.slane %v743, 7
    %v746 = vshll.u32 %v414, 16
    %v748 = vor.u32 %v745, %v746
    %v749 = vrot.slane %v745, 4
    %v751 = vshrl.u32 %v415, 16
    %v753 = vrot.slane %v751, 7
    %v754 = vshll.u32 %v415, 16
    %v756 = vor.u32 %v753, %v754
    %v757 = vsel %vm437, %v749, %v756
    %v759 = vshrl.u32 %v416, 16
    %v761 = vrot.slane %v759, 7
    %v762 = vshll.u32 %v416, 16
    %v764 = vor.u32 %v761, %v762
    %v765 = vrot.slane %v761, 4
    %v767 = vshrl.u32 %v417, 16
    %v769 = vrot.slane %v767, 7
    %v770 = vshll.u32 %v417, 16
    %v772 = vor.u32 %v769, %v770
    %v773 = vsel %vm437, %v765, %v772
    %v775 = vshrl.u32 %v418, 16
    %v777 = vrot.slane %v775, 7
    %v778 = vshll.u32 %v418, 16
    %v780 = vor.u32 %v777, %v778
    %v781 = vrot.slane %v777, 4
    %v783 = vshrl.u32 %v419, 16
    %v785 = vrot.slane %v783, 7
    %v786 = vshll.u32 %v419, 16
    %v788 = vor.u32 %v785, %v786
    %v789 = vsel %vm437, %v781, %v788
    %v791 = vshrl.u32 %v420, 16
    %v793 = vrot.slane %v791, 7
    %v794 = vshll.u32 %v420, 16
    %v796 = vor.u32 %v793, %v794
    %v797 = vrot.slane %v793, 4
    %v799 = vshrl.u32 %v421, 16
    %v801 = vrot.slane %v799, 7
    %v802 = vshll.u32 %v421, 16
    %v804 = vor.u32 %v801, %v802
    %v805 = vsel %vm437, %v797, %v804
    %v807 = vshrl.u32 %v422, 16
    %v809 = vrot.slane %v807, 7
    %v810 = vshll.u32 %v422, 16
    %v812 = vor.u32 %v809, %v810
    %v813 = vrot.slane %v809, 4
    %v815 = vshrl.u32 %v423, 16
    %v817 = vrot.slane %v815, 7
    %v818 = vshll.u32 %v423, 16
    %v820 = vor.u32 %v817, %v818
    %v821 = vsel %vm437, %v813, %v820
    %v823 = vshrl.u32 %v424, 16
    %v825 = vrot.slane %v823, 7
    %v826 = vshll.u32 %v424, 16
    %v828 = vor.u32 %v825, %v826
    %v829 = vrot.slane %v825, 4
    %v831 = vshrl.u32 %v425, 16
    %v833 = vrot.slane %v831, 7
    %v834 = vshll.u32 %v425, 16
    %v836 = vor.u32 %v833, %v834
    %v837 = vsel %vm437, %v829, %v836
    %v839 = vshrl.u32 %v426, 16
    %v841 = vrot.slane %v839, 7
    %v842 = vshll.u32 %v426, 16
    %v844 = vor.u32 %v841, %v842
    %v845 = vrot.slane %v841, 4
    %v847 = vshrl.u32 %v427, 16
    %v849 = vrot.slane %v847, 7
    %v850 = vshll.u32 %v427, 16
    %v852 = vor.u32 %v849, %v850
    %v853 = vsel %vm437, %v845, %v852
    %v855 = vshrl.u32 %v428, 16
    %v857 = vrot.slane %v855, 7
    %v858 = vshll.u32 %v428, 16
    %v860 = vor.u32 %v857, %v858
    %v861 = vrot.slane %v857, 4
    %v863 = vshrl.u32 %v429, 16
    %v865 = vrot.slane %v863, 7
    %v866 = vshll.u32 %v429, 16
    %v868 = vor.u32 %v865, %v866
    %v869 = vsel %vm437, %v861, %v868
    %v871 = vshrl.u32 %v430, 16
    %v873 = vrot.slane %v871, 7
    %v874 = vshll.u32 %v430, 16
    %v876 = vor.u32 %v873, %v874
    %v877 = vrot.slane %v873, 4
    %v879 = vshrl.u32 %v431, 16
    %v881 = vrot.slane %v879, 7
    %v882 = vshll.u32 %v431, 16
    %v884 = vor.u32 %v881, %v882
    %v885 = vsel %vm437, %v877, %v884
    %v887 = vshrl.u32 %v432, 16
    %v889 = vrot.slane %v887, 7
    %v890 = vshll.u32 %v432, 16
    %v892 = vor.u32 %v889, %v890
    %v893 = vrot.slane %v889, 4
    %v895 = vshrl.u32 %v433, 16
    %v897 = vrot.slane %v895, 7
    %v898 = vshll.u32 %v433, 16
    %v900 = vor.u32 %v897, %v898
    %v901 = vsel %vm437, %v893, %v900
    %v903 = vshrl.u32 %v434, 16
    %v905 = vrot.slane %v903, 7
    %v906 = vshll.u32 %v434, 16
    %v908 = vor.u32 %v905, %v906
    %v909 = vrot.slane %v905, 4
    %v911 = vshrl.u32 %v435, 16
    %v913 = vrot.slane %v911, 7
    %v914 = vshll.u32 %v435, 16
    %v916 = vor.u32 %v913, %v914
    %v917 = vsel %vm437, %v909, %v916
    %s978 = scalar_lea.vmem [#allocation2], 8
    %vm979 = vcmask 27648
    %vm980 = vsmask.f32 7938
    %vm981 = vmand %vm979, %vm980
    %v982 = vld [vmem:[%s978] sm:$0xf]
    %v983 = vsel %vm981, %v444, %v982
    %984 = vst [vmem:[%s978] sm:$0xf] %v983
    %985 = vst.msk [vmem:[%s978 + $0x4] sm:$0xf] %vm182, %v453
    %v986 = vld [vmem:[%s978 + $0x8] sm:$0xf]
    %v987 = vsel %vm981, %v460, %v986
    %988 = vst [vmem:[%s978 + $0x8] sm:$0xf] %v987
    %989 = vst.msk [vmem:[%s978 + $0xc] sm:$0xf] %vm182, %v469
    %v990 = vld [vmem:[%s978 + $0x10] sm:$0xf]
    %v991 = vsel %vm981, %v476, %v990
    %992 = vst [vmem:[%s978 + $0x10] sm:$0xf] %v991
    %993 = vst.msk [vmem:[%s978 + $0x14] sm:$0xf] %vm182, %v485
    %v994 = vld [vmem:[%s978 + $0x18] sm:$0xf]
    %v995 = vsel %vm981, %v492, %v994
    %996 = vst [vmem:[%s978 + $0x18] sm:$0xf] %v995
    %997 = vst.msk [vmem:[%s978 + $0x1c] sm:$0xf] %vm182, %v501
    %v998 = vld [vmem:[%s978 + $0x20] sm:$0xf]
    %v999 = vsel %vm981, %v508, %v998
    %1000 = vst [vmem:[%s978 + $0x20] sm:$0xf] %v999
    %1001 = vst.msk [vmem:[%s978 + $0x24] sm:$0xf] %vm182, %v517
    %v1002 = vld [vmem:[%s978 + $0x28] sm:$0xf]
    %v1003 = vsel %vm981, %v524, %v1002
    %1004 = vst [vmem:[%s978 + $0x28] sm:$0xf] %v1003
    %1005 = vst.msk [vmem:[%s978 + $0x2c] sm:$0xf] %vm182, %v533
    %v1006 = vld [vmem:[%s978 + $0x30] sm:$0xf]
    %v1007 = vsel %vm981, %v540, %v1006
    %1008 = vst [vmem:[%s978 + $0x30] sm:$0xf] %v1007
    %1009 = vst.msk [vmem:[%s978 + $0x34] sm:$0xf] %vm182, %v549
    %v1010 = vld [vmem:[%s978 + $0x38] sm:$0xf]
    %v1011 = vsel %vm981, %v556, %v1010
    %1012 = vst [vmem:[%s978 + $0x38] sm:$0xf] %v1011
    %1013 = vst.msk [vmem:[%s978 + $0x3c] sm:$0xf] %vm182, %v565
    %v1014 = vld [vmem:[%s978 + $0x40] sm:$0xf]
    %v1015 = vsel %vm981, %v572, %v1014
    %1016 = vst [vmem:[%s978 + $0x40] sm:$0xf] %v1015
    %1017 = vst.msk [vmem:[%s978 + $0x44] sm:$0xf] %vm182, %v581
    %v1018 = vld [vmem:[%s978 + $0x48] sm:$0xf]
    %v1019 = vsel %vm981, %v588, %v1018
    %1020 = vst [vmem:[%s978 + $0x48] sm:$0xf] %v1019
    %1021 = vst.msk [vmem:[%s978 + $0x4c] sm:$0xf] %vm182, %v597
    %v1022 = vld [vmem:[%s978 + $0x50] sm:$0xf]
    %v1023 = vsel %vm981, %v604, %v1022
    %1024 = vst [vmem:[%s978 + $0x50] sm:$0xf] %v1023
    %1025 = vst.msk [vmem:[%s978 + $0x54] sm:$0xf] %vm182, %v613
    %v1026 = vld [vmem:[%s978 + $0x58] sm:$0xf]
    %v1027 = vsel %vm981, %v620, %v1026
    %1028 = vst [vmem:[%s978 + $0x58] sm:$0xf] %v1027
    %1029 = vst.msk [vmem:[%s978 + $0x5c] sm:$0xf] %vm182, %v629
    %v1030 = vld [vmem:[%s978 + $0x60] sm:$0xf]
    %v1031 = vsel %vm981, %v636, %v1030
    %1032 = vst [vmem:[%s978 + $0x60] sm:$0xf] %v1031
    %1033 = vst.msk [vmem:[%s978 + $0x64] sm:$0xf] %vm182, %v645
    %v1034 = vld [vmem:[%s978 + $0x68] sm:$0xf]
    %v1035 = vsel %vm981, %v652, %v1034
    %1036 = vst [vmem:[%s978 + $0x68] sm:$0xf] %v1035
    %1037 = vst.msk [vmem:[%s978 + $0x6c] sm:$0xf] %vm182, %v661
    %v1038 = vld [vmem:[%s978 + $0x70] sm:$0xf]
    %v1039 = vsel %vm981, %v668, %v1038
    %1040 = vst [vmem:[%s978 + $0x70] sm:$0xf] %v1039
    %1041 = vst.msk [vmem:[%s978 + $0x74] sm:$0xf] %vm182, %v677
    %v1042 = vld [vmem:[%s978 + $0x80] sm:$0xf]
    %v1043 = vsel %vm981, %v684, %v1042
    %1044 = vst [vmem:[%s978 + $0x80] sm:$0xf] %v1043
    %1045 = vst.msk [vmem:[%s978 + $0x84] sm:$0xf] %vm182, %v693
    %v1046 = vld [vmem:[%s978 + $0x88] sm:$0xf]
    %v1047 = vsel %vm981, %v700, %v1046
    %1048 = vst [vmem:[%s978 + $0x88] sm:$0xf] %v1047
    %1049 = vst.msk [vmem:[%s978 + $0x8c] sm:$0xf] %vm182, %v709
    %v1050 = vld [vmem:[%s978 + $0x90] sm:$0xf]
    %v1051 = vsel %vm981, %v716, %v1050
    %1052 = vst [vmem:[%s978 + $0x90] sm:$0xf] %v1051
    %1053 = vst.msk [vmem:[%s978 + $0x94] sm:$0xf] %vm182, %v725
    %v1054 = vld [vmem:[%s978 + $0x98] sm:$0xf]
    %v1055 = vsel %vm981, %v732, %v1054
    %1056 = vst [vmem:[%s978 + $0x98] sm:$0xf] %v1055
    %1057 = vst.msk [vmem:[%s978 + $0x9c] sm:$0xf] %vm182, %v741
    %v1058 = vld [vmem:[%s978 + $0xa0] sm:$0xf]
    %v1059 = vsel %vm981, %v748, %v1058
    %1060 = vst [vmem:[%s978 + $0xa0] sm:$0xf] %v1059
    %1061 = vst.msk [vmem:[%s978 + $0xa4] sm:$0xf] %vm182, %v757
    %v1062 = vld [vmem:[%s978 + $0xa8] sm:$0xf]
    %v1063 = vsel %vm981, %v764, %v1062
    %1064 = vst [vmem:[%s978 + $0xa8] sm:$0xf] %v1063
    %1065 = vst.msk [vmem:[%s978 + $0xac] sm:$0xf] %vm182, %v773
    %v1066 = vld [vmem:[%s978 + $0xb0] sm:$0xf]
    %v1067 = vsel %vm981, %v780, %v1066
    %1068 = vst [vmem:[%s978 + $0xb0] sm:$0xf] %v1067
    %1069 = vst.msk [vmem:[%s978 + $0xb4] sm:$0xf] %vm182, %v789
    %v1070 = vld [vmem:[%s978 + $0xb8] sm:$0xf]
    %v1071 = vsel %vm981, %v796, %v1070
    %1072 = vst [vmem:[%s978 + $0xb8] sm:$0xf] %v1071
    %1073 = vst.msk [vmem:[%s978 + $0xbc] sm:$0xf] %vm182, %v805
    %v1074 = vld [vmem:[%s978 + $0xc0] sm:$0xf]
    %v1075 = vsel %vm981, %v812, %v1074
    %1076 = vst [vmem:[%s978 + $0xc0] sm:$0xf] %v1075
    %1077 = vst.msk [vmem:[%s978 + $0xc4] sm:$0xf] %vm182, %v821
    %v1078 = vld [vmem:[%s978 + $0xc8] sm:$0xf]
    %v1079 = vsel %vm981, %v828, %v1078
    %1080 = vst [vmem:[%s978 + $0xc8] sm:$0xf] %v1079
    %1081 = vst.msk [vmem:[%s978 + $0xcc] sm:$0xf] %vm182, %v837
    %v1082 = vld [vmem:[%s978 + $0xd0] sm:$0xf]
    %v1083 = vsel %vm981, %v844, %v1082
    %1084 = vst [vmem:[%s978 + $0xd0] sm:$0xf] %v1083
    %1085 = vst.msk [vmem:[%s978 + $0xd4] sm:$0xf] %vm182, %v853
    %v1086 = vld [vmem:[%s978 + $0xd8] sm:$0xf]
    %v1087 = vsel %vm981, %v860, %v1086
    %1088 = vst [vmem:[%s978 + $0xd8] sm:$0xf] %v1087
    %1089 = vst.msk [vmem:[%s978 + $0xdc] sm:$0xf] %vm182, %v869
    %v1090 = vld [vmem:[%s978 + $0xe0] sm:$0xf]
    %v1091 = vsel %vm981, %v876, %v1090
    %1092 = vst [vmem:[%s978 + $0xe0] sm:$0xf] %v1091
    %1093 = vst.msk [vmem:[%s978 + $0xe4] sm:$0xf] %vm182, %v885
    %v1094 = vld [vmem:[%s978 + $0xe8] sm:$0xf]
    %v1095 = vsel %vm981, %v892, %v1094
    %1096 = vst [vmem:[%s978 + $0xe8] sm:$0xf] %v1095
    %1097 = vst.msk [vmem:[%s978 + $0xec] sm:$0xf] %vm182, %v901
    %v1098 = vld [vmem:[%s978 + $0xf0] sm:$0xf]
    %v1099 = vsel %vm981, %v908, %v1098
    %1100 = vst [vmem:[%s978 + $0xf0] sm:$0xf] %v1099
    %1101 = vst.msk [vmem:[%s978 + $0xf4] sm:$0xf] %vm182, %v917
    %vm1102 = vcmask 60448
    %1103 = vst.msk [vmem:[#allocation2] sm:$0xf] %vm1102, 0
    %1104 = vst.msk [vmem:[#allocation2 + $0x4] sm:$0xf] %vm1102, 0
    %1105 = vst.msk [vmem:[#allocation2 + $0x80] sm:$0xf] %vm1102, 0
    %1106 = vst.msk [vmem:[#allocation2 + $0x84] sm:$0xf] %vm1102, 0
    %1107 = vrot.lane.b32.xlu0 %v376, 4
    %v1108 = vpop.permute.xlu0 %1107
    %1109 = vrot.lane.b32.xlu0 %v377, 4
    %v1110 = vpop.permute.xlu0 %1109
    %1111 = vrot.lane.b32.xlu0 %v378, 4
    %v1112 = vpop.permute.xlu0 %1111
    %1113 = vrot.lane.b32.xlu0 %v379, 4
    %v1114 = vpop.permute.xlu0 %1113
    %1115 = vrot.lane.b32.xlu0 %v380, 4
    %v1116 = vpop.permute.xlu0 %1115
    %1117 = vrot.lane.b32.xlu0 %v381, 4
    %v1118 = vpop.permute.xlu0 %1117
    %1119 = vrot.lane.b32.xlu0 %v382, 4
    %v1120 = vpop.permute.xlu0 %1119
    %1121 = vrot.lane.b32.xlu0 %v383, 4
    %v1122 = vpop.permute.xlu0 %1121
    %1123 = vrot.lane.b32.xlu0 %v384, 4
    %v1124 = vpop.permute.xlu0 %1123
    %1125 = vrot.lane.b32.xlu0 %v385, 4
    %v1126 = vpop.permute.xlu0 %1125
    %1127 = vrot.lane.b32.xlu0 %v386, 4
    %v1128 = vpop.permute.xlu0 %1127
    %1129 = vrot.lane.b32.xlu0 %v387, 4
    %v1130 = vpop.permute.xlu0 %1129
    %1131 = vrot.lane.b32.xlu0 %v388, 4
    %v1132 = vpop.permute.xlu0 %1131
    %1133 = vrot.lane.b32.xlu0 %v389, 4
    %v1134 = vpop.permute.xlu0 %1133
    %1135 = vrot.lane.b32.xlu0 %v390, 4
    %v1136 = vpop.permute.xlu0 %1135
    %1137 = vrot.lane.b32.xlu0 %v391, 4
    %v1138 = vpop.permute.xlu0 %1137
    %1139 = vrot.lane.b32.xlu0 %v392, 4
    %v1140 = vpop.permute.xlu0 %1139
    %1141 = vrot.lane.b32.xlu0 %v393, 4
    %v1142 = vpop.permute.xlu0 %1141
    %1143 = vrot.lane.b32.xlu0 %v394, 4
    %v1144 = vpop.permute.xlu0 %1143
    %1145 = vrot.lane.b32.xlu0 %v395, 4
    %v1146 = vpop.permute.xlu0 %1145
    %1147 = vrot.lane.b32.xlu0 %v396, 4
    %v1148 = vpop.permute.xlu0 %1147
    %1149 = vrot.lane.b32.xlu0 %v397, 4
    %v1150 = vpop.permute.xlu0 %1149
    %1151 = vrot.lane.b32.xlu0 %v398, 4
    %v1152 = vpop.permute.xlu0 %1151
    %1153 = vrot.lane.b32.xlu0 %v399, 4
    %v1154 = vpop.permute.xlu0 %1153
    %1155 = vrot.lane.b32.xlu0 %v400, 4
    %v1156 = vpop.permute.xlu0 %1155
    %1157 = vrot.lane.b32.xlu0 %v401, 4
    %v1158 = vpop.permute.xlu0 %1157
    %1159 = vrot.lane.b32.xlu0 %v402, 4
    %v1160 = vpop.permute.xlu0 %1159
    %1161 = vrot.lane.b32.xlu0 %v403, 4
    %v1162 = vpop.permute.xlu0 %1161
    %1163 = vrot.lane.b32.xlu0 %v404, 4
    %v1164 = vpop.permute.xlu0 %1163
    %1165 = vrot.lane.b32.xlu0 %v405, 4
    %v1166 = vpop.permute.xlu0 %1165
    %1167 = vrot.lane.b32.xlu0 %v406, 4
    %v1168 = vpop.permute.xlu0 %1167
    %1169 = vrot.lane.b32.xlu0 %v407, 4
    %v1170 = vpop.permute.xlu0 %1169
    %1171 = vrot.lane.b32.xlu0 %v408, 4
    %v1172 = vpop.permute.xlu0 %1171
    %1173 = vrot.lane.b32.xlu0 %v409, 4
    %v1174 = vpop.permute.xlu0 %1173
    %1175 = vrot.lane.b32.xlu0 %v410, 4
    %v1176 = vpop.permute.xlu0 %1175
    %1177 = vrot.lane.b32.xlu0 %v411, 4
    %v1178 = vpop.permute.xlu0 %1177
    %1179 = vrot.lane.b32.xlu0 %v412, 4
    %v1180 = vpop.permute.xlu0 %1179
    %1181 = vrot.lane.b32.xlu0 %v413, 4
    %v1182 = vpop.permute.xlu0 %1181
    %1183 = vrot.lane.b32.xlu0 %v414, 4
    %v1184 = vpop.permute.xlu0 %1183
    %1185 = vrot.lane.b32.xlu0 %v415, 4
    %v1186 = vpop.permute.xlu0 %1185
    %1187 = vrot.lane.b32.xlu0 %v416, 4
    %v1188 = vpop.permute.xlu0 %1187
    %1189 = vrot.lane.b32.xlu0 %v417, 4
    %v1190 = vpop.permute.xlu0 %1189
    %1191 = vrot.lane.b32.xlu0 %v418, 4
    %v1192 = vpop.permute.xlu0 %1191
    %1193 = vrot.lane.b32.xlu0 %v419, 4
    %v1194 = vpop.permute.xlu0 %1193
    %1195 = vrot.lane.b32.xlu0 %v420, 4
    %v1196 = vpop.permute.xlu0 %1195
    %1197 = vrot.lane.b32.xlu0 %v421, 4
    %v1198 = vpop.permute.xlu0 %1197
    %1199 = vrot.lane.b32.xlu0 %v422, 4
    %v1200 = vpop.permute.xlu0 %1199
    %1201 = vrot.lane.b32.xlu0 %v423, 4
    %v1202 = vpop.permute.xlu0 %1201
    %1203 = vrot.lane.b32.xlu0 %v424, 4
    %v1204 = vpop.permute.xlu0 %1203
    %1205 = vrot.lane.b32.xlu0 %v425, 4
    %v1206 = vpop.permute.xlu0 %1205
    %1207 = vrot.lane.b32.xlu0 %v426, 4
    %v1208 = vpop.permute.xlu0 %1207
    %1209 = vrot.lane.b32.xlu0 %v427, 4
    %v1210 = vpop.permute.xlu0 %1209
    %1211 = vrot.lane.b32.xlu0 %v428, 4
    %v1212 = vpop.permute.xlu0 %1211
    %1213 = vrot.lane.b32.xlu0 %v429, 4
    %v1214 = vpop.permute.xlu0 %1213
    %1215 = vrot.lane.b32.xlu0 %v430, 4
    %v1216 = vpop.permute.xlu0 %1215
    %1217 = vrot.lane.b32.xlu0 %v431, 4
    %v1218 = vpop.permute.xlu0 %1217
    %1219 = vrot.lane.b32.xlu0 %v432, 4
    %v1220 = vpop.permute.xlu0 %1219
    %1221 = vrot.lane.b32.xlu0 %v433, 4
    %v1222 = vpop.permute.xlu0 %1221
    %1223 = vrot.lane.b32.xlu0 %v434, 4
    %v1224 = vpop.permute.xlu0 %1223
    %1225 = vrot.lane.b32.xlu0 %v435, 4
    %v1226 = vpop.permute.xlu0 %1225
    %1287 = vst.msk [vmem:[%s978] sm:$0xf] %vm1102, %v1108
    %1288 = vst.msk [vmem:[%s978 + $0x4] sm:$0xf] %vm1102, %v1110
    %1289 = vst.msk [vmem:[%s978 + $0x8] sm:$0xf] %vm1102, %v1112
    %1290 = vst.msk [vmem:[%s978 + $0xc] sm:$0xf] %vm1102, %v1114
    %1291 = vst.msk [vmem:[%s978 + $0x10] sm:$0xf] %vm1102, %v1116
    %1292 = vst.msk [vmem:[%s978 + $0x14] sm:$0xf] %vm1102, %v1118
    %1293 = vst.msk [vmem:[%s978 + $0x18] sm:$0xf] %vm1102, %v1120
    %1294 = vst.msk [vmem:[%s978 + $0x1c] sm:$0xf] %vm1102, %v1122
    %1295 = vst.msk [vmem:[%s978 + $0x20] sm:$0xf] %vm1102, %v1124
    %1296 = vst.msk [vmem:[%s978 + $0x24] sm:$0xf] %vm1102, %v1126
    %1297 = vst.msk [vmem:[%s978 + $0x28] sm:$0xf] %vm1102, %v1128
    %1298 = vst.msk [vmem:[%s978 + $0x2c] sm:$0xf] %vm1102, %v1130
    %1299 = vst.msk [vmem:[%s978 + $0x30] sm:$0xf] %vm1102, %v1132
    %1300 = vst.msk [vmem:[%s978 + $0x34] sm:$0xf] %vm1102, %v1134
    %1301 = vst.msk [vmem:[%s978 + $0x38] sm:$0xf] %vm1102, %v1136
    %1302 = vst.msk [vmem:[%s978 + $0x3c] sm:$0xf] %vm1102, %v1138
    %1303 = vst.msk [vmem:[%s978 + $0x40] sm:$0xf] %vm1102, %v1140
    %1304 = vst.msk [vmem:[%s978 + $0x44] sm:$0xf] %vm1102, %v1142
    %1305 = vst.msk [vmem:[%s978 + $0x48] sm:$0xf] %vm1102, %v1144
    %1306 = vst.msk [vmem:[%s978 + $0x4c] sm:$0xf] %vm1102, %v1146
    %1307 = vst.msk [vmem:[%s978 + $0x50] sm:$0xf] %vm1102, %v1148
    %1308 = vst.msk [vmem:[%s978 + $0x54] sm:$0xf] %vm1102, %v1150
    %1309 = vst.msk [vmem:[%s978 + $0x58] sm:$0xf] %vm1102, %v1152
    %1310 = vst.msk [vmem:[%s978 + $0x5c] sm:$0xf] %vm1102, %v1154
    %1311 = vst.msk [vmem:[%s978 + $0x60] sm:$0xf] %vm1102, %v1156
    %1312 = vst.msk [vmem:[%s978 + $0x64] sm:$0xf] %vm1102, %v1158
    %1313 = vst.msk [vmem:[%s978 + $0x68] sm:$0xf] %vm1102, %v1160
    %1314 = vst.msk [vmem:[%s978 + $0x6c] sm:$0xf] %vm1102, %v1162
    %1315 = vst.msk [vmem:[%s978 + $0x70] sm:$0xf] %vm1102, %v1164
    %1316 = vst.msk [vmem:[%s978 + $0x74] sm:$0xf] %vm1102, %v1166
    %1317 = vst.msk [vmem:[%s978 + $0x80] sm:$0xf] %vm1102, %v1168
    %1318 = vst.msk [vmem:[%s978 + $0x84] sm:$0xf] %vm1102, %v1170
    %1319 = vst.msk [vmem:[%s978 + $0x88] sm:$0xf] %vm1102, %v1172
    %1320 = vst.msk [vmem:[%s978 + $0x8c] sm:$0xf] %vm1102, %v1174
    %1321 = vst.msk [vmem:[%s978 + $0x90] sm:$0xf] %vm1102, %v1176
    %1322 = vst.msk [vmem:[%s978 + $0x94] sm:$0xf] %vm1102, %v1178
    %1323 = vst.msk [vmem:[%s978 + $0x98] sm:$0xf] %vm1102, %v1180
    %1324 = vst.msk [vmem:[%s978 + $0x9c] sm:$0xf] %vm1102, %v1182
    %1325 = vst.msk [vmem:[%s978 + $0xa0] sm:$0xf] %vm1102, %v1184
    %1326 = vst.msk [vmem:[%s978 + $0xa4] sm:$0xf] %vm1102, %v1186
    %1327 = vst.msk [vmem:[%s978 + $0xa8] sm:$0xf] %vm1102, %v1188
    %1328 = vst.msk [vmem:[%s978 + $0xac] sm:$0xf] %vm1102, %v1190
    %1329 = vst.msk [vmem:[%s978 + $0xb0] sm:$0xf] %vm1102, %v1192
    %1330 = vst.msk [vmem:[%s978 + $0xb4] sm:$0xf] %vm1102, %v1194
    %1331 = vst.msk [vmem:[%s978 + $0xb8] sm:$0xf] %vm1102, %v1196
    %1332 = vst.msk [vmem:[%s978 + $0xbc] sm:$0xf] %vm1102, %v1198
    %1333 = vst.msk [vmem:[%s978 + $0xc0] sm:$0xf] %vm1102, %v1200
    %1334 = vst.msk [vmem:[%s978 + $0xc4] sm:$0xf] %vm1102, %v1202
    %1335 = vst.msk [vmem:[%s978 + $0xc8] sm:$0xf] %vm1102, %v1204
    %1336 = vst.msk [vmem:[%s978 + $0xcc] sm:$0xf] %vm1102, %v1206
    %1337 = vst.msk [vmem:[%s978 + $0xd0] sm:$0xf] %vm1102, %v1208
    %1338 = vst.msk [vmem:[%s978 + $0xd4] sm:$0xf] %vm1102, %v1210
    %1339 = vst.msk [vmem:[%s978 + $0xd8] sm:$0xf] %vm1102, %v1212
    %1340 = vst.msk [vmem:[%s978 + $0xdc] sm:$0xf] %vm1102, %v1214
    %1341 = vst.msk [vmem:[%s978 + $0xe0] sm:$0xf] %vm1102, %v1216
    %1342 = vst.msk [vmem:[%s978 + $0xe4] sm:$0xf] %vm1102, %v1218
    %1343 = vst.msk [vmem:[%s978 + $0xe8] sm:$0xf] %vm1102, %v1220
    %1344 = vst.msk [vmem:[%s978 + $0xec] sm:$0xf] %vm1102, %v1222
    %1345 = vst.msk [vmem:[%s978 + $0xf0] sm:$0xf] %vm1102, %v1224
    %1346 = vst.msk [vmem:[%s978 + $0xf4] sm:$0xf] %vm1102, %v1226
    %vm1347 = vcmask 93248
    %1348 = vst.msk [vmem:[#allocation2] sm:$0xf] %vm1347, 0
    %1349 = vst.msk [vmem:[#allocation2 + $0x4] sm:$0xf] %vm1347, 0
    %1350 = vst.msk [vmem:[#allocation2 + $0x80] sm:$0xf] %vm1347, 0
    %1351 = vst.msk [vmem:[#allocation2 + $0x84] sm:$0xf] %vm1347, 0
    %vm1352 = vcmask 93251
    %vm1353 = vsmask.f32 7950
    %vm1354 = vmand %vm1352, %vm1353
    %v1355 = vld [vmem:[#allocation2 + $0x4] sm:$0x8]
    %v1356 = vsel %vm1354, 0, %v1355
    %1357 = vst [vmem:[#allocation2 + $0x4] sm:$0x8] %v1356
    %v1358 = vld [vmem:[#allocation2 + $0xc] sm:$0x8]
    %v1359 = vsel %vm1354, 0, %v1358
    %1360 = vst [vmem:[#allocation2 + $0xc] sm:$0x8] %v1359
    %v1361 = vld [vmem:[#allocation2 + $0x14] sm:$0x8]
    %v1362 = vsel %vm1354, 0, %v1361
    %1363 = vst [vmem:[#allocation2 + $0x14] sm:$0x8] %v1362
    %v1364 = vld [vmem:[#allocation2 + $0x1c] sm:$0x8]
    %v1365 = vsel %vm1354, 0, %v1364
    %1366 = vst [vmem:[#allocation2 + $0x1c] sm:$0x8] %v1365
    %v1367 = vld [vmem:[#allocation2 + $0x24] sm:$0x8]
    %v1368 = vsel %vm1354, 0, %v1367
    %1369 = vst [vmem:[#allocation2 + $0x24] sm:$0x8] %v1368
    %v1370 = vld [vmem:[#allocation2 + $0x2c] sm:$0x8]
    %v1371 = vsel %vm1354, 0, %v1370
    %1372 = vst [vmem:[#allocation2 + $0x2c] sm:$0x8] %v1371
    %v1373 = vld [vmem:[#allocation2 + $0x34] sm:$0x8]
    %v1374 = vsel %vm1354, 0, %v1373
    %1375 = vst [vmem:[#allocation2 + $0x34] sm:$0x8] %v1374
    %v1376 = vld [vmem:[#allocation2 + $0x3c] sm:$0x8]
    %v1377 = vsel %vm1354, 0, %v1376
    %1378 = vst [vmem:[#allocation2 + $0x3c] sm:$0x8] %v1377
    %v1379 = vld [vmem:[#allocation2 + $0x44] sm:$0x8]
    %v1380 = vsel %vm1354, 0, %v1379
    %1381 = vst [vmem:[#allocation2 + $0x44] sm:$0x8] %v1380
    %v1382 = vld [vmem:[#allocation2 + $0x4c] sm:$0x8]
    %v1383 = vsel %vm1354, 0, %v1382
    %1384 = vst [vmem:[#allocation2 + $0x4c] sm:$0x8] %v1383
    %v1385 = vld [vmem:[#allocation2 + $0x54] sm:$0x8]
    %v1386 = vsel %vm1354, 0, %v1385
    %1387 = vst [vmem:[#allocation2 + $0x54] sm:$0x8] %v1386
    %v1388 = vld [vmem:[#allocation2 + $0x5c] sm:$0x8]
    %v1389 = vsel %vm1354, 0, %v1388
    %1390 = vst [vmem:[#allocation2 + $0x5c] sm:$0x8] %v1389
    %v1391 = vld [vmem:[#allocation2 + $0x64] sm:$0x8]
    %v1392 = vsel %vm1354, 0, %v1391
    %1393 = vst [vmem:[#allocation2 + $0x64] sm:$0x8] %v1392
    %v1394 = vld [vmem:[#allocation2 + $0x6c] sm:$0x8]
    %v1395 = vsel %vm1354, 0, %v1394
    %1396 = vst [vmem:[#allocation2 + $0x6c] sm:$0x8] %v1395
    %v1397 = vld [vmem:[#allocation2 + $0x74] sm:$0x8]
    %v1398 = vsel %vm1354, 0, %v1397
    %1399 = vst [vmem:[#allocation2 + $0x74] sm:$0x8] %v1398
    %v1400 = vld [vmem:[#allocation2 + $0x7c] sm:$0x8]
    %v1401 = vsel %vm1354, 0, %v1400
    %1402 = vst [vmem:[#allocation2 + $0x7c] sm:$0x8] %v1401
    %v1403 = vld [vmem:[#allocation2 + $0x84] sm:$0x8]
    %v1404 = vsel %vm1354, 0, %v1403
    %1405 = vst [vmem:[#allocation2 + $0x84] sm:$0x8] %v1404
    %v1406 = vld [vmem:[#allocation2 + $0x8c] sm:$0x8]
    %v1407 = vsel %vm1354, 0, %v1406
    %1408 = vst [vmem:[#allocation2 + $0x8c] sm:$0x8] %v1407
    %v1409 = vld [vmem:[#allocation2 + $0x94] sm:$0x8]
    %v1410 = vsel %vm1354, 0, %v1409
    %1411 = vst [vmem:[#allocation2 + $0x94] sm:$0x8] %v1410
    %v1412 = vld [vmem:[#allocation2 + $0x9c] sm:$0x8]
    %v1413 = vsel %vm1354, 0, %v1412
    %1414 = vst [vmem:[#allocation2 + $0x9c] sm:$0x8] %v1413
    %v1415 = vld [vmem:[#allocation2 + $0xa4] sm:$0x8]
    %v1416 = vsel %vm1354, 0, %v1415
    %1417 = vst [vmem:[#allocation2 + $0xa4] sm:$0x8] %v1416
    %v1418 = vld [vmem:[#allocation2 + $0xac] sm:$0x8]
    %v1419 = vsel %vm1354, 0, %v1418
    %1420 = vst [vmem:[#allocation2 + $0xac] sm:$0x8] %v1419
    %v1421 = vld [vmem:[#allocation2 + $0xb4] sm:$0x8]
    %v1422 = vsel %vm1354, 0, %v1421
    %1423 = vst [vmem:[#allocation2 + $0xb4] sm:$0x8] %v1422
    %v1424 = vld [vmem:[#allocation2 + $0xbc] sm:$0x8]
    %v1425 = vsel %vm1354, 0, %v1424
    %1426 = vst [vmem:[#allocation2 + $0xbc] sm:$0x8] %v1425
    %v1427 = vld [vmem:[#allocation2 + $0xc4] sm:$0x8]
    %v1428 = vsel %vm1354, 0, %v1427
    %1429 = vst [vmem:[#allocation2 + $0xc4] sm:$0x8] %v1428
    %v1430 = vld [vmem:[#allocation2 + $0xcc] sm:$0x8]
    %v1431 = vsel %vm1354, 0, %v1430
    %1432 = vst [vmem:[#allocation2 + $0xcc] sm:$0x8] %v1431
    %v1433 = vld [vmem:[#allocation2 + $0xd4] sm:$0x8]
    %v1434 = vsel %vm1354, 0, %v1433
    %1435 = vst [vmem:[#allocation2 + $0xd4] sm:$0x8] %v1434
    %v1436 = vld [vmem:[#allocation2 + $0xdc] sm:$0x8]
    %v1437 = vsel %vm1354, 0, %v1436
    %1438 = vst [vmem:[#allocation2 + $0xdc] sm:$0x8] %v1437
    %v1439 = vld [vmem:[#allocation2 + $0xe4] sm:$0x8]
    %v1440 = vsel %vm1354, 0, %v1439
    %1441 = vst [vmem:[#allocation2 + $0xe4] sm:$0x8] %v1440
    %v1442 = vld [vmem:[#allocation2 + $0xec] sm:$0x8]
    %v1443 = vsel %vm1354, 0, %v1442
    %1444 = vst [vmem:[#allocation2 + $0xec] sm:$0x8] %v1443
    %v1445 = vld [vmem:[#allocation2 + $0xf4] sm:$0x8]
    %v1446 = vsel %vm1354, 0, %v1445
    %1447 = vst [vmem:[#allocation2 + $0xf4] sm:$0x8] %v1446
    %v1448 = vld [vmem:[#allocation2 + $0xfc] sm:$0x8]
    %v1449 = vsel %vm1354, 0, %v1448
    %1450 = vst [vmem:[#allocation2 + $0xfc] sm:$0x8] %v1449
    %vm1451 = vsmask.f32 3328
    %vm1452 = vsmask.f32 7440
    %vm1453 = vmor %vm1451, %vm1452
    %v1454 = vrot.slane %v439, 4
    %v1455 = vrot.slane %v442, 5
    %v1456 = vor.u32 %v1454, %v1455
    %v1457 = vrot.slane %v1456, 4
    %v1458 = vrot.slane %v450, 5
    %v1459 = vsel %vm1453, %v1457, %v1458
    %v1460 = vrot.slane %v447, 4
    %v1461 = vor.u32 %v1460, %v1458
    %v1462 = vrot.slane %v1461, 4
    %v1463 = vrot.slane %v455, 4
    %v1464 = vrot.slane %v458, 5
    %v1465 = vor.u32 %v1463, %v1464
    %v1466 = vrot.slane %v1465, 4
    %v1467 = vrot.slane %v466, 5
    %v1468 = vsel %vm1453, %v1466, %v1467
    %v1469 = vrot.slane %v463, 4
    %v1470 = vor.u32 %v1469, %v1467
    %v1471 = vrot.slane %v1470, 4
    %v1472 = vrot.slane %v471, 4
    %v1473 = vrot.slane %v474, 5
    %v1474 = vor.u32 %v1472, %v1473
    %v1475 = vrot.slane %v1474, 4
    %v1476 = vrot.slane %v482, 5
    %v1477 = vsel %vm1453, %v1475, %v1476
    %v1478 = vrot.slane %v479, 4
    %v1479 = vor.u32 %v1478, %v1476
    %v1480 = vrot.slane %v1479, 4
    %v1481 = vrot.slane %v487, 4
    %v1482 = vrot.slane %v490, 5
    %v1483 = vor.u32 %v1481, %v1482
    %v1484 = vrot.slane %v1483, 4
    %v1485 = vrot.slane %v498, 5
    %v1486 = vsel %vm1453, %v1484, %v1485
    %v1487 = vrot.slane %v495, 4
    %v1488 = vor.u32 %v1487, %v1485
    %v1489 = vrot.slane %v1488, 4
    %v1490 = vrot.slane %v503, 4
    %v1491 = vrot.slane %v506, 5
    %v1492 = vor.u32 %v1490, %v1491
    %v1493 = vrot.slane %v1492, 4
    %v1494 = vrot.slane %v514, 5
    %v1495 = vsel %vm1453, %v1493, %v1494
    %v1496 = vrot.slane %v511, 4
    %v1497 = vor.u32 %v1496, %v1494
    %v1498 = vrot.slane %v1497, 4
    %v1499 = vrot.slane %v519, 4
    %v1500 = vrot.slane %v522, 5
    %v1501 = vor.u32 %v1499, %v1500
    %v1502 = vrot.slane %v1501, 4
    %v1503 = vrot.slane %v530, 5
    %v1504 = vsel %vm1453, %v1502, %v1503
    %v1505 = vrot.slane %v527, 4
    %v1506 = vor.u32 %v1505, %v1503
    %v1507 = vrot.slane %v1506, 4
    %v1508 = vrot.slane %v535, 4
    %v1509 = vrot.slane %v538, 5
    %v1510 = vor.u32 %v1508, %v1509
    %v1511 = vrot.slane %v1510, 4
    %v1512 = vrot.slane %v546, 5
    %v1513 = vsel %vm1453, %v1511, %v1512
    %v1514 = vrot.slane %v543, 4
    %v1515 = vor.u32 %v1514, %v1512
    %v1516 = vrot.slane %v1515, 4
    %v1517 = vrot.slane %v551, 4
    %v1518 = vrot.slane %v554, 5
    %v1519 = vor.u32 %v1517, %v1518
    %v1520 = vrot.slane %v1519, 4
    %v1521 = vrot.slane %v562, 5
    %v1522 = vsel %vm1453, %v1520, %v1521
    %v1523 = vrot.slane %v559, 4
    %v1524 = vor.u32 %v1523, %v1521
    %v1525 = vrot.slane %v1524, 4
    %v1526 = vrot.slane %v567, 4
    %v1527 = vrot.slane %v570, 5
    %v1528 = vor.u32 %v1526, %v1527
    %v1529 = vrot.slane %v1528, 4
    %v1530 = vrot.slane %v578, 5
    %v1531 = vsel %vm1453, %v1529, %v1530
    %v1532 = vrot.slane %v575, 4
    %v1533 = vor.u32 %v1532, %v1530
    %v1534 = vrot.slane %v1533, 4
    %v1535 = vrot.slane %v583, 4
    %v1536 = vrot.slane %v586, 5
    %v1537 = vor.u32 %v1535, %v1536
    %v1538 = vrot.slane %v1537, 4
    %v1539 = vrot.slane %v594, 5
    %v1540 = vsel %vm1453, %v1538, %v1539
    %v1541 = vrot.slane %v591, 4
    %v1542 = vor.u32 %v1541, %v1539
    %v1543 = vrot.slane %v1542, 4
    %v1544 = vrot.slane %v599, 4
    %v1545 = vrot.slane %v602, 5
    %v1546 = vor.u32 %v1544, %v1545
    %v1547 = vrot.slane %v1546, 4
    %v1548 = vrot.slane %v610, 5
    %v1549 = vsel %vm1453, %v1547, %v1548
    %v1550 = vrot.slane %v607, 4
    %v1551 = vor.u32 %v1550, %v1548
    %v1552 = vrot.slane %v1551, 4
    %v1553 = vrot.slane %v615, 4
    %v1554 = vrot.slane %v618, 5
    %v1555 = vor.u32 %v1553, %v1554
    %v1556 = vrot.slane %v1555, 4
    %v1557 = vrot.slane %v626, 5
    %v1558 = vsel %vm1453, %v1556, %v1557
    %v1559 = vrot.slane %v623, 4
    %v1560 = vor.u32 %v1559, %v1557
    %v1561 = vrot.slane %v1560, 4
    %v1562 = vrot.slane %v631, 4
    %v1563 = vrot.slane %v634, 5
    %v1564 = vor.u32 %v1562, %v1563
    %v1565 = vrot.slane %v1564, 4
    %v1566 = vrot.slane %v642, 5
    %v1567 = vsel %vm1453, %v1565, %v1566
    %v1568 = vrot.slane %v639, 4
    %v1569 = vor.u32 %v1568, %v1566
    %v1570 = vrot.slane %v1569, 4
    %v1571 = vrot.slane %v647, 4
    %v1572 = vrot.slane %v650, 5
    %v1573 = vor.u32 %v1571, %v1572
    %v1574 = vrot.slane %v1573, 4
    %v1575 = vrot.slane %v658, 5
    %v1576 = vsel %vm1453, %v1574, %v1575
    %v1577 = vrot.slane %v655, 4
    %v1578 = vor.u32 %v1577, %v1575
    %v1579 = vrot.slane %v1578, 4
    %v1580 = vrot.slane %v663, 4
    %v1581 = vrot.slane %v666, 5
    %v1582 = vor.u32 %v1580, %v1581
    %v1583 = vrot.slane %v1582, 4
    %v1584 = vrot.slane %v674, 5
    %v1585 = vsel %vm1453, %v1583, %v1584
    %v1586 = vrot.slane %v671, 4
    %v1587 = vor.u32 %v1586, %v1584
    %v1588 = vrot.slane %v1587, 4
    %v1589 = vrot.slane %v679, 4
    %v1590 = vrot.slane %v682, 5
    %v1591 = vor.u32 %v1589, %v1590
    %v1592 = vrot.slane %v1591, 4
    %v1593 = vrot.slane %v690, 5
    %v1594 = vsel %vm1453, %v1592, %v1593
    %v1595 = vrot.slane %v687, 4
    %v1596 = vor.u32 %v1595, %v1593
    %v1597 = vrot.slane %v1596, 4
    %v1598 = vrot.slane %v695, 4
    %v1599 = vrot.slane %v698, 5
    %v1600 = vor.u32 %v1598, %v1599
    %v1601 = vrot.slane %v1600, 4
    %v1602 = vrot.slane %v706, 5
    %v1603 = vsel %vm1453, %v1601, %v1602
    %v1604 = vrot.slane %v703, 4
    %v1605 = vor.u32 %v1604, %v1602
    %v1606 = vrot.slane %v1605, 4
    %v1607 = vrot.slane %v711, 4
    %v1608 = vrot.slane %v714, 5
    %v1609 = vor.u32 %v1607, %v1608
    %v1610 = vrot.slane %v1609, 4
    %v1611 = vrot.slane %v722, 5
    %v1612 = vsel %vm1453, %v1610, %v1611
    %v1613 = vrot.slane %v719, 4
    %v1614 = vor.u32 %v1613, %v1611
    %v1615 = vrot.slane %v1614, 4
    %v1616 = vrot.slane %v727, 4
    %v1617 = vrot.slane %v730, 5
    %v1618 = vor.u32 %v1616, %v1617
    %v1619 = vrot.slane %v1618, 4
    %v1620 = vrot.slane %v738, 5
    %v1621 = vsel %vm1453, %v1619, %v1620
    %v1622 = vrot.slane %v735, 4
    %v1623 = vor.u32 %v1622, %v1620
    %v1624 = vrot.slane %v1623, 4
    %v1625 = vrot.slane %v743, 4
    %v1626 = vrot.slane %v746, 5
    %v1627 = vor.u32 %v1625, %v1626
    %v1628 = vrot.slane %v1627, 4
    %v1629 = vrot.slane %v754, 5
    %v1630 = vsel %vm1453, %v1628, %v1629
    %v1631 = vrot.slane %v751, 4
    %v1632 = vor.u32 %v1631, %v1629
    %v1633 = vrot.slane %v1632, 4
    %v1634 = vrot.slane %v759, 4
    %v1635 = vrot.slane %v762, 5
    %v1636 = vor.u32 %v1634, %v1635
    %v1637 = vrot.slane %v1636, 4
    %v1638 = vrot.slane %v770, 5
    %v1639 = vsel %vm1453, %v1637, %v1638
    %v1640 = vrot.slane %v767, 4
    %v1641 = vor.u32 %v1640, %v1638
    %v1642 = vrot.slane %v1641, 4
    %v1643 = vrot.slane %v775, 4
    %v1644 = vrot.slane %v778, 5
    %v1645 = vor.u32 %v1643, %v1644
    %v1646 = vrot.slane %v1645, 4
    %v1647 = vrot.slane %v786, 5
    %v1648 = vsel %vm1453, %v1646, %v1647
    %v1649 = vrot.slane %v783, 4
    %v1650 = vor.u32 %v1649, %v1647
    %v1651 = vrot.slane %v1650, 4
    %v1652 = vrot.slane %v791, 4
    %v1653 = vrot.slane %v794, 5
    %v1654 = vor.u32 %v1652, %v1653
    %v1655 = vrot.slane %v1654, 4
    %v1656 = vrot.slane %v802, 5
    %v1657 = vsel %vm1453, %v1655, %v1656
    %v1658 = vrot.slane %v799, 4
    %v1659 = vor.u32 %v1658, %v1656
    %v1660 = vrot.slane %v1659, 4
    %v1661 = vrot.slane %v807, 4
    %v1662 = vrot.slane %v810, 5
    %v1663 = vor.u32 %v1661, %v1662
    %v1664 = vrot.slane %v1663, 4
    %v1665 = vrot.slane %v818, 5
    %v1666 = vsel %vm1453, %v1664, %v1665
    %v1667 = vrot.slane %v815, 4
    %v1668 = vor.u32 %v1667, %v1665
    %v1669 = vrot.slane %v1668, 4
    %v1670 = vrot.slane %v823, 4
    %v1671 = vrot.slane %v826, 5
    %v1672 = vor.u32 %v1670, %v1671
    %v1673 = vrot.slane %v1672, 4
    %v1674 = vrot.slane %v834, 5
    %v1675 = vsel %vm1453, %v1673, %v1674
    %v1676 = vrot.slane %v831, 4
    %v1677 = vor.u32 %v1676, %v1674
    %v1678 = vrot.slane %v1677, 4
    %v1679 = vrot.slane %v839, 4
    %v1680 = vrot.slane %v842, 5
    %v1681 = vor.u32 %v1679, %v1680
    %v1682 = vrot.slane %v1681, 4
    %v1683 = vrot.slane %v850, 5
    %v1684 = vsel %vm1453, %v1682, %v1683
    %v1685 = vrot.slane %v847, 4
    %v1686 = vor.u32 %v1685, %v1683
    %v1687 = vrot.slane %v1686, 4
    %v1688 = vrot.slane %v855, 4
    %v1689 = vrot.slane %v858, 5
    %v1690 = vor.u32 %v1688, %v1689
    %v1691 = vrot.slane %v1690, 4
    %v1692 = vrot.slane %v866, 5
    %v1693 = vsel %vm1453, %v1691, %v1692
    %v1694 = vrot.slane %v863, 4
    %v1695 = vor.u32 %v1694, %v1692
    %v1696 = vrot.slane %v1695, 4
    %v1697 = vrot.slane %v871, 4
    %v1698 = vrot.slane %v874, 5
    %v1699 = vor.u32 %v1697, %v1698
    %v1700 = vrot.slane %v1699, 4
    %v1701 = vrot.slane %v882, 5
    %v1702 = vsel %vm1453, %v1700, %v1701
    %v1703 = vrot.slane %v879, 4
    %v1704 = vor.u32 %v1703, %v1701
    %v1705 = vrot.slane %v1704, 4
    %v1706 = vrot.slane %v887, 4
    %v1707 = vrot.slane %v890, 5
    %v1708 = vor.u32 %v1706, %v1707
    %v1709 = vrot.slane %v1708, 4
    %v1710 = vrot.slane %v898, 5
    %v1711 = vsel %vm1453, %v1709, %v1710
    %v1712 = vrot.slane %v895, 4
    %v1713 = vor.u32 %v1712, %v1710
    %v1714 = vrot.slane %v1713, 4
    %v1715 = vrot.slane %v903, 4
    %v1716 = vrot.slane %v906, 5
    %v1717 = vor.u32 %v1715, %v1716
    %v1718 = vrot.slane %v1717, 4
    %v1719 = vrot.slane %v914, 5
    %v1720 = vsel %vm1453, %v1718, %v1719
    %v1721 = vrot.slane %v911, 4
    %v1722 = vor.u32 %v1721, %v1719
    %v1723 = vrot.slane %v1722, 4
    %1724 = vrot.lane.b32.xlu0 %v1459, 8
    %v1725 = vpop.permute.xlu0 %1724
    %1726 = vrot.lane.b32.xlu0 %v1462, 8
    %v1727 = vpop.permute.xlu0 %1726
    %1728 = vrot.lane.b32.xlu0 %v1468, 8
    %v1729 = vpop.permute.xlu0 %1728
    %1730 = vrot.lane.b32.xlu0 %v1471, 8
    %v1731 = vpop.permute.xlu0 %1730
    %1732 = vrot.lane.b32.xlu0 %v1477, 8
    %v1733 = vpop.permute.xlu0 %1732
    %1734 = vrot.lane.b32.xlu0 %v1480, 8
    %v1735 = vpop.permute.xlu0 %1734
    %1736 = vrot.lane.b32.xlu0 %v1486, 8
    %v1737 = vpop.permute.xlu0 %1736
    %1738 = vrot.lane.b32.xlu0 %v1489, 8
    %v1739 = vpop.permute.xlu0 %1738
    %1740 = vrot.lane.b32.xlu0 %v1495, 8
    %v1741 = vpop.permute.xlu0 %1740
    %1742 = vrot.lane.b32.xlu0 %v1498, 8
    %v1743 = vpop.permute.xlu0 %1742
    %1744 = vrot.lane.b32.xlu0 %v1504, 8
    %v1745 = vpop.permute.xlu0 %1744
    %1746 = vrot.lane.b32.xlu0 %v1507, 8
    %v1747 = vpop.permute.xlu0 %1746
    %1748 = vrot.lane.b32.xlu0 %v1513, 8
    %v1749 = vpop.permute.xlu0 %1748
    %1750 = vrot.lane.b32.xlu0 %v1516, 8
    %v1751 = vpop.permute.xlu0 %1750
    %1752 = vrot.lane.b32.xlu0 %v1522, 8
    %v1753 = vpop.permute.xlu0 %1752
    %1754 = vrot.lane.b32.xlu0 %v1525, 8
    %v1755 = vpop.permute.xlu0 %1754
    %1756 = vrot.lane.b32.xlu0 %v1531, 8
    %v1757 = vpop.permute.xlu0 %1756
    %1758 = vrot.lane.b32.xlu0 %v1534, 8
    %v1759 = vpop.permute.xlu0 %1758
    %1760 = vrot.lane.b32.xlu0 %v1540, 8
    %v1761 = vpop.permute.xlu0 %1760
    %1762 = vrot.lane.b32.xlu0 %v1543, 8
    %v1763 = vpop.permute.xlu0 %1762
    %1764 = vrot.lane.b32.xlu0 %v1549, 8
    %v1765 = vpop.permute.xlu0 %1764
    %1766 = vrot.lane.b32.xlu0 %v1552, 8
    %v1767 = vpop.permute.xlu0 %1766
    %1768 = vrot.lane.b32.xlu0 %v1558, 8
    %v1769 = vpop.permute.xlu0 %1768
    %1770 = vrot.lane.b32.xlu0 %v1561, 8
    %v1771 = vpop.permute.xlu0 %1770
    %1772 = vrot.lane.b32.xlu0 %v1567, 8
    %v1773 = vpop.permute.xlu0 %1772
    %1774 = vrot.lane.b32.xlu0 %v1570, 8
    %v1775 = vpop.permute.xlu0 %1774
    %1776 = vrot.lane.b32.xlu0 %v1576, 8
    %v1777 = vpop.permute.xlu0 %1776
    %1778 = vrot.lane.b32.xlu0 %v1579, 8
    %v1779 = vpop.permute.xlu0 %1778
    %1780 = vrot.lane.b32.xlu0 %v1585, 8
    %v1781 = vpop.permute.xlu0 %1780
    %1782 = vrot.lane.b32.xlu0 %v1588, 8
    %v1783 = vpop.permute.xlu0 %1782
    %1784 = vrot.lane.b32.xlu0 %v1594, 8
    %v1785 = vpop.permute.xlu0 %1784
    %1786 = vrot.lane.b32.xlu0 %v1597, 8
    %v1787 = vpop.permute.xlu0 %1786
    %1788 = vrot.lane.b32.xlu0 %v1603, 8
    %v1789 = vpop.permute.xlu0 %1788
    %1790 = vrot.lane.b32.xlu0 %v1606, 8
    %v1791 = vpop.permute.xlu0 %1790
    %1792 = vrot.lane.b32.xlu0 %v1612, 8
    %v1793 = vpop.permute.xlu0 %1792
    %1794 = vrot.lane.b32.xlu0 %v1615, 8
    %v1795 = vpop.permute.xlu0 %1794
    %1796 = vrot.lane.b32.xlu0 %v1621, 8
    %v1797 = vpop.permute.xlu0 %1796
    %1798 = vrot.lane.b32.xlu0 %v1624, 8
    %v1799 = vpop.permute.xlu0 %1798
    %1800 = vrot.lane.b32.xlu0 %v1630, 8
    %v1801 = vpop.permute.xlu0 %1800
    %1802 = vrot.lane.b32.xlu0 %v1633, 8
    %v1803 = vpop.permute.xlu0 %1802
    %1804 = vrot.lane.b32.xlu0 %v1639, 8
    %v1805 = vpop.permute.xlu0 %1804
    %1806 = vrot.lane.b32.xlu0 %v1642, 8
    %v1807 = vpop.permute.xlu0 %1806
    %1808 = vrot.lane.b32.xlu0 %v1648, 8
    %v1809 = vpop.permute.xlu0 %1808
    %1810 = vrot.lane.b32.xlu0 %v1651, 8
    %v1811 = vpop.permute.xlu0 %1810
    %1812 = vrot.lane.b32.xlu0 %v1657, 8
    %v1813 = vpop.permute.xlu0 %1812
    %1814 = vrot.lane.b32.xlu0 %v1660, 8
    %v1815 = vpop.permute.xlu0 %1814
    %1816 = vrot.lane.b32.xlu0 %v1666, 8
    %v1817 = vpop.permute.xlu0 %1816
    %1818 = vrot.lane.b32.xlu0 %v1669, 8
    %v1819 = vpop.permute.xlu0 %1818
    %1820 = vrot.lane.b32.xlu0 %v1675, 8
    %v1821 = vpop.permute.xlu0 %1820
    %1822 = vrot.lane.b32.xlu0 %v1678, 8
    %v1823 = vpop.permute.xlu0 %1822
    %1824 = vrot.lane.b32.xlu0 %v1684, 8
    %v1825 = vpop.permute.xlu0 %1824
    %1826 = vrot.lane.b32.xlu0 %v1687, 8
    %v1827 = vpop.permute.xlu0 %1826
    %1828 = vrot.lane.b32.xlu0 %v1693, 8
    %v1829 = vpop.permute.xlu0 %1828
    %1830 = vrot.lane.b32.xlu0 %v1696, 8
    %v1831 = vpop.permute.xlu0 %1830
    %1832 = vrot.lane.b32.xlu0 %v1702, 8
    %v1833 = vpop.permute.xlu0 %1832
    %1834 = vrot.lane.b32.xlu0 %v1705, 8
    %v1835 = vpop.permute.xlu0 %1834
    %1836 = vrot.lane.b32.xlu0 %v1711, 8
    %v1837 = vpop.permute.xlu0 %1836
    %1838 = vrot.lane.b32.xlu0 %v1714, 8
    %v1839 = vpop.permute.xlu0 %1838
    %1840 = vrot.lane.b32.xlu0 %v1720, 8
    %v1841 = vpop.permute.xlu0 %1840
    %1842 = vrot.lane.b32.xlu0 %v1723, 8
    %v1843 = vpop.permute.xlu0 %1842
    %1904 = vst.msk [vmem:[%s978] sm:$0xf] %vm1347, %v1725
    %vm1905 = vcmask 93248
    %vm1906 = vmand %vm1905, %vm1451
    %v1907 = vld [vmem:[%s978 + $0x4] sm:$0xf]
    %v1908 = vsel %vm1906, %v1727, %v1907
    %1909 = vst [vmem:[%s978 + $0x4] sm:$0xf] %v1908
    %1910 = vst.msk [vmem:[%s978 + $0x8] sm:$0xf] %vm1347, %v1729
    %v1911 = vld [vmem:[%s978 + $0xc] sm:$0xf]
    %v1912 = vsel %vm1906, %v1731, %v1911
    %1913 = vst [vmem:[%s978 + $0xc] sm:$0xf] %v1912
    %1914 = vst.msk [vmem:[%s978 + $0x10] sm:$0xf] %vm1347, %v1733
    %v1915 = vld [vmem:[%s978 + $0x14] sm:$0xf]
    %v1916 = vsel %vm1906, %v1735, %v1915
    %1917 = vst [vmem:[%s978 + $0x14] sm:$0xf] %v1916
    %1918 = vst.msk [vmem:[%s978 + $0x18] sm:$0xf] %vm1347, %v1737
    %v1919 = vld [vmem:[%s978 + $0x1c] sm:$0xf]
    %v1920 = vsel %vm1906, %v1739, %v1919
    %1921 = vst [vmem:[%s978 + $0x1c] sm:$0xf] %v1920
    %1922 = vst.msk [vmem:[%s978 + $0x20] sm:$0xf] %vm1347, %v1741
    %v1923 = vld [vmem:[%s978 + $0x24] sm:$0xf]
    %v1924 = vsel %vm1906, %v1743, %v1923
    %1925 = vst [vmem:[%s978 + $0x24] sm:$0xf] %v1924
    %1926 = vst.msk [vmem:[%s978 + $0x28] sm:$0xf] %vm1347, %v1745
    %v1927 = vld [vmem:[%s978 + $0x2c] sm:$0xf]
    %v1928 = vsel %vm1906, %v1747, %v1927
    %1929 = vst [vmem:[%s978 + $0x2c] sm:$0xf] %v1928
    %1930 = vst.msk [vmem:[%s978 + $0x30] sm:$0xf] %vm1347, %v1749
    %v1931 = vld [vmem:[%s978 + $0x34] sm:$0xf]
    %v1932 = vsel %vm1906, %v1751, %v1931
    %1933 = vst [vmem:[%s978 + $0x34] sm:$0xf] %v1932
    %1934 = vst.msk [vmem:[%s978 + $0x38] sm:$0xf] %vm1347, %v1753
    %v1935 = vld [vmem:[%s978 + $0x3c] sm:$0xf]
    %v1936 = vsel %vm1906, %v1755, %v1935
    %1937 = vst [vmem:[%s978 + $0x3c] sm:$0xf] %v1936
    %1938 = vst.msk [vmem:[%s978 + $0x40] sm:$0xf] %vm1347, %v1757
    %v1939 = vld [vmem:[%s978 + $0x44] sm:$0xf]
    %v1940 = vsel %vm1906, %v1759, %v1939
    %1941 = vst [vmem:[%s978 + $0x44] sm:$0xf] %v1940
    %1942 = vst.msk [vmem:[%s978 + $0x48] sm:$0xf] %vm1347, %v1761
    %v1943 = vld [vmem:[%s978 + $0x4c] sm:$0xf]
    %v1944 = vsel %vm1906, %v1763, %v1943
    %1945 = vst [vmem:[%s978 + $0x4c] sm:$0xf] %v1944
    %1946 = vst.msk [vmem:[%s978 + $0x50] sm:$0xf] %vm1347, %v1765
    %v1947 = vld [vmem:[%s978 + $0x54] sm:$0xf]
    %v1948 = vsel %vm1906, %v1767, %v1947
    %1949 = vst [vmem:[%s978 + $0x54] sm:$0xf] %v1948
    %1950 = vst.msk [vmem:[%s978 + $0x58] sm:$0xf] %vm1347, %v1769
    %v1951 = vld [vmem:[%s978 + $0x5c] sm:$0xf]
    %v1952 = vsel %vm1906, %v1771, %v1951
    %1953 = vst [vmem:[%s978 + $0x5c] sm:$0xf] %v1952
    %1954 = vst.msk [vmem:[%s978 + $0x60] sm:$0xf] %vm1347, %v1773
    %v1955 = vld [vmem:[%s978 + $0x64] sm:$0xf]
    %v1956 = vsel %vm1906, %v1775, %v1955
    %1957 = vst [vmem:[%s978 + $0x64] sm:$0xf] %v1956
    %1958 = vst.msk [vmem:[%s978 + $0x68] sm:$0xf] %vm1347, %v1777
    %v1959 = vld [vmem:[%s978 + $0x6c] sm:$0xf]
    %v1960 = vsel %vm1906, %v1779, %v1959
    %1961 = vst [vmem:[%s978 + $0x6c] sm:$0xf] %v1960
    %1962 = vst.msk [vmem:[%s978 + $0x70] sm:$0xf] %vm1347, %v1781
    %v1963 = vld [vmem:[%s978 + $0x74] sm:$0xf]
    %v1964 = vsel %vm1906, %v1783, %v1963
    %1965 = vst [vmem:[%s978 + $0x74] sm:$0xf] %v1964
    %1966 = vst.msk [vmem:[%s978 + $0x80] sm:$0xf] %vm1347, %v1785
    %v1967 = vld [vmem:[%s978 + $0x84] sm:$0xf]
    %v1968 = vsel %vm1906, %v1787, %v1967
    %1969 = vst [vmem:[%s978 + $0x84] sm:$0xf] %v1968
    %1970 = vst.msk [vmem:[%s978 + $0x88] sm:$0xf] %vm1347, %v1789
    %v1971 = vld [vmem:[%s978 + $0x8c] sm:$0xf]
    %v1972 = vsel %vm1906, %v1791, %v1971
    %1973 = vst [vmem:[%s978 + $0x8c] sm:$0xf] %v1972
    %1974 = vst.msk [vmem:[%s978 + $0x90] sm:$0xf] %vm1347, %v1793
    %v1975 = vld [vmem:[%s978 + $0x94] sm:$0xf]
    %v1976 = vsel %vm1906, %v1795, %v1975
    %1977 = vst [vmem:[%s978 + $0x94] sm:$0xf] %v1976
    %1978 = vst.msk [vmem:[%s978 + $0x98] sm:$0xf] %vm1347, %v1797
    %v1979 = vld [vmem:[%s978 + $0x9c] sm:$0xf]
    %v1980 = vsel %vm1906, %v1799, %v1979
    %1981 = vst [vmem:[%s978 + $0x9c] sm:$0xf] %v1980
    %1982 = vst.msk [vmem:[%s978 + $0xa0] sm:$0xf] %vm1347, %v1801
    %v1983 = vld [vmem:[%s978 + $0xa4] sm:$0xf]
    %v1984 = vsel %vm1906, %v1803, %v1983
    %1985 = vst [vmem:[%s978 + $0xa4] sm:$0xf] %v1984
    %1986 = vst.msk [vmem:[%s978 + $0xa8] sm:$0xf] %vm1347, %v1805
    %v1987 = vld [vmem:[%s978 + $0xac] sm:$0xf]
    %v1988 = vsel %vm1906, %v1807, %v1987
    %1989 = vst [vmem:[%s978 + $0xac] sm:$0xf] %v1988
    %1990 = vst.msk [vmem:[%s978 + $0xb0] sm:$0xf] %vm1347, %v1809
    %v1991 = vld [vmem:[%s978 + $0xb4] sm:$0xf]
    %v1992 = vsel %vm1906, %v1811, %v1991
    %1993 = vst [vmem:[%s978 + $0xb4] sm:$0xf] %v1992
    %1994 = vst.msk [vmem:[%s978 + $0xb8] sm:$0xf] %vm1347, %v1813
    %v1995 = vld [vmem:[%s978 + $0xbc] sm:$0xf]
    %v1996 = vsel %vm1906, %v1815, %v1995
    %1997 = vst [vmem:[%s978 + $0xbc] sm:$0xf] %v1996
    %1998 = vst.msk [vmem:[%s978 + $0xc0] sm:$0xf] %vm1347, %v1817
    %v1999 = vld [vmem:[%s978 + $0xc4] sm:$0xf]
    %v2000 = vsel %vm1906, %v1819, %v1999
    %2001 = vst [vmem:[%s978 + $0xc4] sm:$0xf] %v2000
    %2002 = vst.msk [vmem:[%s978 + $0xc8] sm:$0xf] %vm1347, %v1821
    %v2003 = vld [vmem:[%s978 + $0xcc] sm:$0xf]
    %v2004 = vsel %vm1906, %v1823, %v2003
    %2005 = vst [vmem:[%s978 + $0xcc] sm:$0xf] %v2004
    %2006 = vst.msk [vmem:[%s978 + $0xd0] sm:$0xf] %vm1347, %v1825
    %v2007 = vld [vmem:[%s978 + $0xd4] sm:$0xf]
    %v2008 = vsel %vm1906, %v1827, %v2007
    %2009 = vst [vmem:[%s978 + $0xd4] sm:$0xf] %v2008
    %2010 = vst.msk [vmem:[%s978 + $0xd8] sm:$0xf] %vm1347, %v1829
    %v2011 = vld [vmem:[%s978 + $0xdc] sm:$0xf]
    %v2012 = vsel %vm1906, %v1831, %v2011
    %2013 = vst [vmem:[%s978 + $0xdc] sm:$0xf] %v2012
    %2014 = vst.msk [vmem:[%s978 + $0xe0] sm:$0xf] %vm1347, %v1833
    %v2015 = vld [vmem:[%s978 + $0xe4] sm:$0xf]
    %v2016 = vsel %vm1906, %v1835, %v2015
    %2017 = vst [vmem:[%s978 + $0xe4] sm:$0xf] %v2016
    %2018 = vst.msk [vmem:[%s978 + $0xe8] sm:$0xf] %vm1347, %v1837
    %v2019 = vld [vmem:[%s978 + $0xec] sm:$0xf]
    %v2020 = vsel %vm1906, %v1839, %v2019
    %2021 = vst [vmem:[%s978 + $0xec] sm:$0xf] %v2020
    %2022 = vst.msk [vmem:[%s978 + $0xf0] sm:$0xf] %vm1347, %v1841
    %v2023 = vld [vmem:[%s978 + $0xf4] sm:$0xf]
    %v2024 = vsel %vm1906, %v1843, %v2023
    %2025 = vst [vmem:[%s978 + $0xf4] sm:$0xf] %v2024
    %vm2026 = vcmask 122976
    %vm2027 = vmand %vm2026, %vm188
    %v2028 = vld [vmem:[#allocation2] sm:$0x1]
    %v2029 = vsel %vm2027, 0, %v2028
    %2030 = vst [vmem:[#allocation2] sm:$0x1] %v2029
    %v2031 = vld [vmem:[#allocation2 + $0x8] sm:$0x1]
    %v2032 = vsel %vm2027, 0, %v2031
    %2033 = vst [vmem:[#allocation2 + $0x8] sm:$0x1] %v2032
    %v2034 = vld [vmem:[#allocation2 + $0x10] sm:$0x1]
    %v2035 = vsel %vm2027, 0, %v2034
    %2036 = vst [vmem:[#allocation2 + $0x10] sm:$0x1] %v2035
    %v2037 = vld [vmem:[#allocation2 + $0x18] sm:$0x1]
    %v2038 = vsel %vm2027, 0, %v2037
    %2039 = vst [vmem:[#allocation2 + $0x18] sm:$0x1] %v2038
    %v2040 = vld [vmem:[#allocation2 + $0x20] sm:$0x1]
    %v2041 = vsel %vm2027, 0, %v2040
    %2042 = vst [vmem:[#allocation2 + $0x20] sm:$0x1] %v2041
    %v2043 = vld [vmem:[#allocation2 + $0x28] sm:$0x1]
    %v2044 = vsel %vm2027, 0, %v2043
    %2045 = vst [vmem:[#allocation2 + $0x28] sm:$0x1] %v2044
    %v2046 = vld [vmem:[#allocation2 + $0x30] sm:$0x1]
    %v2047 = vsel %vm2027, 0, %v2046
    %2048 = vst [vmem:[#allocation2 + $0x30] sm:$0x1] %v2047
    %v2049 = vld [vmem:[#allocation2 + $0x38] sm:$0x1]
    %v2050 = vsel %vm2027, 0, %v2049
    %2051 = vst [vmem:[#allocation2 + $0x38] sm:$0x1] %v2050
    %v2052 = vld [vmem:[#allocation2 + $0x40] sm:$0x1]
    %v2053 = vsel %vm2027, 0, %v2052
    %2054 = vst [vmem:[#allocation2 + $0x40] sm:$0x1] %v2053
    %v2055 = vld [vmem:[#allocation2 + $0x48] sm:$0x1]
    %v2056 = vsel %vm2027, 0, %v2055
    %2057 = vst [vmem:[#allocation2 + $0x48] sm:$0x1] %v2056
    %v2058 = vld [vmem:[#allocation2 + $0x50] sm:$0x1]
    %v2059 = vsel %vm2027, 0, %v2058
    %2060 = vst [vmem:[#allocation2 + $0x50] sm:$0x1] %v2059
    %v2061 = vld [vmem:[#allocation2 + $0x58] sm:$0x1]
    %v2062 = vsel %vm2027, 0, %v2061
    %2063 = vst [vmem:[#allocation2 + $0x58] sm:$0x1] %v2062
    %v2064 = vld [vmem:[#allocation2 + $0x60] sm:$0x1]
    %v2065 = vsel %vm2027, 0, %v2064
    %2066 = vst [vmem:[#allocation2 + $0x60] sm:$0x1] %v2065
    %v2067 = vld [vmem:[#allocation2 + $0x68] sm:$0x1]
    %v2068 = vsel %vm2027, 0, %v2067
    %2069 = vst [vmem:[#allocation2 + $0x68] sm:$0x1] %v2068
    %v2070 = vld [vmem:[#allocation2 + $0x70] sm:$0x1]
    %v2071 = vsel %vm2027, 0, %v2070
    %2072 = vst [vmem:[#allocation2 + $0x70] sm:$0x1] %v2071
    %v2073 = vld [vmem:[#allocation2 + $0x78] sm:$0x1]
    %v2074 = vsel %vm2027, 0, %v2073
    %2075 = vst [vmem:[#allocation2 + $0x78] sm:$0x1] %v2074
    %v2076 = vld [vmem:[#allocation2 + $0x80] sm:$0x1]
    %v2077 = vsel %vm2027, 0, %v2076
    %2078 = vst [vmem:[#allocation2 + $0x80] sm:$0x1] %v2077
    %v2079 = vld [vmem:[#allocation2 + $0x88] sm:$0x1]
    %v2080 = vsel %vm2027, 0, %v2079
    %2081 = vst [vmem:[#allocation2 + $0x88] sm:$0x1] %v2080
    %v2082 = vld [vmem:[#allocation2 + $0x90] sm:$0x1]
    %v2083 = vsel %vm2027, 0, %v2082
    %2084 = vst [vmem:[#allocation2 + $0x90] sm:$0x1] %v2083
    %v2085 = vld [vmem:[#allocation2 + $0x98] sm:$0x1]
    %v2086 = vsel %vm2027, 0, %v2085
    %2087 = vst [vmem:[#allocation2 + $0x98] sm:$0x1] %v2086
    %v2088 = vld [vmem:[#allocation2 + $0xa0] sm:$0x1]
    %v2089 = vsel %vm2027, 0, %v2088
    %2090 = vst [vmem:[#allocation2 + $0xa0] sm:$0x1] %v2089
    %v2091 = vld [vmem:[#allocation2 + $0xa8] sm:$0x1]
    %v2092 = vsel %vm2027, 0, %v2091
    %2093 = vst [vmem:[#allocation2 + $0xa8] sm:$0x1] %v2092
    %v2094 = vld [vmem:[#allocation2 + $0xb0] sm:$0x1]
    %v2095 = vsel %vm2027, 0, %v2094
    %2096 = vst [vmem:[#allocation2 + $0xb0] sm:$0x1] %v2095
    %v2097 = vld [vmem:[#allocation2 + $0xb8] sm:$0x1]
    %v2098 = vsel %vm2027, 0, %v2097
    %2099 = vst [vmem:[#allocation2 + $0xb8] sm:$0x1] %v2098
    %v2100 = vld [vmem:[#allocation2 + $0xc0] sm:$0x1]
    %v2101 = vsel %vm2027, 0, %v2100
    %2102 = vst [vmem:[#allocation2 + $0xc0] sm:$0x1] %v2101
    %v2103 = vld [vmem:[#allocation2 + $0xc8] sm:$0x1]
    %v2104 = vsel %vm2027, 0, %v2103
    %2105 = vst [vmem:[#allocation2 + $0xc8] sm:$0x1] %v2104
    %v2106 = vld [vmem:[#allocation2 + $0xd0] sm:$0x1]
    %v2107 = vsel %vm2027, 0, %v2106
    %2108 = vst [vmem:[#allocation2 + $0xd0] sm:$0x1] %v2107
    %v2109 = vld [vmem:[#allocation2 + $0xd8] sm:$0x1]
    %v2110 = vsel %vm2027, 0, %v2109
    %2111 = vst [vmem:[#allocation2 + $0xd8] sm:$0x1] %v2110
    %v2112 = vld [vmem:[#allocation2 + $0xe0] sm:$0x1]
    %v2113 = vsel %vm2027, 0, %v2112
    %2114 = vst [vmem:[#allocation2 + $0xe0] sm:$0x1] %v2113
    %v2115 = vld [vmem:[#allocation2 + $0xe8] sm:$0x1]
    %v2116 = vsel %vm2027, 0, %v2115
    %2117 = vst [vmem:[#allocation2 + $0xe8] sm:$0x1] %v2116
    %v2118 = vld [vmem:[#allocation2 + $0xf0] sm:$0x1]
    %v2119 = vsel %vm2027, 0, %v2118
    %2120 = vst [vmem:[#allocation2 + $0xf0] sm:$0x1] %v2119
    %v2121 = vld [vmem:[#allocation2 + $0xf8] sm:$0x1]
    %v2122 = vsel %vm2027, 0, %v2121
    %2123 = vst [vmem:[#allocation2 + $0xf8] sm:$0x1] %v2122
    %v2126 = vunpack.c.l.b16 %v165
    %v2127 = vunpack.c.h.b16 %v165
    %v2128 = vunpack.c.l.b16 %v181
    %v2129 = vunpack.c.h.b16 %v181
    %v2130 = vpack.c.b16 %v2126, %v2126
    %v2131 = vpack.c.b16 %v2127, %v2127
    %v2132 = vpack.c.b16 %v2128, %v2128
    %v2133 = vpack.c.b16 %v2129, %v2129
    %v2135 = vshrl.u32 %v2130, 16
    %v2137 = vrot.slane %v2135, 7
    %v2138 = vshll.u32 %v2130, 16
    %v2140 = vor.u32 %v2137, %v2138
    %v2141 = vrot.slane %v2137, 4
    %v2143 = vshrl.u32 %v2131, 16
    %v2145 = vrot.slane %v2143, 7
    %v2146 = vshll.u32 %v2131, 16
    %v2148 = vor.u32 %v2145, %v2146
    %v2149 = vsel %vm437, %v2141, %v2148
    %v2151 = vshrl.u32 %v2132, 16
    %v2153 = vrot.slane %v2151, 7
    %v2154 = vshll.u32 %v2132, 16
    %v2156 = vor.u32 %v2153, %v2154
    %v2157 = vrot.slane %v2153, 4
    %v2159 = vshrl.u32 %v2133, 16
    %v2161 = vrot.slane %v2159, 7
    %v2162 = vshll.u32 %v2133, 16
    %v2164 = vor.u32 %v2161, %v2162
    %v2165 = vsel %vm437, %v2157, %v2164
    %2166 = vrot.lane.b32.xlu0 %v444, 12
    %v2167 = vpop.permute.xlu0 %2166
    %2168 = vrot.lane.b32.xlu0 %v453, 12
    %v2169 = vpop.permute.xlu0 %2168
    %2170 = vrot.lane.b32.xlu0 %v460, 12
    %v2171 = vpop.permute.xlu0 %2170
    %2172 = vrot.lane.b32.xlu0 %v469, 12
    %v2173 = vpop.permute.xlu0 %2172
    %2174 = vrot.lane.b32.xlu0 %v476, 12
    %v2175 = vpop.permute.xlu0 %2174
    %2176 = vrot.lane.b32.xlu0 %v485, 12
    %v2177 = vpop.permute.xlu0 %2176
    %2178 = vrot.lane.b32.xlu0 %v492, 12
    %v2179 = vpop.permute.xlu0 %2178
    %2180 = vrot.lane.b32.xlu0 %v501, 12
    %v2181 = vpop.permute.xlu0 %2180
    %2182 = vrot.lane.b32.xlu0 %v508, 12
    %v2183 = vpop.permute.xlu0 %2182
    %2184 = vrot.lane.b32.xlu0 %v517, 12
    %v2185 = vpop.permute.xlu0 %2184
    %2186 = vrot.lane.b32.xlu0 %v524, 12
    %v2187 = vpop.permute.xlu0 %2186
    %2188 = vrot.lane.b32.xlu0 %v533, 12
    %v2189 = vpop.permute.xlu0 %2188
    %2190 = vrot.lane.b32.xlu0 %v540, 12
    %v2191 = vpop.permute.xlu0 %2190
    %2192 = vrot.lane.b32.xlu0 %v549, 12
    %v2193 = vpop.permute.xlu0 %2192
    %2194 = vrot.lane.b32.xlu0 %v556, 12
    %v2195 = vpop.permute.xlu0 %2194
    %2196 = vrot.lane.b32.xlu0 %v565, 12
    %v2197 = vpop.permute.xlu0 %2196
    %2198 = vrot.lane.b32.xlu0 %v572, 12
    %v2199 = vpop.permute.xlu0 %2198
    %2200 = vrot.lane.b32.xlu0 %v581, 12
    %v2201 = vpop.permute.xlu0 %2200
    %2202 = vrot.lane.b32.xlu0 %v588, 12
    %v2203 = vpop.permute.xlu0 %2202
    %2204 = vrot.lane.b32.xlu0 %v597, 12
    %v2205 = vpop.permute.xlu0 %2204
    %2206 = vrot.lane.b32.xlu0 %v604, 12
    %v2207 = vpop.permute.xlu0 %2206
    %2208 = vrot.lane.b32.xlu0 %v613, 12
    %v2209 = vpop.permute.xlu0 %2208
    %2210 = vrot.lane.b32.xlu0 %v620, 12
    %v2211 = vpop.permute.xlu0 %2210
    %2212 = vrot.lane.b32.xlu0 %v629, 12
    %v2213 = vpop.permute.xlu0 %2212
    %2214 = vrot.lane.b32.xlu0 %v636, 12
    %v2215 = vpop.permute.xlu0 %2214
    %2216 = vrot.lane.b32.xlu0 %v645, 12
    %v2217 = vpop.permute.xlu0 %2216
    %2218 = vrot.lane.b32.xlu0 %v652, 12
    %v2219 = vpop.permute.xlu0 %2218
    %2220 = vrot.lane.b32.xlu0 %v661, 12
    %v2221 = vpop.permute.xlu0 %2220
    %2222 = vrot.lane.b32.xlu0 %v668, 12
    %v2223 = vpop.permute.xlu0 %2222
    %2224 = vrot.lane.b32.xlu0 %v677, 12
    %v2225 = vpop.permute.xlu0 %2224
    %2226 = vrot.lane.b32.xlu0 %v2140, 12
    %v2227 = vpop.permute.xlu0 %2226
    %2228 = vrot.lane.b32.xlu0 %v2149, 12
    %v2229 = vpop.permute.xlu0 %2228
    %2230 = vrot.lane.b32.xlu0 %v684, 12
    %v2231 = vpop.permute.xlu0 %2230
    %2232 = vrot.lane.b32.xlu0 %v693, 12
    %v2233 = vpop.permute.xlu0 %2232
    %2234 = vrot.lane.b32.xlu0 %v700, 12
    %v2235 = vpop.permute.xlu0 %2234
    %2236 = vrot.lane.b32.xlu0 %v709, 12
    %v2237 = vpop.permute.xlu0 %2236
    %2238 = vrot.lane.b32.xlu0 %v716, 12
    %v2239 = vpop.permute.xlu0 %2238
    %2240 = vrot.lane.b32.xlu0 %v725, 12
    %v2241 = vpop.permute.xlu0 %2240
    %2242 = vrot.lane.b32.xlu0 %v732, 12
    %v2243 = vpop.permute.xlu0 %2242
    %2244 = vrot.lane.b32.xlu0 %v741, 12
    %v2245 = vpop.permute.xlu0 %2244
    %2246 = vrot.lane.b32.xlu0 %v748, 12
    %v2247 = vpop.permute.xlu0 %2246
    %2248 = vrot.lane.b32.xlu0 %v757, 12
    %v2249 = vpop.permute.xlu0 %2248
    %2250 = vrot.lane.b32.xlu0 %v764, 12
    %v2251 = vpop.permute.xlu0 %2250
    %2252 = vrot.lane.b32.xlu0 %v773, 12
    %v2253 = vpop.permute.xlu0 %2252
    %2254 = vrot.lane.b32.xlu0 %v780, 12
    %v2255 = vpop.permute.xlu0 %2254
    %2256 = vrot.lane.b32.xlu0 %v789, 12
    %v2257 = vpop.permute.xlu0 %2256
    %2258 = vrot.lane.b32.xlu0 %v796, 12
    %v2259 = vpop.permute.xlu0 %2258
    %2260 = vrot.lane.b32.xlu0 %v805, 12
    %v2261 = vpop.permute.xlu0 %2260
    %2262 = vrot.lane.b32.xlu0 %v812, 12
    %v2263 = vpop.permute.xlu0 %2262
    %2264 = vrot.lane.b32.xlu0 %v821, 12
    %v2265 = vpop.permute.xlu0 %2264
    %2266 = vrot.lane.b32.xlu0 %v828, 12
    %v2267 = vpop.permute.xlu0 %2266
    %2268 = vrot.lane.b32.xlu0 %v837, 12
    %v2269 = vpop.permute.xlu0 %2268
    %2270 = vrot.lane.b32.xlu0 %v844, 12
    %v2271 = vpop.permute.xlu0 %2270
    %2272 = vrot.lane.b32.xlu0 %v853, 12
    %v2273 = vpop.permute.xlu0 %2272
    %2274 = vrot.lane.b32.xlu0 %v860, 12
    %v2275 = vpop.permute.xlu0 %2274
    %2276 = vrot.lane.b32.xlu0 %v869, 12
    %v2277 = vpop.permute.xlu0 %2276
    %2278 = vrot.lane.b32.xlu0 %v876, 12
    %v2279 = vpop.permute.xlu0 %2278
    %2280 = vrot.lane.b32.xlu0 %v885, 12
    %v2281 = vpop.permute.xlu0 %2280
    %2282 = vrot.lane.b32.xlu0 %v892, 12
    %v2283 = vpop.permute.xlu0 %2282
    %2284 = vrot.lane.b32.xlu0 %v901, 12
    %v2285 = vpop.permute.xlu0 %2284
    %2286 = vrot.lane.b32.xlu0 %v908, 12
    %v2287 = vpop.permute.xlu0 %2286
    %2288 = vrot.lane.b32.xlu0 %v917, 12
    %v2289 = vpop.permute.xlu0 %2288
    %2290 = vrot.lane.b32.xlu0 %v2156, 12
    %v2291 = vpop.permute.xlu0 %2290
    %2292 = vrot.lane.b32.xlu0 %v2165, 12
    %v2293 = vpop.permute.xlu0 %2292
    %vm2358 = vcmask 126048
    %vm2359 = vmand %vm2358, %vm980
    %v2360 = vld [vmem:[#allocation2] sm:$0xf]
    %v2361 = vsel %vm2359, %v2167, %v2360
    %2362 = vst [vmem:[#allocation2] sm:$0xf] %v2361
    %vm2363 = vcmask 126048
    %2364 = vst.msk [vmem:[#allocation2 + $0x4] sm:$0xf] %vm2363, %v2169
    %v2365 = vld [vmem:[#allocation2 + $0x8] sm:$0xf]
    %v2366 = vsel %vm2359, %v2171, %v2365
    %2367 = vst [vmem:[#allocation2 + $0x8] sm:$0xf] %v2366
    %2368 = vst.msk [vmem:[#allocation2 + $0xc] sm:$0xf] %vm2363, %v2173
    %v2369 = vld [vmem:[#allocation2 + $0x10] sm:$0xf]
    %v2370 = vsel %vm2359, %v2175, %v2369
    %2371 = vst [vmem:[#allocation2 + $0x10] sm:$0xf] %v2370
    %2372 = vst.msk [vmem:[#allocation2 + $0x14] sm:$0xf] %vm2363, %v2177
    %v2373 = vld [vmem:[#allocation2 + $0x18] sm:$0xf]
    %v2374 = vsel %vm2359, %v2179, %v2373
    %2375 = vst [vmem:[#allocation2 + $0x18] sm:$0xf] %v2374
    %2376 = vst.msk [vmem:[#allocation2 + $0x1c] sm:$0xf] %vm2363, %v2181
    %v2377 = vld [vmem:[#allocation2 + $0x20] sm:$0xf]
    %v2378 = vsel %vm2359, %v2183, %v2377
    %2379 = vst [vmem:[#allocation2 + $0x20] sm:$0xf] %v2378
    %2380 = vst.msk [vmem:[#allocation2 + $0x24] sm:$0xf] %vm2363, %v2185
    %v2381 = vld [vmem:[#allocation2 + $0x28] sm:$0xf]
    %v2382 = vsel %vm2359, %v2187, %v2381
    %2383 = vst [vmem:[#allocation2 + $0x28] sm:$0xf] %v2382
    %2384 = vst.msk [vmem:[#allocation2 + $0x2c] sm:$0xf] %vm2363, %v2189
    %v2385 = vld [vmem:[#allocation2 + $0x30] sm:$0xf]
    %v2386 = vsel %vm2359, %v2191, %v2385
    %2387 = vst [vmem:[#allocation2 + $0x30] sm:$0xf] %v2386
    %2388 = vst.msk [vmem:[#allocation2 + $0x34] sm:$0xf] %vm2363, %v2193
    %v2389 = vld [vmem:[#allocation2 + $0x38] sm:$0xf]
    %v2390 = vsel %vm2359, %v2195, %v2389
    %2391 = vst [vmem:[#allocation2 + $0x38] sm:$0xf] %v2390
    %2392 = vst.msk [vmem:[#allocation2 + $0x3c] sm:$0xf] %vm2363, %v2197
    %v2393 = vld [vmem:[#allocation2 + $0x40] sm:$0xf]
    %v2394 = vsel %vm2359, %v2199, %v2393
    %2395 = vst [vmem:[#allocation2 + $0x40] sm:$0xf] %v2394
    %2396 = vst.msk [vmem:[#allocation2 + $0x44] sm:$0xf] %vm2363, %v2201
    %v2397 = vld [vmem:[#allocation2 + $0x48] sm:$0xf]
    %v2398 = vsel %vm2359, %v2203, %v2397
    %2399 = vst [vmem:[#allocation2 + $0x48] sm:$0xf] %v2398
    %2400 = vst.msk [vmem:[#allocation2 + $0x4c] sm:$0xf] %vm2363, %v2205
    %v2401 = vld [vmem:[#allocation2 + $0x50] sm:$0xf]
    %v2402 = vsel %vm2359, %v2207, %v2401
    %2403 = vst [vmem:[#allocation2 + $0x50] sm:$0xf] %v2402
    %2404 = vst.msk [vmem:[#allocation2 + $0x54] sm:$0xf] %vm2363, %v2209
    %v2405 = vld [vmem:[#allocation2 + $0x58] sm:$0xf]
    %v2406 = vsel %vm2359, %v2211, %v2405
    %2407 = vst [vmem:[#allocation2 + $0x58] sm:$0xf] %v2406
    %2408 = vst.msk [vmem:[#allocation2 + $0x5c] sm:$0xf] %vm2363, %v2213
    %v2409 = vld [vmem:[#allocation2 + $0x60] sm:$0xf]
    %v2410 = vsel %vm2359, %v2215, %v2409
    %2411 = vst [vmem:[#allocation2 + $0x60] sm:$0xf] %v2410
    %2412 = vst.msk [vmem:[#allocation2 + $0x64] sm:$0xf] %vm2363, %v2217
    %v2413 = vld [vmem:[#allocation2 + $0x68] sm:$0xf]
    %v2414 = vsel %vm2359, %v2219, %v2413
    %2415 = vst [vmem:[#allocation2 + $0x68] sm:$0xf] %v2414
    %2416 = vst.msk [vmem:[#allocation2 + $0x6c] sm:$0xf] %vm2363, %v2221
    %v2417 = vld [vmem:[#allocation2 + $0x70] sm:$0xf]
    %v2418 = vsel %vm2359, %v2223, %v2417
    %2419 = vst [vmem:[#allocation2 + $0x70] sm:$0xf] %v2418
    %2420 = vst.msk [vmem:[#allocation2 + $0x74] sm:$0xf] %vm2363, %v2225
    %v2421 = vld [vmem:[#allocation2 + $0x78] sm:$0xf]
    %v2422 = vsel %vm2359, %v2227, %v2421
    %2423 = vst [vmem:[#allocation2 + $0x78] sm:$0xf] %v2422
    %2424 = vst.msk [vmem:[#allocation2 + $0x7c] sm:$0xf] %vm2363, %v2229
    %v2425 = vld [vmem:[#allocation2 + $0x80] sm:$0xf]
    %v2426 = vsel %vm2359, %v2231, %v2425
    %2427 = vst [vmem:[#allocation2 + $0x80] sm:$0xf] %v2426
    %2428 = vst.msk [vmem:[#allocation2 + $0x84] sm:$0xf] %vm2363, %v2233
    %v2429 = vld [vmem:[#allocation2 + $0x88] sm:$0xf]
    %v2430 = vsel %vm2359, %v2235, %v2429
    %2431 = vst [vmem:[#allocation2 + $0x88] sm:$0xf] %v2430
    %2432 = vst.msk [vmem:[#allocation2 + $0x8c] sm:$0xf] %vm2363, %v2237
    %v2433 = vld [vmem:[#allocation2 + $0x90] sm:$0xf]
    %v2434 = vsel %vm2359, %v2239, %v2433
    %2435 = vst [vmem:[#allocation2 + $0x90] sm:$0xf] %v2434
    %2436 = vst.msk [vmem:[#allocation2 + $0x94] sm:$0xf] %vm2363, %v2241
    %v2437 = vld [vmem:[#allocation2 + $0x98] sm:$0xf]
    %v2438 = vsel %vm2359, %v2243, %v2437
    %2439 = vst [vmem:[#allocation2 + $0x98] sm:$0xf] %v2438
    %2440 = vst.msk [vmem:[#allocation2 + $0x9c] sm:$0xf] %vm2363, %v2245
    %v2441 = vld [vmem:[#allocation2 + $0xa0] sm:$0xf]
    %v2442 = vsel %vm2359, %v2247, %v2441
    %2443 = vst [vmem:[#allocation2 + $0xa0] sm:$0xf] %v2442
    %2444 = vst.msk [vmem:[#allocation2 + $0xa4] sm:$0xf] %vm2363, %v2249
    %v2445 = vld [vmem:[#allocation2 + $0xa8] sm:$0xf]
    %v2446 = vsel %vm2359, %v2251, %v2445
    %2447 = vst [vmem:[#allocation2 + $0xa8] sm:$0xf] %v2446
    %2448 = vst.msk [vmem:[#allocation2 + $0xac] sm:$0xf] %vm2363, %v2253
    %v2449 = vld [vmem:[#allocation2 + $0xb0] sm:$0xf]
    %v2450 = vsel %vm2359, %v2255, %v2449
    %2451 = vst [vmem:[#allocation2 + $0xb0] sm:$0xf] %v2450
    %2452 = vst.msk [vmem:[#allocation2 + $0xb4] sm:$0xf] %vm2363, %v2257
    %v2453 = vld [vmem:[#allocation2 + $0xb8] sm:$0xf]
    %v2454 = vsel %vm2359, %v2259, %v2453
    %2455 = vst [vmem:[#allocation2 + $0xb8] sm:$0xf] %v2454
    %2456 = vst.msk [vmem:[#allocation2 + $0xbc] sm:$0xf] %vm2363, %v2261
    %v2457 = vld [vmem:[#allocation2 + $0xc0] sm:$0xf]
    %v2458 = vsel %vm2359, %v2263, %v2457
    %2459 = vst [vmem:[#allocation2 + $0xc0] sm:$0xf] %v2458
    %2460 = vst.msk [vmem:[#allocation2 + $0xc4] sm:$0xf] %vm2363, %v2265
    %v2461 = vld [vmem:[#allocation2 + $0xc8] sm:$0xf]
    %v2462 = vsel %vm2359, %v2267, %v2461
    %2463 = vst [vmem:[#allocation2 + $0xc8] sm:$0xf] %v2462
    %2464 = vst.msk [vmem:[#allocation2 + $0xcc] sm:$0xf] %vm2363, %v2269
    %v2465 = vld [vmem:[#allocation2 + $0xd0] sm:$0xf]
    %v2466 = vsel %vm2359, %v2271, %v2465
    %2467 = vst [vmem:[#allocation2 + $0xd0] sm:$0xf] %v2466
    %2468 = vst.msk [vmem:[#allocation2 + $0xd4] sm:$0xf] %vm2363, %v2273
    %v2469 = vld [vmem:[#allocation2 + $0xd8] sm:$0xf]
    %v2470 = vsel %vm2359, %v2275, %v2469
    %2471 = vst [vmem:[#allocation2 + $0xd8] sm:$0xf] %v2470
    %2472 = vst.msk [vmem:[#allocation2 + $0xdc] sm:$0xf] %vm2363, %v2277
    %v2473 = vld [vmem:[#allocation2 + $0xe0] sm:$0xf]
    %v2474 = vsel %vm2359, %v2279, %v2473
    %2475 = vst [vmem:[#allocation2 + $0xe0] sm:$0xf] %v2474
    %2476 = vst.msk [vmem:[#allocation2 + $0xe4] sm:$0xf] %vm2363, %v2281
    %v2477 = vld [vmem:[#allocation2 + $0xe8] sm:$0xf]
    %v2478 = vsel %vm2359, %v2283, %v2477
    %2479 = vst [vmem:[#allocation2 + $0xe8] sm:$0xf] %v2478
    %2480 = vst.msk [vmem:[#allocation2 + $0xec] sm:$0xf] %vm2363, %v2285
    %v2481 = vld [vmem:[#allocation2 + $0xf0] sm:$0xf]
    %v2482 = vsel %vm2359, %v2287, %v2481
    %2483 = vst [vmem:[#allocation2 + $0xf0] sm:$0xf] %v2482
    %2484 = vst.msk [vmem:[#allocation2 + $0xf4] sm:$0xf] %vm2363, %v2289
    %v2485 = vld [vmem:[#allocation2 + $0xf8] sm:$0xf]
    %v2486 = vsel %vm2359, %v2291, %v2485
    %2487 = vst [vmem:[#allocation2 + $0xf8] sm:$0xf] %v2486
    %2488 = vst.msk [vmem:[#allocation2 + $0xfc] sm:$0xf] %vm2363, %v2293
    %2489 = vrot.lane.b32.xlu0 %v376, 16
    %v2490 = vpop.permute.xlu0 %2489
    %2491 = vrot.lane.b32.xlu0 %v377, 16
    %v2492 = vpop.permute.xlu0 %2491
    %2493 = vrot.lane.b32.xlu0 %v378, 16
    %v2494 = vpop.permute.xlu0 %2493
    %2495 = vrot.lane.b32.xlu0 %v379, 16
    %v2496 = vpop.permute.xlu0 %2495
    %2497 = vrot.lane.b32.xlu0 %v380, 16
    %v2498 = vpop.permute.xlu0 %2497
    %2499 = vrot.lane.b32.xlu0 %v381, 16
    %v2500 = vpop.permute.xlu0 %2499
    %2501 = vrot.lane.b32.xlu0 %v382, 16
    %v2502 = vpop.permute.xlu0 %2501
    %2503 = vrot.lane.b32.xlu0 %v383, 16
    %v2504 = vpop.permute.xlu0 %2503
    %2505 = vrot.lane.b32.xlu0 %v384, 16
    %v2506 = vpop.permute.xlu0 %2505
    %2507 = vrot.lane.b32.xlu0 %v385, 16
    %v2508 = vpop.permute.xlu0 %2507
    %2509 = vrot.lane.b32.xlu0 %v386, 16
    %v2510 = vpop.permute.xlu0 %2509
    %2511 = vrot.lane.b32.xlu0 %v387, 16
    %v2512 = vpop.permute.xlu0 %2511
    %2513 = vrot.lane.b32.xlu0 %v388, 16
    %v2514 = vpop.permute.xlu0 %2513
    %2515 = vrot.lane.b32.xlu0 %v389, 16
    %v2516 = vpop.permute.xlu0 %2515
    %2517 = vrot.lane.b32.xlu0 %v390, 16
    %v2518 = vpop.permute.xlu0 %2517
    %2519 = vrot.lane.b32.xlu0 %v391, 16
    %v2520 = vpop.permute.xlu0 %2519
    %2521 = vrot.lane.b32.xlu0 %v392, 16
    %v2522 = vpop.permute.xlu0 %2521
    %2523 = vrot.lane.b32.xlu0 %v393, 16
    %v2524 = vpop.permute.xlu0 %2523
    %2525 = vrot.lane.b32.xlu0 %v394, 16
    %v2526 = vpop.permute.xlu0 %2525
    %2527 = vrot.lane.b32.xlu0 %v395, 16
    %v2528 = vpop.permute.xlu0 %2527
    %2529 = vrot.lane.b32.xlu0 %v396, 16
    %v2530 = vpop.permute.xlu0 %2529
    %2531 = vrot.lane.b32.xlu0 %v397, 16
    %v2532 = vpop.permute.xlu0 %2531
    %2533 = vrot.lane.b32.xlu0 %v398, 16
    %v2534 = vpop.permute.xlu0 %2533
    %2535 = vrot.lane.b32.xlu0 %v399, 16
    %v2536 = vpop.permute.xlu0 %2535
    %2537 = vrot.lane.b32.xlu0 %v400, 16
    %v2538 = vpop.permute.xlu0 %2537
    %2539 = vrot.lane.b32.xlu0 %v401, 16
    %v2540 = vpop.permute.xlu0 %2539
    %2541 = vrot.lane.b32.xlu0 %v402, 16
    %v2542 = vpop.permute.xlu0 %2541
    %2543 = vrot.lane.b32.xlu0 %v403, 16
    %v2544 = vpop.permute.xlu0 %2543
    %2545 = vrot.lane.b32.xlu0 %v404, 16
    %v2546 = vpop.permute.xlu0 %2545
    %2547 = vrot.lane.b32.xlu0 %v405, 16
    %v2548 = vpop.permute.xlu0 %2547
    %2549 = vrot.lane.b32.xlu0 %v2130, 16
    %v2550 = vpop.permute.xlu0 %2549
    %2551 = vrot.lane.b32.xlu0 %v2131, 16
    %v2552 = vpop.permute.xlu0 %2551
    %2553 = vrot.lane.b32.xlu0 %v406, 16
    %v2554 = vpop.permute.xlu0 %2553
    %2555 = vrot.lane.b32.xlu0 %v407, 16
    %v2556 = vpop.permute.xlu0 %2555
    %2557 = vrot.lane.b32.xlu0 %v408, 16
    %v2558 = vpop.permute.xlu0 %2557
    %2559 = vrot.lane.b32.xlu0 %v409, 16
    %v2560 = vpop.permute.xlu0 %2559
    %2561 = vrot.lane.b32.xlu0 %v410, 16
    %v2562 = vpop.permute.xlu0 %2561
    %2563 = vrot.lane.b32.xlu0 %v411, 16
    %v2564 = vpop.permute.xlu0 %2563
    %2565 = vrot.lane.b32.xlu0 %v412, 16
    %v2566 = vpop.permute.xlu0 %2565
    %2567 = vrot.lane.b32.xlu0 %v413, 16
    %v2568 = vpop.permute.xlu0 %2567
    %2569 = vrot.lane.b32.xlu0 %v414, 16
    %v2570 = vpop.permute.xlu0 %2569
    %2571 = vrot.lane.b32.xlu0 %v415, 16
    %v2572 = vpop.permute.xlu0 %2571
    %2573 = vrot.lane.b32.xlu0 %v416, 16
    %v2574 = vpop.permute.xlu0 %2573
    %2575 = vrot.lane.b32.xlu0 %v417, 16
    %v2576 = vpop.permute.xlu0 %2575
    %2577 = vrot.lane.b32.xlu0 %v418, 16
    %v2578 = vpop.permute.xlu0 %2577
    %2579 = vrot.lane.b32.xlu0 %v419, 16
    %v2580 = vpop.permute.xlu0 %2579
    %2581 = vrot.lane.b32.xlu0 %v420, 16
    %v2582 = vpop.permute.xlu0 %2581
    %2583 = vrot.lane.b32.xlu0 %v421, 16
    %v2584 = vpop.permute.xlu0 %2583
    %2585 = vrot.lane.b32.xlu0 %v422, 16
    %v2586 = vpop.permute.xlu0 %2585
    %2587 = vrot.lane.b32.xlu0 %v423, 16
    %v2588 = vpop.permute.xlu0 %2587
    %2589 = vrot.lane.b32.xlu0 %v424, 16
    %v2590 = vpop.permute.xlu0 %2589
    %2591 = vrot.lane.b32.xlu0 %v425, 16
    %v2592 = vpop.permute.xlu0 %2591
    %2593 = vrot.lane.b32.xlu0 %v426, 16
    %v2594 = vpop.permute.xlu0 %2593
    %2595 = vrot.lane.b32.xlu0 %v427, 16
    %v2596 = vpop.permute.xlu0 %2595
    %2597 = vrot.lane.b32.xlu0 %v428, 16
    %v2598 = vpop.permute.xlu0 %2597
    %2599 = vrot.lane.b32.xlu0 %v429, 16
    %v2600 = vpop.permute.xlu0 %2599
    %2601 = vrot.lane.b32.xlu0 %v430, 16
    %v2602 = vpop.permute.xlu0 %2601
    %2603 = vrot.lane.b32.xlu0 %v431, 16
    %v2604 = vpop.permute.xlu0 %2603
    %2605 = vrot.lane.b32.xlu0 %v432, 16
    %v2606 = vpop.permute.xlu0 %2605
    %2607 = vrot.lane.b32.xlu0 %v433, 16
    %v2608 = vpop.permute.xlu0 %2607
    %2609 = vrot.lane.b32.xlu0 %v434, 16
    %v2610 = vpop.permute.xlu0 %2609
    %2611 = vrot.lane.b32.xlu0 %v435, 16
    %v2612 = vpop.permute.xlu0 %2611
    %2613 = vrot.lane.b32.xlu0 %v2132, 16
    %v2614 = vpop.permute.xlu0 %2613
    %2615 = vrot.lane.b32.xlu0 %v2133, 16
    %v2616 = vpop.permute.xlu0 %2615
    %vm2681 = vcmask 158848
    %2682 = vst.msk [vmem:[#allocation2] sm:$0xf] %vm2681, %v2490
    %2683 = vst.msk [vmem:[#allocation2 + $0x4] sm:$0xf] %vm2681, %v2492
    %2684 = vst.msk [vmem:[#allocation2 + $0x8] sm:$0xf] %vm2681, %v2494
    %2685 = vst.msk [vmem:[#allocation2 + $0xc] sm:$0xf] %vm2681, %v2496
    %2686 = vst.msk [vmem:[#allocation2 + $0x10] sm:$0xf] %vm2681, %v2498
    %2687 = vst.msk [vmem:[#allocation2 + $0x14] sm:$0xf] %vm2681, %v2500
    %2688 = vst.msk [vmem:[#allocation2 + $0x18] sm:$0xf] %vm2681, %v2502
    %2689 = vst.msk [vmem:[#allocation2 + $0x1c] sm:$0xf] %vm2681, %v2504
    %2690 = vst.msk [vmem:[#allocation2 + $0x20] sm:$0xf] %vm2681, %v2506
    %2691 = vst.msk [vmem:[#allocation2 + $0x24] sm:$0xf] %vm2681, %v2508
    %2692 = vst.msk [vmem:[#allocation2 + $0x28] sm:$0xf] %vm2681, %v2510
    %2693 = vst.msk [vmem:[#allocation2 + $0x2c] sm:$0xf] %vm2681, %v2512
    %2694 = vst.msk [vmem:[#allocation2 + $0x30] sm:$0xf] %vm2681, %v2514
    %2695 = vst.msk [vmem:[#allocation2 + $0x34] sm:$0xf] %vm2681, %v2516
    %2696 = vst.msk [vmem:[#allocation2 + $0x38] sm:$0xf] %vm2681, %v2518
    %2697 = vst.msk [vmem:[#allocation2 + $0x3c] sm:$0xf] %vm2681, %v2520
    %2698 = vst.msk [vmem:[#allocation2 + $0x40] sm:$0xf] %vm2681, %v2522
    %2699 = vst.msk [vmem:[#allocation2 + $0x44] sm:$0xf] %vm2681, %v2524
    %2700 = vst.msk [vmem:[#allocation2 + $0x48] sm:$0xf] %vm2681, %v2526
    %2701 = vst.msk [vmem:[#allocation2 + $0x4c] sm:$0xf] %vm2681, %v2528
    %2702 = vst.msk [vmem:[#allocation2 + $0x50] sm:$0xf] %vm2681, %v2530
    %2703 = vst.msk [vmem:[#allocation2 + $0x54] sm:$0xf] %vm2681, %v2532
    %2704 = vst.msk [vmem:[#allocation2 + $0x58] sm:$0xf] %vm2681, %v2534
    %2705 = vst.msk [vmem:[#allocation2 + $0x5c] sm:$0xf] %vm2681, %v2536
    %2706 = vst.msk [vmem:[#allocation2 + $0x60] sm:$0xf] %vm2681, %v2538
    %2707 = vst.msk [vmem:[#allocation2 + $0x64] sm:$0xf] %vm2681, %v2540
    %2708 = vst.msk [vmem:[#allocation2 + $0x68] sm:$0xf] %vm2681, %v2542
    %2709 = vst.msk [vmem:[#allocation2 + $0x6c] sm:$0xf] %vm2681, %v2544
    %2710 = vst.msk [vmem:[#allocation2 + $0x70] sm:$0xf] %vm2681, %v2546
    %2711 = vst.msk [vmem:[#allocation2 + $0x74] sm:$0xf] %vm2681, %v2548
    %2712 = vst.msk [vmem:[#allocation2 + $0x78] sm:$0xf] %vm2681, %v2550
    %2713 = vst.msk [vmem:[#allocation2 + $0x7c] sm:$0xf] %vm2681, %v2552
    %2714 = vst.msk [vmem:[#allocation2 + $0x80] sm:$0xf] %vm2681, %v2554
    %2715 = vst.msk [vmem:[#allocation2 + $0x84] sm:$0xf] %vm2681, %v2556
    %2716 = vst.msk [vmem:[#allocation2 + $0x88] sm:$0xf] %vm2681, %v2558
    %2717 = vst.msk [vmem:[#allocation2 + $0x8c] sm:$0xf] %vm2681, %v2560
    %2718 = vst.msk [vmem:[#allocation2 + $0x90] sm:$0xf] %vm2681, %v2562
    %2719 = vst.msk [vmem:[#allocation2 + $0x94] sm:$0xf] %vm2681, %v2564
    %2720 = vst.msk [vmem:[#allocation2 + $0x98] sm:$0xf] %vm2681, %v2566
    %2721 = vst.msk [vmem:[#allocation2 + $0x9c] sm:$0xf] %vm2681, %v2568
    %2722 = vst.msk [vmem:[#allocation2 + $0xa0] sm:$0xf] %vm2681, %v2570
    %2723 = vst.msk [vmem:[#allocation2 + $0xa4] sm:$0xf] %vm2681, %v2572
    %2724 = vst.msk [vmem:[#allocation2 + $0xa8] sm:$0xf] %vm2681, %v2574
    %2725 = vst.msk [vmem:[#allocation2 + $0xac] sm:$0xf] %vm2681, %v2576
    %2726 = vst.msk [vmem:[#allocation2 + $0xb0] sm:$0xf] %vm2681, %v2578
    %2727 = vst.msk [vmem:[#allocation2 + $0xb4] sm:$0xf] %vm2681, %v2580
    %2728 = vst.msk [vmem:[#allocation2 + $0xb8] sm:$0xf] %vm2681, %v2582
    %2729 = vst.msk [vmem:[#allocation2 + $0xbc] sm:$0xf] %vm2681, %v2584
    %2730 = vst.msk [vmem:[#allocation2 + $0xc0] sm:$0xf] %vm2681, %v2586
    %2731 = vst.msk [vmem:[#allocation2 + $0xc4] sm:$0xf] %vm2681, %v2588
    %2732 = vst.msk [vmem:[#allocation2 + $0xc8] sm:$0xf] %vm2681, %v2590
    %2733 = vst.msk [vmem:[#allocation2 + $0xcc] sm:$0xf] %vm2681, %v2592
    %2734 = vst.msk [vmem:[#allocation2 + $0xd0] sm:$0xf] %vm2681, %v2594
    %2735 = vst.msk [vmem:[#allocation2 + $0xd4] sm:$0xf] %vm2681, %v2596
    %2736 = vst.msk [vmem:[#allocation2 + $0xd8] sm:$0xf] %vm2681, %v2598
    %2737 = vst.msk [vmem:[#allocation2 + $0xdc] sm:$0xf] %vm2681, %v2600
    %2738 = vst.msk [vmem:[#allocation2 + $0xe0] sm:$0xf] %vm2681, %v2602
    %2739 = vst.msk [vmem:[#allocation2 + $0xe4] sm:$0xf] %vm2681, %v2604
    %2740 = vst.msk [vmem:[#allocation2 + $0xe8] sm:$0xf] %vm2681, %v2606
    %2741 = vst.msk [vmem:[#allocation2 + $0xec] sm:$0xf] %vm2681, %v2608
    %2742 = vst.msk [vmem:[#allocation2 + $0xf0] sm:$0xf] %vm2681, %v2610
    %2743 = vst.msk [vmem:[#allocation2 + $0xf4] sm:$0xf] %vm2681, %v2612
    %2744 = vst.msk [vmem:[#allocation2 + $0xf8] sm:$0xf] %vm2681, %v2614
    %2745 = vst.msk [vmem:[#allocation2 + $0xfc] sm:$0xf] %vm2681, %v2616
    %vm2746 = vcmask 191651
    %vm2747 = vmand %vm2746, %vm1353
    %v2748 = vld [vmem:[#allocation2 + $0x4] sm:$0x8]
    %v2749 = vsel %vm2747, 0, %v2748
    %2750 = vst [vmem:[#allocation2 + $0x4] sm:$0x8] %v2749
    %v2751 = vld [vmem:[#allocation2 + $0xc] sm:$0x8]
    %v2752 = vsel %vm2747, 0, %v2751
    %2753 = vst [vmem:[#allocation2 + $0xc] sm:$0x8] %v2752
    %v2754 = vld [vmem:[#allocation2 + $0x14] sm:$0x8]
    %v2755 = vsel %vm2747, 0, %v2754
    %2756 = vst [vmem:[#allocation2 + $0x14] sm:$0x8] %v2755
    %v2757 = vld [vmem:[#allocation2 + $0x1c] sm:$0x8]
    %v2758 = vsel %vm2747, 0, %v2757
    %2759 = vst [vmem:[#allocation2 + $0x1c] sm:$0x8] %v2758
    %v2760 = vld [vmem:[#allocation2 + $0x24] sm:$0x8]
    %v2761 = vsel %vm2747, 0, %v2760
    %2762 = vst [vmem:[#allocation2 + $0x24] sm:$0x8] %v2761
    %v2763 = vld [vmem:[#allocation2 + $0x2c] sm:$0x8]
    %v2764 = vsel %vm2747, 0, %v2763
    %2765 = vst [vmem:[#allocation2 + $0x2c] sm:$0x8] %v2764
    %v2766 = vld [vmem:[#allocation2 + $0x34] sm:$0x8]
    %v2767 = vsel %vm2747, 0, %v2766
    %2768 = vst [vmem:[#allocation2 + $0x34] sm:$0x8] %v2767
    %v2769 = vld [vmem:[#allocation2 + $0x3c] sm:$0x8]
    %v2770 = vsel %vm2747, 0, %v2769
    %2771 = vst [vmem:[#allocation2 + $0x3c] sm:$0x8] %v2770
    %v2772 = vld [vmem:[#allocation2 + $0x44] sm:$0x8]
    %v2773 = vsel %vm2747, 0, %v2772
    %2774 = vst [vmem:[#allocation2 + $0x44] sm:$0x8] %v2773
    %v2775 = vld [vmem:[#allocation2 + $0x4c] sm:$0x8]
    %v2776 = vsel %vm2747, 0, %v2775
    %2777 = vst [vmem:[#allocation2 + $0x4c] sm:$0x8] %v2776
    %v2778 = vld [vmem:[#allocation2 + $0x54] sm:$0x8]
    %v2779 = vsel %vm2747, 0, %v2778
    %2780 = vst [vmem:[#allocation2 + $0x54] sm:$0x8] %v2779
    %v2781 = vld [vmem:[#allocation2 + $0x5c] sm:$0x8]
    %v2782 = vsel %vm2747, 0, %v2781
    %2783 = vst [vmem:[#allocation2 + $0x5c] sm:$0x8] %v2782
    %v2784 = vld [vmem:[#allocation2 + $0x64] sm:$0x8]
    %v2785 = vsel %vm2747, 0, %v2784
    %2786 = vst [vmem:[#allocation2 + $0x64] sm:$0x8] %v2785
    %v2787 = vld [vmem:[#allocation2 + $0x6c] sm:$0x8]
    %v2788 = vsel %vm2747, 0, %v2787
    %2789 = vst [vmem:[#allocation2 + $0x6c] sm:$0x8] %v2788
    %v2790 = vld [vmem:[#allocation2 + $0x74] sm:$0x8]
    %v2791 = vsel %vm2747, 0, %v2790
    %2792 = vst [vmem:[#allocation2 + $0x74] sm:$0x8] %v2791
    %v2793 = vld [vmem:[#allocation2 + $0x7c] sm:$0x8]
    %v2794 = vsel %vm2747, 0, %v2793
    %2795 = vst [vmem:[#allocation2 + $0x7c] sm:$0x8] %v2794
    %v2796 = vld [vmem:[#allocation2 + $0x84] sm:$0x8]
    %v2797 = vsel %vm2747, 0, %v2796
    %2798 = vst [vmem:[#allocation2 + $0x84] sm:$0x8] %v2797
    %v2799 = vld [vmem:[#allocation2 + $0x8c] sm:$0x8]
    %v2800 = vsel %vm2747, 0, %v2799
    %2801 = vst [vmem:[#allocation2 + $0x8c] sm:$0x8] %v2800
    %v2802 = vld [vmem:[#allocation2 + $0x94] sm:$0x8]
    %v2803 = vsel %vm2747, 0, %v2802
    %2804 = vst [vmem:[#allocation2 + $0x94] sm:$0x8] %v2803
    %v2805 = vld [vmem:[#allocation2 + $0x9c] sm:$0x8]
    %v2806 = vsel %vm2747, 0, %v2805
    %2807 = vst [vmem:[#allocation2 + $0x9c] sm:$0x8] %v2806
    %v2808 = vld [vmem:[#allocation2 + $0xa4] sm:$0x8]
    %v2809 = vsel %vm2747, 0, %v2808
    %2810 = vst [vmem:[#allocation2 + $0xa4] sm:$0x8] %v2809
    %v2811 = vld [vmem:[#allocation2 + $0xac] sm:$0x8]
    %v2812 = vsel %vm2747, 0, %v2811
    %2813 = vst [vmem:[#allocation2 + $0xac] sm:$0x8] %v2812
    %v2814 = vld [vmem:[#allocation2 + $0xb4] sm:$0x8]
    %v2815 = vsel %vm2747, 0, %v2814
    %2816 = vst [vmem:[#allocation2 + $0xb4] sm:$0x8] %v2815
    %v2817 = vld [vmem:[#allocation2 + $0xbc] sm:$0x8]
    %v2818 = vsel %vm2747, 0, %v2817
    %2819 = vst [vmem:[#allocation2 + $0xbc] sm:$0x8] %v2818
    %v2820 = vld [vmem:[#allocation2 + $0xc4] sm:$0x8]
    %v2821 = vsel %vm2747, 0, %v2820
    %2822 = vst [vmem:[#allocation2 + $0xc4] sm:$0x8] %v2821
    %v2823 = vld [vmem:[#allocation2 + $0xcc] sm:$0x8]
    %v2824 = vsel %vm2747, 0, %v2823
    %2825 = vst [vmem:[#allocation2 + $0xcc] sm:$0x8] %v2824
    %v2826 = vld [vmem:[#allocation2 + $0xd4] sm:$0x8]
    %v2827 = vsel %vm2747, 0, %v2826
    %2828 = vst [vmem:[#allocation2 + $0xd4] sm:$0x8] %v2827
    %v2829 = vld [vmem:[#allocation2 + $0xdc] sm:$0x8]
    %v2830 = vsel %vm2747, 0, %v2829
    %2831 = vst [vmem:[#allocation2 + $0xdc] sm:$0x8] %v2830
    %v2832 = vld [vmem:[#allocation2 + $0xe4] sm:$0x8]
    %v2833 = vsel %vm2747, 0, %v2832
    %2834 = vst [vmem:[#allocation2 + $0xe4] sm:$0x8] %v2833
    %v2835 = vld [vmem:[#allocation2 + $0xec] sm:$0x8]
    %v2836 = vsel %vm2747, 0, %v2835
    %2837 = vst [vmem:[#allocation2 + $0xec] sm:$0x8] %v2836
    %v2838 = vld [vmem:[#allocation2 + $0xf4] sm:$0x8]
    %v2839 = vsel %vm2747, 0, %v2838
    %2840 = vst [vmem:[#allocation2 + $0xf4] sm:$0x8] %v2839
    %v2841 = vld [vmem:[#allocation2 + $0xfc] sm:$0x8]
    %v2842 = vsel %vm2747, 0, %v2841
    %2843 = vst [vmem:[#allocation2 + $0xfc] sm:$0x8] %v2842
    %v2844 = vrot.slane %v2135, 4
    %v2845 = vrot.slane %v2138, 5
    %v2846 = vor.u32 %v2844, %v2845
    %v2847 = vrot.slane %v2846, 4
    %v2848 = vrot.slane %v2146, 5
    %v2849 = vsel %vm1453, %v2847, %v2848
    %v2850 = vrot.slane %v2143, 4
    %v2851 = vor.u32 %v2850, %v2848
    %v2852 = vrot.slane %v2851, 4
    %v2853 = vrot.slane %v2151, 4
    %v2854 = vrot.slane %v2154, 5
    %v2855 = vor.u32 %v2853, %v2854
    %v2856 = vrot.slane %v2855, 4
    %v2857 = vrot.slane %v2162, 5
    %v2858 = vsel %vm1453, %v2856, %v2857
    %v2859 = vrot.slane %v2159, 4
    %v2860 = vor.u32 %v2859, %v2857
    %v2861 = vrot.slane %v2860, 4
    %2862 = vrot.lane.b32.xlu0 %v1459, 20
    %v2863 = vpop.permute.xlu0 %2862
    %2864 = vrot.lane.b32.xlu0 %v1462, 20
    %v2865 = vpop.permute.xlu0 %2864
    %2866 = vrot.lane.b32.xlu0 %v1468, 20
    %v2867 = vpop.permute.xlu0 %2866
    %2868 = vrot.lane.b32.xlu0 %v1471, 20
    %v2869 = vpop.permute.xlu0 %2868
    %2870 = vrot.lane.b32.xlu0 %v1477, 20
    %v2871 = vpop.permute.xlu0 %2870
    %2872 = vrot.lane.b32.xlu0 %v1480, 20
    %v2873 = vpop.permute.xlu0 %2872
    %2874 = vrot.lane.b32.xlu0 %v1486, 20
    %v2875 = vpop.permute.xlu0 %2874
    %2876 = vrot.lane.b32.xlu0 %v1489, 20
    %v2877 = vpop.permute.xlu0 %2876
    %2878 = vrot.lane.b32.xlu0 %v1495, 20
    %v2879 = vpop.permute.xlu0 %2878
    %2880 = vrot.lane.b32.xlu0 %v1498, 20
    %v2881 = vpop.permute.xlu0 %2880
    %2882 = vrot.lane.b32.xlu0 %v1504, 20
    %v2883 = vpop.permute.xlu0 %2882
    %2884 = vrot.lane.b32.xlu0 %v1507, 20
    %v2885 = vpop.permute.xlu0 %2884
    %2886 = vrot.lane.b32.xlu0 %v1513, 20
    %v2887 = vpop.permute.xlu0 %2886
    %2888 = vrot.lane.b32.xlu0 %v1516, 20
    %v2889 = vpop.permute.xlu0 %2888
    %2890 = vrot.lane.b32.xlu0 %v1522, 20
    %v2891 = vpop.permute.xlu0 %2890
    %2892 = vrot.lane.b32.xlu0 %v1525, 20
    %v2893 = vpop.permute.xlu0 %2892
    %2894 = vrot.lane.b32.xlu0 %v1531, 20
    %v2895 = vpop.permute.xlu0 %2894
    %2896 = vrot.lane.b32.xlu0 %v1534, 20
    %v2897 = vpop.permute.xlu0 %2896
    %2898 = vrot.lane.b32.xlu0 %v1540, 20
    %v2899 = vpop.permute.xlu0 %2898
    %2900 = vrot.lane.b32.xlu0 %v1543, 20
    %v2901 = vpop.permute.xlu0 %2900
    %2902 = vrot.lane.b32.xlu0 %v1549, 20
    %v2903 = vpop.permute.xlu0 %2902
    %2904 = vrot.lane.b32.xlu0 %v1552, 20
    %v2905 = vpop.permute.xlu0 %2904
    %2906 = vrot.lane.b32.xlu0 %v1558, 20
    %v2907 = vpop.permute.xlu0 %2906
    %2908 = vrot.lane.b32.xlu0 %v1561, 20
    %v2909 = vpop.permute.xlu0 %2908
    %2910 = vrot.lane.b32.xlu0 %v1567, 20
    %v2911 = vpop.permute.xlu0 %2910
    %2912 = vrot.lane.b32.xlu0 %v1570, 20
    %v2913 = vpop.permute.xlu0 %2912
    %2914 = vrot.lane.b32.xlu0 %v1576, 20
    %v2915 = vpop.permute.xlu0 %2914
    %2916 = vrot.lane.b32.xlu0 %v1579, 20
    %v2917 = vpop.permute.xlu0 %2916
    %2918 = vrot.lane.b32.xlu0 %v1585, 20
    %v2919 = vpop.permute.xlu0 %2918
    %2920 = vrot.lane.b32.xlu0 %v1588, 20
    %v2921 = vpop.permute.xlu0 %2920
    %2922 = vrot.lane.b32.xlu0 %v2849, 20
    %v2923 = vpop.permute.xlu0 %2922
    %2924 = vrot.lane.b32.xlu0 %v2852, 20
    %v2925 = vpop.permute.xlu0 %2924
    %2926 = vrot.lane.b32.xlu0 %v1594, 20
    %v2927 = vpop.permute.xlu0 %2926
    %2928 = vrot.lane.b32.xlu0 %v1597, 20
    %v2929 = vpop.permute.xlu0 %2928
    %2930 = vrot.lane.b32.xlu0 %v1603, 20
    %v2931 = vpop.permute.xlu0 %2930
    %2932 = vrot.lane.b32.xlu0 %v1606, 20
    %v2933 = vpop.permute.xlu0 %2932
    %2934 = vrot.lane.b32.xlu0 %v1612, 20
    %v2935 = vpop.permute.xlu0 %2934
    %2936 = vrot.lane.b32.xlu0 %v1615, 20
    %v2937 = vpop.permute.xlu0 %2936
    %2938 = vrot.lane.b32.xlu0 %v1621, 20
    %v2939 = vpop.permute.xlu0 %2938
    %2940 = vrot.lane.b32.xlu0 %v1624, 20
    %v2941 = vpop.permute.xlu0 %2940
    %2942 = vrot.lane.b32.xlu0 %v1630, 20
    %v2943 = vpop.permute.xlu0 %2942
    %2944 = vrot.lane.b32.xlu0 %v1633, 20
    %v2945 = vpop.permute.xlu0 %2944
    %2946 = vrot.lane.b32.xlu0 %v1639, 20
    %v2947 = vpop.permute.xlu0 %2946
    %2948 = vrot.lane.b32.xlu0 %v1642, 20
    %v2949 = vpop.permute.xlu0 %2948
    %2950 = vrot.lane.b32.xlu0 %v1648, 20
    %v2951 = vpop.permute.xlu0 %2950
    %2952 = vrot.lane.b32.xlu0 %v1651, 20
    %v2953 = vpop.permute.xlu0 %2952
    %2954 = vrot.lane.b32.xlu0 %v1657, 20
    %v2955 = vpop.permute.xlu0 %2954
    %2956 = vrot.lane.b32.xlu0 %v1660, 20
    %v2957 = vpop.permute.xlu0 %2956
    %2958 = vrot.lane.b32.xlu0 %v1666, 20
    %v2959 = vpop.permute.xlu0 %2958
    %2960 = vrot.lane.b32.xlu0 %v1669, 20
    %v2961 = vpop.permute.xlu0 %2960
    %2962 = vrot.lane.b32.xlu0 %v1675, 20
    %v2963 = vpop.permute.xlu0 %2962
    %2964 = vrot.lane.b32.xlu0 %v1678, 20
    %v2965 = vpop.permute.xlu0 %2964
    %2966 = vrot.lane.b32.xlu0 %v1684, 20
    %v2967 = vpop.permute.xlu0 %2966
    %2968 = vrot.lane.b32.xlu0 %v1687, 20
    %v2969 = vpop.permute.xlu0 %2968
    %2970 = vrot.lane.b32.xlu0 %v1693, 20
    %v2971 = vpop.permute.xlu0 %2970
    %2972 = vrot.lane.b32.xlu0 %v1696, 20
    %v2973 = vpop.permute.xlu0 %2972
    %2974 = vrot.lane.b32.xlu0 %v1702, 20
    %v2975 = vpop.permute.xlu0 %2974
    %2976 = vrot.lane.b32.xlu0 %v1705, 20
    %v2977 = vpop.permute.xlu0 %2976
    %2978 = vrot.lane.b32.xlu0 %v1711, 20
    %v2979 = vpop.permute.xlu0 %2978
    %2980 = vrot.lane.b32.xlu0 %v1714, 20
    %v2981 = vpop.permute.xlu0 %2980
    %2982 = vrot.lane.b32.xlu0 %v1720, 20
    %v2983 = vpop.permute.xlu0 %2982
    %2984 = vrot.lane.b32.xlu0 %v1723, 20
    %v2985 = vpop.permute.xlu0 %2984
    %2986 = vrot.lane.b32.xlu0 %v2858, 20
    %v2987 = vpop.permute.xlu0 %2986
    %2988 = vrot.lane.b32.xlu0 %v2861, 20
    %v2989 = vpop.permute.xlu0 %2988
    %vm3054 = vcmask 191648
    %3055 = vst.msk [vmem:[#allocation2] sm:$0xf] %vm3054, %v2863
    %vm3056 = vcmask 191648
    %vm3057 = vmand %vm3056, %vm1451
    %v3058 = vld [vmem:[#allocation2 + $0x4] sm:$0xf]
    %v3059 = vsel %vm3057, %v2865, %v3058
    %3060 = vst [vmem:[#allocation2 + $0x4] sm:$0xf] %v3059
    %3061 = vst.msk [vmem:[#allocation2 + $0x8] sm:$0xf] %vm3054, %v2867
    %v3062 = vld [vmem:[#allocation2 + $0xc] sm:$0xf]
    %v3063 = vsel %vm3057, %v2869, %v3062
    %3064 = vst [vmem:[#allocation2 + $0xc] sm:$0xf] %v3063
    %3065 = vst.msk [vmem:[#allocation2 + $0x10] sm:$0xf] %vm3054, %v2871
    %v3066 = vld [vmem:[#allocation2 + $0x14] sm:$0xf]
    %v3067 = vsel %vm3057, %v2873, %v3066
    %3068 = vst [vmem:[#allocation2 + $0x14] sm:$0xf] %v3067
    %3069 = vst.msk [vmem:[#allocation2 + $0x18] sm:$0xf] %vm3054, %v2875
    %v3070 = vld [vmem:[#allocation2 + $0x1c] sm:$0xf]
    %v3071 = vsel %vm3057, %v2877, %v3070
    %3072 = vst [vmem:[#allocation2 + $0x1c] sm:$0xf] %v3071
    %3073 = vst.msk [vmem:[#allocation2 + $0x20] sm:$0xf] %vm3054, %v2879
    %v3074 = vld [vmem:[#allocation2 + $0x24] sm:$0xf]
    %v3075 = vsel %vm3057, %v2881, %v3074
    %3076 = vst [vmem:[#allocation2 + $0x24] sm:$0xf] %v3075
    %3077 = vst.msk [vmem:[#allocation2 + $0x28] sm:$0xf] %vm3054, %v2883
    %v3078 = vld [vmem:[#allocation2 + $0x2c] sm:$0xf]
    %v3079 = vsel %vm3057, %v2885, %v3078
    %3080 = vst [vmem:[#allocation2 + $0x2c] sm:$0xf] %v3079
    %3081 = vst.msk [vmem:[#allocation2 + $0x30] sm:$0xf] %vm3054, %v2887
    %v3082 = vld [vmem:[#allocation2 + $0x34] sm:$0xf]
    %v3083 = vsel %vm3057, %v2889, %v3082
    %3084 = vst [vmem:[#allocation2 + $0x34] sm:$0xf] %v3083
    %3085 = vst.msk [vmem:[#allocation2 + $0x38] sm:$0xf] %vm3054, %v2891
    %v3086 = vld [vmem:[#allocation2 + $0x3c] sm:$0xf]
    %v3087 = vsel %vm3057, %v2893, %v3086
    %3088 = vst [vmem:[#allocation2 + $0x3c] sm:$0xf] %v3087
    %3089 = vst.msk [vmem:[#allocation2 + $0x40] sm:$0xf] %vm3054, %v2895
    %v3090 = vld [vmem:[#allocation2 + $0x44] sm:$0xf]
    %v3091 = vsel %vm3057, %v2897, %v3090
    %3092 = vst [vmem:[#allocation2 + $0x44] sm:$0xf] %v3091
    %3093 = vst.msk [vmem:[#allocation2 + $0x48] sm:$0xf] %vm3054, %v2899
    %v3094 = vld [vmem:[#allocation2 + $0x4c] sm:$0xf]
    %v3095 = vsel %vm3057, %v2901, %v3094
    %3096 = vst [vmem:[#allocation2 + $0x4c] sm:$0xf] %v3095
    %3097 = vst.msk [vmem:[#allocation2 + $0x50] sm:$0xf] %vm3054, %v2903
    %v3098 = vld [vmem:[#allocation2 + $0x54] sm:$0xf]
    %v3099 = vsel %vm3057, %v2905, %v3098
    %3100 = vst [vmem:[#allocation2 + $0x54] sm:$0xf] %v3099
    %3101 = vst.msk [vmem:[#allocation2 + $0x58] sm:$0xf] %vm3054, %v2907
    %v3102 = vld [vmem:[#allocation2 + $0x5c] sm:$0xf]
    %v3103 = vsel %vm3057, %v2909, %v3102
    %3104 = vst [vmem:[#allocation2 + $0x5c] sm:$0xf] %v3103
    %3105 = vst.msk [vmem:[#allocation2 + $0x60] sm:$0xf] %vm3054, %v2911
    %v3106 = vld [vmem:[#allocation2 + $0x64] sm:$0xf]
    %v3107 = vsel %vm3057, %v2913, %v3106
    %3108 = vst [vmem:[#allocation2 + $0x64] sm:$0xf] %v3107
    %3109 = vst.msk [vmem:[#allocation2 + $0x68] sm:$0xf] %vm3054, %v2915
    %v3110 = vld [vmem:[#allocation2 + $0x6c] sm:$0xf]
    %v3111 = vsel %vm3057, %v2917, %v3110
    %3112 = vst [vmem:[#allocation2 + $0x6c] sm:$0xf] %v3111
    %3113 = vst.msk [vmem:[#allocation2 + $0x70] sm:$0xf] %vm3054, %v2919
    %v3114 = vld [vmem:[#allocation2 + $0x74] sm:$0xf]
    %v3115 = vsel %vm3057, %v2921, %v3114
    %3116 = vst [vmem:[#allocation2 + $0x74] sm:$0xf] %v3115
    %3117 = vst.msk [vmem:[#allocation2 + $0x78] sm:$0xf] %vm3054, %v2923
    %v3118 = vld [vmem:[#allocation2 + $0x7c] sm:$0xf]
    %v3119 = vsel %vm3057, %v2925, %v3118
    %3120 = vst [vmem:[#allocation2 + $0x7c] sm:$0xf] %v3119
    %3121 = vst.msk [vmem:[#allocation2 + $0x80] sm:$0xf] %vm3054, %v2927
    %v3122 = vld [vmem:[#allocation2 + $0x84] sm:$0xf]
    %v3123 = vsel %vm3057, %v2929, %v3122
    %3124 = vst [vmem:[#allocation2 + $0x84] sm:$0xf] %v3123
    %3125 = vst.msk [vmem:[#allocation2 + $0x88] sm:$0xf] %vm3054, %v2931
    %v3126 = vld [vmem:[#allocation2 + $0x8c] sm:$0xf]
    %v3127 = vsel %vm3057, %v2933, %v3126
    %3128 = vst [vmem:[#allocation2 + $0x8c] sm:$0xf] %v3127
    %3129 = vst.msk [vmem:[#allocation2 + $0x90] sm:$0xf] %vm3054, %v2935
    %v3130 = vld [vmem:[#allocation2 + $0x94] sm:$0xf]
    %v3131 = vsel %vm3057, %v2937, %v3130
    %3132 = vst [vmem:[#allocation2 + $0x94] sm:$0xf] %v3131
    %3133 = vst.msk [vmem:[#allocation2 + $0x98] sm:$0xf] %vm3054, %v2939
    %v3134 = vld [vmem:[#allocation2 + $0x9c] sm:$0xf]
    %v3135 = vsel %vm3057, %v2941, %v3134
    %3136 = vst [vmem:[#allocation2 + $0x9c] sm:$0xf] %v3135
    %3137 = vst.msk [vmem:[#allocation2 + $0xa0] sm:$0xf] %vm3054, %v2943
    %v3138 = vld [vmem:[#allocation2 + $0xa4] sm:$0xf]
    %v3139 = vsel %vm3057, %v2945, %v3138
    %3140 = vst [vmem:[#allocation2 + $0xa4] sm:$0xf] %v3139
    %3141 = vst.msk [vmem:[#allocation2 + $0xa8] sm:$0xf] %vm3054, %v2947
    %v3142 = vld [vmem:[#allocation2 + $0xac] sm:$0xf]
    %v3143 = vsel %vm3057, %v2949, %v3142
    %3144 = vst [vmem:[#allocation2 + $0xac] sm:$0xf] %v3143
    %3145 = vst.msk [vmem:[#allocation2 + $0xb0] sm:$0xf] %vm3054, %v2951
    %v3146 = vld [vmem:[#allocation2 + $0xb4] sm:$0xf]
    %v3147 = vsel %vm3057, %v2953, %v3146
    %3148 = vst [vmem:[#allocation2 + $0xb4] sm:$0xf] %v3147
    %3149 = vst.msk [vmem:[#allocation2 + $0xb8] sm:$0xf] %vm3054, %v2955
    %v3150 = vld [vmem:[#allocation2 + $0xbc] sm:$0xf]
    %v3151 = vsel %vm3057, %v2957, %v3150
    %3152 = vst [vmem:[#allocation2 + $0xbc] sm:$0xf] %v3151
    %3153 = vst.msk [vmem:[#allocation2 + $0xc0] sm:$0xf] %vm3054, %v2959
    %v3154 = vld [vmem:[#allocation2 + $0xc4] sm:$0xf]
    %v3155 = vsel %vm3057, %v2961, %v3154
    %3156 = vst [vmem:[#allocation2 + $0xc4] sm:$0xf] %v3155
    %3157 = vst.msk [vmem:[#allocation2 + $0xc8] sm:$0xf] %vm3054, %v2963
    %v3158 = vld [vmem:[#allocation2 + $0xcc] sm:$0xf]
    %v3159 = vsel %vm3057, %v2965, %v3158
    %3160 = vst [vmem:[#allocation2 + $0xcc] sm:$0xf] %v3159
    %3161 = vst.msk [vmem:[#allocation2 + $0xd0] sm:$0xf] %vm3054, %v2967
    %v3162 = vld [vmem:[#allocation2 + $0xd4] sm:$0xf]
    %v3163 = vsel %vm3057, %v2969, %v3162
    %3164 = vst [vmem:[#allocation2 + $0xd4] sm:$0xf] %v3163
    %3165 = vst.msk [vmem:[#allocation2 + $0xd8] sm:$0xf] %vm3054, %v2971
    %v3166 = vld [vmem:[#allocation2 + $0xdc] sm:$0xf]
    %v3167 = vsel %vm3057, %v2973, %v3166
    %3168 = vst [vmem:[#allocation2 + $0xdc] sm:$0xf] %v3167
    %3169 = vst.msk [vmem:[#allocation2 + $0xe0] sm:$0xf] %vm3054, %v2975
    %v3170 = vld [vmem:[#allocation2 + $0xe4] sm:$0xf]
    %v3171 = vsel %vm3057, %v2977, %v3170
    %3172 = vst [vmem:[#allocation2 + $0xe4] sm:$0xf] %v3171
    %3173 = vst.msk [vmem:[#allocation2 + $0xe8] sm:$0xf] %vm3054, %v2979
    %v3174 = vld [vmem:[#allocation2 + $0xec] sm:$0xf]
    %v3175 = vsel %vm3057, %v2981, %v3174
    %3176 = vst [vmem:[#allocation2 + $0xec] sm:$0xf] %v3175
    %3177 = vst.msk [vmem:[#allocation2 + $0xf0] sm:$0xf] %vm3054, %v2983
    %v3178 = vld [vmem:[#allocation2 + $0xf4] sm:$0xf]
    %v3179 = vsel %vm3057, %v2985, %v3178
    %3180 = vst [vmem:[#allocation2 + $0xf4] sm:$0xf] %v3179
    %3181 = vst.msk [vmem:[#allocation2 + $0xf8] sm:$0xf] %vm3054, %v2987
    %v3182 = vld [vmem:[#allocation2 + $0xfc] sm:$0xf]
    %v3183 = vsel %vm3057, %v2989, %v3182
    %3184 = vst [vmem:[#allocation2 + $0xfc] sm:$0xf] %v3183
    %s3185 = scalar_lea.vmem [#allocation2], 120
    %vm3186 = vcmask 224448
    %3187 = vst.msk [vmem:[%s3185] sm:$0xf] %vm3186, 0
    %3188 = vst.msk [vmem:[%s3185 + $0x4] sm:$0xf] %vm3186, 0
    %3189 = vst.msk [vmem:[%s3185 + $0x80] sm:$0xf] %vm3186, 0
    %3190 = vst.msk [vmem:[%s3185 + $0x84] sm:$0xf] %vm3186, 0
    %vm3191 = vcmask 221376
    %vm3192 = vmand %vm3191, %vm188
    %v3193 = vld [vmem:[#allocation2] sm:$0x1]
    %v3194 = vsel %vm3192, 0, %v3193
    %3195 = vst [vmem:[#allocation2] sm:$0x1] %v3194
    %v3196 = vld [vmem:[#allocation2 + $0x8] sm:$0x1]
    %v3197 = vsel %vm3192, 0, %v3196
    %3198 = vst [vmem:[#allocation2 + $0x8] sm:$0x1] %v3197
    %v3199 = vld [vmem:[#allocation2 + $0x10] sm:$0x1]
    %v3200 = vsel %vm3192, 0, %v3199
    %3201 = vst [vmem:[#allocation2 + $0x10] sm:$0x1] %v3200
    %v3202 = vld [vmem:[#allocation2 + $0x18] sm:$0x1]
    %v3203 = vsel %vm3192, 0, %v3202
    %3204 = vst [vmem:[#allocation2 + $0x18] sm:$0x1] %v3203
    %v3205 = vld [vmem:[#allocation2 + $0x20] sm:$0x1]
    %v3206 = vsel %vm3192, 0, %v3205
    %3207 = vst [vmem:[#allocation2 + $0x20] sm:$0x1] %v3206
    %v3208 = vld [vmem:[#allocation2 + $0x28] sm:$0x1]
    %v3209 = vsel %vm3192, 0, %v3208
    %3210 = vst [vmem:[#allocation2 + $0x28] sm:$0x1] %v3209
    %v3211 = vld [vmem:[#allocation2 + $0x30] sm:$0x1]
    %v3212 = vsel %vm3192, 0, %v3211
    %3213 = vst [vmem:[#allocation2 + $0x30] sm:$0x1] %v3212
    %v3214 = vld [vmem:[#allocation2 + $0x38] sm:$0x1]
    %v3215 = vsel %vm3192, 0, %v3214
    %3216 = vst [vmem:[#allocation2 + $0x38] sm:$0x1] %v3215
    %v3217 = vld [vmem:[#allocation2 + $0x40] sm:$0x1]
    %v3218 = vsel %vm3192, 0, %v3217
    %3219 = vst [vmem:[#allocation2 + $0x40] sm:$0x1] %v3218
    %v3220 = vld [vmem:[#allocation2 + $0x48] sm:$0x1]
    %v3221 = vsel %vm3192, 0, %v3220
    %3222 = vst [vmem:[#allocation2 + $0x48] sm:$0x1] %v3221
    %v3223 = vld [vmem:[#allocation2 + $0x50] sm:$0x1]
    %v3224 = vsel %vm3192, 0, %v3223
    %3225 = vst [vmem:[#allocation2 + $0x50] sm:$0x1] %v3224
    %v3226 = vld [vmem:[#allocation2 + $0x58] sm:$0x1]
    %v3227 = vsel %vm3192, 0, %v3226
    %3228 = vst [vmem:[#allocation2 + $0x58] sm:$0x1] %v3227
    %v3229 = vld [vmem:[#allocation2 + $0x60] sm:$0x1]
    %v3230 = vsel %vm3192, 0, %v3229
    %3231 = vst [vmem:[#allocation2 + $0x60] sm:$0x1] %v3230
    %v3232 = vld [vmem:[#allocation2 + $0x68] sm:$0x1]
    %v3233 = vsel %vm3192, 0, %v3232
    %3234 = vst [vmem:[#allocation2 + $0x68] sm:$0x1] %v3233
    %v3235 = vld [vmem:[#allocation2 + $0x70] sm:$0x1]
    %v3236 = vsel %vm3192, 0, %v3235
    %3237 = vst [vmem:[#allocation2 + $0x70] sm:$0x1] %v3236
    %v3238 = vld [vmem:[#allocation2 + $0x78] sm:$0x1]
    %v3239 = vsel %vm3192, 0, %v3238
    %3240 = vst [vmem:[#allocation2 + $0x78] sm:$0x1] %v3239
    %v3241 = vld [vmem:[#allocation2 + $0x80] sm:$0x1]
    %v3242 = vsel %vm3192, 0, %v3241
    %3243 = vst [vmem:[#allocation2 + $0x80] sm:$0x1] %v3242
    %v3244 = vld [vmem:[#allocation2 + $0x88] sm:$0x1]
    %v3245 = vsel %vm3192, 0, %v3244
    %3246 = vst [vmem:[#allocation2 + $0x88] sm:$0x1] %v3245
    %v3247 = vld [vmem:[#allocation2 + $0x90] sm:$0x1]
    %v3248 = vsel %vm3192, 0, %v3247
    %3249 = vst [vmem:[#allocation2 + $0x90] sm:$0x1] %v3248
    %v3250 = vld [vmem:[#allocation2 + $0x98] sm:$0x1]
    %v3251 = vsel %vm3192, 0, %v3250
    %3252 = vst [vmem:[#allocation2 + $0x98] sm:$0x1] %v3251
    %v3253 = vld [vmem:[#allocation2 + $0xa0] sm:$0x1]
    %v3254 = vsel %vm3192, 0, %v3253
    %3255 = vst [vmem:[#allocation2 + $0xa0] sm:$0x1] %v3254
    %v3256 = vld [vmem:[#allocation2 + $0xa8] sm:$0x1]
    %v3257 = vsel %vm3192, 0, %v3256
    %3258 = vst [vmem:[#allocation2 + $0xa8] sm:$0x1] %v3257
    %v3259 = vld [vmem:[#allocation2 + $0xb0] sm:$0x1]
    %v3260 = vsel %vm3192, 0, %v3259
    %3261 = vst [vmem:[#allocation2 + $0xb0] sm:$0x1] %v3260
    %v3262 = vld [vmem:[#allocation2 + $0xb8] sm:$0x1]
    %v3263 = vsel %vm3192, 0, %v3262
    %3264 = vst [vmem:[#allocation2 + $0xb8] sm:$0x1] %v3263
    %v3265 = vld [vmem:[#allocation2 + $0xc0] sm:$0x1]
    %v3266 = vsel %vm3192, 0, %v3265
    %3267 = vst [vmem:[#allocation2 + $0xc0] sm:$0x1] %v3266
    %v3268 = vld [vmem:[#allocation2 + $0xc8] sm:$0x1]
    %v3269 = vsel %vm3192, 0, %v3268
    %3270 = vst [vmem:[#allocation2 + $0xc8] sm:$0x1] %v3269
    %v3271 = vld [vmem:[#allocation2 + $0xd0] sm:$0x1]
    %v3272 = vsel %vm3192, 0, %v3271
    %3273 = vst [vmem:[#allocation2 + $0xd0] sm:$0x1] %v3272
    %v3274 = vld [vmem:[#allocation2 + $0xd8] sm:$0x1]
    %v3275 = vsel %vm3192, 0, %v3274
    %3276 = vst [vmem:[#allocation2 + $0xd8] sm:$0x1] %v3275
    %v3277 = vld [vmem:[#allocation2 + $0xe0] sm:$0x1]
    %v3278 = vsel %vm3192, 0, %v3277
    %3279 = vst [vmem:[#allocation2 + $0xe0] sm:$0x1] %v3278
    %v3280 = vld [vmem:[#allocation2 + $0xe8] sm:$0x1]
    %v3281 = vsel %vm3192, 0, %v3280
    %3282 = vst [vmem:[#allocation2 + $0xe8] sm:$0x1] %v3281
    %v3283 = vld [vmem:[#allocation2 + $0xf0] sm:$0x1]
    %v3284 = vsel %vm3192, 0, %v3283
    %3285 = vst [vmem:[#allocation2 + $0xf0] sm:$0x1] %v3284
    %v3286 = vld [vmem:[#allocation2 + $0xf8] sm:$0x1]
    %v3287 = vsel %vm3192, 0, %v3286
    %3288 = vst [vmem:[#allocation2 + $0xf8] sm:$0x1] %v3287
    %3289 = vrot.lane.b32.xlu0 %v460, 24
    %v3290 = vpop.permute.xlu0 %3289
    %3291 = vrot.lane.b32.xlu0 %v469, 24
    %v3292 = vpop.permute.xlu0 %3291
    %3293 = vrot.lane.b32.xlu0 %v476, 24
    %v3294 = vpop.permute.xlu0 %3293
    %3295 = vrot.lane.b32.xlu0 %v485, 24
    %v3296 = vpop.permute.xlu0 %3295
    %3297 = vrot.lane.b32.xlu0 %v492, 24
    %v3298 = vpop.permute.xlu0 %3297
    %3299 = vrot.lane.b32.xlu0 %v501, 24
    %v3300 = vpop.permute.xlu0 %3299
    %3301 = vrot.lane.b32.xlu0 %v508, 24
    %v3302 = vpop.permute.xlu0 %3301
    %3303 = vrot.lane.b32.xlu0 %v517, 24
    %v3304 = vpop.permute.xlu0 %3303
    %3305 = vrot.lane.b32.xlu0 %v524, 24
    %v3306 = vpop.permute.xlu0 %3305
    %3307 = vrot.lane.b32.xlu0 %v533, 24
    %v3308 = vpop.permute.xlu0 %3307
    %3309 = vrot.lane.b32.xlu0 %v540, 24
    %v3310 = vpop.permute.xlu0 %3309
    %3311 = vrot.lane.b32.xlu0 %v549, 24
    %v3312 = vpop.permute.xlu0 %3311
    %3313 = vrot.lane.b32.xlu0 %v556, 24
    %v3314 = vpop.permute.xlu0 %3313
    %3315 = vrot.lane.b32.xlu0 %v565, 24
    %v3316 = vpop.permute.xlu0 %3315
    %3317 = vrot.lane.b32.xlu0 %v572, 24
    %v3318 = vpop.permute.xlu0 %3317
    %3319 = vrot.lane.b32.xlu0 %v581, 24
    %v3320 = vpop.permute.xlu0 %3319
    %3321 = vrot.lane.b32.xlu0 %v588, 24
    %v3322 = vpop.permute.xlu0 %3321
    %3323 = vrot.lane.b32.xlu0 %v597, 24
    %v3324 = vpop.permute.xlu0 %3323
    %3325 = vrot.lane.b32.xlu0 %v604, 24
    %v3326 = vpop.permute.xlu0 %3325
    %3327 = vrot.lane.b32.xlu0 %v613, 24
    %v3328 = vpop.permute.xlu0 %3327
    %3329 = vrot.lane.b32.xlu0 %v620, 24
    %v3330 = vpop.permute.xlu0 %3329
    %3331 = vrot.lane.b32.xlu0 %v629, 24
    %v3332 = vpop.permute.xlu0 %3331
    %3333 = vrot.lane.b32.xlu0 %v636, 24
    %v3334 = vpop.permute.xlu0 %3333
    %3335 = vrot.lane.b32.xlu0 %v645, 24
    %v3336 = vpop.permute.xlu0 %3335
    %3337 = vrot.lane.b32.xlu0 %v652, 24
    %v3338 = vpop.permute.xlu0 %3337
    %3339 = vrot.lane.b32.xlu0 %v661, 24
    %v3340 = vpop.permute.xlu0 %3339
    %3341 = vrot.lane.b32.xlu0 %v668, 24
    %v3342 = vpop.permute.xlu0 %3341
    %3343 = vrot.lane.b32.xlu0 %v677, 24
    %v3344 = vpop.permute.xlu0 %3343
    %3345 = vrot.lane.b32.xlu0 %v2140, 24
    %v3346 = vpop.permute.xlu0 %3345
    %3347 = vrot.lane.b32.xlu0 %v2149, 24
    %v3348 = vpop.permute.xlu0 %3347
    %3349 = vrot.lane.b32.xlu0 %v700, 24
    %v3350 = vpop.permute.xlu0 %3349
    %3351 = vrot.lane.b32.xlu0 %v709, 24
    %v3352 = vpop.permute.xlu0 %3351
    %3353 = vrot.lane.b32.xlu0 %v716, 24
    %v3354 = vpop.permute.xlu0 %3353
    %3355 = vrot.lane.b32.xlu0 %v725, 24
    %v3356 = vpop.permute.xlu0 %3355
    %3357 = vrot.lane.b32.xlu0 %v732, 24
    %v3358 = vpop.permute.xlu0 %3357
    %3359 = vrot.lane.b32.xlu0 %v741, 24
    %v3360 = vpop.permute.xlu0 %3359
    %3361 = vrot.lane.b32.xlu0 %v748, 24
    %v3362 = vpop.permute.xlu0 %3361
    %3363 = vrot.lane.b32.xlu0 %v757, 24
    %v3364 = vpop.permute.xlu0 %3363
    %3365 = vrot.lane.b32.xlu0 %v764, 24
    %v3366 = vpop.permute.xlu0 %3365
    %3367 = vrot.lane.b32.xlu0 %v773, 24
    %v3368 = vpop.permute.xlu0 %3367
    %3369 = vrot.lane.b32.xlu0 %v780, 24
    %v3370 = vpop.permute.xlu0 %3369
    %3371 = vrot.lane.b32.xlu0 %v789, 24
    %v3372 = vpop.permute.xlu0 %3371
    %3373 = vrot.lane.b32.xlu0 %v796, 24
    %v3374 = vpop.permute.xlu0 %3373
    %3375 = vrot.lane.b32.xlu0 %v805, 24
    %v3376 = vpop.permute.xlu0 %3375
    %3377 = vrot.lane.b32.xlu0 %v812, 24
    %v3378 = vpop.permute.xlu0 %3377
    %3379 = vrot.lane.b32.xlu0 %v821, 24
    %v3380 = vpop.permute.xlu0 %3379
    %3381 = vrot.lane.b32.xlu0 %v828, 24
    %v3382 = vpop.permute.xlu0 %3381
    %3383 = vrot.lane.b32.xlu0 %v837, 24
    %v3384 = vpop.permute.xlu0 %3383
    %3385 = vrot.lane.b32.xlu0 %v844, 24
    %v3386 = vpop.permute.xlu0 %3385
    %3387 = vrot.lane.b32.xlu0 %v853, 24
    %v3388 = vpop.permute.xlu0 %3387
    %3389 = vrot.lane.b32.xlu0 %v860, 24
    %v3390 = vpop.permute.xlu0 %3389
    %3391 = vrot.lane.b32.xlu0 %v869, 24
    %v3392 = vpop.permute.xlu0 %3391
    %3393 = vrot.lane.b32.xlu0 %v876, 24
    %v3394 = vpop.permute.xlu0 %3393
    %3395 = vrot.lane.b32.xlu0 %v885, 24
    %v3396 = vpop.permute.xlu0 %3395
    %3397 = vrot.lane.b32.xlu0 %v892, 24
    %v3398 = vpop.permute.xlu0 %3397
    %3399 = vrot.lane.b32.xlu0 %v901, 24
    %v3400 = vpop.permute.xlu0 %3399
    %3401 = vrot.lane.b32.xlu0 %v908, 24
    %v3402 = vpop.permute.xlu0 %3401
    %3403 = vrot.lane.b32.xlu0 %v917, 24
    %v3404 = vpop.permute.xlu0 %3403
    %3405 = vrot.lane.b32.xlu0 %v2156, 24
    %v3406 = vpop.permute.xlu0 %3405
    %3407 = vrot.lane.b32.xlu0 %v2165, 24
    %v3408 = vpop.permute.xlu0 %3407
    %vm3469 = vcmask 224448
    %vm3470 = vmand %vm3469, %vm980
    %v3471 = vld [vmem:[#allocation2] sm:$0xf]
    %v3472 = vsel %vm3470, %v3290, %v3471
    %3473 = vst [vmem:[#allocation2] sm:$0xf] %v3472
    %3474 = vst.msk [vmem:[#allocation2 + $0x4] sm:$0xf] %vm3186, %v3292
    %v3475 = vld [vmem:[#allocation2 + $0x8] sm:$0xf]
    %v3476 = vsel %vm3470, %v3294, %v3475
    %3477 = vst [vmem:[#allocation2 + $0x8] sm:$0xf] %v3476
    %3478 = vst.msk [vmem:[#allocation2 + $0xc] sm:$0xf] %vm3186, %v3296
    %v3479 = vld [vmem:[#allocation2 + $0x10] sm:$0xf]
    %v3480 = vsel %vm3470, %v3298, %v3479
    %3481 = vst [vmem:[#allocation2 + $0x10] sm:$0xf] %v3480
    %3482 = vst.msk [vmem:[#allocation2 + $0x14] sm:$0xf] %vm3186, %v3300
    %v3483 = vld [vmem:[#allocation2 + $0x18] sm:$0xf]
    %v3484 = vsel %vm3470, %v3302, %v3483
    %3485 = vst [vmem:[#allocation2 + $0x18] sm:$0xf] %v3484
    %3486 = vst.msk [vmem:[#allocation2 + $0x1c] sm:$0xf] %vm3186, %v3304
    %v3487 = vld [vmem:[#allocation2 + $0x20] sm:$0xf]
    %v3488 = vsel %vm3470, %v3306, %v3487
    %3489 = vst [vmem:[#allocation2 + $0x20] sm:$0xf] %v3488
    %3490 = vst.msk [vmem:[#allocation2 + $0x24] sm:$0xf] %vm3186, %v3308
    %v3491 = vld [vmem:[#allocation2 + $0x28] sm:$0xf]
    %v3492 = vsel %vm3470, %v3310, %v3491
    %3493 = vst [vmem:[#allocation2 + $0x28] sm:$0xf] %v3492
    %3494 = vst.msk [vmem:[#allocation2 + $0x2c] sm:$0xf] %vm3186, %v3312
    %v3495 = vld [vmem:[#allocation2 + $0x30] sm:$0xf]
    %v3496 = vsel %vm3470, %v3314, %v3495
    %3497 = vst [vmem:[#allocation2 + $0x30] sm:$0xf] %v3496
    %3498 = vst.msk [vmem:[#allocation2 + $0x34] sm:$0xf] %vm3186, %v3316
    %v3499 = vld [vmem:[#allocation2 + $0x38] sm:$0xf]
    %v3500 = vsel %vm3470, %v3318, %v3499
    %3501 = vst [vmem:[#allocation2 + $0x38] sm:$0xf] %v3500
    %3502 = vst.msk [vmem:[#allocation2 + $0x3c] sm:$0xf] %vm3186, %v3320
    %v3503 = vld [vmem:[#allocation2 + $0x40] sm:$0xf]
    %v3504 = vsel %vm3470, %v3322, %v3503
    %3505 = vst [vmem:[#allocation2 + $0x40] sm:$0xf] %v3504
    %3506 = vst.msk [vmem:[#allocation2 + $0x44] sm:$0xf] %vm3186, %v3324
    %v3507 = vld [vmem:[#allocation2 + $0x48] sm:$0xf]
    %v3508 = vsel %vm3470, %v3326, %v3507
    %3509 = vst [vmem:[#allocation2 + $0x48] sm:$0xf] %v3508
    %3510 = vst.msk [vmem:[#allocation2 + $0x4c] sm:$0xf] %vm3186, %v3328
    %v3511 = vld [vmem:[#allocation2 + $0x50] sm:$0xf]
    %v3512 = vsel %vm3470, %v3330, %v3511
    %3513 = vst [vmem:[#allocation2 + $0x50] sm:$0xf] %v3512
    %3514 = vst.msk [vmem:[#allocation2 + $0x54] sm:$0xf] %vm3186, %v3332
    %v3515 = vld [vmem:[#allocation2 + $0x58] sm:$0xf]
    %v3516 = vsel %vm3470, %v3334, %v3515
    %3517 = vst [vmem:[#allocation2 + $0x58] sm:$0xf] %v3516
    %3518 = vst.msk [vmem:[#allocation2 + $0x5c] sm:$0xf] %vm3186, %v3336
    %v3519 = vld [vmem:[#allocation2 + $0x60] sm:$0xf]
    %v3520 = vsel %vm3470, %v3338, %v3519
    %3521 = vst [vmem:[#allocation2 + $0x60] sm:$0xf] %v3520
    %3522 = vst.msk [vmem:[#allocation2 + $0x64] sm:$0xf] %vm3186, %v3340
    %v3523 = vld [vmem:[#allocation2 + $0x68] sm:$0xf]
    %v3524 = vsel %vm3470, %v3342, %v3523
    %3525 = vst [vmem:[#allocation2 + $0x68] sm:$0xf] %v3524
    %3526 = vst.msk [vmem:[#allocation2 + $0x6c] sm:$0xf] %vm3186, %v3344
    %v3527 = vld [vmem:[#allocation2 + $0x70] sm:$0xf]
    %v3528 = vsel %vm3470, %v3346, %v3527
    %3529 = vst [vmem:[#allocation2 + $0x70] sm:$0xf] %v3528
    %3530 = vst.msk [vmem:[#allocation2 + $0x74] sm:$0xf] %vm3186, %v3348
    %v3531 = vld [vmem:[#allocation2 + $0x80] sm:$0xf]
    %v3532 = vsel %vm3470, %v3350, %v3531
    %3533 = vst [vmem:[#allocation2 + $0x80] sm:$0xf] %v3532
    %3534 = vst.msk [vmem:[#allocation2 + $0x84] sm:$0xf] %vm3186, %v3352
    %v3535 = vld [vmem:[#allocation2 + $0x88] sm:$0xf]
    %v3536 = vsel %vm3470, %v3354, %v3535
    %3537 = vst [vmem:[#allocation2 + $0x88] sm:$0xf] %v3536
    %3538 = vst.msk [vmem:[#allocation2 + $0x8c] sm:$0xf] %vm3186, %v3356
    %v3539 = vld [vmem:[#allocation2 + $0x90] sm:$0xf]
    %v3540 = vsel %vm3470, %v3358, %v3539
    %3541 = vst [vmem:[#allocation2 + $0x90] sm:$0xf] %v3540
    %3542 = vst.msk [vmem:[#allocation2 + $0x94] sm:$0xf] %vm3186, %v3360
    %v3543 = vld [vmem:[#allocation2 + $0x98] sm:$0xf]
    %v3544 = vsel %vm3470, %v3362, %v3543
    %3545 = vst [vmem:[#allocation2 + $0x98] sm:$0xf] %v3544
    %3546 = vst.msk [vmem:[#allocation2 + $0x9c] sm:$0xf] %vm3186, %v3364
    %v3547 = vld [vmem:[#allocation2 + $0xa0] sm:$0xf]
    %v3548 = vsel %vm3470, %v3366, %v3547
    %3549 = vst [vmem:[#allocation2 + $0xa0] sm:$0xf] %v3548
    %3550 = vst.msk [vmem:[#allocation2 + $0xa4] sm:$0xf] %vm3186, %v3368
    %v3551 = vld [vmem:[#allocation2 + $0xa8] sm:$0xf]
    %v3552 = vsel %vm3470, %v3370, %v3551
    %3553 = vst [vmem:[#allocation2 + $0xa8] sm:$0xf] %v3552
    %3554 = vst.msk [vmem:[#allocation2 + $0xac] sm:$0xf] %vm3186, %v3372
    %v3555 = vld [vmem:[#allocation2 + $0xb0] sm:$0xf]
    %v3556 = vsel %vm3470, %v3374, %v3555
    %3557 = vst [vmem:[#allocation2 + $0xb0] sm:$0xf] %v3556
    %3558 = vst.msk [vmem:[#allocation2 + $0xb4] sm:$0xf] %vm3186, %v3376
    %v3559 = vld [vmem:[#allocation2 + $0xb8] sm:$0xf]
    %v3560 = vsel %vm3470, %v3378, %v3559
    %3561 = vst [vmem:[#allocation2 + $0xb8] sm:$0xf] %v3560
    %3562 = vst.msk [vmem:[#allocation2 + $0xbc] sm:$0xf] %vm3186, %v3380
    %v3563 = vld [vmem:[#allocation2 + $0xc0] sm:$0xf]
    %v3564 = vsel %vm3470, %v3382, %v3563
    %3565 = vst [vmem:[#allocation2 + $0xc0] sm:$0xf] %v3564
    %3566 = vst.msk [vmem:[#allocation2 + $0xc4] sm:$0xf] %vm3186, %v3384
    %v3567 = vld [vmem:[#allocation2 + $0xc8] sm:$0xf]
    %v3568 = vsel %vm3470, %v3386, %v3567
    %3569 = vst [vmem:[#allocation2 + $0xc8] sm:$0xf] %v3568
    %3570 = vst.msk [vmem:[#allocation2 + $0xcc] sm:$0xf] %vm3186, %v3388
    %v3571 = vld [vmem:[#allocation2 + $0xd0] sm:$0xf]
    %v3572 = vsel %vm3470, %v3390, %v3571
    %3573 = vst [vmem:[#allocation2 + $0xd0] sm:$0xf] %v3572
    %3574 = vst.msk [vmem:[#allocation2 + $0xd4] sm:$0xf] %vm3186, %v3392
    %v3575 = vld [vmem:[#allocation2 + $0xd8] sm:$0xf]
    %v3576 = vsel %vm3470, %v3394, %v3575
    %3577 = vst [vmem:[#allocation2 + $0xd8] sm:$0xf] %v3576
    %3578 = vst.msk [vmem:[#allocation2 + $0xdc] sm:$0xf] %vm3186, %v3396
    %v3579 = vld [vmem:[#allocation2 + $0xe0] sm:$0xf]
    %v3580 = vsel %vm3470, %v3398, %v3579
    %3581 = vst [vmem:[#allocation2 + $0xe0] sm:$0xf] %v3580
    %3582 = vst.msk [vmem:[#allocation2 + $0xe4] sm:$0xf] %vm3186, %v3400
    %v3583 = vld [vmem:[#allocation2 + $0xe8] sm:$0xf]
    %v3584 = vsel %vm3470, %v3402, %v3583
    %3585 = vst [vmem:[#allocation2 + $0xe8] sm:$0xf] %v3584
    %3586 = vst.msk [vmem:[#allocation2 + $0xec] sm:$0xf] %vm3186, %v3404
    %v3587 = vld [vmem:[#allocation2 + $0xf0] sm:$0xf]
    %v3588 = vsel %vm3470, %v3406, %v3587
    %3589 = vst [vmem:[#allocation2 + $0xf0] sm:$0xf] %v3588
    %3590 = vst.msk [vmem:[#allocation2 + $0xf4] sm:$0xf] %vm3186, %v3408
    %vm3591 = vcmask 257248
    %3592 = vst.msk [vmem:[%s3185] sm:$0xf] %vm3591, 0
    %3593 = vst.msk [vmem:[%s3185 + $0x4] sm:$0xf] %vm3591, 0
    %3594 = vst.msk [vmem:[%s3185 + $0x80] sm:$0xf] %vm3591, 0
    %3595 = vst.msk [vmem:[%s3185 + $0x84] sm:$0xf] %vm3591, 0
    %3596 = vrot.lane.b32.xlu0 %v378, 28
    %v3597 = vpop.permute.xlu0 %3596
    %3598 = vrot.lane.b32.xlu0 %v379, 28
    %v3599 = vpop.permute.xlu0 %3598
    %3600 = vrot.lane.b32.xlu0 %v380, 28
    %v3601 = vpop.permute.xlu0 %3600
    %3602 = vrot.lane.b32.xlu0 %v381, 28
    %v3603 = vpop.permute.xlu0 %3602
    %3604 = vrot.lane.b32.xlu0 %v382, 28
    %v3605 = vpop.permute.xlu0 %3604
    %3606 = vrot.lane.b32.xlu0 %v383, 28
    %v3607 = vpop.permute.xlu0 %3606
    %3608 = vrot.lane.b32.xlu0 %v384, 28
    %v3609 = vpop.permute.xlu0 %3608
    %3610 = vrot.lane.b32.xlu0 %v385, 28
    %v3611 = vpop.permute.xlu0 %3610
    %3612 = vrot.lane.b32.xlu0 %v386, 28
    %v3613 = vpop.permute.xlu0 %3612
    %3614 = vrot.lane.b32.xlu0 %v387, 28
    %v3615 = vpop.permute.xlu0 %3614
    %3616 = vrot.lane.b32.xlu0 %v388, 28
    %v3617 = vpop.permute.xlu0 %3616
    %3618 = vrot.lane.b32.xlu0 %v389, 28
    %v3619 = vpop.permute.xlu0 %3618
    %3620 = vrot.lane.b32.xlu0 %v390, 28
    %v3621 = vpop.permute.xlu0 %3620
    %3622 = vrot.lane.b32.xlu0 %v391, 28
    %v3623 = vpop.permute.xlu0 %3622
    %3624 = vrot.lane.b32.xlu0 %v392, 28
    %v3625 = vpop.permute.xlu0 %3624
    %3626 = vrot.lane.b32.xlu0 %v393, 28
    %v3627 = vpop.permute.xlu0 %3626
    %3628 = vrot.lane.b32.xlu0 %v394, 28
    %v3629 = vpop.permute.xlu0 %3628
    %3630 = vrot.lane.b32.xlu0 %v395, 28
    %v3631 = vpop.permute.xlu0 %3630
    %3632 = vrot.lane.b32.xlu0 %v396, 28
    %v3633 = vpop.permute.xlu0 %3632
    %3634 = vrot.lane.b32.xlu0 %v397, 28
    %v3635 = vpop.permute.xlu0 %3634
    %3636 = vrot.lane.b32.xlu0 %v398, 28
    %v3637 = vpop.permute.xlu0 %3636
    %3638 = vrot.lane.b32.xlu0 %v399, 28
    %v3639 = vpop.permute.xlu0 %3638
    %3640 = vrot.lane.b32.xlu0 %v400, 28
    %v3641 = vpop.permute.xlu0 %3640
    %3642 = vrot.lane.b32.xlu0 %v401, 28
    %v3643 = vpop.permute.xlu0 %3642
    %3644 = vrot.lane.b32.xlu0 %v402, 28
    %v3645 = vpop.permute.xlu0 %3644
    %3646 = vrot.lane.b32.xlu0 %v403, 28
    %v3647 = vpop.permute.xlu0 %3646
    %3648 = vrot.lane.b32.xlu0 %v404, 28
    %v3649 = vpop.permute.xlu0 %3648
    %3650 = vrot.lane.b32.xlu0 %v405, 28
    %v3651 = vpop.permute.xlu0 %3650
    %3652 = vrot.lane.b32.xlu0 %v2130, 28
    %v3653 = vpop.permute.xlu0 %3652
    %3654 = vrot.lane.b32.xlu0 %v2131, 28
    %v3655 = vpop.permute.xlu0 %3654
    %3656 = vrot.lane.b32.xlu0 %v408, 28
    %v3657 = vpop.permute.xlu0 %3656
    %3658 = vrot.lane.b32.xlu0 %v409, 28
    %v3659 = vpop.permute.xlu0 %3658
    %3660 = vrot.lane.b32.xlu0 %v410, 28
    %v3661 = vpop.permute.xlu0 %3660
    %3662 = vrot.lane.b32.xlu0 %v411, 28
    %v3663 = vpop.permute.xlu0 %3662
    %3664 = vrot.lane.b32.xlu0 %v412, 28
    %v3665 = vpop.permute.xlu0 %3664
    %3666 = vrot.lane.b32.xlu0 %v413, 28
    %v3667 = vpop.permute.xlu0 %3666
    %3668 = vrot.lane.b32.xlu0 %v414, 28
    %v3669 = vpop.permute.xlu0 %3668
    %3670 = vrot.lane.b32.xlu0 %v415, 28
    %v3671 = vpop.permute.xlu0 %3670
    %3672 = vrot.lane.b32.xlu0 %v416, 28
    %v3673 = vpop.permute.xlu0 %3672
    %3674 = vrot.lane.b32.xlu0 %v417, 28
    %v3675 = vpop.permute.xlu0 %3674
    %3676 = vrot.lane.b32.xlu0 %v418, 28
    %v3677 = vpop.permute.xlu0 %3676
    %3678 = vrot.lane.b32.xlu0 %v419, 28
    %v3679 = vpop.permute.xlu0 %3678
    %3680 = vrot.lane.b32.xlu0 %v420, 28
    %v3681 = vpop.permute.xlu0 %3680
    %3682 = vrot.lane.b32.xlu0 %v421, 28
    %v3683 = vpop.permute.xlu0 %3682
    %3684 = vrot.lane.b32.xlu0 %v422, 28
    %v3685 = vpop.permute.xlu0 %3684
    %3686 = vrot.lane.b32.xlu0 %v423, 28
    %v3687 = vpop.permute.xlu0 %3686
    %3688 = vrot.lane.b32.xlu0 %v424, 28
    %v3689 = vpop.permute.xlu0 %3688
    %3690 = vrot.lane.b32.xlu0 %v425, 28
    %v3691 = vpop.permute.xlu0 %3690
    %3692 = vrot.lane.b32.xlu0 %v426, 28
    %v3693 = vpop.permute.xlu0 %3692
    %3694 = vrot.lane.b32.xlu0 %v427, 28
    %v3695 = vpop.permute.xlu0 %3694
    %3696 = vrot.lane.b32.xlu0 %v428, 28
    %v3697 = vpop.permute.xlu0 %3696
    %3698 = vrot.lane.b32.xlu0 %v429, 28
    %v3699 = vpop.permute.xlu0 %3698
    %3700 = vrot.lane.b32.xlu0 %v430, 28
    %v3701 = vpop.permute.xlu0 %3700
    %3702 = vrot.lane.b32.xlu0 %v431, 28
    %v3703 = vpop.permute.xlu0 %3702
    %3704 = vrot.lane.b32.xlu0 %v432, 28
    %v3705 = vpop.permute.xlu0 %3704
    %3706 = vrot.lane.b32.xlu0 %v433, 28
    %v3707 = vpop.permute.xlu0 %3706
    %3708 = vrot.lane.b32.xlu0 %v434, 28
    %v3709 = vpop.permute.xlu0 %3708
    %3710 = vrot.lane.b32.xlu0 %v435, 28
    %v3711 = vpop.permute.xlu0 %3710
    %3712 = vrot.lane.b32.xlu0 %v2132, 28
    %v3713 = vpop.permute.xlu0 %3712
    %3714 = vrot.lane.b32.xlu0 %v2133, 28
    %v3715 = vpop.permute.xlu0 %3714
    %3776 = vst.msk [vmem:[#allocation2] sm:$0xf] %vm3591, %v3597
    %3777 = vst.msk [vmem:[#allocation2 + $0x4] sm:$0xf] %vm3591, %v3599
    %3778 = vst.msk [vmem:[#allocation2 + $0x8] sm:$0xf] %vm3591, %v3601
    %3779 = vst.msk [vmem:[#allocation2 + $0xc] sm:$0xf] %vm3591, %v3603
    %3780 = vst.msk [vmem:[#allocation2 + $0x10] sm:$0xf] %vm3591, %v3605
    %3781 = vst.msk [vmem:[#allocation2 + $0x14] sm:$0xf] %vm3591, %v3607
    %3782 = vst.msk [vmem:[#allocation2 + $0x18] sm:$0xf] %vm3591, %v3609
    %3783 = vst.msk [vmem:[#allocation2 + $0x1c] sm:$0xf] %vm3591, %v3611
    %3784 = vst.msk [vmem:[#allocation2 + $0x20] sm:$0xf] %vm3591, %v3613
    %3785 = vst.msk [vmem:[#allocation2 + $0x24] sm:$0xf] %vm3591, %v3615
    %3786 = vst.msk [vmem:[#allocation2 + $0x28] sm:$0xf] %vm3591, %v3617
    %3787 = vst.msk [vmem:[#allocation2 + $0x2c] sm:$0xf] %vm3591, %v3619
    %3788 = vst.msk [vmem:[#allocation2 + $0x30] sm:$0xf] %vm3591, %v3621
    %3789 = vst.msk [vmem:[#allocation2 + $0x34] sm:$0xf] %vm3591, %v3623
    %3790 = vst.msk [vmem:[#allocation2 + $0x38] sm:$0xf] %vm3591, %v3625
    %3791 = vst.msk [vmem:[#allocation2 + $0x3c] sm:$0xf] %vm3591, %v3627
    %3792 = vst.msk [vmem:[#allocation2 + $0x40] sm:$0xf] %vm3591, %v3629
    %3793 = vst.msk [vmem:[#allocation2 + $0x44] sm:$0xf] %vm3591, %v3631
    %3794 = vst.msk [vmem:[#allocation2 + $0x48] sm:$0xf] %vm3591, %v3633
    %3795 = vst.msk [vmem:[#allocation2 + $0x4c] sm:$0xf] %vm3591, %v3635
    %3796 = vst.msk [vmem:[#allocation2 + $0x50] sm:$0xf] %vm3591, %v3637
    %3797 = vst.msk [vmem:[#allocation2 + $0x54] sm:$0xf] %vm3591, %v3639
    %3798 = vst.msk [vmem:[#allocation2 + $0x58] sm:$0xf] %vm3591, %v3641
    %3799 = vst.msk [vmem:[#allocation2 + $0x5c] sm:$0xf] %vm3591, %v3643
    %3800 = vst.msk [vmem:[#allocation2 + $0x60] sm:$0xf] %vm3591, %v3645
    %3801 = vst.msk [vmem:[#allocation2 + $0x64] sm:$0xf] %vm3591, %v3647
    %3802 = vst.msk [vmem:[#allocation2 + $0x68] sm:$0xf] %vm3591, %v3649
    %3803 = vst.msk [vmem:[#allocation2 + $0x6c] sm:$0xf] %vm3591, %v3651
    %3804 = vst.msk [vmem:[#allocation2 + $0x70] sm:$0xf] %vm3591, %v3653
    %3805 = vst.msk [vmem:[#allocation2 + $0x74] sm:$0xf] %vm3591, %v3655
    %3806 = vst.msk [vmem:[#allocation2 + $0x80] sm:$0xf] %vm3591, %v3657
    %3807 = vst.msk [vmem:[#allocation2 + $0x84] sm:$0xf] %vm3591, %v3659
    %3808 = vst.msk [vmem:[#allocation2 + $0x88] sm:$0xf] %vm3591, %v3661
    %3809 = vst.msk [vmem:[#allocation2 + $0x8c] sm:$0xf] %vm3591, %v3663
    %3810 = vst.msk [vmem:[#allocation2 + $0x90] sm:$0xf] %vm3591, %v3665
    %3811 = vst.msk [vmem:[#allocation2 + $0x94] sm:$0xf] %vm3591, %v3667
    %3812 = vst.msk [vmem:[#allocation2 + $0x98] sm:$0xf] %vm3591, %v3669
    %3813 = vst.msk [vmem:[#allocation2 + $0x9c] sm:$0xf] %vm3591, %v3671
    %3814 = vst.msk [vmem:[#allocation2 + $0xa0] sm:$0xf] %vm3591, %v3673
    %3815 = vst.msk [vmem:[#allocation2 + $0xa4] sm:$0xf] %vm3591, %v3675
    %3816 = vst.msk [vmem:[#allocation2 + $0xa8] sm:$0xf] %vm3591, %v3677
    %3817 = vst.msk [vmem:[#allocation2 + $0xac] sm:$0xf] %vm3591, %v3679
    %3818 = vst.msk [vmem:[#allocation2 + $0xb0] sm:$0xf] %vm3591, %v3681
    %3819 = vst.msk [vmem:[#allocation2 + $0xb4] sm:$0xf] %vm3591, %v3683
    %3820 = vst.msk [vmem:[#allocation2 + $0xb8] sm:$0xf] %vm3591, %v3685
    %3821 = vst.msk [vmem:[#allocation2 + $0xbc] sm:$0xf] %vm3591, %v3687
    %3822 = vst.msk [vmem:[#allocation2 + $0xc0] sm:$0xf] %vm3591, %v3689
    %3823 = vst.msk [vmem:[#allocation2 + $0xc4] sm:$0xf] %vm3591, %v3691
    %3824 = vst.msk [vmem:[#allocation2 + $0xc8] sm:$0xf] %vm3591, %v3693
    %3825 = vst.msk [vmem:[#allocation2 + $0xcc] sm:$0xf] %vm3591, %v3695
    %3826 = vst.msk [vmem:[#allocation2 + $0xd0] sm:$0xf] %vm3591, %v3697
    %3827 = vst.msk [vmem:[#allocation2 + $0xd4] sm:$0xf] %vm3591, %v3699
    %3828 = vst.msk [vmem:[#allocation2 + $0xd8] sm:$0xf] %vm3591, %v3701
    %3829 = vst.msk [vmem:[#allocation2 + $0xdc] sm:$0xf] %vm3591, %v3703
    %3830 = vst.msk [vmem:[#allocation2 + $0xe0] sm:$0xf] %vm3591, %v3705
    %3831 = vst.msk [vmem:[#allocation2 + $0xe4] sm:$0xf] %vm3591, %v3707
    %3832 = vst.msk [vmem:[#allocation2 + $0xe8] sm:$0xf] %vm3591, %v3709
    %3833 = vst.msk [vmem:[#allocation2 + $0xec] sm:$0xf] %vm3591, %v3711
    %3834 = vst.msk [vmem:[#allocation2 + $0xf0] sm:$0xf] %vm3591, %v3713
    %3835 = vst.msk [vmem:[#allocation2 + $0xf4] sm:$0xf] %vm3591, %v3715
    %vm3836 = vcmask 290048
    %3837 = vst.msk [vmem:[%s3185] sm:$0xf] %vm3836, 0
    %3838 = vst.msk [vmem:[%s3185 + $0x4] sm:$0xf] %vm3836, 0
    %3839 = vst.msk [vmem:[%s3185 + $0x80] sm:$0xf] %vm3836, 0
    %3840 = vst.msk [vmem:[%s3185 + $0x84] sm:$0xf] %vm3836, 0
    %vm3841 = vcmask 290051
    %vm3842 = vmand %vm3841, %vm1353
    %v3843 = vld [vmem:[#allocation2 + $0x4] sm:$0x8]
    %v3844 = vsel %vm3842, 0, %v3843
    %3845 = vst [vmem:[#allocation2 + $0x4] sm:$0x8] %v3844
    %v3846 = vld [vmem:[#allocation2 + $0xc] sm:$0x8]
    %v3847 = vsel %vm3842, 0, %v3846
    %3848 = vst [vmem:[#allocation2 + $0xc] sm:$0x8] %v3847
    %v3849 = vld [vmem:[#allocation2 + $0x14] sm:$0x8]
    %v3850 = vsel %vm3842, 0, %v3849
    %3851 = vst [vmem:[#allocation2 + $0x14] sm:$0x8] %v3850
    %v3852 = vld [vmem:[#allocation2 + $0x1c] sm:$0x8]
    %v3853 = vsel %vm3842, 0, %v3852
    %3854 = vst [vmem:[#allocation2 + $0x1c] sm:$0x8] %v3853
    %v3855 = vld [vmem:[#allocation2 + $0x24] sm:$0x8]
    %v3856 = vsel %vm3842, 0, %v3855
    %3857 = vst [vmem:[#allocation2 + $0x24] sm:$0x8] %v3856
    %v3858 = vld [vmem:[#allocation2 + $0x2c] sm:$0x8]
    %v3859 = vsel %vm3842, 0, %v3858
    %3860 = vst [vmem:[#allocation2 + $0x2c] sm:$0x8] %v3859
    %v3861 = vld [vmem:[#allocation2 + $0x34] sm:$0x8]
    %v3862 = vsel %vm3842, 0, %v3861
    %3863 = vst [vmem:[#allocation2 + $0x34] sm:$0x8] %v3862
    %v3864 = vld [vmem:[#allocation2 + $0x3c] sm:$0x8]
    %v3865 = vsel %vm3842, 0, %v3864
    %3866 = vst [vmem:[#allocation2 + $0x3c] sm:$0x8] %v3865
    %v3867 = vld [vmem:[#allocation2 + $0x44] sm:$0x8]
    %v3868 = vsel %vm3842, 0, %v3867
    %3869 = vst [vmem:[#allocation2 + $0x44] sm:$0x8] %v3868
    %v3870 = vld [vmem:[#allocation2 + $0x4c] sm:$0x8]
    %v3871 = vsel %vm3842, 0, %v3870
    %3872 = vst [vmem:[#allocation2 + $0x4c] sm:$0x8] %v3871
    %v3873 = vld [vmem:[#allocation2 + $0x54] sm:$0x8]
    %v3874 = vsel %vm3842, 0, %v3873
    %3875 = vst [vmem:[#allocation2 + $0x54] sm:$0x8] %v3874
    %v3876 = vld [vmem:[#allocation2 + $0x5c] sm:$0x8]
    %v3877 = vsel %vm3842, 0, %v3876
    %3878 = vst [vmem:[#allocation2 + $0x5c] sm:$0x8] %v3877
    %v3879 = vld [vmem:[#allocation2 + $0x64] sm:$0x8]
    %v3880 = vsel %vm3842, 0, %v3879
    %3881 = vst [vmem:[#allocation2 + $0x64] sm:$0x8] %v3880
    %v3882 = vld [vmem:[#allocation2 + $0x6c] sm:$0x8]
    %v3883 = vsel %vm3842, 0, %v3882
    %3884 = vst [vmem:[#allocation2 + $0x6c] sm:$0x8] %v3883
    %v3885 = vld [vmem:[#allocation2 + $0x74] sm:$0x8]
    %v3886 = vsel %vm3842, 0, %v3885
    %3887 = vst [vmem:[#allocation2 + $0x74] sm:$0x8] %v3886
    %v3888 = vld [vmem:[#allocation2 + $0x7c] sm:$0x8]
    %v3889 = vsel %vm3842, 0, %v3888
    %3890 = vst [vmem:[#allocation2 + $0x7c] sm:$0x8] %v3889
    %v3891 = vld [vmem:[#allocation2 + $0x84] sm:$0x8]
    %v3892 = vsel %vm3842, 0, %v3891
    %3893 = vst [vmem:[#allocation2 + $0x84] sm:$0x8] %v3892
    %v3894 = vld [vmem:[#allocation2 + $0x8c] sm:$0x8]
    %v3895 = vsel %vm3842, 0, %v3894
    %3896 = vst [vmem:[#allocation2 + $0x8c] sm:$0x8] %v3895
    %v3897 = vld [vmem:[#allocation2 + $0x94] sm:$0x8]
    %v3898 = vsel %vm3842, 0, %v3897
    %3899 = vst [vmem:[#allocation2 + $0x94] sm:$0x8] %v3898
    %v3900 = vld [vmem:[#allocation2 + $0x9c] sm:$0x8]
    %v3901 = vsel %vm3842, 0, %v3900
    %3902 = vst [vmem:[#allocation2 + $0x9c] sm:$0x8] %v3901
    %v3903 = vld [vmem:[#allocation2 + $0xa4] sm:$0x8]
    %v3904 = vsel %vm3842, 0, %v3903
    %3905 = vst [vmem:[#allocation2 + $0xa4] sm:$0x8] %v3904
    %v3906 = vld [vmem:[#allocation2 + $0xac] sm:$0x8]
    %v3907 = vsel %vm3842, 0, %v3906
    %3908 = vst [vmem:[#allocation2 + $0xac] sm:$0x8] %v3907
    %v3909 = vld [vmem:[#allocation2 + $0xb4] sm:$0x8]
    %v3910 = vsel %vm3842, 0, %v3909
    %3911 = vst [vmem:[#allocation2 + $0xb4] sm:$0x8] %v3910
    %v3912 = vld [vmem:[#allocation2 + $0xbc] sm:$0x8]
    %v3913 = vsel %vm3842, 0, %v3912
    %3914 = vst [vmem:[#allocation2 + $0xbc] sm:$0x8] %v3913
    %v3915 = vld [vmem:[#allocation2 + $0xc4] sm:$0x8]
    %v3916 = vsel %vm3842, 0, %v3915
    %3917 = vst [vmem:[#allocation2 + $0xc4] sm:$0x8] %v3916
    %v3918 = vld [vmem:[#allocation2 + $0xcc] sm:$0x8]
    %v3919 = vsel %vm3842, 0, %v3918
    %3920 = vst [vmem:[#allocation2 + $0xcc] sm:$0x8] %v3919
    %v3921 = vld [vmem:[#allocation2 + $0xd4] sm:$0x8]
    %v3922 = vsel %vm3842, 0, %v3921
    %3923 = vst [vmem:[#allocation2 + $0xd4] sm:$0x8] %v3922
    %v3924 = vld [vmem:[#allocation2 + $0xdc] sm:$0x8]
    %v3925 = vsel %vm3842, 0, %v3924
    %3926 = vst [vmem:[#allocation2 + $0xdc] sm:$0x8] %v3925
    %v3927 = vld [vmem:[#allocation2 + $0xe4] sm:$0x8]
    %v3928 = vsel %vm3842, 0, %v3927
    %3929 = vst [vmem:[#allocation2 + $0xe4] sm:$0x8] %v3928
    %v3930 = vld [vmem:[#allocation2 + $0xec] sm:$0x8]
    %v3931 = vsel %vm3842, 0, %v3930
    %3932 = vst [vmem:[#allocation2 + $0xec] sm:$0x8] %v3931
    %v3933 = vld [vmem:[#allocation2 + $0xf4] sm:$0x8]
    %v3934 = vsel %vm3842, 0, %v3933
    %3935 = vst [vmem:[#allocation2 + $0xf4] sm:$0x8] %v3934
    %v3936 = vld [vmem:[#allocation2 + $0xfc] sm:$0x8]
    %v3937 = vsel %vm3842, 0, %v3936
    %3938 = vst [vmem:[#allocation2 + $0xfc] sm:$0x8] %v3937
    %3939 = vrot.lane.b32.xlu0 %v1468, 32
    %v3940 = vpop.permute.xlu0 %3939
    %3941 = vrot.lane.b32.xlu0 %v1471, 32
    %v3942 = vpop.permute.xlu0 %3941
    %3943 = vrot.lane.b32.xlu0 %v1477, 32
    %v3944 = vpop.permute.xlu0 %3943
    %3945 = vrot.lane.b32.xlu0 %v1480, 32
    %v3946 = vpop.permute.xlu0 %3945
    %3947 = vrot.lane.b32.xlu0 %v1486, 32
    %v3948 = vpop.permute.xlu0 %3947
    %3949 = vrot.lane.b32.xlu0 %v1489, 32
    %v3950 = vpop.permute.xlu0 %3949
    %3951 = vrot.lane.b32.xlu0 %v1495, 32
    %v3952 = vpop.permute.xlu0 %3951
    %3953 = vrot.lane.b32.xlu0 %v1498, 32
    %v3954 = vpop.permute.xlu0 %3953
    %3955 = vrot.lane.b32.xlu0 %v1504, 32
    %v3956 = vpop.permute.xlu0 %3955
    %3957 = vrot.lane.b32.xlu0 %v1507, 32
    %v3958 = vpop.permute.xlu0 %3957
    %3959 = vrot.lane.b32.xlu0 %v1513, 32
    %v3960 = vpop.permute.xlu0 %3959
    %3961 = vrot.lane.b32.xlu0 %v1516, 32
    %v3962 = vpop.permute.xlu0 %3961
    %3963 = vrot.lane.b32.xlu0 %v1522, 32
    %v3964 = vpop.permute.xlu0 %3963
    %3965 = vrot.lane.b32.xlu0 %v1525, 32
    %v3966 = vpop.permute.xlu0 %3965
    %3967 = vrot.lane.b32.xlu0 %v1531, 32
    %v3968 = vpop.permute.xlu0 %3967
    %3969 = vrot.lane.b32.xlu0 %v1534, 32
    %v3970 = vpop.permute.xlu0 %3969
    %3971 = vrot.lane.b32.xlu0 %v1540, 32
    %v3972 = vpop.permute.xlu0 %3971
    %3973 = vrot.lane.b32.xlu0 %v1543, 32
    %v3974 = vpop.permute.xlu0 %3973
    %3975 = vrot.lane.b32.xlu0 %v1549, 32
    %v3976 = vpop.permute.xlu0 %3975
    %3977 = vrot.lane.b32.xlu0 %v1552, 32
    %v3978 = vpop.permute.xlu0 %3977
    %3979 = vrot.lane.b32.xlu0 %v1558, 32
    %v3980 = vpop.permute.xlu0 %3979
    %3981 = vrot.lane.b32.xlu0 %v1561, 32
    %v3982 = vpop.permute.xlu0 %3981
    %3983 = vrot.lane.b32.xlu0 %v1567, 32
    %v3984 = vpop.permute.xlu0 %3983
    %3985 = vrot.lane.b32.xlu0 %v1570, 32
    %v3986 = vpop.permute.xlu0 %3985
    %3987 = vrot.lane.b32.xlu0 %v1576, 32
    %v3988 = vpop.permute.xlu0 %3987
    %3989 = vrot.lane.b32.xlu0 %v1579, 32
    %v3990 = vpop.permute.xlu0 %3989
    %3991 = vrot.lane.b32.xlu0 %v1585, 32
    %v3992 = vpop.permute.xlu0 %3991
    %3993 = vrot.lane.b32.xlu0 %v1588, 32
    %v3994 = vpop.permute.xlu0 %3993
    %3995 = vrot.lane.b32.xlu0 %v2849, 32
    %v3996 = vpop.permute.xlu0 %3995
    %3997 = vrot.lane.b32.xlu0 %v2852, 32
    %v3998 = vpop.permute.xlu0 %3997
    %3999 = vrot.lane.b32.xlu0 %v1603, 32
    %v4000 = vpop.permute.xlu0 %3999
    %4001 = vrot.lane.b32.xlu0 %v1606, 32
    %v4002 = vpop.permute.xlu0 %4001
    %4003 = vrot.lane.b32.xlu0 %v1612, 32
    %v4004 = vpop.permute.xlu0 %4003
    %4005 = vrot.lane.b32.xlu0 %v1615, 32
    %v4006 = vpop.permute.xlu0 %4005
    %4007 = vrot.lane.b32.xlu0 %v1621, 32
    %v4008 = vpop.permute.xlu0 %4007
    %4009 = vrot.lane.b32.xlu0 %v1624, 32
    %v4010 = vpop.permute.xlu0 %4009
    %4011 = vrot.lane.b32.xlu0 %v1630, 32
    %v4012 = vpop.permute.xlu0 %4011
    %4013 = vrot.lane.b32.xlu0 %v1633, 32
    %v4014 = vpop.permute.xlu0 %4013
    %4015 = vrot.lane.b32.xlu0 %v1639, 32
    %v4016 = vpop.permute.xlu0 %4015
    %4017 = vrot.lane.b32.xlu0 %v1642, 32
    %v4018 = vpop.permute.xlu0 %4017
    %4019 = vrot.lane.b32.xlu0 %v1648, 32
    %v4020 = vpop.permute.xlu0 %4019
    %4021 = vrot.lane.b32.xlu0 %v1651, 32
    %v4022 = vpop.permute.xlu0 %4021
    %4023 = vrot.lane.b32.xlu0 %v1657, 32
    %v4024 = vpop.permute.xlu0 %4023
    %4025 = vrot.lane.b32.xlu0 %v1660, 32
    %v4026 = vpop.permute.xlu0 %4025
    %4027 = vrot.lane.b32.xlu0 %v1666, 32
    %v4028 = vpop.permute.xlu0 %4027
    %4029 = vrot.lane.b32.xlu0 %v1669, 32
    %v4030 = vpop.permute.xlu0 %4029
    %4031 = vrot.lane.b32.xlu0 %v1675, 32
    %v4032 = vpop.permute.xlu0 %4031
    %4033 = vrot.lane.b32.xlu0 %v1678, 32
    %v4034 = vpop.permute.xlu0 %4033
    %4035 = vrot.lane.b32.xlu0 %v1684, 32
    %v4036 = vpop.permute.xlu0 %4035
    %4037 = vrot.lane.b32.xlu0 %v1687, 32
    %v4038 = vpop.permute.xlu0 %4037
    %4039 = vrot.lane.b32.xlu0 %v1693, 32
    %v4040 = vpop.permute.xlu0 %4039
    %4041 = vrot.lane.b32.xlu0 %v1696, 32
    %v4042 = vpop.permute.xlu0 %4041
    %4043 = vrot.lane.b32.xlu0 %v1702, 32
    %v4044 = vpop.permute.xlu0 %4043
    %4045 = vrot.lane.b32.xlu0 %v1705, 32
    %v4046 = vpop.permute.xlu0 %4045
    %4047 = vrot.lane.b32.xlu0 %v1711, 32
    %v4048 = vpop.permute.xlu0 %4047
    %4049 = vrot.lane.b32.xlu0 %v1714, 32
    %v4050 = vpop.permute.xlu0 %4049
    %4051 = vrot.lane.b32.xlu0 %v1720, 32
    %v4052 = vpop.permute.xlu0 %4051
    %4053 = vrot.lane.b32.xlu0 %v1723, 32
    %v4054 = vpop.permute.xlu0 %4053
    %4055 = vrot.lane.b32.xlu0 %v2858, 32
    %v4056 = vpop.permute.xlu0 %4055
    %4057 = vrot.lane.b32.xlu0 %v2861, 32
    %v4058 = vpop.permute.xlu0 %4057
    %4119 = vst.msk [vmem:[#allocation2] sm:$0xf] %vm3836, %v3940
    %vm4120 = vcmask 290048
    %vm4121 = vmand %vm4120, %vm1451
    %v4122 = vld [vmem:[#allocation2 + $0x4] sm:$0xf]
    %v4123 = vsel %vm4121, %v3942, %v4122
    %4124 = vst [vmem:[#allocation2 + $0x4] sm:$0xf] %v4123
    %4125 = vst.msk [vmem:[#allocation2 + $0x8] sm:$0xf] %vm3836, %v3944
    %v4126 = vld [vmem:[#allocation2 + $0xc] sm:$0xf]
    %v4127 = vsel %vm4121, %v3946, %v4126
    %4128 = vst [vmem:[#allocation2 + $0xc] sm:$0xf] %v4127
    %4129 = vst.msk [vmem:[#allocation2 + $0x10] sm:$0xf] %vm3836, %v3948
    %v4130 = vld [vmem:[#allocation2 + $0x14] sm:$0xf]
    %v4131 = vsel %vm4121, %v3950, %v4130
    %4132 = vst [vmem:[#allocation2 + $0x14] sm:$0xf] %v4131
    %4133 = vst.msk [vmem:[#allocation2 + $0x18] sm:$0xf] %vm3836, %v3952
    %v4134 = vld [vmem:[#allocation2 + $0x1c] sm:$0xf]
    %v4135 = vsel %vm4121, %v3954, %v4134
    %4136 = vst [vmem:[#allocation2 + $0x1c] sm:$0xf] %v4135
    %4137 = vst.msk [vmem:[#allocation2 + $0x20] sm:$0xf] %vm3836, %v3956
    %v4138 = vld [vmem:[#allocation2 + $0x24] sm:$0xf]
    %v4139 = vsel %vm4121, %v3958, %v4138
    %4140 = vst [vmem:[#allocation2 + $0x24] sm:$0xf] %v4139
    %4141 = vst.msk [vmem:[#allocation2 + $0x28] sm:$0xf] %vm3836, %v3960
    %v4142 = vld [vmem:[#allocation2 + $0x2c] sm:$0xf]
    %v4143 = vsel %vm4121, %v3962, %v4142
    %4144 = vst [vmem:[#allocation2 + $0x2c] sm:$0xf] %v4143
    %4145 = vst.msk [vmem:[#allocation2 + $0x30] sm:$0xf] %vm3836, %v3964
    %v4146 = vld [vmem:[#allocation2 + $0x34] sm:$0xf]
    %v4147 = vsel %vm4121, %v3966, %v4146
    %4148 = vst [vmem:[#allocation2 + $0x34] sm:$0xf] %v4147
    %4149 = vst.msk [vmem:[#allocation2 + $0x38] sm:$0xf] %vm3836, %v3968
    %v4150 = vld [vmem:[#allocation2 + $0x3c] sm:$0xf]
    %v4151 = vsel %vm4121, %v3970, %v4150
    %4152 = vst [vmem:[#allocation2 + $0x3c] sm:$0xf] %v4151
    %4153 = vst.msk [vmem:[#allocation2 + $0x40] sm:$0xf] %vm3836, %v3972
    %v4154 = vld [vmem:[#allocation2 + $0x44] sm:$0xf]
    %v4155 = vsel %vm4121, %v3974, %v4154
    %4156 = vst [vmem:[#allocation2 + $0x44] sm:$0xf] %v4155
    %4157 = vst.msk [vmem:[#allocation2 + $0x48] sm:$0xf] %vm3836, %v3976
    %v4158 = vld [vmem:[#allocation2 + $0x4c] sm:$0xf]
    %v4159 = vsel %vm4121, %v3978, %v4158
    %4160 = vst [vmem:[#allocation2 + $0x4c] sm:$0xf] %v4159
    %4161 = vst.msk [vmem:[#allocation2 + $0x50] sm:$0xf] %vm3836, %v3980
    %v4162 = vld [vmem:[#allocation2 + $0x54] sm:$0xf]
    %v4163 = vsel %vm4121, %v3982, %v4162
    %4164 = vst [vmem:[#allocation2 + $0x54] sm:$0xf] %v4163
    %4165 = vst.msk [vmem:[#allocation2 + $0x58] sm:$0xf] %vm3836, %v3984
    %v4166 = vld [vmem:[#allocation2 + $0x5c] sm:$0xf]
    %v4167 = vsel %vm4121, %v3986, %v4166
    %4168 = vst [vmem:[#allocation2 + $0x5c] sm:$0xf] %v4167
    %4169 = vst.msk [vmem:[#allocation2 + $0x60] sm:$0xf] %vm3836, %v3988
    %v4170 = vld [vmem:[#allocation2 + $0x64] sm:$0xf]
    %v4171 = vsel %vm4121, %v3990, %v4170
    %4172 = vst [vmem:[#allocation2 + $0x64] sm:$0xf] %v4171
    %4173 = vst.msk [vmem:[#allocation2 + $0x68] sm:$0xf] %vm3836, %v3992
    %v4174 = vld [vmem:[#allocation2 + $0x6c] sm:$0xf]
    %v4175 = vsel %vm4121, %v3994, %v4174
    %4176 = vst [vmem:[#allocation2 + $0x6c] sm:$0xf] %v4175
    %4177 = vst.msk [vmem:[#allocation2 + $0x70] sm:$0xf] %vm3836, %v3996
    %v4178 = vld [vmem:[#allocation2 + $0x74] sm:$0xf]
    %v4179 = vsel %vm4121, %v3998, %v4178
    %4180 = vst [vmem:[#allocation2 + $0x74] sm:$0xf] %v4179
    %4181 = vst.msk [vmem:[#allocation2 + $0x80] sm:$0xf] %vm3836, %v4000
    %v4182 = vld [vmem:[#allocation2 + $0x84] sm:$0xf]
    %v4183 = vsel %vm4121, %v4002, %v4182
    %4184 = vst [vmem:[#allocation2 + $0x84] sm:$0xf] %v4183
    %4185 = vst.msk [vmem:[#allocation2 + $0x88] sm:$0xf] %vm3836, %v4004
    %v4186 = vld [vmem:[#allocation2 + $0x8c] sm:$0xf]
    %v4187 = vsel %vm4121, %v4006, %v4186
    %4188 = vst [vmem:[#allocation2 + $0x8c] sm:$0xf] %v4187
    %4189 = vst.msk [vmem:[#allocation2 + $0x90] sm:$0xf] %vm3836, %v4008
    %v4190 = vld [vmem:[#allocation2 + $0x94] sm:$0xf]
    %v4191 = vsel %vm4121, %v4010, %v4190
    %4192 = vst [vmem:[#allocation2 + $0x94] sm:$0xf] %v4191
    %4193 = vst.msk [vmem:[#allocation2 + $0x98] sm:$0xf] %vm3836, %v4012
    %v4194 = vld [vmem:[#allocation2 + $0x9c] sm:$0xf]
    %v4195 = vsel %vm4121, %v4014, %v4194
    %4196 = vst [vmem:[#allocation2 + $0x9c] sm:$0xf] %v4195
    %4197 = vst.msk [vmem:[#allocation2 + $0xa0] sm:$0xf] %vm3836, %v4016
    %v4198 = vld [vmem:[#allocation2 + $0xa4] sm:$0xf]
    %v4199 = vsel %vm4121, %v4018, %v4198
    %4200 = vst [vmem:[#allocation2 + $0xa4] sm:$0xf] %v4199
    %4201 = vst.msk [vmem:[#allocation2 + $0xa8] sm:$0xf] %vm3836, %v4020
    %v4202 = vld [vmem:[#allocation2 + $0xac] sm:$0xf]
    %v4203 = vsel %vm4121, %v4022, %v4202
    %4204 = vst [vmem:[#allocation2 + $0xac] sm:$0xf] %v4203
    %4205 = vst.msk [vmem:[#allocation2 + $0xb0] sm:$0xf] %vm3836, %v4024
    %v4206 = vld [vmem:[#allocation2 + $0xb4] sm:$0xf]
    %v4207 = vsel %vm4121, %v4026, %v4206
    %4208 = vst [vmem:[#allocation2 + $0xb4] sm:$0xf] %v4207
    %4209 = vst.msk [vmem:[#allocation2 + $0xb8] sm:$0xf] %vm3836, %v4028
    %v4210 = vld [vmem:[#allocation2 + $0xbc] sm:$0xf]
    %v4211 = vsel %vm4121, %v4030, %v4210
    %4212 = vst [vmem:[#allocation2 + $0xbc] sm:$0xf] %v4211
    %4213 = vst.msk [vmem:[#allocation2 + $0xc0] sm:$0xf] %vm3836, %v4032
    %v4214 = vld [vmem:[#allocation2 + $0xc4] sm:$0xf]
    %v4215 = vsel %vm4121, %v4034, %v4214
    %4216 = vst [vmem:[#allocation2 + $0xc4] sm:$0xf] %v4215
    %4217 = vst.msk [vmem:[#allocation2 + $0xc8] sm:$0xf] %vm3836, %v4036
    %v4218 = vld [vmem:[#allocation2 + $0xcc] sm:$0xf]
    %v4219 = vsel %vm4121, %v4038, %v4218
    %4220 = vst [vmem:[#allocation2 + $0xcc] sm:$0xf] %v4219
    %4221 = vst.msk [vmem:[#allocation2 + $0xd0] sm:$0xf] %vm3836, %v4040
    %v4222 = vld [vmem:[#allocation2 + $0xd4] sm:$0xf]
    %v4223 = vsel %vm4121, %v4042, %v4222
    %4224 = vst [vmem:[#allocation2 + $0xd4] sm:$0xf] %v4223
    %4225 = vst.msk [vmem:[#allocation2 + $0xd8] sm:$0xf] %vm3836, %v4044
    %v4226 = vld [vmem:[#allocation2 + $0xdc] sm:$0xf]
    %v4227 = vsel %vm4121, %v4046, %v4226
    %4228 = vst [vmem:[#allocation2 + $0xdc] sm:$0xf] %v4227
    %4229 = vst.msk [vmem:[#allocation2 + $0xe0] sm:$0xf] %vm3836, %v4048
    %v4230 = vld [vmem:[#allocation2 + $0xe4] sm:$0xf]
    %v4231 = vsel %vm4121, %v4050, %v4230
    %4232 = vst [vmem:[#allocation2 + $0xe4] sm:$0xf] %v4231
    %4233 = vst.msk [vmem:[#allocation2 + $0xe8] sm:$0xf] %vm3836, %v4052
    %v4234 = vld [vmem:[#allocation2 + $0xec] sm:$0xf]
    %v4235 = vsel %vm4121, %v4054, %v4234
    %4236 = vst [vmem:[#allocation2 + $0xec] sm:$0xf] %v4235
    %4237 = vst.msk [vmem:[#allocation2 + $0xf0] sm:$0xf] %vm3836, %v4056
    %v4238 = vld [vmem:[#allocation2 + $0xf4] sm:$0xf]
    %v4239 = vsel %vm4121, %v4058, %v4238
    %4240 = vst [vmem:[#allocation2 + $0xf4] sm:$0xf] %v4239
    %v4241 = vld [vmem:[#allocation2] sm:$0xf]
    %v4242 = vld [vmem:[#allocation2 + $0x4] sm:$0xf]
    %v4243 = vld [vmem:[#allocation2 + $0x8] sm:$0xf]
    %v4244 = vld [vmem:[#allocation2 + $0xc] sm:$0xf]
    %v4245 = vld [vmem:[#allocation2 + $0x10] sm:$0xf]
    %v4246 = vld [vmem:[#allocation2 + $0x14] sm:$0xf]
    %v4247 = vld [vmem:[#allocation2 + $0x18] sm:$0xf]
    %v4248 = vld [vmem:[#allocation2 + $0x1c] sm:$0xf]
    %v4249 = vld [vmem:[#allocation2 + $0x20] sm:$0xf]
    %v4250 = vld [vmem:[#allocation2 + $0x24] sm:$0xf]
    %v4251 = vld [vmem:[#allocation2 + $0x28] sm:$0xf]
    %v4252 = vld [vmem:[#allocation2 + $0x2c] sm:$0xf]
    %v4253 = vld [vmem:[#allocation2 + $0x30] sm:$0xf]
    %v4254 = vld [vmem:[#allocation2 + $0x34] sm:$0xf]
    %v4255 = vld [vmem:[#allocation2 + $0x38] sm:$0xf]
    %v4256 = vld [vmem:[#allocation2 + $0x3c] sm:$0xf]
    %v4257 = vld [vmem:[#allocation2 + $0x40] sm:$0xf]
    %v4258 = vld [vmem:[#allocation2 + $0x44] sm:$0xf]
    %v4259 = vld [vmem:[#allocation2 + $0x48] sm:$0xf]
    %v4260 = vld [vmem:[#allocation2 + $0x4c] sm:$0xf]
    %v4261 = vld [vmem:[#allocation2 + $0x50] sm:$0xf]
    %v4262 = vld [vmem:[#allocation2 + $0x54] sm:$0xf]
    %v4263 = vld [vmem:[#allocation2 + $0x58] sm:$0xf]
    %v4264 = vld [vmem:[#allocation2 + $0x5c] sm:$0xf]
    %v4265 = vld [vmem:[#allocation2 + $0x60] sm:$0xf]
    %v4266 = vld [vmem:[#allocation2 + $0x64] sm:$0xf]
    %v4267 = vld [vmem:[#allocation2 + $0x68] sm:$0xf]
    %v4268 = vld [vmem:[#allocation2 + $0x6c] sm:$0xf]
    %v4269 = vld [vmem:[#allocation2 + $0x70] sm:$0xf]
    %v4270 = vld [vmem:[#allocation2 + $0x74] sm:$0xf]
    %v4271 = vld [vmem:[#allocation2 + $0x78] sm:$0xf]
    %v4272 = vld [vmem:[#allocation2 + $0x7c] sm:$0xf]
    %v4273 = vld [vmem:[#allocation2 + $0x80] sm:$0xf]
    %v4274 = vld [vmem:[#allocation2 + $0x84] sm:$0xf]
    %v4275 = vld [vmem:[#allocation2 + $0x88] sm:$0xf]
    %v4276 = vld [vmem:[#allocation2 + $0x8c] sm:$0xf]
    %v4277 = vld [vmem:[#allocation2 + $0x90] sm:$0xf]
    %v4278 = vld [vmem:[#allocation2 + $0x94] sm:$0xf]
    %v4279 = vld [vmem:[#allocation2 + $0x98] sm:$0xf]
    %v4280 = vld [vmem:[#allocation2 + $0x9c] sm:$0xf]
    %v4281 = vld [vmem:[#allocation2 + $0xa0] sm:$0xf]
    %v4282 = vld [vmem:[#allocation2 + $0xa4] sm:$0xf]
    %v4283 = vld [vmem:[#allocation2 + $0xa8] sm:$0xf]
    %v4284 = vld [vmem:[#allocation2 + $0xac] sm:$0xf]
    %v4285 = vld [vmem:[#allocation2 + $0xb0] sm:$0xf]
    %v4286 = vld [vmem:[#allocation2 + $0xb4] sm:$0xf]
    %v4287 = vld [vmem:[#allocation2 + $0xb8] sm:$0xf]
    %v4288 = vld [vmem:[#allocation2 + $0xbc] sm:$0xf]
    %v4289 = vld [vmem:[#allocation2 + $0xc0] sm:$0xf]
    %v4290 = vld [vmem:[#allocation2 + $0xc4] sm:$0xf]
    %v4291 = vld [vmem:[#allocation2 + $0xc8] sm:$0xf]
    %v4292 = vld [vmem:[#allocation2 + $0xcc] sm:$0xf]
    %v4293 = vld [vmem:[#allocation2 + $0xd0] sm:$0xf]
    %v4294 = vld [vmem:[#allocation2 + $0xd4] sm:$0xf]
    %v4295 = vld [vmem:[#allocation2 + $0xd8] sm:$0xf]
    %v4296 = vld [vmem:[#allocation2 + $0xdc] sm:$0xf]
    %v4297 = vld [vmem:[#allocation2 + $0xe0] sm:$0xf]
    %v4298 = vld [vmem:[#allocation2 + $0xe4] sm:$0xf]
    %v4299 = vld [vmem:[#allocation2 + $0xe8] sm:$0xf]
    %v4300 = vld [vmem:[#allocation2 + $0xec] sm:$0xf]
    %v4301 = vld [vmem:[#allocation2 + $0xf0] sm:$0xf]
    %v4302 = vld [vmem:[#allocation2 + $0xf4] sm:$0xf]
    %v4303 = vld [vmem:[#allocation2 + $0xf8] sm:$0xf]
    %v4304 = vld [vmem:[#allocation2 + $0xfc] sm:$0xf]
    %v4305 = vld [vmem:[%s1] sm:$0xf]
    %v4306 = vld [vmem:[%s1 + $0x4] sm:$0xf]
    %v4307 = vld [vmem:[%s1 + $0x8] sm:$0xf]
    %v4308 = vld [vmem:[%s1 + $0xc] sm:$0xf]
    %v4309 = vld [vmem:[%s1 + $0x10] sm:$0x3]
    %v4310 = vld [vmem:[%s2] sm:$0x1]
    %v4312 = vlaneseq
    %v4313 = vshrl.u32 %v4312, 7
    %v4314 = vsub.s32 0, %v4313
    %v4315 = vrot.slane %v4310, %v4314
    %v4381 = vunpack.c.l.b16 %v4241
    %v4382 = vunpack.c.l.b16 %v4242
    %v4383 = vunpack.c.l.b16 %v4243
    %v4384 = vunpack.c.l.b16 %v4244
    %v4385 = vunpack.c.l.b16 %v4245
    %v4386 = vunpack.c.l.b16 %v4246
    %v4387 = vunpack.c.l.b16 %v4247
    %v4388 = vunpack.c.l.b16 %v4248
    %v4389 = vunpack.c.l.b16 %v4249
    %v4390 = vunpack.c.l.b16 %v4250
    %v4391 = vunpack.c.l.b16 %v4251
    %v4392 = vunpack.c.l.b16 %v4252
    %v4393 = vunpack.c.l.b16 %v4253
    %v4394 = vunpack.c.l.b16 %v4254
    %v4395 = vunpack.c.l.b16 %v4255
    %v4396 = vunpack.c.l.b16 %v4256
    %v4397 = vunpack.c.l.b16 %v4257
    %v4398 = vunpack.c.l.b16 %v4258
    %v4399 = vunpack.c.l.b16 %v4259
    %v4400 = vunpack.c.l.b16 %v4260
    %v4401 = vunpack.c.l.b16 %v4261
    %v4402 = vunpack.c.l.b16 %v4262
    %v4403 = vunpack.c.l.b16 %v4263
    %v4404 = vunpack.c.l.b16 %v4264
    %v4405 = vunpack.c.l.b16 %v4265
    %v4406 = vunpack.c.l.b16 %v4266
    %v4407 = vunpack.c.l.b16 %v4267
    %v4408 = vunpack.c.l.b16 %v4268
    %v4409 = vunpack.c.l.b16 %v4269
    %v4410 = vunpack.c.l.b16 %v4270
    %v4411 = vunpack.c.l.b16 %v4271
    %v4412 = vunpack.c.l.b16 %v4272
    %v4413 = vunpack.c.l.b16 %v4273
    %v4414 = vunpack.c.l.b16 %v4274
    %v4415 = vunpack.c.l.b16 %v4275
    %v4416 = vunpack.c.l.b16 %v4276
    %v4417 = vunpack.c.l.b16 %v4277
    %v4418 = vunpack.c.l.b16 %v4278
    %v4419 = vunpack.c.l.b16 %v4279
    %v4420 = vunpack.c.l.b16 %v4280
    %v4421 = vunpack.c.l.b16 %v4281
    %v4422 = vunpack.c.l.b16 %v4282
    %v4423 = vunpack.c.l.b16 %v4283
    %v4424 = vunpack.c.l.b16 %v4284
    %v4425 = vunpack.c.l.b16 %v4285
    %v4426 = vunpack.c.l.b16 %v4286
    %v4427 = vunpack.c.l.b16 %v4287
    %v4428 = vunpack.c.l.b16 %v4288
    %v4429 = vunpack.c.l.b16 %v4289
    %v4430 = vunpack.c.l.b16 %v4290
    %v4431 = vunpack.c.l.b16 %v4291
    %v4432 = vunpack.c.l.b16 %v4292
    %v4433 = vunpack.c.l.b16 %v4293
    %v4434 = vunpack.c.l.b16 %v4294
    %v4435 = vunpack.c.l.b16 %v4295
    %v4436 = vunpack.c.l.b16 %v4296
    %v4437 = vunpack.c.l.b16 %v4297
    %v4438 = vunpack.c.l.b16 %v4298
    %v4439 = vunpack.c.l.b16 %v4299
    %v4440 = vunpack.c.l.b16 %v4300
    %v4441 = vunpack.c.l.b16 %v4301
    %v4442 = vunpack.c.l.b16 %v4302
    %v4443 = vunpack.c.l.b16 %v4303
    %v4444 = vunpack.c.l.b16 %v4304
    %v4445 = vpack.c.b16 %v4382, %v4381
    %v4446 = vpack.c.b16 %v4384, %v4383
    %v4447 = vpack.c.b16 %v4386, %v4385
    %v4448 = vpack.c.b16 %v4388, %v4387
    %v4449 = vpack.c.b16 %v4390, %v4389
    %v4450 = vpack.c.b16 %v4392, %v4391
    %v4451 = vpack.c.b16 %v4394, %v4393
    %v4452 = vpack.c.b16 %v4396, %v4395
    %v4453 = vpack.c.b16 %v4398, %v4397
    %v4454 = vpack.c.b16 %v4400, %v4399
    %v4455 = vpack.c.b16 %v4402, %v4401
    %v4456 = vpack.c.b16 %v4404, %v4403
    %v4457 = vpack.c.b16 %v4406, %v4405
    %v4458 = vpack.c.b16 %v4408, %v4407
    %v4459 = vpack.c.b16 %v4410, %v4409
    %v4460 = vpack.c.b16 %v4412, %v4411
    %v4461 = vpack.c.b16 %v4414, %v4413
    %v4462 = vpack.c.b16 %v4416, %v4415
    %v4463 = vpack.c.b16 %v4418, %v4417
    %v4464 = vpack.c.b16 %v4420, %v4419
    %v4465 = vpack.c.b16 %v4422, %v4421
    %v4466 = vpack.c.b16 %v4424, %v4423
    %v4467 = vpack.c.b16 %v4426, %v4425
    %v4468 = vpack.c.b16 %v4428, %v4427
    %v4469 = vpack.c.b16 %v4430, %v4429
    %v4470 = vpack.c.b16 %v4432, %v4431
    %v4471 = vpack.c.b16 %v4434, %v4433
    %v4472 = vpack.c.b16 %v4436, %v4435
    %v4473 = vpack.c.b16 %v4438, %v4437
    %v4474 = vpack.c.b16 %v4440, %v4439
    %v4475 = vpack.c.b16 %v4442, %v4441
    %v4476 = vpack.c.b16 %v4444, %v4443
    %v4482 = vunpack.c.l.b16 %v4305
    %v4483 = vunpack.c.l.b16 %v4306
    %v4484 = vunpack.c.l.b16 %v4307
    %v4485 = vunpack.c.l.b16 %v4308
    %v4486 = vunpack.c.l.b16 %v4309
    %v4487 = vpack.c.b16 %v4483, %v4482
    %v4488 = vpack.c.b16 %v4485, %v4484
    %v4489 = vpack.c.b16 %v4486, %v4486
    %vm4492 = vcmask 293888
    %v4494 = vsel %vm4492, %v4445, 0
    %v4497 = vsel %vm4492, %v4446, 0
    %v4500 = vsel %vm4492, %v4447, 0
    %v4503 = vsel %vm4492, %v4448, 0
    %v4506 = vsel %vm4492, %v4449, 0
    %v4509 = vsel %vm4492, %v4450, 0
    %v4512 = vsel %vm4492, %v4451, 0
    %v4515 = vsel %vm4492, %v4452, 0
    %v4518 = vsel %vm4492, %v4453, 0
    %v4521 = vsel %vm4492, %v4454, 0
    %v4524 = vsel %vm4492, %v4455, 0
    %v4527 = vsel %vm4492, %v4456, 0
    %v4530 = vsel %vm4492, %v4457, 0
    %v4533 = vsel %vm4492, %v4458, 0
    %v4536 = vsel %vm4492, %v4459, 0
    %v4539 = vsel %vm4492, %v4460, 0
    %v4542 = vsel %vm4492, %v4461, 0
    %v4545 = vsel %vm4492, %v4462, 0
    %v4548 = vsel %vm4492, %v4463, 0
    %v4551 = vsel %vm4492, %v4464, 0
    %v4554 = vsel %vm4492, %v4465, 0
    %v4557 = vsel %vm4492, %v4466, 0
    %v4560 = vsel %vm4492, %v4467, 0
    %v4563 = vsel %vm4492, %v4468, 0
    %v4566 = vsel %vm4492, %v4469, 0
    %v4569 = vsel %vm4492, %v4470, 0
    %v4572 = vsel %vm4492, %v4471, 0
    %v4575 = vsel %vm4492, %v4472, 0
    %v4578 = vsel %vm4492, %v4473, 0
    %v4581 = vsel %vm4492, %v4474, 0
    %v4584 = vsel %vm4492, %v4475, 0
    %v4587 = vsel %vm4492, %v4476, 0
    %vm4589 = vcmask 1041408
    %v4591 = vsel %vm4589, %v4489, 0
    %4593 = vmatprep.subr.bf16.mxu0 0
    %4594 = vmatpush1.bf16.msra.mxu0 0
    %4595 = vmatprep.subr.bf16.mxu0 0
    %4596 = vmatpush1.bf16.msra.mxu0 0
    %4597 = vmatprep.subr.bf16.mxu0 0
    %4598 = vmatpush1.bf16.msra.mxu0 0
    %4599 = vmatprep.subr.bf16.mxu0 0
    %4600 = vmatpush1.bf16.msra.mxu0 0
    %4601 = vmatprep.subr.bf16.mxu0 0
    %4602 = vmatpush1.bf16.msra.mxu0 0
    %4603 = vmatprep.subr.bf16.mxu0 0
    %4604 = vmatpush1.bf16.msra.mxu0 %v4591
    %4605 = vmatprep.subr.bf16.mxu0 0
    %4606 = vmatpush1.bf16.msra.mxu0 %v4488
    %4607 = vmatprep.subr.bf16.mxu0 0
    %4608 = vmatpush1.bf16.msra.mxu0 %v4487
    %4609 = vmatprep.subr.bf16.mxu0 0
    %4610 = vmatpush2.bf16.msra.mxu0 0
    %4611 = vmatprep.subr.bf16.mxu0 0
    %4612 = vmatpush2.bf16.msra.mxu0 0
    %4613 = vmatprep.subr.bf16.mxu0 0
    %4614 = vmatpush2.bf16.msra.mxu0 0
    %4615 = vmatprep.subr.bf16.mxu0 0
    %4616 = vmatpush2.bf16.msra.mxu0 0
    %4617 = vmatprep.subr.bf16.mxu0 0
    %4618 = vmatpush2.bf16.msra.mxu0 0
    %4619 = vmatprep.subr.bf16.mxu0 0
    %4620 = vmatpush2.bf16.msra.mxu0 0
    %4621 = vmatprep.subr.bf16.mxu0 0
    %4622 = vmatpush2.bf16.msra.mxu0 0
    %4623 = vmatprep.subr.bf16.mxu0 0
    %4624 = vmatpush2.bf16.msra.mxu0 0
    %4625 = vmatprep.mubr.bf16.mxu0 0
    %4626 = vmatmul.mubr.bf16.gmra.mxu0 %v4494
    %v4627 = vpop.f32.mrf.mxu0
    %v4628 = vadd.f32 %v4315, %v4627
    %v4629 = vpop.f32.mrf.mxu0
    %v4630 = vpop.f32.mrf.mxu0
    %v4631 = vadd.f32 %v4315, %v4630
    %v4632 = vpop.f32.mrf.mxu0
    %4633 = vmatprep.mubr.bf16.mxu0 0
    %4634 = vmatmul.mubr.bf16.gmra.mxu0 %v4497
    %v4635 = vpop.f32.mrf.mxu0
    %v4636 = vadd.f32 %v4315, %v4635
    %v4637 = vpop.f32.mrf.mxu0
    %v4638 = vpop.f32.mrf.mxu0
    %v4639 = vadd.f32 %v4315, %v4638
    %v4640 = vpop.f32.mrf.mxu0
    %4641 = vmatprep.mubr.bf16.mxu0 0
    %4642 = vmatmul.mubr.bf16.gmra.mxu0 %v4500
    %v4643 = vpop.f32.mrf.mxu0
    %v4644 = vadd.f32 %v4315, %v4643
    %v4645 = vpop.f32.mrf.mxu0
    %v4646 = vpop.f32.mrf.mxu0
    %v4647 = vadd.f32 %v4315, %v4646
    %v4648 = vpop.f32.mrf.mxu0
    %4649 = vmatprep.mubr.bf16.mxu0 0
    %4650 = vmatmul.mubr.bf16.gmra.mxu0 %v4503
    %v4651 = vpop.f32.mrf.mxu0
    %v4652 = vadd.f32 %v4315, %v4651
    %v4653 = vpop.f32.mrf.mxu0
    %v4654 = vpop.f32.mrf.mxu0
    %v4655 = vadd.f32 %v4315, %v4654
    %v4656 = vpop.f32.mrf.mxu0
    %4657 = vmatprep.mubr.bf16.mxu0 0
    %4658 = vmatmul.mubr.bf16.gmra.mxu0 %v4506
    %v4659 = vpop.f32.mrf.mxu0
    %v4660 = vadd.f32 %v4315, %v4659
    %v4661 = vpop.f32.mrf.mxu0
    %v4662 = vpop.f32.mrf.mxu0
    %v4663 = vadd.f32 %v4315, %v4662
    %v4664 = vpop.f32.mrf.mxu0
    %4665 = vmatprep.mubr.bf16.mxu0 0
    %4666 = vmatmul.mubr.bf16.gmra.mxu0 %v4509
    %v4667 = vpop.f32.mrf.mxu0
    %v4668 = vadd.f32 %v4315, %v4667
    %v4669 = vpop.f32.mrf.mxu0
    %v4670 = vpop.f32.mrf.mxu0
    %v4671 = vadd.f32 %v4315, %v4670
    %v4672 = vpop.f32.mrf.mxu0
    %4673 = vmatprep.mubr.bf16.mxu0 0
    %4674 = vmatmul.mubr.bf16.gmra.mxu0 %v4512
    %v4675 = vpop.f32.mrf.mxu0
    %v4676 = vadd.f32 %v4315, %v4675
    %v4677 = vpop.f32.mrf.mxu0
    %v4678 = vpop.f32.mrf.mxu0
    %v4679 = vadd.f32 %v4315, %v4678
    %v4680 = vpop.f32.mrf.mxu0
    %4681 = vmatprep.mubr.bf16.mxu0 0
    %4682 = vmatmul.mubr.bf16.gmra.mxu0 %v4515
    %v4683 = vpop.f32.mrf.mxu0
    %v4684 = vadd.f32 %v4315, %v4683
    %v4685 = vpop.f32.mrf.mxu0
    %v4686 = vpop.f32.mrf.mxu0
    %v4687 = vadd.f32 %v4315, %v4686
    %v4688 = vpop.f32.mrf.mxu0
    %4689 = vmatprep.mubr.bf16.mxu0 0
    %4690 = vmatmul.mubr.bf16.gmra.mxu0 %v4518
    %v4691 = vpop.f32.mrf.mxu0
    %v4692 = vadd.f32 %v4315, %v4691
    %v4693 = vpop.f32.mrf.mxu0
    %v4694 = vpop.f32.mrf.mxu0
    %v4695 = vadd.f32 %v4315, %v4694
    %v4696 = vpop.f32.mrf.mxu0
    %4697 = vmatprep.mubr.bf16.mxu0 0
    %4698 = vmatmul.mubr.bf16.gmra.mxu0 %v4521
    %v4699 = vpop.f32.mrf.mxu0
    %v4700 = vadd.f32 %v4315, %v4699
    %v4701 = vpop.f32.mrf.mxu0
    %v4702 = vpop.f32.mrf.mxu0
    %v4703 = vadd.f32 %v4315, %v4702
    %v4704 = vpop.f32.mrf.mxu0
    %4705 = vmatprep.mubr.bf16.mxu0 0
    %4706 = vmatmul.mubr.bf16.gmra.mxu0 %v4524
    %v4707 = vpop.f32.mrf.mxu0
    %v4708 = vadd.f32 %v4315, %v4707
    %v4709 = vpop.f32.mrf.mxu0
    %v4710 = vpop.f32.mrf.mxu0
    %v4711 = vadd.f32 %v4315, %v4710
    %v4712 = vpop.f32.mrf.mxu0
    %4713 = vmatprep.mubr.bf16.mxu0 0
    %4714 = vmatmul.mubr.bf16.gmra.mxu0 %v4527
    %v4715 = vpop.f32.mrf.mxu0
    %v4716 = vadd.f32 %v4315, %v4715
    %v4717 = vpop.f32.mrf.mxu0
    %v4718 = vpop.f32.mrf.mxu0
    %v4719 = vadd.f32 %v4315, %v4718
    %v4720 = vpop.f32.mrf.mxu0
    %4721 = vmatprep.mubr.bf16.mxu0 0
    %4722 = vmatmul.mubr.bf16.gmra.mxu0 %v4530
    %v4723 = vpop.f32.mrf.mxu0
    %v4724 = vadd.f32 %v4315, %v4723
    %v4725 = vpop.f32.mrf.mxu0
    %v4726 = vpop.f32.mrf.mxu0
    %v4727 = vadd.f32 %v4315, %v4726
    %v4728 = vpop.f32.mrf.mxu0
    %4729 = vmatprep.mubr.bf16.mxu0 0
    %4730 = vmatmul.mubr.bf16.gmra.mxu0 %v4533
    %v4731 = vpop.f32.mrf.mxu0
    %v4732 = vadd.f32 %v4315, %v4731
    %v4733 = vpop.f32.mrf.mxu0
    %v4734 = vpop.f32.mrf.mxu0
    %v4735 = vadd.f32 %v4315, %v4734
    %v4736 = vpop.f32.mrf.mxu0
    %4737 = vmatprep.mubr.bf16.mxu0 0
    %4738 = vmatmul.mubr.bf16.gmra.mxu0 %v4536
    %v4739 = vpop.f32.mrf.mxu0
    %v4740 = vadd.f32 %v4315, %v4739
    %v4741 = vpop.f32.mrf.mxu0
    %v4742 = vpop.f32.mrf.mxu0
    %v4743 = vadd.f32 %v4315, %v4742
    %v4744 = vpop.f32.mrf.mxu0
    %4745 = vmatprep.mubr.bf16.mxu0 0
    %4746 = vmatmul.mubr.bf16.gmra.mxu0 %v4539
    %v4747 = vpop.f32.mrf.mxu0
    %v4748 = vadd.f32 %v4315, %v4747
    %v4749 = vpop.f32.mrf.mxu0
    %v4750 = vpop.f32.mrf.mxu0
    %v4751 = vadd.f32 %v4315, %v4750
    %v4752 = vpop.f32.mrf.mxu0
    %4753 = vmatprep.mubr.bf16.mxu0 0
    %4754 = vmatmul.mubr.bf16.gmra.mxu0 %v4542
    %v4755 = vpop.f32.mrf.mxu0
    %v4756 = vadd.f32 %v4315, %v4755
    %v4757 = vpop.f32.mrf.mxu0
    %v4758 = vpop.f32.mrf.mxu0
    %v4759 = vadd.f32 %v4315, %v4758
    %v4760 = vpop.f32.mrf.mxu0
    %4761 = vmatprep.mubr.bf16.mxu0 0
    %4762 = vmatmul.mubr.bf16.gmra.mxu0 %v4545
    %v4763 = vpop.f32.mrf.mxu0
    %v4764 = vadd.f32 %v4315, %v4763
    %v4765 = vpop.f32.mrf.mxu0
    %v4766 = vpop.f32.mrf.mxu0
    %v4767 = vadd.f32 %v4315, %v4766
    %v4768 = vpop.f32.mrf.mxu0
    %4769 = vmatprep.mubr.bf16.mxu0 0
    %4770 = vmatmul.mubr.bf16.gmra.mxu0 %v4548
    %v4771 = vpop.f32.mrf.mxu0
    %v4772 = vadd.f32 %v4315, %v4771
    %v4773 = vpop.f32.mrf.mxu0
    %v4774 = vpop.f32.mrf.mxu0
    %v4775 = vadd.f32 %v4315, %v4774
    %v4776 = vpop.f32.mrf.mxu0
    %4777 = vmatprep.mubr.bf16.mxu0 0
    %4778 = vmatmul.mubr.bf16.gmra.mxu0 %v4551
    %v4779 = vpop.f32.mrf.mxu0
    %v4780 = vadd.f32 %v4315, %v4779
    %v4781 = vpop.f32.mrf.mxu0
    %v4782 = vpop.f32.mrf.mxu0
    %v4783 = vadd.f32 %v4315, %v4782
    %v4784 = vpop.f32.mrf.mxu0
    %4785 = vmatprep.mubr.bf16.mxu0 0
    %4786 = vmatmul.mubr.bf16.gmra.mxu0 %v4554
    %v4787 = vpop.f32.mrf.mxu0
    %v4788 = vadd.f32 %v4315, %v4787
    %v4789 = vpop.f32.mrf.mxu0
    %v4790 = vpop.f32.mrf.mxu0
    %v4791 = vadd.f32 %v4315, %v4790
    %v4792 = vpop.f32.mrf.mxu0
    %4793 = vmatprep.mubr.bf16.mxu0 0
    %4794 = vmatmul.mubr.bf16.gmra.mxu0 %v4557
    %v4795 = vpop.f32.mrf.mxu0
    %v4796 = vadd.f32 %v4315, %v4795
    %v4797 = vpop.f32.mrf.mxu0
    %v4798 = vpop.f32.mrf.mxu0
    %v4799 = vadd.f32 %v4315, %v4798
    %v4800 = vpop.f32.mrf.mxu0
    %4801 = vmatprep.mubr.bf16.mxu0 0
    %4802 = vmatmul.mubr.bf16.gmra.mxu0 %v4560
    %v4803 = vpop.f32.mrf.mxu0
    %v4804 = vadd.f32 %v4315, %v4803
    %v4805 = vpop.f32.mrf.mxu0
    %v4806 = vpop.f32.mrf.mxu0
    %v4807 = vadd.f32 %v4315, %v4806
    %v4808 = vpop.f32.mrf.mxu0
    %4809 = vmatprep.mubr.bf16.mxu0 0
    %4810 = vmatmul.mubr.bf16.gmra.mxu0 %v4563
    %v4811 = vpop.f32.mrf.mxu0
    %v4812 = vadd.f32 %v4315, %v4811
    %v4813 = vpop.f32.mrf.mxu0
    %v4814 = vpop.f32.mrf.mxu0
    %v4815 = vadd.f32 %v4315, %v4814
    %v4816 = vpop.f32.mrf.mxu0
    %4817 = vmatprep.mubr.bf16.mxu0 0
    %4818 = vmatmul.mubr.bf16.gmra.mxu0 %v4566
    %v4819 = vpop.f32.mrf.mxu0
    %v4820 = vadd.f32 %v4315, %v4819
    %v4821 = vpop.f32.mrf.mxu0
    %v4822 = vpop.f32.mrf.mxu0
    %v4823 = vadd.f32 %v4315, %v4822
    %v4824 = vpop.f32.mrf.mxu0
    %4825 = vmatprep.mubr.bf16.mxu0 0
    %4826 = vmatmul.mubr.bf16.gmra.mxu0 %v4569
    %v4827 = vpop.f32.mrf.mxu0
    %v4828 = vadd.f32 %v4315, %v4827
    %v4829 = vpop.f32.mrf.mxu0
    %v4830 = vpop.f32.mrf.mxu0
    %v4831 = vadd.f32 %v4315, %v4830
    %v4832 = vpop.f32.mrf.mxu0
    %4833 = vmatprep.mubr.bf16.mxu0 0
    %4834 = vmatmul.mubr.bf16.gmra.mxu0 %v4572
    %v4835 = vpop.f32.mrf.mxu0
    %v4836 = vadd.f32 %v4315, %v4835
    %v4837 = vpop.f32.mrf.mxu0
    %v4838 = vpop.f32.mrf.mxu0
    %v4839 = vadd.f32 %v4315, %v4838
    %v4840 = vpop.f32.mrf.mxu0
    %4841 = vmatprep.mubr.bf16.mxu0 0
    %4842 = vmatmul.mubr.bf16.gmra.mxu0 %v4575
    %v4843 = vpop.f32.mrf.mxu0
    %v4844 = vadd.f32 %v4315, %v4843
    %v4845 = vpop.f32.mrf.mxu0
    %v4846 = vpop.f32.mrf.mxu0
    %v4847 = vadd.f32 %v4315, %v4846
    %v4848 = vpop.f32.mrf.mxu0
    %4849 = vmatprep.mubr.bf16.mxu0 0
    %4850 = vmatmul.mubr.bf16.gmra.mxu0 %v4578
    %v4851 = vpop.f32.mrf.mxu0
    %v4852 = vadd.f32 %v4315, %v4851
    %v4853 = vpop.f32.mrf.mxu0
    %v4854 = vpop.f32.mrf.mxu0
    %v4855 = vadd.f32 %v4315, %v4854
    %v4856 = vpop.f32.mrf.mxu0
    %4857 = vmatprep.mubr.bf16.mxu0 0
    %4858 = vmatmul.mubr.bf16.gmra.mxu0 %v4581
    %v4859 = vpop.f32.mrf.mxu0
    %v4860 = vadd.f32 %v4315, %v4859
    %v4861 = vpop.f32.mrf.mxu0
    %v4862 = vpop.f32.mrf.mxu0
    %v4863 = vadd.f32 %v4315, %v4862
    %v4864 = vpop.f32.mrf.mxu0
    %4865 = vmatprep.mubr.bf16.mxu0 0
    %4866 = vmatmul.mubr.bf16.gmra.mxu0 %v4584
    %v4867 = vpop.f32.mrf.mxu0
    %v4868 = vadd.f32 %v4315, %v4867
    %v4869 = vpop.f32.mrf.mxu0
    %v4870 = vpop.f32.mrf.mxu0
    %v4871 = vadd.f32 %v4315, %v4870
    %v4872 = vpop.f32.mrf.mxu0
    %4873 = vmatprep.mubr.bf16.mxu0 0
    %4874 = vmatmul.mubr.bf16.gmra.mxu0 %v4587
    %v4875 = vpop.f32.mrf.mxu0
    %v4876 = vadd.f32 %v4315, %v4875
    %v4877 = vpop.f32.mrf.mxu0
    %v4878 = vpop.f32.mrf.mxu0
    %v4879 = vadd.f32 %v4315, %v4878
    %v4880 = vpop.f32.mrf.mxu0
    %4881 = vdwg.mxu0
    %v4882 = vmax.f32 %v4628, 0.0
    %v4883 = vmax.f32 %v4631, 0.0
    %v4884 = vmax.f32 %v4636, 0.0
    %v4885 = vmax.f32 %v4639, 0.0
    %v4886 = vmax.f32 %v4644, 0.0
    %v4887 = vmax.f32 %v4647, 0.0
    %v4888 = vmax.f32 %v4652, 0.0
    %v4889 = vmax.f32 %v4655, 0.0
    %v4890 = vmax.f32 %v4660, 0.0
    %v4891 = vmax.f32 %v4663, 0.0
    %v4892 = vmax.f32 %v4668, 0.0
    %v4893 = vmax.f32 %v4671, 0.0
    %v4894 = vmax.f32 %v4676, 0.0
    %v4895 = vmax.f32 %v4679, 0.0
    %v4896 = vmax.f32 %v4684, 0.0
    %v4897 = vmax.f32 %v4687, 0.0
    %v4898 = vmax.f32 %v4692, 0.0
    %v4899 = vmax.f32 %v4695, 0.0
    %v4900 = vmax.f32 %v4700, 0.0
    %v4901 = vmax.f32 %v4703, 0.0
    %v4902 = vmax.f32 %v4708, 0.0
    %v4903 = vmax.f32 %v4711, 0.0
    %v4904 = vmax.f32 %v4716, 0.0
    %v4905 = vmax.f32 %v4719, 0.0
    %v4906 = vmax.f32 %v4724, 0.0
    %v4907 = vmax.f32 %v4727, 0.0
    %v4908 = vmax.f32 %v4732, 0.0
    %v4909 = vmax.f32 %v4735, 0.0
    %v4910 = vmax.f32 %v4740, 0.0
    %v4911 = vmax.f32 %v4743, 0.0
    %v4912 = vmax.f32 %v4748, 0.0
    %v4913 = vmax.f32 %v4751, 0.0
    %v4914 = vmax.f32 %v4756, 0.0
    %v4915 = vmax.f32 %v4759, 0.0
    %v4916 = vmax.f32 %v4764, 0.0
    %v4917 = vmax.f32 %v4767, 0.0
    %v4918 = vmax.f32 %v4772, 0.0
    %v4919 = vmax.f32 %v4775, 0.0
    %v4920 = vmax.f32 %v4780, 0.0
    %v4921 = vmax.f32 %v4783, 0.0
    %v4922 = vmax.f32 %v4788, 0.0
    %v4923 = vmax.f32 %v4791, 0.0
    %v4924 = vmax.f32 %v4796, 0.0
    %v4925 = vmax.f32 %v4799, 0.0
    %v4926 = vmax.f32 %v4804, 0.0
    %v4927 = vmax.f32 %v4807, 0.0
    %v4928 = vmax.f32 %v4812, 0.0
    %v4929 = vmax.f32 %v4815, 0.0
    %v4930 = vmax.f32 %v4820, 0.0
    %v4931 = vmax.f32 %v4823, 0.0
    %v4932 = vmax.f32 %v4828, 0.0
    %v4933 = vmax.f32 %v4831, 0.0
    %v4934 = vmax.f32 %v4836, 0.0
    %v4935 = vmax.f32 %v4839, 0.0
    %v4936 = vmax.f32 %v4844, 0.0
    %v4937 = vmax.f32 %v4847, 0.0
    %v4938 = vmax.f32 %v4852, 0.0
    %v4939 = vmax.f32 %v4855, 0.0
    %v4940 = vmax.f32 %v4860, 0.0
    %v4941 = vmax.f32 %v4863, 0.0
    %v4942 = vmax.f32 %v4868, 0.0
    %v4943 = vmax.f32 %v4871, 0.0
    %v4944 = vmax.f32 %v4876, 0.0
    %v4945 = vmax.f32 %v4879, 0.0
    %v4946 = vpack.c.bf16 %v4883, %v4882
    %v4947 = vpack.c.bf16 %v4885, %v4884
    %v4948 = vpack.c.bf16 %v4887, %v4886
    %v4949 = vpack.c.bf16 %v4889, %v4888
    %v4950 = vpack.c.bf16 %v4891, %v4890
    %v4951 = vpack.c.bf16 %v4893, %v4892
    %v4952 = vpack.c.bf16 %v4895, %v4894
    %v4953 = vpack.c.bf16 %v4897, %v4896
    %v4954 = vpack.c.bf16 %v4899, %v4898
    %v4955 = vpack.c.bf16 %v4901, %v4900
    %v4956 = vpack.c.bf16 %v4903, %v4902
    %v4957 = vpack.c.bf16 %v4905, %v4904
    %v4958 = vpack.c.bf16 %v4907, %v4906
    %v4959 = vpack.c.bf16 %v4909, %v4908
    %v4960 = vpack.c.bf16 %v4911, %v4910
    %v4961 = vpack.c.bf16 %v4913, %v4912
    %v4962 = vpack.c.bf16 %v4915, %v4914
    %v4963 = vpack.c.bf16 %v4917, %v4916
    %v4964 = vpack.c.bf16 %v4919, %v4918
    %v4965 = vpack.c.bf16 %v4921, %v4920
    %v4966 = vpack.c.bf16 %v4923, %v4922
    %v4967 = vpack.c.bf16 %v4925, %v4924
    %v4968 = vpack.c.bf16 %v4927, %v4926
    %v4969 = vpack.c.bf16 %v4929, %v4928
    %v4970 = vpack.c.bf16 %v4931, %v4930
    %v4971 = vpack.c.bf16 %v4933, %v4932
    %v4972 = vpack.c.bf16 %v4935, %v4934
    %v4973 = vpack.c.bf16 %v4937, %v4936
    %v4974 = vpack.c.bf16 %v4939, %v4938
    %v4975 = vpack.c.bf16 %v4941, %v4940
    %v4976 = vpack.c.bf16 %v4943, %v4942
    %v4977 = vpack.c.bf16 %v4945, %v4944
    %4978 = vst.msk [vmem:[#allocation3] sm:$0xf] %vm182, 0
    %4979 = vst.msk [vmem:[#allocation3 + $0x4] sm:$0xf] %vm182, 0
    %4980 = vst.msk [vmem:[#allocation3 + $0x80] sm:$0xf] %vm182, 0
    %4981 = vst.msk [vmem:[#allocation3 + $0x84] sm:$0xf] %vm182, 0
    %v4982 = vld [vmem:[#allocation3] sm:$0x1]
    %v4983 = vsel %vm189, 0, %v4982
    %4984 = vst [vmem:[#allocation3] sm:$0x1] %v4983
    %v4985 = vld [vmem:[#allocation3 + $0x8] sm:$0x1]
    %v4986 = vsel %vm189, 0, %v4985
    %4987 = vst [vmem:[#allocation3 + $0x8] sm:$0x1] %v4986
    %v4988 = vld [vmem:[#allocation3 + $0x10] sm:$0x1]
    %v4989 = vsel %vm189, 0, %v4988
    %4990 = vst [vmem:[#allocation3 + $0x10] sm:$0x1] %v4989
    %v4991 = vld [vmem:[#allocation3 + $0x18] sm:$0x1]
    %v4992 = vsel %vm189, 0, %v4991
    %4993 = vst [vmem:[#allocation3 + $0x18] sm:$0x1] %v4992
    %v4994 = vld [vmem:[#allocation3 + $0x20] sm:$0x1]
    %v4995 = vsel %vm189, 0, %v4994
    %4996 = vst [vmem:[#allocation3 + $0x20] sm:$0x1] %v4995
    %v4997 = vld [vmem:[#allocation3 + $0x28] sm:$0x1]
    %v4998 = vsel %vm189, 0, %v4997
    %4999 = vst [vmem:[#allocation3 + $0x28] sm:$0x1] %v4998
    %v5000 = vld [vmem:[#allocation3 + $0x30] sm:$0x1]
    %v5001 = vsel %vm189, 0, %v5000
    %5002 = vst [vmem:[#allocation3 + $0x30] sm:$0x1] %v5001
    %v5003 = vld [vmem:[#allocation3 + $0x38] sm:$0x1]
    %v5004 = vsel %vm189, 0, %v5003
    %5005 = vst [vmem:[#allocation3 + $0x38] sm:$0x1] %v5004
    %v5006 = vld [vmem:[#allocation3 + $0x40] sm:$0x1]
    %v5007 = vsel %vm189, 0, %v5006
    %5008 = vst [vmem:[#allocation3 + $0x40] sm:$0x1] %v5007
    %v5009 = vld [vmem:[#allocation3 + $0x48] sm:$0x1]
    %v5010 = vsel %vm189, 0, %v5009
    %5011 = vst [vmem:[#allocation3 + $0x48] sm:$0x1] %v5010
    %v5012 = vld [vmem:[#allocation3 + $0x50] sm:$0x1]
    %v5013 = vsel %vm189, 0, %v5012
    %5014 = vst [vmem:[#allocation3 + $0x50] sm:$0x1] %v5013
    %v5015 = vld [vmem:[#allocation3 + $0x58] sm:$0x1]
    %v5016 = vsel %vm189, 0, %v5015
    %5017 = vst [vmem:[#allocation3 + $0x58] sm:$0x1] %v5016
    %v5018 = vld [vmem:[#allocation3 + $0x60] sm:$0x1]
    %v5019 = vsel %vm189, 0, %v5018
    %5020 = vst [vmem:[#allocation3 + $0x60] sm:$0x1] %v5019
    %v5021 = vld [vmem:[#allocation3 + $0x68] sm:$0x1]
    %v5022 = vsel %vm189, 0, %v5021
    %5023 = vst [vmem:[#allocation3 + $0x68] sm:$0x1] %v5022
    %v5024 = vld [vmem:[#allocation3 + $0x70] sm:$0x1]
    %v5025 = vsel %vm189, 0, %v5024
    %5026 = vst [vmem:[#allocation3 + $0x70] sm:$0x1] %v5025
    %v5027 = vld [vmem:[#allocation3 + $0x78] sm:$0x1]
    %v5028 = vsel %vm189, 0, %v5027
    %5029 = vst [vmem:[#allocation3 + $0x78] sm:$0x1] %v5028
    %v5030 = vld [vmem:[#allocation3 + $0x80] sm:$0x1]
    %v5031 = vsel %vm189, 0, %v5030
    %5032 = vst [vmem:[#allocation3 + $0x80] sm:$0x1] %v5031
    %v5033 = vld [vmem:[#allocation3 + $0x88] sm:$0x1]
    %v5034 = vsel %vm189, 0, %v5033
    %5035 = vst [vmem:[#allocation3 + $0x88] sm:$0x1] %v5034
    %v5036 = vld [vmem:[#allocation3 + $0x90] sm:$0x1]
    %v5037 = vsel %vm189, 0, %v5036
    %5038 = vst [vmem:[#allocation3 + $0x90] sm:$0x1] %v5037
    %v5039 = vld [vmem:[#allocation3 + $0x98] sm:$0x1]
    %v5040 = vsel %vm189, 0, %v5039
    %5041 = vst [vmem:[#allocation3 + $0x98] sm:$0x1] %v5040
    %v5042 = vld [vmem:[#allocation3 + $0xa0] sm:$0x1]
    %v5043 = vsel %vm189, 0, %v5042
    %5044 = vst [vmem:[#allocation3 + $0xa0] sm:$0x1] %v5043
    %v5045 = vld [vmem:[#allocation3 + $0xa8] sm:$0x1]
    %v5046 = vsel %vm189, 0, %v5045
    %5047 = vst [vmem:[#allocation3 + $0xa8] sm:$0x1] %v5046
    %v5048 = vld [vmem:[#allocation3 + $0xb0] sm:$0x1]
    %v5049 = vsel %vm189, 0, %v5048
    %5050 = vst [vmem:[#allocation3 + $0xb0] sm:$0x1] %v5049
    %v5051 = vld [vmem:[#allocation3 + $0xb8] sm:$0x1]
    %v5052 = vsel %vm189, 0, %v5051
    %5053 = vst [vmem:[#allocation3 + $0xb8] sm:$0x1] %v5052
    %v5054 = vld [vmem:[#allocation3 + $0xc0] sm:$0x1]
    %v5055 = vsel %vm189, 0, %v5054
    %5056 = vst [vmem:[#allocation3 + $0xc0] sm:$0x1] %v5055
    %v5057 = vld [vmem:[#allocation3 + $0xc8] sm:$0x1]
    %v5058 = vsel %vm189, 0, %v5057
    %5059 = vst [vmem:[#allocation3 + $0xc8] sm:$0x1] %v5058
    %v5060 = vld [vmem:[#allocation3 + $0xd0] sm:$0x1]
    %v5061 = vsel %vm189, 0, %v5060
    %5062 = vst [vmem:[#allocation3 + $0xd0] sm:$0x1] %v5061
    %v5063 = vld [vmem:[#allocation3 + $0xd8] sm:$0x1]
    %v5064 = vsel %vm189, 0, %v5063
    %5065 = vst [vmem:[#allocation3 + $0xd8] sm:$0x1] %v5064
    %v5066 = vld [vmem:[#allocation3 + $0xe0] sm:$0x1]
    %v5067 = vsel %vm189, 0, %v5066
    %5068 = vst [vmem:[#allocation3 + $0xe0] sm:$0x1] %v5067
    %v5069 = vld [vmem:[#allocation3 + $0xe8] sm:$0x1]
    %v5070 = vsel %vm189, 0, %v5069
    %5071 = vst [vmem:[#allocation3 + $0xe8] sm:$0x1] %v5070
    %v5072 = vld [vmem:[#allocation3 + $0xf0] sm:$0x1]
    %v5073 = vsel %vm189, 0, %v5072
    %5074 = vst [vmem:[#allocation3 + $0xf0] sm:$0x1] %v5073
    %v5075 = vld [vmem:[#allocation3 + $0xf8] sm:$0x1]
    %v5076 = vsel %vm189, 0, %v5075
    %5077 = vst [vmem:[#allocation3 + $0xf8] sm:$0x1] %v5076
    %v5108 = vunpack.c.l.b16 %v4946
    %v5109 = vunpack.c.h.b16 %v4946
    %v5110 = vunpack.c.l.b16 %v4947
    %v5111 = vunpack.c.h.b16 %v4947
    %v5112 = vunpack.c.l.b16 %v4948
    %v5113 = vunpack.c.h.b16 %v4948
    %v5114 = vunpack.c.l.b16 %v4949
    %v5115 = vunpack.c.h.b16 %v4949
    %v5116 = vunpack.c.l.b16 %v4950
    %v5117 = vunpack.c.h.b16 %v4950
    %v5118 = vunpack.c.l.b16 %v4951
    %v5119 = vunpack.c.h.b16 %v4951
    %v5120 = vunpack.c.l.b16 %v4952
    %v5121 = vunpack.c.h.b16 %v4952
    %v5122 = vunpack.c.l.b16 %v4953
    %v5123 = vunpack.c.h.b16 %v4953
    %v5124 = vunpack.c.l.b16 %v4954
    %v5125 = vunpack.c.h.b16 %v4954
    %v5126 = vunpack.c.l.b16 %v4955
    %v5127 = vunpack.c.h.b16 %v4955
    %v5128 = vunpack.c.l.b16 %v4956
    %v5129 = vunpack.c.h.b16 %v4956
    %v5130 = vunpack.c.l.b16 %v4957
    %v5131 = vunpack.c.h.b16 %v4957
    %v5132 = vunpack.c.l.b16 %v4958
    %v5133 = vunpack.c.h.b16 %v4958
    %v5134 = vunpack.c.l.b16 %v4959
    %v5135 = vunpack.c.h.b16 %v4959
    %v5136 = vunpack.c.l.b16 %v4960
    %v5137 = vunpack.c.h.b16 %v4960
    %v5138 = vunpack.c.l.b16 %v4962
    %v5139 = vunpack.c.h.b16 %v4962
    %v5140 = vunpack.c.l.b16 %v4963
    %v5141 = vunpack.c.h.b16 %v4963
    %v5142 = vunpack.c.l.b16 %v4964
    %v5143 = vunpack.c.h.b16 %v4964
    %v5144 = vunpack.c.l.b16 %v4965
    %v5145 = vunpack.c.h.b16 %v4965
    %v5146 = vunpack.c.l.b16 %v4966
    %v5147 = vunpack.c.h.b16 %v4966
    %v5148 = vunpack.c.l.b16 %v4967
    %v5149 = vunpack.c.h.b16 %v4967
    %v5150 = vunpack.c.l.b16 %v4968
    %v5151 = vunpack.c.h.b16 %v4968
    %v5152 = vunpack.c.l.b16 %v4969
    %v5153 = vunpack.c.h.b16 %v4969
    %v5154 = vunpack.c.l.b16 %v4970
    %v5155 = vunpack.c.h.b16 %v4970
    %v5156 = vunpack.c.l.b16 %v4971
    %v5157 = vunpack.c.h.b16 %v4971
    %v5158 = vunpack.c.l.b16 %v4972
    %v5159 = vunpack.c.h.b16 %v4972
    %v5160 = vunpack.c.l.b16 %v4973
    %v5161 = vunpack.c.h.b16 %v4973
    %v5162 = vunpack.c.l.b16 %v4974
    %v5163 = vunpack.c.h.b16 %v4974
    %v5164 = vunpack.c.l.b16 %v4975
    %v5165 = vunpack.c.h.b16 %v4975
    %v5166 = vunpack.c.l.b16 %v4976
    %v5167 = vunpack.c.h.b16 %v4976
    %v5168 = vpack.c.b16 %v5108, %v5108
    %v5169 = vpack.c.b16 %v5109, %v5109
    %v5170 = vpack.c.b16 %v5110, %v5110
    %v5171 = vpack.c.b16 %v5111, %v5111
    %v5172 = vpack.c.b16 %v5112, %v5112
    %v5173 = vpack.c.b16 %v5113, %v5113
    %v5174 = vpack.c.b16 %v5114, %v5114
    %v5175 = vpack.c.b16 %v5115, %v5115
    %v5176 = vpack.c.b16 %v5116, %v5116
    %v5177 = vpack.c.b16 %v5117, %v5117
    %v5178 = vpack.c.b16 %v5118, %v5118
    %v5179 = vpack.c.b16 %v5119, %v5119
    %v5180 = vpack.c.b16 %v5120, %v5120
    %v5181 = vpack.c.b16 %v5121, %v5121
    %v5182 = vpack.c.b16 %v5122, %v5122
    %v5183 = vpack.c.b16 %v5123, %v5123
    %v5184 = vpack.c.b16 %v5124, %v5124
    %v5185 = vpack.c.b16 %v5125, %v5125
    %v5186 = vpack.c.b16 %v5126, %v5126
    %v5187 = vpack.c.b16 %v5127, %v5127
    %v5188 = vpack.c.b16 %v5128, %v5128
    %v5189 = vpack.c.b16 %v5129, %v5129
    %v5190 = vpack.c.b16 %v5130, %v5130
    %v5191 = vpack.c.b16 %v5131, %v5131
    %v5192 = vpack.c.b16 %v5132, %v5132
    %v5193 = vpack.c.b16 %v5133, %v5133
    %v5194 = vpack.c.b16 %v5134, %v5134
    %v5195 = vpack.c.b16 %v5135, %v5135
    %v5196 = vpack.c.b16 %v5136, %v5136
    %v5197 = vpack.c.b16 %v5137, %v5137
    %v5198 = vpack.c.b16 %v5138, %v5138
    %v5199 = vpack.c.b16 %v5139, %v5139
    %v5200 = vpack.c.b16 %v5140, %v5140
    %v5201 = vpack.c.b16 %v5141, %v5141
    %v5202 = vpack.c.b16 %v5142, %v5142
    %v5203 = vpack.c.b16 %v5143, %v5143
    %v5204 = vpack.c.b16 %v5144, %v5144
    %v5205 = vpack.c.b16 %v5145, %v5145
    %v5206 = vpack.c.b16 %v5146, %v5146
    %v5207 = vpack.c.b16 %v5147, %v5147
    %v5208 = vpack.c.b16 %v5148, %v5148
    %v5209 = vpack.c.b16 %v5149, %v5149
    %v5210 = vpack.c.b16 %v5150, %v5150
    %v5211 = vpack.c.b16 %v5151, %v5151
    %v5212 = vpack.c.b16 %v5152, %v5152
    %v5213 = vpack.c.b16 %v5153, %v5153
    %v5214 = vpack.c.b16 %v5154, %v5154
    %v5215 = vpack.c.b16 %v5155, %v5155
    %v5216 = vpack.c.b16 %v5156, %v5156
    %v5217 = vpack.c.b16 %v5157, %v5157
    %v5218 = vpack.c.b16 %v5158, %v5158
    %v5219 = vpack.c.b16 %v5159, %v5159
    %v5220 = vpack.c.b16 %v5160, %v5160
    %v5221 = vpack.c.b16 %v5161, %v5161
    %v5222 = vpack.c.b16 %v5162, %v5162
    %v5223 = vpack.c.b16 %v5163, %v5163
    %v5224 = vpack.c.b16 %v5164, %v5164
    %v5225 = vpack.c.b16 %v5165, %v5165
    %v5226 = vpack.c.b16 %v5166, %v5166
    %v5227 = vpack.c.b16 %v5167, %v5167
    %v5229 = vshrl.u32 %v5168, 16
    %v5231 = vrot.slane %v5229, 7
    %v5232 = vshll.u32 %v5168, 16
    %v5234 = vor.u32 %v5231, %v5232
    %v5235 = vrot.slane %v5231, 4
    %v5237 = vshrl.u32 %v5169, 16
    %v5239 = vrot.slane %v5237, 7
    %v5240 = vshll.u32 %v5169, 16
    %v5242 = vor.u32 %v5239, %v5240
    %v5243 = vsel %vm437, %v5235, %v5242
    %v5245 = vshrl.u32 %v5170, 16
    %v5247 = vrot.slane %v5245, 7
    %v5248 = vshll.u32 %v5170, 16
    %v5250 = vor.u32 %v5247, %v5248
    %v5251 = vrot.slane %v5247, 4
    %v5253 = vshrl.u32 %v5171, 16
    %v5255 = vrot.slane %v5253, 7
    %v5256 = vshll.u32 %v5171, 16
    %v5258 = vor.u32 %v5255, %v5256
    %v5259 = vsel %vm437, %v5251, %v5258
    %v5261 = vshrl.u32 %v5172, 16
    %v5263 = vrot.slane %v5261, 7
    %v5264 = vshll.u32 %v5172, 16
    %v5266 = vor.u32 %v5263, %v5264
    %v5267 = vrot.slane %v5263, 4
    %v5269 = vshrl.u32 %v5173, 16
    %v5271 = vrot.slane %v5269, 7
    %v5272 = vshll.u32 %v5173, 16
    %v5274 = vor.u32 %v5271, %v5272
    %v5275 = vsel %vm437, %v5267, %v5274
    %v5277 = vshrl.u32 %v5174, 16
    %v5279 = vrot.slane %v5277, 7
    %v5280 = vshll.u32 %v5174, 16
    %v5282 = vor.u32 %v5279, %v5280
    %v5283 = vrot.slane %v5279, 4
    %v5285 = vshrl.u32 %v5175, 16
    %v5287 = vrot.slane %v5285, 7
    %v5288 = vshll.u32 %v5175, 16
    %v5290 = vor.u32 %v5287, %v5288
    %v5291 = vsel %vm437, %v5283, %v5290
    %v5293 = vshrl.u32 %v5176, 16
    %v5295 = vrot.slane %v5293, 7
    %v5296 = vshll.u32 %v5176, 16
    %v5298 = vor.u32 %v5295, %v5296
    %v5299 = vrot.slane %v5295, 4
    %v5301 = vshrl.u32 %v5177, 16
    %v5303 = vrot.slane %v5301, 7
    %v5304 = vshll.u32 %v5177, 16
    %v5306 = vor.u32 %v5303, %v5304
    %v5307 = vsel %vm437, %v5299, %v5306
    %v5309 = vshrl.u32 %v5178, 16
    %v5311 = vrot.slane %v5309, 7
    %v5312 = vshll.u32 %v5178, 16
    %v5314 = vor.u32 %v5311, %v5312
    %v5315 = vrot.slane %v5311, 4
    %v5317 = vshrl.u32 %v5179, 16
    %v5319 = vrot.slane %v5317, 7
    %v5320 = vshll.u32 %v5179, 16
    %v5322 = vor.u32 %v5319, %v5320
    %v5323 = vsel %vm437, %v5315, %v5322
    %v5325 = vshrl.u32 %v5180, 16
    %v5327 = vrot.slane %v5325, 7
    %v5328 = vshll.u32 %v5180, 16
    %v5330 = vor.u32 %v5327, %v5328
    %v5331 = vrot.slane %v5327, 4
    %v5333 = vshrl.u32 %v5181, 16
    %v5335 = vrot.slane %v5333, 7
    %v5336 = vshll.u32 %v5181, 16
    %v5338 = vor.u32 %v5335, %v5336
    %v5339 = vsel %vm437, %v5331, %v5338
    %v5341 = vshrl.u32 %v5182, 16
    %v5343 = vrot.slane %v5341, 7
    %v5344 = vshll.u32 %v5182, 16
    %v5346 = vor.u32 %v5343, %v5344
    %v5347 = vrot.slane %v5343, 4
    %v5349 = vshrl.u32 %v5183, 16
    %v5351 = vrot.slane %v5349, 7
    %v5352 = vshll.u32 %v5183, 16
    %v5354 = vor.u32 %v5351, %v5352
    %v5355 = vsel %vm437, %v5347, %v5354
    %v5357 = vshrl.u32 %v5184, 16
    %v5359 = vrot.slane %v5357, 7
    %v5360 = vshll.u32 %v5184, 16
    %v5362 = vor.u32 %v5359, %v5360
    %v5363 = vrot.slane %v5359, 4
    %v5365 = vshrl.u32 %v5185, 16
    %v5367 = vrot.slane %v5365, 7
    %v5368 = vshll.u32 %v5185, 16
    %v5370 = vor.u32 %v5367, %v5368
    %v5371 = vsel %vm437, %v5363, %v5370
    %v5373 = vshrl.u32 %v5186, 16
    %v5375 = vrot.slane %v5373, 7
    %v5376 = vshll.u32 %v5186, 16
    %v5378 = vor.u32 %v5375, %v5376
    %v5379 = vrot.slane %v5375, 4
    %v5381 = vshrl.u32 %v5187, 16
    %v5383 = vrot.slane %v5381, 7
    %v5384 = vshll.u32 %v5187, 16
    %v5386 = vor.u32 %v5383, %v5384
    %v5387 = vsel %vm437, %v5379, %v5386
    %v5389 = vshrl.u32 %v5188, 16
    %v5391 = vrot.slane %v5389, 7
    %v5392 = vshll.u32 %v5188, 16
    %v5394 = vor.u32 %v5391, %v5392
    %v5395 = vrot.slane %v5391, 4
    %v5397 = vshrl.u32 %v5189, 16
    %v5399 = vrot.slane %v5397, 7
    %v5400 = vshll.u32 %v5189, 16
    %v5402 = vor.u32 %v5399, %v5400
    %v5403 = vsel %vm437, %v5395, %v5402
    %v5405 = vshrl.u32 %v5190, 16
    %v5407 = vrot.slane %v5405, 7
    %v5408 = vshll.u32 %v5190, 16
    %v5410 = vor.u32 %v5407, %v5408
    %v5411 = vrot.slane %v5407, 4
    %v5413 = vshrl.u32 %v5191, 16
    %v5415 = vrot.slane %v5413, 7
    %v5416 = vshll.u32 %v5191, 16
    %v5418 = vor.u32 %v5415, %v5416
    %v5419 = vsel %vm437, %v5411, %v5418
    %v5421 = vshrl.u32 %v5192, 16
    %v5423 = vrot.slane %v5421, 7
    %v5424 = vshll.u32 %v5192, 16
    %v5426 = vor.u32 %v5423, %v5424
    %v5427 = vrot.slane %v5423, 4
    %v5429 = vshrl.u32 %v5193, 16
    %v5431 = vrot.slane %v5429, 7
    %v5432 = vshll.u32 %v5193, 16
    %v5434 = vor.u32 %v5431, %v5432
    %v5435 = vsel %vm437, %v5427, %v5434
    %v5437 = vshrl.u32 %v5194, 16
    %v5439 = vrot.slane %v5437, 7
    %v5440 = vshll.u32 %v5194, 16
    %v5442 = vor.u32 %v5439, %v5440
    %v5443 = vrot.slane %v5439, 4
    %v5445 = vshrl.u32 %v5195, 16
    %v5447 = vrot.slane %v5445, 7
    %v5448 = vshll.u32 %v5195, 16
    %v5450 = vor.u32 %v5447, %v5448
    %v5451 = vsel %vm437, %v5443, %v5450
    %v5453 = vshrl.u32 %v5196, 16
    %v5455 = vrot.slane %v5453, 7
    %v5456 = vshll.u32 %v5196, 16
    %v5458 = vor.u32 %v5455, %v5456
    %v5459 = vrot.slane %v5455, 4
    %v5461 = vshrl.u32 %v5197, 16
    %v5463 = vrot.slane %v5461, 7
    %v5464 = vshll.u32 %v5197, 16
    %v5466 = vor.u32 %v5463, %v5464
    %v5467 = vsel %vm437, %v5459, %v5466
    %v5469 = vshrl.u32 %v5198, 16
    %v5471 = vrot.slane %v5469, 7
    %v5472 = vshll.u32 %v5198, 16
    %v5474 = vor.u32 %v5471, %v5472
    %v5475 = vrot.slane %v5471, 4
    %v5477 = vshrl.u32 %v5199, 16
    %v5479 = vrot.slane %v5477, 7
    %v5480 = vshll.u32 %v5199, 16
    %v5482 = vor.u32 %v5479, %v5480
    %v5483 = vsel %vm437, %v5475, %v5482
    %v5485 = vshrl.u32 %v5200, 16
    %v5487 = vrot.slane %v5485, 7
    %v5488 = vshll.u32 %v5200, 16
    %v5490 = vor.u32 %v5487, %v5488
    %v5491 = vrot.slane %v5487, 4
    %v5493 = vshrl.u32 %v5201, 16
    %v5495 = vrot.slane %v5493, 7
    %v5496 = vshll.u32 %v5201, 16
    %v5498 = vor.u32 %v5495, %v5496
    %v5499 = vsel %vm437, %v5491, %v5498
    %v5501 = vshrl.u32 %v5202, 16
    %v5503 = vrot.slane %v5501, 7
    %v5504 = vshll.u32 %v5202, 16
    %v5506 = vor.u32 %v5503, %v5504
    %v5507 = vrot.slane %v5503, 4
    %v5509 = vshrl.u32 %v5203, 16
    %v5511 = vrot.slane %v5509, 7
    %v5512 = vshll.u32 %v5203, 16
    %v5514 = vor.u32 %v5511, %v5512
    %v5515 = vsel %vm437, %v5507, %v5514
    %v5517 = vshrl.u32 %v5204, 16
    %v5519 = vrot.slane %v5517, 7
    %v5520 = vshll.u32 %v5204, 16
    %v5522 = vor.u32 %v5519, %v5520
    %v5523 = vrot.slane %v5519, 4
    %v5525 = vshrl.u32 %v5205, 16
    %v5527 = vrot.slane %v5525, 7
    %v5528 = vshll.u32 %v5205, 16
    %v5530 = vor.u32 %v5527, %v5528
    %v5531 = vsel %vm437, %v5523, %v5530
    %v5533 = vshrl.u32 %v5206, 16
    %v5535 = vrot.slane %v5533, 7
    %v5536 = vshll.u32 %v5206, 16
    %v5538 = vor.u32 %v5535, %v5536
    %v5539 = vrot.slane %v5535, 4
    %v5541 = vshrl.u32 %v5207, 16
    %v5543 = vrot.slane %v5541, 7
    %v5544 = vshll.u32 %v5207, 16
    %v5546 = vor.u32 %v5543, %v5544
    %v5547 = vsel %vm437, %v5539, %v5546
    %v5549 = vshrl.u32 %v5208, 16
    %v5551 = vrot.slane %v5549, 7
    %v5552 = vshll.u32 %v5208, 16
    %v5554 = vor.u32 %v5551, %v5552
    %v5555 = vrot.slane %v5551, 4
    %v5557 = vshrl.u32 %v5209, 16
    %v5559 = vrot.slane %v5557, 7
    %v5560 = vshll.u32 %v5209, 16
    %v5562 = vor.u32 %v5559, %v5560
    %v5563 = vsel %vm437, %v5555, %v5562
    %v5565 = vshrl.u32 %v5210, 16
    %v5567 = vrot.slane %v5565, 7
    %v5568 = vshll.u32 %v5210, 16
    %v5570 = vor.u32 %v5567, %v5568
    %v5571 = vrot.slane %v5567, 4
    %v5573 = vshrl.u32 %v5211, 16
    %v5575 = vrot.slane %v5573, 7
    %v5576 = vshll.u32 %v5211, 16
    %v5578 = vor.u32 %v5575, %v5576
    %v5579 = vsel %vm437, %v5571, %v5578
    %v5581 = vshrl.u32 %v5212, 16
    %v5583 = vrot.slane %v5581, 7
    %v5584 = vshll.u32 %v5212, 16
    %v5586 = vor.u32 %v5583, %v5584
    %v5587 = vrot.slane %v5583, 4
    %v5589 = vshrl.u32 %v5213, 16
    %v5591 = vrot.slane %v5589, 7
    %v5592 = vshll.u32 %v5213, 16
    %v5594 = vor.u32 %v5591, %v5592
    %v5595 = vsel %vm437, %v5587, %v5594
    %v5597 = vshrl.u32 %v5214, 16
    %v5599 = vrot.slane %v5597, 7
    %v5600 = vshll.u32 %v5214, 16
    %v5602 = vor.u32 %v5599, %v5600
    %v5603 = vrot.slane %v5599, 4
    %v5605 = vshrl.u32 %v5215, 16
    %v5607 = vrot.slane %v5605, 7
    %v5608 = vshll.u32 %v5215, 16
    %v5610 = vor.u32 %v5607, %v5608
    %v5611 = vsel %vm437, %v5603, %v5610
    %v5613 = vshrl.u32 %v5216, 16
    %v5615 = vrot.slane %v5613, 7
    %v5616 = vshll.u32 %v5216, 16
    %v5618 = vor.u32 %v5615, %v5616
    %v5619 = vrot.slane %v5615, 4
    %v5621 = vshrl.u32 %v5217, 16
    %v5623 = vrot.slane %v5621, 7
    %v5624 = vshll.u32 %v5217, 16
    %v5626 = vor.u32 %v5623, %v5624
    %v5627 = vsel %vm437, %v5619, %v5626
    %v5629 = vshrl.u32 %v5218, 16
    %v5631 = vrot.slane %v5629, 7
    %v5632 = vshll.u32 %v5218, 16
    %v5634 = vor.u32 %v5631, %v5632
    %v5635 = vrot.slane %v5631, 4
    %v5637 = vshrl.u32 %v5219, 16
    %v5639 = vrot.slane %v5637, 7
    %v5640 = vshll.u32 %v5219, 16
    %v5642 = vor.u32 %v5639, %v5640
    %v5643 = vsel %vm437, %v5635, %v5642
    %v5645 = vshrl.u32 %v5220, 16
    %v5647 = vrot.slane %v5645, 7
    %v5648 = vshll.u32 %v5220, 16
    %v5650 = vor.u32 %v5647, %v5648
    %v5651 = vrot.slane %v5647, 4
    %v5653 = vshrl.u32 %v5221, 16
    %v5655 = vrot.slane %v5653, 7
    %v5656 = vshll.u32 %v5221, 16
    %v5658 = vor.u32 %v5655, %v5656
    %v5659 = vsel %vm437, %v5651, %v5658
    %v5661 = vshrl.u32 %v5222, 16
    %v5663 = vrot.slane %v5661, 7
    %v5664 = vshll.u32 %v5222, 16
    %v5666 = vor.u32 %v5663, %v5664
    %v5667 = vrot.slane %v5663, 4
    %v5669 = vshrl.u32 %v5223, 16
    %v5671 = vrot.slane %v5669, 7
    %v5672 = vshll.u32 %v5223, 16
    %v5674 = vor.u32 %v5671, %v5672
    %v5675 = vsel %vm437, %v5667, %v5674
    %v5677 = vshrl.u32 %v5224, 16
    %v5679 = vrot.slane %v5677, 7
    %v5680 = vshll.u32 %v5224, 16
    %v5682 = vor.u32 %v5679, %v5680
    %v5683 = vrot.slane %v5679, 4
    %v5685 = vshrl.u32 %v5225, 16
    %v5687 = vrot.slane %v5685, 7
    %v5688 = vshll.u32 %v5225, 16
    %v5690 = vor.u32 %v5687, %v5688
    %v5691 = vsel %vm437, %v5683, %v5690
    %v5693 = vshrl.u32 %v5226, 16
    %v5695 = vrot.slane %v5693, 7
    %v5696 = vshll.u32 %v5226, 16
    %v5698 = vor.u32 %v5695, %v5696
    %v5699 = vrot.slane %v5695, 4
    %v5701 = vshrl.u32 %v5227, 16
    %v5703 = vrot.slane %v5701, 7
    %v5704 = vshll.u32 %v5227, 16
    %v5706 = vor.u32 %v5703, %v5704
    %v5707 = vsel %vm437, %v5699, %v5706
    %s5768 = scalar_lea.vmem [#allocation3], 8
    %v5769 = vld [vmem:[%s5768] sm:$0xf]
    %v5770 = vsel %vm981, %v5234, %v5769
    %5771 = vst [vmem:[%s5768] sm:$0xf] %v5770
    %5772 = vst.msk [vmem:[%s5768 + $0x4] sm:$0xf] %vm182, %v5243
    %v5773 = vld [vmem:[%s5768 + $0x8] sm:$0xf]
    %v5774 = vsel %vm981, %v5250, %v5773
    %5775 = vst [vmem:[%s5768 + $0x8] sm:$0xf] %v5774
    %5776 = vst.msk [vmem:[%s5768 + $0xc] sm:$0xf] %vm182, %v5259
    %v5777 = vld [vmem:[%s5768 + $0x10] sm:$0xf]
    %v5778 = vsel %vm981, %v5266, %v5777
    %5779 = vst [vmem:[%s5768 + $0x10] sm:$0xf] %v5778
    %5780 = vst.msk [vmem:[%s5768 + $0x14] sm:$0xf] %vm182, %v5275
    %v5781 = vld [vmem:[%s5768 + $0x18] sm:$0xf]
    %v5782 = vsel %vm981, %v5282, %v5781
    %5783 = vst [vmem:[%s5768 + $0x18] sm:$0xf] %v5782
    %5784 = vst.msk [vmem:[%s5768 + $0x1c] sm:$0xf] %vm182, %v5291
    %v5785 = vld [vmem:[%s5768 + $0x20] sm:$0xf]
    %v5786 = vsel %vm981, %v5298, %v5785
    %5787 = vst [vmem:[%s5768 + $0x20] sm:$0xf] %v5786
    %5788 = vst.msk [vmem:[%s5768 + $0x24] sm:$0xf] %vm182, %v5307
    %v5789 = vld [vmem:[%s5768 + $0x28] sm:$0xf]
    %v5790 = vsel %vm981, %v5314, %v5789
    %5791 = vst [vmem:[%s5768 + $0x28] sm:$0xf] %v5790
    %5792 = vst.msk [vmem:[%s5768 + $0x2c] sm:$0xf] %vm182, %v5323
    %v5793 = vld [vmem:[%s5768 + $0x30] sm:$0xf]
    %v5794 = vsel %vm981, %v5330, %v5793
    %5795 = vst [vmem:[%s5768 + $0x30] sm:$0xf] %v5794
    %5796 = vst.msk [vmem:[%s5768 + $0x34] sm:$0xf] %vm182, %v5339
    %v5797 = vld [vmem:[%s5768 + $0x38] sm:$0xf]
    %v5798 = vsel %vm981, %v5346, %v5797
    %5799 = vst [vmem:[%s5768 + $0x38] sm:$0xf] %v5798
    %5800 = vst.msk [vmem:[%s5768 + $0x3c] sm:$0xf] %vm182, %v5355
    %v5801 = vld [vmem:[%s5768 + $0x40] sm:$0xf]
    %v5802 = vsel %vm981, %v5362, %v5801
    %5803 = vst [vmem:[%s5768 + $0x40] sm:$0xf] %v5802
    %5804 = vst.msk [vmem:[%s5768 + $0x44] sm:$0xf] %vm182, %v5371
    %v5805 = vld [vmem:[%s5768 + $0x48] sm:$0xf]
    %v5806 = vsel %vm981, %v5378, %v5805
    %5807 = vst [vmem:[%s5768 + $0x48] sm:$0xf] %v5806
    %5808 = vst.msk [vmem:[%s5768 + $0x4c] sm:$0xf] %vm182, %v5387
    %v5809 = vld [vmem:[%s5768 + $0x50] sm:$0xf]
    %v5810 = vsel %vm981, %v5394, %v5809
    %5811 = vst [vmem:[%s5768 + $0x50] sm:$0xf] %v5810
    %5812 = vst.msk [vmem:[%s5768 + $0x54] sm:$0xf] %vm182, %v5403
    %v5813 = vld [vmem:[%s5768 + $0x58] sm:$0xf]
    %v5814 = vsel %vm981, %v5410, %v5813
    %5815 = vst [vmem:[%s5768 + $0x58] sm:$0xf] %v5814
    %5816 = vst.msk [vmem:[%s5768 + $0x5c] sm:$0xf] %vm182, %v5419
    %v5817 = vld [vmem:[%s5768 + $0x60] sm:$0xf]
    %v5818 = vsel %vm981, %v5426, %v5817
    %5819 = vst [vmem:[%s5768 + $0x60] sm:$0xf] %v5818
    %5820 = vst.msk [vmem:[%s5768 + $0x64] sm:$0xf] %vm182, %v5435
    %v5821 = vld [vmem:[%s5768 + $0x68] sm:$0xf]
    %v5822 = vsel %vm981, %v5442, %v5821
    %5823 = vst [vmem:[%s5768 + $0x68] sm:$0xf] %v5822
    %5824 = vst.msk [vmem:[%s5768 + $0x6c] sm:$0xf] %vm182, %v5451
    %v5825 = vld [vmem:[%s5768 + $0x70] sm:$0xf]
    %v5826 = vsel %vm981, %v5458, %v5825
    %5827 = vst [vmem:[%s5768 + $0x70] sm:$0xf] %v5826
    %5828 = vst.msk [vmem:[%s5768 + $0x74] sm:$0xf] %vm182, %v5467
    %v5829 = vld [vmem:[%s5768 + $0x80] sm:$0xf]
    %v5830 = vsel %vm981, %v5474, %v5829
    %5831 = vst [vmem:[%s5768 + $0x80] sm:$0xf] %v5830
    %5832 = vst.msk [vmem:[%s5768 + $0x84] sm:$0xf] %vm182, %v5483
    %v5833 = vld [vmem:[%s5768 + $0x88] sm:$0xf]
    %v5834 = vsel %vm981, %v5490, %v5833
    %5835 = vst [vmem:[%s5768 + $0x88] sm:$0xf] %v5834
    %5836 = vst.msk [vmem:[%s5768 + $0x8c] sm:$0xf] %vm182, %v5499
    %v5837 = vld [vmem:[%s5768 + $0x90] sm:$0xf]
    %v5838 = vsel %vm981, %v5506, %v5837
    %5839 = vst [vmem:[%s5768 + $0x90] sm:$0xf] %v5838
    %5840 = vst.msk [vmem:[%s5768 + $0x94] sm:$0xf] %vm182, %v5515
    %v5841 = vld [vmem:[%s5768 + $0x98] sm:$0xf]
    %v5842 = vsel %vm981, %v5522, %v5841
    %5843 = vst [vmem:[%s5768 + $0x98] sm:$0xf] %v5842
    %5844 = vst.msk [vmem:[%s5768 + $0x9c] sm:$0xf] %vm182, %v5531
    %v5845 = vld [vmem:[%s5768 + $0xa0] sm:$0xf]
    %v5846 = vsel %vm981, %v5538, %v5845
    %5847 = vst [vmem:[%s5768 + $0xa0] sm:$0xf] %v5846
    %5848 = vst.msk [vmem:[%s5768 + $0xa4] sm:$0xf] %vm182, %v5547
    %v5849 = vld [vmem:[%s5768 + $0xa8] sm:$0xf]
    %v5850 = vsel %vm981, %v5554, %v5849
    %5851 = vst [vmem:[%s5768 + $0xa8] sm:$0xf] %v5850
    %5852 = vst.msk [vmem:[%s5768 + $0xac] sm:$0xf] %vm182, %v5563
    %v5853 = vld [vmem:[%s5768 + $0xb0] sm:$0xf]
    %v5854 = vsel %vm981, %v5570, %v5853
    %5855 = vst [vmem:[%s5768 + $0xb0] sm:$0xf] %v5854
    %5856 = vst.msk [vmem:[%s5768 + $0xb4] sm:$0xf] %vm182, %v5579
    %v5857 = vld [vmem:[%s5768 + $0xb8] sm:$0xf]
    %v5858 = vsel %vm981, %v5586, %v5857
    %5859 = vst [vmem:[%s5768 + $0xb8] sm:$0xf] %v5858
    %5860 = vst.msk [vmem:[%s5768 + $0xbc] sm:$0xf] %vm182, %v5595
    %v5861 = vld [vmem:[%s5768 + $0xc0] sm:$0xf]
    %v5862 = vsel %vm981, %v5602, %v5861
    %5863 = vst [vmem:[%s5768 + $0xc0] sm:$0xf] %v5862
    %5864 = vst.msk [vmem:[%s5768 + $0xc4] sm:$0xf] %vm182, %v5611
    %v5865 = vld [vmem:[%s5768 + $0xc8] sm:$0xf]
    %v5866 = vsel %vm981, %v5618, %v5865
    %5867 = vst [vmem:[%s5768 + $0xc8] sm:$0xf] %v5866
    %5868 = vst.msk [vmem:[%s5768 + $0xcc] sm:$0xf] %vm182, %v5627
    %v5869 = vld [vmem:[%s5768 + $0xd0] sm:$0xf]
    %v5870 = vsel %vm981, %v5634, %v5869
    %5871 = vst [vmem:[%s5768 + $0xd0] sm:$0xf] %v5870
    %5872 = vst.msk [vmem:[%s5768 + $0xd4] sm:$0xf] %vm182, %v5643
    %v5873 = vld [vmem:[%s5768 + $0xd8] sm:$0xf]
    %v5874 = vsel %vm981, %v5650, %v5873
    %5875 = vst [vmem:[%s5768 + $0xd8] sm:$0xf] %v5874
    %5876 = vst.msk [vmem:[%s5768 + $0xdc] sm:$0xf] %vm182, %v5659
    %v5877 = vld [vmem:[%s5768 + $0xe0] sm:$0xf]
    %v5878 = vsel %vm981, %v5666, %v5877
    %5879 = vst [vmem:[%s5768 + $0xe0] sm:$0xf] %v5878
    %5880 = vst.msk [vmem:[%s5768 + $0xe4] sm:$0xf] %vm182, %v5675
    %v5881 = vld [vmem:[%s5768 + $0xe8] sm:$0xf]
    %v5882 = vsel %vm981, %v5682, %v5881
    %5883 = vst [vmem:[%s5768 + $0xe8] sm:$0xf] %v5882
    %5884 = vst.msk [vmem:[%s5768 + $0xec] sm:$0xf] %vm182, %v5691
    %v5885 = vld [vmem:[%s5768 + $0xf0] sm:$0xf]
    %v5886 = vsel %vm981, %v5698, %v5885
    %5887 = vst [vmem:[%s5768 + $0xf0] sm:$0xf] %v5886
    %5888 = vst.msk [vmem:[%s5768 + $0xf4] sm:$0xf] %vm182, %v5707
    %5889 = vst.msk [vmem:[#allocation3] sm:$0xf] %vm1102, 0
    %5890 = vst.msk [vmem:[#allocation3 + $0x4] sm:$0xf] %vm1102, 0
    %5891 = vst.msk [vmem:[#allocation3 + $0x80] sm:$0xf] %vm1102, 0
    %5892 = vst.msk [vmem:[#allocation3 + $0x84] sm:$0xf] %vm1102, 0
    %5893 = vrot.lane.b32.xlu0 %v5168, 4
    %v5894 = vpop.permute.xlu0 %5893
    %5895 = vrot.lane.b32.xlu0 %v5169, 4
    %v5896 = vpop.permute.xlu0 %5895
    %5897 = vrot.lane.b32.xlu0 %v5170, 4
    %v5898 = vpop.permute.xlu0 %5897
    %5899 = vrot.lane.b32.xlu0 %v5171, 4
    %v5900 = vpop.permute.xlu0 %5899
    %5901 = vrot.lane.b32.xlu0 %v5172, 4
    %v5902 = vpop.permute.xlu0 %5901
    %5903 = vrot.lane.b32.xlu0 %v5173, 4
    %v5904 = vpop.permute.xlu0 %5903
    %5905 = vrot.lane.b32.xlu0 %v5174, 4
    %v5906 = vpop.permute.xlu0 %5905
    %5907 = vrot.lane.b32.xlu0 %v5175, 4
    %v5908 = vpop.permute.xlu0 %5907
    %5909 = vrot.lane.b32.xlu0 %v5176, 4
    %v5910 = vpop.permute.xlu0 %5909
    %5911 = vrot.lane.b32.xlu0 %v5177, 4
    %v5912 = vpop.permute.xlu0 %5911
    %5913 = vrot.lane.b32.xlu0 %v5178, 4
    %v5914 = vpop.permute.xlu0 %5913
    %5915 = vrot.lane.b32.xlu0 %v5179, 4
    %v5916 = vpop.permute.xlu0 %5915
    %5917 = vrot.lane.b32.xlu0 %v5180, 4
    %v5918 = vpop.permute.xlu0 %5917
    %5919 = vrot.lane.b32.xlu0 %v5181, 4
    %v5920 = vpop.permute.xlu0 %5919
    %5921 = vrot.lane.b32.xlu0 %v5182, 4
    %v5922 = vpop.permute.xlu0 %5921
    %5923 = vrot.lane.b32.xlu0 %v5183, 4
    %v5924 = vpop.permute.xlu0 %5923
    %5925 = vrot.lane.b32.xlu0 %v5184, 4
    %v5926 = vpop.permute.xlu0 %5925
    %5927 = vrot.lane.b32.xlu0 %v5185, 4
    %v5928 = vpop.permute.xlu0 %5927
    %5929 = vrot.lane.b32.xlu0 %v5186, 4
    %v5930 = vpop.permute.xlu0 %5929
    %5931 = vrot.lane.b32.xlu0 %v5187, 4
    %v5932 = vpop.permute.xlu0 %5931
    %5933 = vrot.lane.b32.xlu0 %v5188, 4
    %v5934 = vpop.permute.xlu0 %5933
    %5935 = vrot.lane.b32.xlu0 %v5189, 4
    %v5936 = vpop.permute.xlu0 %5935
    %5937 = vrot.lane.b32.xlu0 %v5190, 4
    %v5938 = vpop.permute.xlu0 %5937
    %5939 = vrot.lane.b32.xlu0 %v5191, 4
    %v5940 = vpop.permute.xlu0 %5939
    %5941 = vrot.lane.b32.xlu0 %v5192, 4
    %v5942 = vpop.permute.xlu0 %5941
    %5943 = vrot.lane.b32.xlu0 %v5193, 4
    %v5944 = vpop.permute.xlu0 %5943
    %5945 = vrot.lane.b32.xlu0 %v5194, 4
    %v5946 = vpop.permute.xlu0 %5945
    %5947 = vrot.lane.b32.xlu0 %v5195, 4
    %v5948 = vpop.permute.xlu0 %5947
    %5949 = vrot.lane.b32.xlu0 %v5196, 4
    %v5950 = vpop.permute.xlu0 %5949
    %5951 = vrot.lane.b32.xlu0 %v5197, 4
    %v5952 = vpop.permute.xlu0 %5951
    %5953 = vrot.lane.b32.xlu0 %v5198, 4
    %v5954 = vpop.permute.xlu0 %5953
    %5955 = vrot.lane.b32.xlu0 %v5199, 4
    %v5956 = vpop.permute.xlu0 %5955
    %5957 = vrot.lane.b32.xlu0 %v5200, 4
    %v5958 = vpop.permute.xlu0 %5957
    %5959 = vrot.lane.b32.xlu0 %v5201, 4
    %v5960 = vpop.permute.xlu0 %5959
    %5961 = vrot.lane.b32.xlu0 %v5202, 4
    %v5962 = vpop.permute.xlu0 %5961
    %5963 = vrot.lane.b32.xlu0 %v5203, 4
    %v5964 = vpop.permute.xlu0 %5963
    %5965 = vrot.lane.b32.xlu0 %v5204, 4
    %v5966 = vpop.permute.xlu0 %5965
    %5967 = vrot.lane.b32.xlu0 %v5205, 4
    %v5968 = vpop.permute.xlu0 %5967
    %5969 = vrot.lane.b32.xlu0 %v5206, 4
    %v5970 = vpop.permute.xlu0 %5969
    %5971 = vrot.lane.b32.xlu0 %v5207, 4
    %v5972 = vpop.permute.xlu0 %5971
    %5973 = vrot.lane.b32.xlu0 %v5208, 4
    %v5974 = vpop.permute.xlu0 %5973
    %5975 = vrot.lane.b32.xlu0 %v5209, 4
    %v5976 = vpop.permute.xlu0 %5975
    %5977 = vrot.lane.b32.xlu0 %v5210, 4
    %v5978 = vpop.permute.xlu0 %5977
    %5979 = vrot.lane.b32.xlu0 %v5211, 4
    %v5980 = vpop.permute.xlu0 %5979
    %5981 = vrot.lane.b32.xlu0 %v5212, 4
    %v5982 = vpop.permute.xlu0 %5981
    %5983 = vrot.lane.b32.xlu0 %v5213, 4
    %v5984 = vpop.permute.xlu0 %5983
    %5985 = vrot.lane.b32.xlu0 %v5214, 4
    %v5986 = vpop.permute.xlu0 %5985
    %5987 = vrot.lane.b32.xlu0 %v5215, 4
    %v5988 = vpop.permute.xlu0 %5987
    %5989 = vrot.lane.b32.xlu0 %v5216, 4
    %v5990 = vpop.permute.xlu0 %5989
    %5991 = vrot.lane.b32.xlu0 %v5217, 4
    %v5992 = vpop.permute.xlu0 %5991
    %5993 = vrot.lane.b32.xlu0 %v5218, 4
    %v5994 = vpop.permute.xlu0 %5993
    %5995 = vrot.lane.b32.xlu0 %v5219, 4
    %v5996 = vpop.permute.xlu0 %5995
    %5997 = vrot.lane.b32.xlu0 %v5220, 4
    %v5998 = vpop.permute.xlu0 %5997
    %5999 = vrot.lane.b32.xlu0 %v5221, 4
    %v6000 = vpop.permute.xlu0 %5999
    %6001 = vrot.lane.b32.xlu0 %v5222, 4
    %v6002 = vpop.permute.xlu0 %6001
    %6003 = vrot.lane.b32.xlu0 %v5223, 4
    %v6004 = vpop.permute.xlu0 %6003
    %6005 = vrot.lane.b32.xlu0 %v5224, 4
    %v6006 = vpop.permute.xlu0 %6005
    %6007 = vrot.lane.b32.xlu0 %v5225, 4
    %v6008 = vpop.permute.xlu0 %6007
    %6009 = vrot.lane.b32.xlu0 %v5226, 4
    %v6010 = vpop.permute.xlu0 %6009
    %6011 = vrot.lane.b32.xlu0 %v5227, 4
    %v6012 = vpop.permute.xlu0 %6011
    %6073 = vst.msk [vmem:[%s5768] sm:$0xf] %vm1102, %v5894
    %6074 = vst.msk [vmem:[%s5768 + $0x4] sm:$0xf] %vm1102, %v5896
    %6075 = vst.msk [vmem:[%s5768 + $0x8] sm:$0xf] %vm1102, %v5898
    %6076 = vst.msk [vmem:[%s5768 + $0xc] sm:$0xf] %vm1102, %v5900
    %6077 = vst.msk [vmem:[%s5768 + $0x10] sm:$0xf] %vm1102, %v5902
    %6078 = vst.msk [vmem:[%s5768 + $0x14] sm:$0xf] %vm1102, %v5904
    %6079 = vst.msk [vmem:[%s5768 + $0x18] sm:$0xf] %vm1102, %v5906
    %6080 = vst.msk [vmem:[%s5768 + $0x1c] sm:$0xf] %vm1102, %v5908
    %6081 = vst.msk [vmem:[%s5768 + $0x20] sm:$0xf] %vm1102, %v5910
    %6082 = vst.msk [vmem:[%s5768 + $0x24] sm:$0xf] %vm1102, %v5912
    %6083 = vst.msk [vmem:[%s5768 + $0x28] sm:$0xf] %vm1102, %v5914
    %6084 = vst.msk [vmem:[%s5768 + $0x2c] sm:$0xf] %vm1102, %v5916
    %6085 = vst.msk [vmem:[%s5768 + $0x30] sm:$0xf] %vm1102, %v5918
    %6086 = vst.msk [vmem:[%s5768 + $0x34] sm:$0xf] %vm1102, %v5920
    %6087 = vst.msk [vmem:[%s5768 + $0x38] sm:$0xf] %vm1102, %v5922
    %6088 = vst.msk [vmem:[%s5768 + $0x3c] sm:$0xf] %vm1102, %v5924
    %6089 = vst.msk [vmem:[%s5768 + $0x40] sm:$0xf] %vm1102, %v5926
    %6090 = vst.msk [vmem:[%s5768 + $0x44] sm:$0xf] %vm1102, %v5928
    %6091 = vst.msk [vmem:[%s5768 + $0x48] sm:$0xf] %vm1102, %v5930
    %6092 = vst.msk [vmem:[%s5768 + $0x4c] sm:$0xf] %vm1102, %v5932
    %6093 = vst.msk [vmem:[%s5768 + $0x50] sm:$0xf] %vm1102, %v5934
    %6094 = vst.msk [vmem:[%s5768 + $0x54] sm:$0xf] %vm1102, %v5936
    %6095 = vst.msk [vmem:[%s5768 + $0x58] sm:$0xf] %vm1102, %v5938
    %6096 = vst.msk [vmem:[%s5768 + $0x5c] sm:$0xf] %vm1102, %v5940
    %6097 = vst.msk [vmem:[%s5768 + $0x60] sm:$0xf] %vm1102, %v5942
    %6098 = vst.msk [vmem:[%s5768 + $0x64] sm:$0xf] %vm1102, %v5944
    %6099 = vst.msk [vmem:[%s5768 + $0x68] sm:$0xf] %vm1102, %v5946
    %6100 = vst.msk [vmem:[%s5768 + $0x6c] sm:$0xf] %vm1102, %v5948
    %6101 = vst.msk [vmem:[%s5768 + $0x70] sm:$0xf] %vm1102, %v5950
    %6102 = vst.msk [vmem:[%s5768 + $0x74] sm:$0xf] %vm1102, %v5952
    %6103 = vst.msk [vmem:[%s5768 + $0x80] sm:$0xf] %vm1102, %v5954
    %6104 = vst.msk [vmem:[%s5768 + $0x84] sm:$0xf] %vm1102, %v5956
    %6105 = vst.msk [vmem:[%s5768 + $0x88] sm:$0xf] %vm1102, %v5958
    %6106 = vst.msk [vmem:[%s5768 + $0x8c] sm:$0xf] %vm1102, %v5960
    %6107 = vst.msk [vmem:[%s5768 + $0x90] sm:$0xf] %vm1102, %v5962
    %6108 = vst.msk [vmem:[%s5768 + $0x94] sm:$0xf] %vm1102, %v5964
    %6109 = vst.msk [vmem:[%s5768 + $0x98] sm:$0xf] %vm1102, %v5966
    %6110 = vst.msk [vmem:[%s5768 + $0x9c] sm:$0xf] %vm1102, %v5968
    %6111 = vst.msk [vmem:[%s5768 + $0xa0] sm:$0xf] %vm1102, %v5970
    %6112 = vst.msk [vmem:[%s5768 + $0xa4] sm:$0xf] %vm1102, %v5972
    %6113 = vst.msk [vmem:[%s5768 + $0xa8] sm:$0xf] %vm1102, %v5974
    %6114 = vst.msk [vmem:[%s5768 + $0xac] sm:$0xf] %vm1102, %v5976
    %6115 = vst.msk [vmem:[%s5768 + $0xb0] sm:$0xf] %vm1102, %v5978
    %6116 = vst.msk [vmem:[%s5768 + $0xb4] sm:$0xf] %vm1102, %v5980
    %6117 = vst.msk [vmem:[%s5768 + $0xb8] sm:$0xf] %vm1102, %v5982
    %6118 = vst.msk [vmem:[%s5768 + $0xbc] sm:$0xf] %vm1102, %v5984
    %6119 = vst.msk [vmem:[%s5768 + $0xc0] sm:$0xf] %vm1102, %v5986
    %6120 = vst.msk [vmem:[%s5768 + $0xc4] sm:$0xf] %vm1102, %v5988
    %6121 = vst.msk [vmem:[%s5768 + $0xc8] sm:$0xf] %vm1102, %v5990
    %6122 = vst.msk [vmem:[%s5768 + $0xcc] sm:$0xf] %vm1102, %v5992
    %6123 = vst.msk [vmem:[%s5768 + $0xd0] sm:$0xf] %vm1102, %v5994
    %6124 = vst.msk [vmem:[%s5768 + $0xd4] sm:$0xf] %vm1102, %v5996
    %6125 = vst.msk [vmem:[%s5768 + $0xd8] sm:$0xf] %vm1102, %v5998
    %6126 = vst.msk [vmem:[%s5768 + $0xdc] sm:$0xf] %vm1102, %v6000
    %6127 = vst.msk [vmem:[%s5768 + $0xe0] sm:$0xf] %vm1102, %v6002
    %6128 = vst.msk [vmem:[%s5768 + $0xe4] sm:$0xf] %vm1102, %v6004
    %6129 = vst.msk [vmem:[%s5768 + $0xe8] sm:$0xf] %vm1102, %v6006
    %6130 = vst.msk [vmem:[%s5768 + $0xec] sm:$0xf] %vm1102, %v6008
    %6131 = vst.msk [vmem:[%s5768 + $0xf0] sm:$0xf] %vm1102, %v6010
    %6132 = vst.msk [vmem:[%s5768 + $0xf4] sm:$0xf] %vm1102, %v6012
    %6133 = vst.msk [vmem:[#allocation3] sm:$0xf] %vm1347, 0
    %6134 = vst.msk [vmem:[#allocation3 + $0x4] sm:$0xf] %vm1347, 0
    %6135 = vst.msk [vmem:[#allocation3 + $0x80] sm:$0xf] %vm1347, 0
    %6136 = vst.msk [vmem:[#allocation3 + $0x84] sm:$0xf] %vm1347, 0
    %v6137 = vld [vmem:[#allocation3 + $0x4] sm:$0x8]
    %v6138 = vsel %vm1354, 0, %v6137
    %6139 = vst [vmem:[#allocation3 + $0x4] sm:$0x8] %v6138
    %v6140 = vld [vmem:[#allocation3 + $0xc] sm:$0x8]
    %v6141 = vsel %vm1354, 0, %v6140
    %6142 = vst [vmem:[#allocation3 + $0xc] sm:$0x8] %v6141
    %v6143 = vld [vmem:[#allocation3 + $0x14] sm:$0x8]
    %v6144 = vsel %vm1354, 0, %v6143
    %6145 = vst [vmem:[#allocation3 + $0x14] sm:$0x8] %v6144
    %v6146 = vld [vmem:[#allocation3 + $0x1c] sm:$0x8]
    %v6147 = vsel %vm1354, 0, %v6146
    %6148 = vst [vmem:[#allocation3 + $0x1c] sm:$0x8] %v6147
    %v6149 = vld [vmem:[#allocation3 + $0x24] sm:$0x8]
    %v6150 = vsel %vm1354, 0, %v6149
    %6151 = vst [vmem:[#allocation3 + $0x24] sm:$0x8] %v6150
    %v6152 = vld [vmem:[#allocation3 + $0x2c] sm:$0x8]
    %v6153 = vsel %vm1354, 0, %v6152
    %6154 = vst [vmem:[#allocation3 + $0x2c] sm:$0x8] %v6153
    %v6155 = vld [vmem:[#allocation3 + $0x34] sm:$0x8]
    %v6156 = vsel %vm1354, 0, %v6155
    %6157 = vst [vmem:[#allocation3 + $0x34] sm:$0x8] %v6156
    %v6158 = vld [vmem:[#allocation3 + $0x3c] sm:$0x8]
    %v6159 = vsel %vm1354, 0, %v6158
    %6160 = vst [vmem:[#allocation3 + $0x3c] sm:$0x8] %v6159
    %v6161 = vld [vmem:[#allocation3 + $0x44] sm:$0x8]
    %v6162 = vsel %vm1354, 0, %v6161
    %6163 = vst [vmem:[#allocation3 + $0x44] sm:$0x8] %v6162
    %v6164 = vld [vmem:[#allocation3 + $0x4c] sm:$0x8]
    %v6165 = vsel %vm1354, 0, %v6164
    %6166 = vst [vmem:[#allocation3 + $0x4c] sm:$0x8] %v6165
    %v6167 = vld [vmem:[#allocation3 + $0x54] sm:$0x8]
    %v6168 = vsel %vm1354, 0, %v6167
    %6169 = vst [vmem:[#allocation3 + $0x54] sm:$0x8] %v6168
    %v6170 = vld [vmem:[#allocation3 + $0x5c] sm:$0x8]
    %v6171 = vsel %vm1354, 0, %v6170
    %6172 = vst [vmem:[#allocation3 + $0x5c] sm:$0x8] %v6171
    %v6173 = vld [vmem:[#allocation3 + $0x64] sm:$0x8]
    %v6174 = vsel %vm1354, 0, %v6173
    %6175 = vst [vmem:[#allocation3 + $0x64] sm:$0x8] %v6174
    %v6176 = vld [vmem:[#allocation3 + $0x6c] sm:$0x8]
    %v6177 = vsel %vm1354, 0, %v6176
    %6178 = vst [vmem:[#allocation3 + $0x6c] sm:$0x8] %v6177
    %v6179 = vld [vmem:[#allocation3 + $0x74] sm:$0x8]
    %v6180 = vsel %vm1354, 0, %v6179
    %6181 = vst [vmem:[#allocation3 + $0x74] sm:$0x8] %v6180
    %v6182 = vld [vmem:[#allocation3 + $0x7c] sm:$0x8]
    %v6183 = vsel %vm1354, 0, %v6182
    %6184 = vst [vmem:[#allocation3 + $0x7c] sm:$0x8] %v6183
    %v6185 = vld [vmem:[#allocation3 + $0x84] sm:$0x8]
    %v6186 = vsel %vm1354, 0, %v6185
    %6187 = vst [vmem:[#allocation3 + $0x84] sm:$0x8] %v6186
    %v6188 = vld [vmem:[#allocation3 + $0x8c] sm:$0x8]
    %v6189 = vsel %vm1354, 0, %v6188
    %6190 = vst [vmem:[#allocation3 + $0x8c] sm:$0x8] %v6189
    %v6191 = vld [vmem:[#allocation3 + $0x94] sm:$0x8]
    %v6192 = vsel %vm1354, 0, %v6191
    %6193 = vst [vmem:[#allocation3 + $0x94] sm:$0x8] %v6192
    %v6194 = vld [vmem:[#allocation3 + $0x9c] sm:$0x8]
    %v6195 = vsel %vm1354, 0, %v6194
    %6196 = vst [vmem:[#allocation3 + $0x9c] sm:$0x8] %v6195
    %v6197 = vld [vmem:[#allocation3 + $0xa4] sm:$0x8]
    %v6198 = vsel %vm1354, 0, %v6197
    %6199 = vst [vmem:[#allocation3 + $0xa4] sm:$0x8] %v6198
    %v6200 = vld [vmem:[#allocation3 + $0xac] sm:$0x8]
    %v6201 = vsel %vm1354, 0, %v6200
    %6202 = vst [vmem:[#allocation3 + $0xac] sm:$0x8] %v6201
    %v6203 = vld [vmem:[#allocation3 + $0xb4] sm:$0x8]
    %v6204 = vsel %vm1354, 0, %v6203
    %6205 = vst [vmem:[#allocation3 + $0xb4] sm:$0x8] %v6204
    %v6206 = vld [vmem:[#allocation3 + $0xbc] sm:$0x8]
    %v6207 = vsel %vm1354, 0, %v6206
    %6208 = vst [vmem:[#allocation3 + $0xbc] sm:$0x8] %v6207
    %v6209 = vld [vmem:[#allocation3 + $0xc4] sm:$0x8]
    %v6210 = vsel %vm1354, 0, %v6209
    %6211 = vst [vmem:[#allocation3 + $0xc4] sm:$0x8] %v6210
    %v6212 = vld [vmem:[#allocation3 + $0xcc] sm:$0x8]
    %v6213 = vsel %vm1354, 0, %v6212
    %6214 = vst [vmem:[#allocation3 + $0xcc] sm:$0x8] %v6213
    %v6215 = vld [vmem:[#allocation3 + $0xd4] sm:$0x8]
    %v6216 = vsel %vm1354, 0, %v6215
    %6217 = vst [vmem:[#allocation3 + $0xd4] sm:$0x8] %v6216
    %v6218 = vld [vmem:[#allocation3 + $0xdc] sm:$0x8]
    %v6219 = vsel %vm1354, 0, %v6218
    %6220 = vst [vmem:[#allocation3 + $0xdc] sm:$0x8] %v6219
    %v6221 = vld [vmem:[#allocation3 + $0xe4] sm:$0x8]
    %v6222 = vsel %vm1354, 0, %v6221
    %6223 = vst [vmem:[#allocation3 + $0xe4] sm:$0x8] %v6222
    %v6224 = vld [vmem:[#allocation3 + $0xec] sm:$0x8]
    %v6225 = vsel %vm1354, 0, %v6224
    %6226 = vst [vmem:[#allocation3 + $0xec] sm:$0x8] %v6225
    %v6227 = vld [vmem:[#allocation3 + $0xf4] sm:$0x8]
    %v6228 = vsel %vm1354, 0, %v6227
    %6229 = vst [vmem:[#allocation3 + $0xf4] sm:$0x8] %v6228
    %v6230 = vld [vmem:[#allocation3 + $0xfc] sm:$0x8]
    %v6231 = vsel %vm1354, 0, %v6230
    %6232 = vst [vmem:[#allocation3 + $0xfc] sm:$0x8] %v6231
    %v6233 = vrot.slane %v5229, 4
    %v6234 = vrot.slane %v5232, 5
    %v6235 = vor.u32 %v6233, %v6234
    %v6236 = vrot.slane %v6235, 4
    %v6237 = vrot.slane %v5240, 5
    %v6238 = vsel %vm1453, %v6236, %v6237
    %v6239 = vrot.slane %v5237, 4
    %v6240 = vor.u32 %v6239, %v6237
    %v6241 = vrot.slane %v6240, 4
    %v6242 = vrot.slane %v5245, 4
    %v6243 = vrot.slane %v5248, 5
    %v6244 = vor.u32 %v6242, %v6243
    %v6245 = vrot.slane %v6244, 4
    %v6246 = vrot.slane %v5256, 5
    %v6247 = vsel %vm1453, %v6245, %v6246
    %v6248 = vrot.slane %v5253, 4
    %v6249 = vor.u32 %v6248, %v6246
    %v6250 = vrot.slane %v6249, 4
    %v6251 = vrot.slane %v5261, 4
    %v6252 = vrot.slane %v5264, 5
    %v6253 = vor.u32 %v6251, %v6252
    %v6254 = vrot.slane %v6253, 4
    %v6255 = vrot.slane %v5272, 5
    %v6256 = vsel %vm1453, %v6254, %v6255
    %v6257 = vrot.slane %v5269, 4
    %v6258 = vor.u32 %v6257, %v6255
    %v6259 = vrot.slane %v6258, 4
    %v6260 = vrot.slane %v5277, 4
    %v6261 = vrot.slane %v5280, 5
    %v6262 = vor.u32 %v6260, %v6261
    %v6263 = vrot.slane %v6262, 4
    %v6264 = vrot.slane %v5288, 5
    %v6265 = vsel %vm1453, %v6263, %v6264
    %v6266 = vrot.slane %v5285, 4
    %v6267 = vor.u32 %v6266, %v6264
    %v6268 = vrot.slane %v6267, 4
    %v6269 = vrot.slane %v5293, 4
    %v6270 = vrot.slane %v5296, 5
    %v6271 = vor.u32 %v6269, %v6270
    %v6272 = vrot.slane %v6271, 4
    %v6273 = vrot.slane %v5304, 5
    %v6274 = vsel %vm1453, %v6272, %v6273
    %v6275 = vrot.slane %v5301, 4
    %v6276 = vor.u32 %v6275, %v6273
    %v6277 = vrot.slane %v6276, 4
    %v6278 = vrot.slane %v5309, 4
    %v6279 = vrot.slane %v5312, 5
    %v6280 = vor.u32 %v6278, %v6279
    %v6281 = vrot.slane %v6280, 4
    %v6282 = vrot.slane %v5320, 5
    %v6283 = vsel %vm1453, %v6281, %v6282
    %v6284 = vrot.slane %v5317, 4
    %v6285 = vor.u32 %v6284, %v6282
    %v6286 = vrot.slane %v6285, 4
    %v6287 = vrot.slane %v5325, 4
    %v6288 = vrot.slane %v5328, 5
    %v6289 = vor.u32 %v6287, %v6288
    %v6290 = vrot.slane %v6289, 4
    %v6291 = vrot.slane %v5336, 5
    %v6292 = vsel %vm1453, %v6290, %v6291
    %v6293 = vrot.slane %v5333, 4
    %v6294 = vor.u32 %v6293, %v6291
    %v6295 = vrot.slane %v6294, 4
    %v6296 = vrot.slane %v5341, 4
    %v6297 = vrot.slane %v5344, 5
    %v6298 = vor.u32 %v6296, %v6297
    %v6299 = vrot.slane %v6298, 4
    %v6300 = vrot.slane %v5352, 5
    %v6301 = vsel %vm1453, %v6299, %v6300
    %v6302 = vrot.slane %v5349, 4
    %v6303 = vor.u32 %v6302, %v6300
    %v6304 = vrot.slane %v6303, 4
    %v6305 = vrot.slane %v5357, 4
    %v6306 = vrot.slane %v5360, 5
    %v6307 = vor.u32 %v6305, %v6306
    %v6308 = vrot.slane %v6307, 4
    %v6309 = vrot.slane %v5368, 5
    %v6310 = vsel %vm1453, %v6308, %v6309
    %v6311 = vrot.slane %v5365, 4
    %v6312 = vor.u32 %v6311, %v6309
    %v6313 = vrot.slane %v6312, 4
    %v6314 = vrot.slane %v5373, 4
    %v6315 = vrot.slane %v5376, 5
    %v6316 = vor.u32 %v6314, %v6315
    %v6317 = vrot.slane %v6316, 4
    %v6318 = vrot.slane %v5384, 5
    %v6319 = vsel %vm1453, %v6317, %v6318
    %v6320 = vrot.slane %v5381, 4
    %v6321 = vor.u32 %v6320, %v6318
    %v6322 = vrot.slane %v6321, 4
    %v6323 = vrot.slane %v5389, 4
    %v6324 = vrot.slane %v5392, 5
    %v6325 = vor.u32 %v6323, %v6324
    %v6326 = vrot.slane %v6325, 4
    %v6327 = vrot.slane %v5400, 5
    %v6328 = vsel %vm1453, %v6326, %v6327
    %v6329 = vrot.slane %v5397, 4
    %v6330 = vor.u32 %v6329, %v6327
    %v6331 = vrot.slane %v6330, 4
    %v6332 = vrot.slane %v5405, 4
    %v6333 = vrot.slane %v5408, 5
    %v6334 = vor.u32 %v6332, %v6333
    %v6335 = vrot.slane %v6334, 4
    %v6336 = vrot.slane %v5416, 5
    %v6337 = vsel %vm1453, %v6335, %v6336
    %v6338 = vrot.slane %v5413, 4
    %v6339 = vor.u32 %v6338, %v6336
    %v6340 = vrot.slane %v6339, 4
    %v6341 = vrot.slane %v5421, 4
    %v6342 = vrot.slane %v5424, 5
    %v6343 = vor.u32 %v6341, %v6342
    %v6344 = vrot.slane %v6343, 4
    %v6345 = vrot.slane %v5432, 5
    %v6346 = vsel %vm1453, %v6344, %v6345
    %v6347 = vrot.slane %v5429, 4
    %v6348 = vor.u32 %v6347, %v6345
    %v6349 = vrot.slane %v6348, 4
    %v6350 = vrot.slane %v5437, 4
    %v6351 = vrot.slane %v5440, 5
    %v6352 = vor.u32 %v6350, %v6351
    %v6353 = vrot.slane %v6352, 4
    %v6354 = vrot.slane %v5448, 5
    %v6355 = vsel %vm1453, %v6353, %v6354
    %v6356 = vrot.slane %v5445, 4
    %v6357 = vor.u32 %v6356, %v6354
    %v6358 = vrot.slane %v6357, 4
    %v6359 = vrot.slane %v5453, 4
    %v6360 = vrot.slane %v5456, 5
    %v6361 = vor.u32 %v6359, %v6360
    %v6362 = vrot.slane %v6361, 4
    %v6363 = vrot.slane %v5464, 5
    %v6364 = vsel %vm1453, %v6362, %v6363
    %v6365 = vrot.slane %v5461, 4
    %v6366 = vor.u32 %v6365, %v6363
    %v6367 = vrot.slane %v6366, 4
    %v6368 = vrot.slane %v5469, 4
    %v6369 = vrot.slane %v5472, 5
    %v6370 = vor.u32 %v6368, %v6369
    %v6371 = vrot.slane %v6370, 4
    %v6372 = vrot.slane %v5480, 5
    %v6373 = vsel %vm1453, %v6371, %v6372
    %v6374 = vrot.slane %v5477, 4
    %v6375 = vor.u32 %v6374, %v6372
    %v6376 = vrot.slane %v6375, 4
    %v6377 = vrot.slane %v5485, 4
    %v6378 = vrot.slane %v5488, 5
    %v6379 = vor.u32 %v6377, %v6378
    %v6380 = vrot.slane %v6379, 4
    %v6381 = vrot.slane %v5496, 5
    %v6382 = vsel %vm1453, %v6380, %v6381
    %v6383 = vrot.slane %v5493, 4
    %v6384 = vor.u32 %v6383, %v6381
    %v6385 = vrot.slane %v6384, 4
    %v6386 = vrot.slane %v5501, 4
    %v6387 = vrot.slane %v5504, 5
    %v6388 = vor.u32 %v6386, %v6387
    %v6389 = vrot.slane %v6388, 4
    %v6390 = vrot.slane %v5512, 5
    %v6391 = vsel %vm1453, %v6389, %v6390
    %v6392 = vrot.slane %v5509, 4
    %v6393 = vor.u32 %v6392, %v6390
    %v6394 = vrot.slane %v6393, 4
    %v6395 = vrot.slane %v5517, 4
    %v6396 = vrot.slane %v5520, 5
    %v6397 = vor.u32 %v6395, %v6396
    %v6398 = vrot.slane %v6397, 4
    %v6399 = vrot.slane %v5528, 5
    %v6400 = vsel %vm1453, %v6398, %v6399
    %v6401 = vrot.slane %v5525, 4
    %v6402 = vor.u32 %v6401, %v6399
    %v6403 = vrot.slane %v6402, 4
    %v6404 = vrot.slane %v5533, 4
    %v6405 = vrot.slane %v5536, 5
    %v6406 = vor.u32 %v6404, %v6405
    %v6407 = vrot.slane %v6406, 4
    %v6408 = vrot.slane %v5544, 5
    %v6409 = vsel %vm1453, %v6407, %v6408
    %v6410 = vrot.slane %v5541, 4
    %v6411 = vor.u32 %v6410, %v6408
    %v6412 = vrot.slane %v6411, 4
    %v6413 = vrot.slane %v5549, 4
    %v6414 = vrot.slane %v5552, 5
    %v6415 = vor.u32 %v6413, %v6414
    %v6416 = vrot.slane %v6415, 4
    %v6417 = vrot.slane %v5560, 5
    %v6418 = vsel %vm1453, %v6416, %v6417
    %v6419 = vrot.slane %v5557, 4
    %v6420 = vor.u32 %v6419, %v6417
    %v6421 = vrot.slane %v6420, 4
    %v6422 = vrot.slane %v5565, 4
    %v6423 = vrot.slane %v5568, 5
    %v6424 = vor.u32 %v6422, %v6423
    %v6425 = vrot.slane %v6424, 4
    %v6426 = vrot.slane %v5576, 5
    %v6427 = vsel %vm1453, %v6425, %v6426
    %v6428 = vrot.slane %v5573, 4
    %v6429 = vor.u32 %v6428, %v6426
    %v6430 = vrot.slane %v6429, 4
    %v6431 = vrot.slane %v5581, 4
    %v6432 = vrot.slane %v5584, 5
    %v6433 = vor.u32 %v6431, %v6432
    %v6434 = vrot.slane %v6433, 4
    %v6435 = vrot.slane %v5592, 5
    %v6436 = vsel %vm1453, %v6434, %v6435
    %v6437 = vrot.slane %v5589, 4
    %v6438 = vor.u32 %v6437, %v6435
    %v6439 = vrot.slane %v6438, 4
    %v6440 = vrot.slane %v5597, 4
    %v6441 = vrot.slane %v5600, 5
    %v6442 = vor.u32 %v6440, %v6441
    %v6443 = vrot.slane %v6442, 4
    %v6444 = vrot.slane %v5608, 5
    %v6445 = vsel %vm1453, %v6443, %v6444
    %v6446 = vrot.slane %v5605, 4
    %v6447 = vor.u32 %v6446, %v6444
    %v6448 = vrot.slane %v6447, 4
    %v6449 = vrot.slane %v5613, 4
    %v6450 = vrot.slane %v5616, 5
    %v6451 = vor.u32 %v6449, %v6450
    %v6452 = vrot.slane %v6451, 4
    %v6453 = vrot.slane %v5624, 5
    %v6454 = vsel %vm1453, %v6452, %v6453
    %v6455 = vrot.slane %v5621, 4
    %v6456 = vor.u32 %v6455, %v6453
    %v6457 = vrot.slane %v6456, 4
    %v6458 = vrot.slane %v5629, 4
    %v6459 = vrot.slane %v5632, 5
    %v6460 = vor.u32 %v6458, %v6459
    %v6461 = vrot.slane %v6460, 4
    %v6462 = vrot.slane %v5640, 5
    %v6463 = vsel %vm1453, %v6461, %v6462
    %v6464 = vrot.slane %v5637, 4
    %v6465 = vor.u32 %v6464, %v6462
    %v6466 = vrot.slane %v6465, 4
    %v6467 = vrot.slane %v5645, 4
    %v6468 = vrot.slane %v5648, 5
    %v6469 = vor.u32 %v6467, %v6468
    %v6470 = vrot.slane %v6469, 4
    %v6471 = vrot.slane %v5656, 5
    %v6472 = vsel %vm1453, %v6470, %v6471
    %v6473 = vrot.slane %v5653, 4
    %v6474 = vor.u32 %v6473, %v6471
    %v6475 = vrot.slane %v6474, 4
    %v6476 = vrot.slane %v5661, 4
    %v6477 = vrot.slane %v5664, 5
    %v6478 = vor.u32 %v6476, %v6477
    %v6479 = vrot.slane %v6478, 4
    %v6480 = vrot.slane %v5672, 5
    %v6481 = vsel %vm1453, %v6479, %v6480
    %v6482 = vrot.slane %v5669, 4
    %v6483 = vor.u32 %v6482, %v6480
    %v6484 = vrot.slane %v6483, 4
    %v6485 = vrot.slane %v5677, 4
    %v6486 = vrot.slane %v5680, 5
    %v6487 = vor.u32 %v6485, %v6486
    %v6488 = vrot.slane %v6487, 4
    %v6489 = vrot.slane %v5688, 5
    %v6490 = vsel %vm1453, %v6488, %v6489
    %v6491 = vrot.slane %v5685, 4
    %v6492 = vor.u32 %v6491, %v6489
    %v6493 = vrot.slane %v6492, 4
    %v6494 = vrot.slane %v5693, 4
    %v6495 = vrot.slane %v5696, 5
    %v6496 = vor.u32 %v6494, %v6495
    %v6497 = vrot.slane %v6496, 4
    %v6498 = vrot.slane %v5704, 5
    %v6499 = vsel %vm1453, %v6497, %v6498
    %v6500 = vrot.slane %v5701, 4
    %v6501 = vor.u32 %v6500, %v6498
    %v6502 = vrot.slane %v6501, 4
    %6503 = vrot.lane.b32.xlu0 %v6238, 8
    %v6504 = vpop.permute.xlu0 %6503
    %6505 = vrot.lane.b32.xlu0 %v6241, 8
    %v6506 = vpop.permute.xlu0 %6505
    %6507 = vrot.lane.b32.xlu0 %v6247, 8
    %v6508 = vpop.permute.xlu0 %6507
    %6509 = vrot.lane.b32.xlu0 %v6250, 8
    %v6510 = vpop.permute.xlu0 %6509
    %6511 = vrot.lane.b32.xlu0 %v6256, 8
    %v6512 = vpop.permute.xlu0 %6511
    %6513 = vrot.lane.b32.xlu0 %v6259, 8
    %v6514 = vpop.permute.xlu0 %6513
    %6515 = vrot.lane.b32.xlu0 %v6265, 8
    %v6516 = vpop.permute.xlu0 %6515
    %6517 = vrot.lane.b32.xlu0 %v6268, 8
    %v6518 = vpop.permute.xlu0 %6517
    %6519 = vrot.lane.b32.xlu0 %v6274, 8
    %v6520 = vpop.permute.xlu0 %6519
    %6521 = vrot.lane.b32.xlu0 %v6277, 8
    %v6522 = vpop.permute.xlu0 %6521
    %6523 = vrot.lane.b32.xlu0 %v6283, 8
    %v6524 = vpop.permute.xlu0 %6523
    %6525 = vrot.lane.b32.xlu0 %v6286, 8
    %v6526 = vpop.permute.xlu0 %6525
    %6527 = vrot.lane.b32.xlu0 %v6292, 8
    %v6528 = vpop.permute.xlu0 %6527
    %6529 = vrot.lane.b32.xlu0 %v6295, 8
    %v6530 = vpop.permute.xlu0 %6529
    %6531 = vrot.lane.b32.xlu0 %v6301, 8
    %v6532 = vpop.permute.xlu0 %6531
    %6533 = vrot.lane.b32.xlu0 %v6304, 8
    %v6534 = vpop.permute.xlu0 %6533
    %6535 = vrot.lane.b32.xlu0 %v6310, 8
    %v6536 = vpop.permute.xlu0 %6535
    %6537 = vrot.lane.b32.xlu0 %v6313, 8
    %v6538 = vpop.permute.xlu0 %6537
    %6539 = vrot.lane.b32.xlu0 %v6319, 8
    %v6540 = vpop.permute.xlu0 %6539
    %6541 = vrot.lane.b32.xlu0 %v6322, 8
    %v6542 = vpop.permute.xlu0 %6541
    %6543 = vrot.lane.b32.xlu0 %v6328, 8
    %v6544 = vpop.permute.xlu0 %6543
    %6545 = vrot.lane.b32.xlu0 %v6331, 8
    %v6546 = vpop.permute.xlu0 %6545
    %6547 = vrot.lane.b32.xlu0 %v6337, 8
    %v6548 = vpop.permute.xlu0 %6547
    %6549 = vrot.lane.b32.xlu0 %v6340, 8
    %v6550 = vpop.permute.xlu0 %6549
    %6551 = vrot.lane.b32.xlu0 %v6346, 8
    %v6552 = vpop.permute.xlu0 %6551
    %6553 = vrot.lane.b32.xlu0 %v6349, 8
    %v6554 = vpop.permute.xlu0 %6553
    %6555 = vrot.lane.b32.xlu0 %v6355, 8
    %v6556 = vpop.permute.xlu0 %6555
    %6557 = vrot.lane.b32.xlu0 %v6358, 8
    %v6558 = vpop.permute.xlu0 %6557
    %6559 = vrot.lane.b32.xlu0 %v6364, 8
    %v6560 = vpop.permute.xlu0 %6559
    %6561 = vrot.lane.b32.xlu0 %v6367, 8
    %v6562 = vpop.permute.xlu0 %6561
    %6563 = vrot.lane.b32.xlu0 %v6373, 8
    %v6564 = vpop.permute.xlu0 %6563
    %6565 = vrot.lane.b32.xlu0 %v6376, 8
    %v6566 = vpop.permute.xlu0 %6565
    %6567 = vrot.lane.b32.xlu0 %v6382, 8
    %v6568 = vpop.permute.xlu0 %6567
    %6569 = vrot.lane.b32.xlu0 %v6385, 8
    %v6570 = vpop.permute.xlu0 %6569
    %6571 = vrot.lane.b32.xlu0 %v6391, 8
    %v6572 = vpop.permute.xlu0 %6571
    %6573 = vrot.lane.b32.xlu0 %v6394, 8
    %v6574 = vpop.permute.xlu0 %6573
    %6575 = vrot.lane.b32.xlu0 %v6400, 8
    %v6576 = vpop.permute.xlu0 %6575
    %6577 = vrot.lane.b32.xlu0 %v6403, 8
    %v6578 = vpop.permute.xlu0 %6577
    %6579 = vrot.lane.b32.xlu0 %v6409, 8
    %v6580 = vpop.permute.xlu0 %6579
    %6581 = vrot.lane.b32.xlu0 %v6412, 8
    %v6582 = vpop.permute.xlu0 %6581
    %6583 = vrot.lane.b32.xlu0 %v6418, 8
    %v6584 = vpop.permute.xlu0 %6583
    %6585 = vrot.lane.b32.xlu0 %v6421, 8
    %v6586 = vpop.permute.xlu0 %6585
    %6587 = vrot.lane.b32.xlu0 %v6427, 8
    %v6588 = vpop.permute.xlu0 %6587
    %6589 = vrot.lane.b32.xlu0 %v6430, 8
    %v6590 = vpop.permute.xlu0 %6589
    %6591 = vrot.lane.b32.xlu0 %v6436, 8
    %v6592 = vpop.permute.xlu0 %6591
    %6593 = vrot.lane.b32.xlu0 %v6439, 8
    %v6594 = vpop.permute.xlu0 %6593
    %6595 = vrot.lane.b32.xlu0 %v6445, 8
    %v6596 = vpop.permute.xlu0 %6595
    %6597 = vrot.lane.b32.xlu0 %v6448, 8
    %v6598 = vpop.permute.xlu0 %6597
    %6599 = vrot.lane.b32.xlu0 %v6454, 8
    %v6600 = vpop.permute.xlu0 %6599
    %6601 = vrot.lane.b32.xlu0 %v6457, 8
    %v6602 = vpop.permute.xlu0 %6601
    %6603 = vrot.lane.b32.xlu0 %v6463, 8
    %v6604 = vpop.permute.xlu0 %6603
    %6605 = vrot.lane.b32.xlu0 %v6466, 8
    %v6606 = vpop.permute.xlu0 %6605
    %6607 = vrot.lane.b32.xlu0 %v6472, 8
    %v6608 = vpop.permute.xlu0 %6607
    %6609 = vrot.lane.b32.xlu0 %v6475, 8
    %v6610 = vpop.permute.xlu0 %6609
    %6611 = vrot.lane.b32.xlu0 %v6481, 8
    %v6612 = vpop.permute.xlu0 %6611
    %6613 = vrot.lane.b32.xlu0 %v6484, 8
    %v6614 = vpop.permute.xlu0 %6613
    %6615 = vrot.lane.b32.xlu0 %v6490, 8
    %v6616 = vpop.permute.xlu0 %6615
    %6617 = vrot.lane.b32.xlu0 %v6493, 8
    %v6618 = vpop.permute.xlu0 %6617
    %6619 = vrot.lane.b32.xlu0 %v6499, 8
    %v6620 = vpop.permute.xlu0 %6619
    %6621 = vrot.lane.b32.xlu0 %v6502, 8
    %v6622 = vpop.permute.xlu0 %6621
    %6683 = vst.msk [vmem:[%s5768] sm:$0xf] %vm1347, %v6504
    %v6684 = vld [vmem:[%s5768 + $0x4] sm:$0xf]
    %v6685 = vsel %vm1906, %v6506, %v6684
    %6686 = vst [vmem:[%s5768 + $0x4] sm:$0xf] %v6685
    %6687 = vst.msk [vmem:[%s5768 + $0x8] sm:$0xf] %vm1347, %v6508
    %v6688 = vld [vmem:[%s5768 + $0xc] sm:$0xf]
    %v6689 = vsel %vm1906, %v6510, %v6688
    %6690 = vst [vmem:[%s5768 + $0xc] sm:$0xf] %v6689
    %6691 = vst.msk [vmem:[%s5768 + $0x10] sm:$0xf] %vm1347, %v6512
    %v6692 = vld [vmem:[%s5768 + $0x14] sm:$0xf]
    %v6693 = vsel %vm1906, %v6514, %v6692
    %6694 = vst [vmem:[%s5768 + $0x14] sm:$0xf] %v6693
    %6695 = vst.msk [vmem:[%s5768 + $0x18] sm:$0xf] %vm1347, %v6516
    %v6696 = vld [vmem:[%s5768 + $0x1c] sm:$0xf]
    %v6697 = vsel %vm1906, %v6518, %v6696
    %6698 = vst [vmem:[%s5768 + $0x1c] sm:$0xf] %v6697
    %6699 = vst.msk [vmem:[%s5768 + $0x20] sm:$0xf] %vm1347, %v6520
    %v6700 = vld [vmem:[%s5768 + $0x24] sm:$0xf]
    %v6701 = vsel %vm1906, %v6522, %v6700
    %6702 = vst [vmem:[%s5768 + $0x24] sm:$0xf] %v6701
    %6703 = vst.msk [vmem:[%s5768 + $0x28] sm:$0xf] %vm1347, %v6524
    %v6704 = vld [vmem:[%s5768 + $0x2c] sm:$0xf]
    %v6705 = vsel %vm1906, %v6526, %v6704
    %6706 = vst [vmem:[%s5768 + $0x2c] sm:$0xf] %v6705
    %6707 = vst.msk [vmem:[%s5768 + $0x30] sm:$0xf] %vm1347, %v6528
    %v6708 = vld [vmem:[%s5768 + $0x34] sm:$0xf]
    %v6709 = vsel %vm1906, %v6530, %v6708
    %6710 = vst [vmem:[%s5768 + $0x34] sm:$0xf] %v6709
    %6711 = vst.msk [vmem:[%s5768 + $0x38] sm:$0xf] %vm1347, %v6532
    %v6712 = vld [vmem:[%s5768 + $0x3c] sm:$0xf]
    %v6713 = vsel %vm1906, %v6534, %v6712
    %6714 = vst [vmem:[%s5768 + $0x3c] sm:$0xf] %v6713
    %6715 = vst.msk [vmem:[%s5768 + $0x40] sm:$0xf] %vm1347, %v6536
    %v6716 = vld [vmem:[%s5768 + $0x44] sm:$0xf]
    %v6717 = vsel %vm1906, %v6538, %v6716
    %6718 = vst [vmem:[%s5768 + $0x44] sm:$0xf] %v6717
    %6719 = vst.msk [vmem:[%s5768 + $0x48] sm:$0xf] %vm1347, %v6540
    %v6720 = vld [vmem:[%s5768 + $0x4c] sm:$0xf]
    %v6721 = vsel %vm1906, %v6542, %v6720
    %6722 = vst [vmem:[%s5768 + $0x4c] sm:$0xf] %v6721
    %6723 = vst.msk [vmem:[%s5768 + $0x50] sm:$0xf] %vm1347, %v6544
    %v6724 = vld [vmem:[%s5768 + $0x54] sm:$0xf]
    %v6725 = vsel %vm1906, %v6546, %v6724
    %6726 = vst [vmem:[%s5768 + $0x54] sm:$0xf] %v6725
    %6727 = vst.msk [vmem:[%s5768 + $0x58] sm:$0xf] %vm1347, %v6548
    %v6728 = vld [vmem:[%s5768 + $0x5c] sm:$0xf]
    %v6729 = vsel %vm1906, %v6550, %v6728
    %6730 = vst [vmem:[%s5768 + $0x5c] sm:$0xf] %v6729
    %6731 = vst.msk [vmem:[%s5768 + $0x60] sm:$0xf] %vm1347, %v6552
    %v6732 = vld [vmem:[%s5768 + $0x64] sm:$0xf]
    %v6733 = vsel %vm1906, %v6554, %v6732
    %6734 = vst [vmem:[%s5768 + $0x64] sm:$0xf] %v6733
    %6735 = vst.msk [vmem:[%s5768 + $0x68] sm:$0xf] %vm1347, %v6556
    %v6736 = vld [vmem:[%s5768 + $0x6c] sm:$0xf]
    %v6737 = vsel %vm1906, %v6558, %v6736
    %6738 = vst [vmem:[%s5768 + $0x6c] sm:$0xf] %v6737
    %6739 = vst.msk [vmem:[%s5768 + $0x70] sm:$0xf] %vm1347, %v6560
    %v6740 = vld [vmem:[%s5768 + $0x74] sm:$0xf]
    %v6741 = vsel %vm1906, %v6562, %v6740
    %6742 = vst [vmem:[%s5768 + $0x74] sm:$0xf] %v6741
    %6743 = vst.msk [vmem:[%s5768 + $0x80] sm:$0xf] %vm1347, %v6564
    %v6744 = vld [vmem:[%s5768 + $0x84] sm:$0xf]
    %v6745 = vsel %vm1906, %v6566, %v6744
    %6746 = vst [vmem:[%s5768 + $0x84] sm:$0xf] %v6745
    %6747 = vst.msk [vmem:[%s5768 + $0x88] sm:$0xf] %vm1347, %v6568
    %v6748 = vld [vmem:[%s5768 + $0x8c] sm:$0xf]
    %v6749 = vsel %vm1906, %v6570, %v6748
    %6750 = vst [vmem:[%s5768 + $0x8c] sm:$0xf] %v6749
    %6751 = vst.msk [vmem:[%s5768 + $0x90] sm:$0xf] %vm1347, %v6572
    %v6752 = vld [vmem:[%s5768 + $0x94] sm:$0xf]
    %v6753 = vsel %vm1906, %v6574, %v6752
    %6754 = vst [vmem:[%s5768 + $0x94] sm:$0xf] %v6753
    %6755 = vst.msk [vmem:[%s5768 + $0x98] sm:$0xf] %vm1347, %v6576
    %v6756 = vld [vmem:[%s5768 + $0x9c] sm:$0xf]
    %v6757 = vsel %vm1906, %v6578, %v6756
    %6758 = vst [vmem:[%s5768 + $0x9c] sm:$0xf] %v6757
    %6759 = vst.msk [vmem:[%s5768 + $0xa0] sm:$0xf] %vm1347, %v6580
    %v6760 = vld [vmem:[%s5768 + $0xa4] sm:$0xf]
    %v6761 = vsel %vm1906, %v6582, %v6760
    %6762 = vst [vmem:[%s5768 + $0xa4] sm:$0xf] %v6761
    %6763 = vst.msk [vmem:[%s5768 + $0xa8] sm:$0xf] %vm1347, %v6584
    %v6764 = vld [vmem:[%s5768 + $0xac] sm:$0xf]
    %v6765 = vsel %vm1906, %v6586, %v6764
    %6766 = vst [vmem:[%s5768 + $0xac] sm:$0xf] %v6765
    %6767 = vst.msk [vmem:[%s5768 + $0xb0] sm:$0xf] %vm1347, %v6588
    %v6768 = vld [vmem:[%s5768 + $0xb4] sm:$0xf]
    %v6769 = vsel %vm1906, %v6590, %v6768
    %6770 = vst [vmem:[%s5768 + $0xb4] sm:$0xf] %v6769
    %6771 = vst.msk [vmem:[%s5768 + $0xb8] sm:$0xf] %vm1347, %v6592
    %v6772 = vld [vmem:[%s5768 + $0xbc] sm:$0xf]
    %v6773 = vsel %vm1906, %v6594, %v6772
    %6774 = vst [vmem:[%s5768 + $0xbc] sm:$0xf] %v6773
    %6775 = vst.msk [vmem:[%s5768 + $0xc0] sm:$0xf] %vm1347, %v6596
    %v6776 = vld [vmem:[%s5768 + $0xc4] sm:$0xf]
    %v6777 = vsel %vm1906, %v6598, %v6776
    %6778 = vst [vmem:[%s5768 + $0xc4] sm:$0xf] %v6777
    %6779 = vst.msk [vmem:[%s5768 + $0xc8] sm:$0xf] %vm1347, %v6600
    %v6780 = vld [vmem:[%s5768 + $0xcc] sm:$0xf]
    %v6781 = vsel %vm1906, %v6602, %v6780
    %6782 = vst [vmem:[%s5768 + $0xcc] sm:$0xf] %v6781
    %6783 = vst.msk [vmem:[%s5768 + $0xd0] sm:$0xf] %vm1347, %v6604
    %v6784 = vld [vmem:[%s5768 + $0xd4] sm:$0xf]
    %v6785 = vsel %vm1906, %v6606, %v6784
    %6786 = vst [vmem:[%s5768 + $0xd4] sm:$0xf] %v6785
    %6787 = vst.msk [vmem:[%s5768 + $0xd8] sm:$0xf] %vm1347, %v6608
    %v6788 = vld [vmem:[%s5768 + $0xdc] sm:$0xf]
    %v6789 = vsel %vm1906, %v6610, %v6788
    %6790 = vst [vmem:[%s5768 + $0xdc] sm:$0xf] %v6789
    %6791 = vst.msk [vmem:[%s5768 + $0xe0] sm:$0xf] %vm1347, %v6612
    %v6792 = vld [vmem:[%s5768 + $0xe4] sm:$0xf]
    %v6793 = vsel %vm1906, %v6614, %v6792
    %6794 = vst [vmem:[%s5768 + $0xe4] sm:$0xf] %v6793
    %6795 = vst.msk [vmem:[%s5768 + $0xe8] sm:$0xf] %vm1347, %v6616
    %v6796 = vld [vmem:[%s5768 + $0xec] sm:$0xf]
    %v6797 = vsel %vm1906, %v6618, %v6796
    %6798 = vst [vmem:[%s5768 + $0xec] sm:$0xf] %v6797
    %6799 = vst.msk [vmem:[%s5768 + $0xf0] sm:$0xf] %vm1347, %v6620
    %v6800 = vld [vmem:[%s5768 + $0xf4] sm:$0xf]
    %v6801 = vsel %vm1906, %v6622, %v6800
    %6802 = vst [vmem:[%s5768 + $0xf4] sm:$0xf] %v6801
    %v6803 = vld [vmem:[#allocation3] sm:$0x1]
    %v6804 = vsel %vm2027, 0, %v6803
    %6805 = vst [vmem:[#allocation3] sm:$0x1] %v6804
    %v6806 = vld [vmem:[#allocation3 + $0x8] sm:$0x1]
    %v6807 = vsel %vm2027, 0, %v6806
    %6808 = vst [vmem:[#allocation3 + $0x8] sm:$0x1] %v6807
    %v6809 = vld [vmem:[#allocation3 + $0x10] sm:$0x1]
    %v6810 = vsel %vm2027, 0, %v6809
    %6811 = vst [vmem:[#allocation3 + $0x10] sm:$0x1] %v6810
    %v6812 = vld [vmem:[#allocation3 + $0x18] sm:$0x1]
    %v6813 = vsel %vm2027, 0, %v6812
    %6814 = vst [vmem:[#allocation3 + $0x18] sm:$0x1] %v6813
    %v6815 = vld [vmem:[#allocation3 + $0x20] sm:$0x1]
    %v6816 = vsel %vm2027, 0, %v6815
    %6817 = vst [vmem:[#allocation3 + $0x20] sm:$0x1] %v6816
    %v6818 = vld [vmem:[#allocation3 + $0x28] sm:$0x1]
    %v6819 = vsel %vm2027, 0, %v6818
    %6820 = vst [vmem:[#allocation3 + $0x28] sm:$0x1] %v6819
    %v6821 = vld [vmem:[#allocation3 + $0x30] sm:$0x1]
    %v6822 = vsel %vm2027, 0, %v6821
    %6823 = vst [vmem:[#allocation3 + $0x30] sm:$0x1] %v6822
    %v6824 = vld [vmem:[#allocation3 + $0x38] sm:$0x1]
    %v6825 = vsel %vm2027, 0, %v6824
    %6826 = vst [vmem:[#allocation3 + $0x38] sm:$0x1] %v6825
    %v6827 = vld [vmem:[#allocation3 + $0x40] sm:$0x1]
    %v6828 = vsel %vm2027, 0, %v6827
    %6829 = vst [vmem:[#allocation3 + $0x40] sm:$0x1] %v6828
    %v6830 = vld [vmem:[#allocation3 + $0x48] sm:$0x1]
    %v6831 = vsel %vm2027, 0, %v6830
    %6832 = vst [vmem:[#allocation3 + $0x48] sm:$0x1] %v6831
    %v6833 = vld [vmem:[#allocation3 + $0x50] sm:$0x1]
    %v6834 = vsel %vm2027, 0, %v6833
    %6835 = vst [vmem:[#allocation3 + $0x50] sm:$0x1] %v6834
    %v6836 = vld [vmem:[#allocation3 + $0x58] sm:$0x1]
    %v6837 = vsel %vm2027, 0, %v6836
    %6838 = vst [vmem:[#allocation3 + $0x58] sm:$0x1] %v6837
    %v6839 = vld [vmem:[#allocation3 + $0x60] sm:$0x1]
    %v6840 = vsel %vm2027, 0, %v6839
    %6841 = vst [vmem:[#allocation3 + $0x60] sm:$0x1] %v6840
    %v6842 = vld [vmem:[#allocation3 + $0x68] sm:$0x1]
    %v6843 = vsel %vm2027, 0, %v6842
    %6844 = vst [vmem:[#allocation3 + $0x68] sm:$0x1] %v6843
    %v6845 = vld [vmem:[#allocation3 + $0x70] sm:$0x1]
    %v6846 = vsel %vm2027, 0, %v6845
    %6847 = vst [vmem:[#allocation3 + $0x70] sm:$0x1] %v6846
    %v6848 = vld [vmem:[#allocation3 + $0x78] sm:$0x1]
    %v6849 = vsel %vm2027, 0, %v6848
    %6850 = vst [vmem:[#allocation3 + $0x78] sm:$0x1] %v6849
    %v6851 = vld [vmem:[#allocation3 + $0x80] sm:$0x1]
    %v6852 = vsel %vm2027, 0, %v6851
    %6853 = vst [vmem:[#allocation3 + $0x80] sm:$0x1] %v6852
    %v6854 = vld [vmem:[#allocation3 + $0x88] sm:$0x1]
    %v6855 = vsel %vm2027, 0, %v6854
    %6856 = vst [vmem:[#allocation3 + $0x88] sm:$0x1] %v6855
    %v6857 = vld [vmem:[#allocation3 + $0x90] sm:$0x1]
    %v6858 = vsel %vm2027, 0, %v6857
    %6859 = vst [vmem:[#allocation3 + $0x90] sm:$0x1] %v6858
    %v6860 = vld [vmem:[#allocation3 + $0x98] sm:$0x1]
    %v6861 = vsel %vm2027, 0, %v6860
    %6862 = vst [vmem:[#allocation3 + $0x98] sm:$0x1] %v6861
    %v6863 = vld [vmem:[#allocation3 + $0xa0] sm:$0x1]
    %v6864 = vsel %vm2027, 0, %v6863
    %6865 = vst [vmem:[#allocation3 + $0xa0] sm:$0x1] %v6864
    %v6866 = vld [vmem:[#allocation3 + $0xa8] sm:$0x1]
    %v6867 = vsel %vm2027, 0, %v6866
    %6868 = vst [vmem:[#allocation3 + $0xa8] sm:$0x1] %v6867
    %v6869 = vld [vmem:[#allocation3 + $0xb0] sm:$0x1]
    %v6870 = vsel %vm2027, 0, %v6869
    %6871 = vst [vmem:[#allocation3 + $0xb0] sm:$0x1] %v6870
    %v6872 = vld [vmem:[#allocation3 + $0xb8] sm:$0x1]
    %v6873 = vsel %vm2027, 0, %v6872
    %6874 = vst [vmem:[#allocation3 + $0xb8] sm:$0x1] %v6873
    %v6875 = vld [vmem:[#allocation3 + $0xc0] sm:$0x1]
    %v6876 = vsel %vm2027, 0, %v6875
    %6877 = vst [vmem:[#allocation3 + $0xc0] sm:$0x1] %v6876
    %v6878 = vld [vmem:[#allocation3 + $0xc8] sm:$0x1]
    %v6879 = vsel %vm2027, 0, %v6878
    %6880 = vst [vmem:[#allocation3 + $0xc8] sm:$0x1] %v6879
    %v6881 = vld [vmem:[#allocation3 + $0xd0] sm:$0x1]
    %v6882 = vsel %vm2027, 0, %v6881
    %6883 = vst [vmem:[#allocation3 + $0xd0] sm:$0x1] %v6882
    %v6884 = vld [vmem:[#allocation3 + $0xd8] sm:$0x1]
    %v6885 = vsel %vm2027, 0, %v6884
    %6886 = vst [vmem:[#allocation3 + $0xd8] sm:$0x1] %v6885
    %v6887 = vld [vmem:[#allocation3 + $0xe0] sm:$0x1]
    %v6888 = vsel %vm2027, 0, %v6887
    %6889 = vst [vmem:[#allocation3 + $0xe0] sm:$0x1] %v6888
    %v6890 = vld [vmem:[#allocation3 + $0xe8] sm:$0x1]
    %v6891 = vsel %vm2027, 0, %v6890
    %6892 = vst [vmem:[#allocation3 + $0xe8] sm:$0x1] %v6891
    %v6893 = vld [vmem:[#allocation3 + $0xf0] sm:$0x1]
    %v6894 = vsel %vm2027, 0, %v6893
    %6895 = vst [vmem:[#allocation3 + $0xf0] sm:$0x1] %v6894
    %v6896 = vld [vmem:[#allocation3 + $0xf8] sm:$0x1]
    %v6897 = vsel %vm2027, 0, %v6896
    %6898 = vst [vmem:[#allocation3 + $0xf8] sm:$0x1] %v6897
    %v6901 = vunpack.c.l.b16 %v4961
    %v6902 = vunpack.c.h.b16 %v4961
    %v6903 = vunpack.c.l.b16 %v4977
    %v6904 = vunpack.c.h.b16 %v4977
    %v6905 = vpack.c.b16 %v6901, %v6901
    %v6906 = vpack.c.b16 %v6902, %v6902
    %v6907 = vpack.c.b16 %v6903, %v6903
    %v6908 = vpack.c.b16 %v6904, %v6904
    %v6910 = vshrl.u32 %v6905, 16
    %v6912 = vrot.slane %v6910, 7
    %v6913 = vshll.u32 %v6905, 16
    %v6915 = vor.u32 %v6912, %v6913
    %v6916 = vrot.slane %v6912, 4
    %v6918 = vshrl.u32 %v6906, 16
    %v6920 = vrot.slane %v6918, 7
    %v6921 = vshll.u32 %v6906, 16
    %v6923 = vor.u32 %v6920, %v6921
    %v6924 = vsel %vm437, %v6916, %v6923
    %v6926 = vshrl.u32 %v6907, 16
    %v6928 = vrot.slane %v6926, 7
    %v6929 = vshll.u32 %v6907, 16
    %v6931 = vor.u32 %v6928, %v6929
    %v6932 = vrot.slane %v6928, 4
    %v6934 = vshrl.u32 %v6908, 16
    %v6936 = vrot.slane %v6934, 7
    %v6937 = vshll.u32 %v6908, 16
    %v6939 = vor.u32 %v6936, %v6937
    %v6940 = vsel %vm437, %v6932, %v6939
    %6941 = vrot.lane.b32.xlu0 %v5234, 12
    %v6942 = vpop.permute.xlu0 %6941
    %6943 = vrot.lane.b32.xlu0 %v5243, 12
    %v6944 = vpop.permute.xlu0 %6943
    %6945 = vrot.lane.b32.xlu0 %v5250, 12
    %v6946 = vpop.permute.xlu0 %6945
    %6947 = vrot.lane.b32.xlu0 %v5259, 12
    %v6948 = vpop.permute.xlu0 %6947
    %6949 = vrot.lane.b32.xlu0 %v5266, 12
    %v6950 = vpop.permute.xlu0 %6949
    %6951 = vrot.lane.b32.xlu0 %v5275, 12
    %v6952 = vpop.permute.xlu0 %6951
    %6953 = vrot.lane.b32.xlu0 %v5282, 12
    %v6954 = vpop.permute.xlu0 %6953
    %6955 = vrot.lane.b32.xlu0 %v5291, 12
    %v6956 = vpop.permute.xlu0 %6955
    %6957 = vrot.lane.b32.xlu0 %v5298, 12
    %v6958 = vpop.permute.xlu0 %6957
    %6959 = vrot.lane.b32.xlu0 %v5307, 12
    %v6960 = vpop.permute.xlu0 %6959
    %6961 = vrot.lane.b32.xlu0 %v5314, 12
    %v6962 = vpop.permute.xlu0 %6961
    %6963 = vrot.lane.b32.xlu0 %v5323, 12
    %v6964 = vpop.permute.xlu0 %6963
    %6965 = vrot.lane.b32.xlu0 %v5330, 12
    %v6966 = vpop.permute.xlu0 %6965
    %6967 = vrot.lane.b32.xlu0 %v5339, 12
    %v6968 = vpop.permute.xlu0 %6967
    %6969 = vrot.lane.b32.xlu0 %v5346, 12
    %v6970 = vpop.permute.xlu0 %6969
    %6971 = vrot.lane.b32.xlu0 %v5355, 12
    %v6972 = vpop.permute.xlu0 %6971
    %6973 = vrot.lane.b32.xlu0 %v5362, 12
    %v6974 = vpop.permute.xlu0 %6973
    %6975 = vrot.lane.b32.xlu0 %v5371, 12
    %v6976 = vpop.permute.xlu0 %6975
    %6977 = vrot.lane.b32.xlu0 %v5378, 12
    %v6978 = vpop.permute.xlu0 %6977
    %6979 = vrot.lane.b32.xlu0 %v5387, 12
    %v6980 = vpop.permute.xlu0 %6979
    %6981 = vrot.lane.b32.xlu0 %v5394, 12
    %v6982 = vpop.permute.xlu0 %6981
    %6983 = vrot.lane.b32.xlu0 %v5403, 12
    %v6984 = vpop.permute.xlu0 %6983
    %6985 = vrot.lane.b32.xlu0 %v5410, 12
    %v6986 = vpop.permute.xlu0 %6985
    %6987 = vrot.lane.b32.xlu0 %v5419, 12
    %v6988 = vpop.permute.xlu0 %6987
    %6989 = vrot.lane.b32.xlu0 %v5426, 12
    %v6990 = vpop.permute.xlu0 %6989
    %6991 = vrot.lane.b32.xlu0 %v5435, 12
    %v6992 = vpop.permute.xlu0 %6991
    %6993 = vrot.lane.b32.xlu0 %v5442, 12
    %v6994 = vpop.permute.xlu0 %6993
    %6995 = vrot.lane.b32.xlu0 %v5451, 12
    %v6996 = vpop.permute.xlu0 %6995
    %6997 = vrot.lane.b32.xlu0 %v5458, 12
    %v6998 = vpop.permute.xlu0 %6997
    %6999 = vrot.lane.b32.xlu0 %v5467, 12
    %v7000 = vpop.permute.xlu0 %6999
    %7001 = vrot.lane.b32.xlu0 %v6915, 12
    %v7002 = vpop.permute.xlu0 %7001
    %7003 = vrot.lane.b32.xlu0 %v6924, 12
    %v7004 = vpop.permute.xlu0 %7003
    %7005 = vrot.lane.b32.xlu0 %v5474, 12
    %v7006 = vpop.permute.xlu0 %7005
    %7007 = vrot.lane.b32.xlu0 %v5483, 12
    %v7008 = vpop.permute.xlu0 %7007
    %7009 = vrot.lane.b32.xlu0 %v5490, 12
    %v7010 = vpop.permute.xlu0 %7009
    %7011 = vrot.lane.b32.xlu0 %v5499, 12
    %v7012 = vpop.permute.xlu0 %7011
    %7013 = vrot.lane.b32.xlu0 %v5506, 12
    %v7014 = vpop.permute.xlu0 %7013
    %7015 = vrot.lane.b32.xlu0 %v5515, 12
    %v7016 = vpop.permute.xlu0 %7015
    %7017 = vrot.lane.b32.xlu0 %v5522, 12
    %v7018 = vpop.permute.xlu0 %7017
    %7019 = vrot.lane.b32.xlu0 %v5531, 12
    %v7020 = vpop.permute.xlu0 %7019
    %7021 = vrot.lane.b32.xlu0 %v5538, 12
    %v7022 = vpop.permute.xlu0 %7021
    %7023 = vrot.lane.b32.xlu0 %v5547, 12
    %v7024 = vpop.permute.xlu0 %7023
    %7025 = vrot.lane.b32.xlu0 %v5554, 12
    %v7026 = vpop.permute.xlu0 %7025
    %7027 = vrot.lane.b32.xlu0 %v5563, 12
    %v7028 = vpop.permute.xlu0 %7027
    %7029 = vrot.lane.b32.xlu0 %v5570, 12
    %v7030 = vpop.permute.xlu0 %7029
    %7031 = vrot.lane.b32.xlu0 %v5579, 12
    %v7032 = vpop.permute.xlu0 %7031
    %7033 = vrot.lane.b32.xlu0 %v5586, 12
    %v7034 = vpop.permute.xlu0 %7033
    %7035 = vrot.lane.b32.xlu0 %v5595, 12
    %v7036 = vpop.permute.xlu0 %7035
    %7037 = vrot.lane.b32.xlu0 %v5602, 12
    %v7038 = vpop.permute.xlu0 %7037
    %7039 = vrot.lane.b32.xlu0 %v5611, 12
    %v7040 = vpop.permute.xlu0 %7039
    %7041 = vrot.lane.b32.xlu0 %v5618, 12
    %v7042 = vpop.permute.xlu0 %7041
    %7043 = vrot.lane.b32.xlu0 %v5627, 12
    %v7044 = vpop.permute.xlu0 %7043
    %7045 = vrot.lane.b32.xlu0 %v5634, 12
    %v7046 = vpop.permute.xlu0 %7045
    %7047 = vrot.lane.b32.xlu0 %v5643, 12
    %v7048 = vpop.permute.xlu0 %7047
    %7049 = vrot.lane.b32.xlu0 %v5650, 12
    %v7050 = vpop.permute.xlu0 %7049
    %7051 = vrot.lane.b32.xlu0 %v5659, 12
    %v7052 = vpop.permute.xlu0 %7051
    %7053 = vrot.lane.b32.xlu0 %v5666, 12
    %v7054 = vpop.permute.xlu0 %7053
    %7055 = vrot.lane.b32.xlu0 %v5675, 12
    %v7056 = vpop.permute.xlu0 %7055
    %7057 = vrot.lane.b32.xlu0 %v5682, 12
    %v7058 = vpop.permute.xlu0 %7057
    %7059 = vrot.lane.b32.xlu0 %v5691, 12
    %v7060 = vpop.permute.xlu0 %7059
    %7061 = vrot.lane.b32.xlu0 %v5698, 12
    %v7062 = vpop.permute.xlu0 %7061
    %7063 = vrot.lane.b32.xlu0 %v5707, 12
    %v7064 = vpop.permute.xlu0 %7063
    %7065 = vrot.lane.b32.xlu0 %v6931, 12
    %v7066 = vpop.permute.xlu0 %7065
    %7067 = vrot.lane.b32.xlu0 %v6940, 12
    %v7068 = vpop.permute.xlu0 %7067
    %v7133 = vld [vmem:[#allocation3] sm:$0xf]
    %v7134 = vsel %vm2359, %v6942, %v7133
    %7135 = vst [vmem:[#allocation3] sm:$0xf] %v7134
    %7136 = vst.msk [vmem:[#allocation3 + $0x4] sm:$0xf] %vm2363, %v6944
    %v7137 = vld [vmem:[#allocation3 + $0x8] sm:$0xf]
    %v7138 = vsel %vm2359, %v6946, %v7137
    %7139 = vst [vmem:[#allocation3 + $0x8] sm:$0xf] %v7138
    %7140 = vst.msk [vmem:[#allocation3 + $0xc] sm:$0xf] %vm2363, %v6948
    %v7141 = vld [vmem:[#allocation3 + $0x10] sm:$0xf]
    %v7142 = vsel %vm2359, %v6950, %v7141
    %7143 = vst [vmem:[#allocation3 + $0x10] sm:$0xf] %v7142
    %7144 = vst.msk [vmem:[#allocation3 + $0x14] sm:$0xf] %vm2363, %v6952
    %v7145 = vld [vmem:[#allocation3 + $0x18] sm:$0xf]
    %v7146 = vsel %vm2359, %v6954, %v7145
    %7147 = vst [vmem:[#allocation3 + $0x18] sm:$0xf] %v7146
    %7148 = vst.msk [vmem:[#allocation3 + $0x1c] sm:$0xf] %vm2363, %v6956
    %v7149 = vld [vmem:[#allocation3 + $0x20] sm:$0xf]
    %v7150 = vsel %vm2359, %v6958, %v7149
    %7151 = vst [vmem:[#allocation3 + $0x20] sm:$0xf] %v7150
    %7152 = vst.msk [vmem:[#allocation3 + $0x24] sm:$0xf] %vm2363, %v6960
    %v7153 = vld [vmem:[#allocation3 + $0x28] sm:$0xf]
    %v7154 = vsel %vm2359, %v6962, %v7153
    %7155 = vst [vmem:[#allocation3 + $0x28] sm:$0xf] %v7154
    %7156 = vst.msk [vmem:[#allocation3 + $0x2c] sm:$0xf] %vm2363, %v6964
    %v7157 = vld [vmem:[#allocation3 + $0x30] sm:$0xf]
    %v7158 = vsel %vm2359, %v6966, %v7157
    %7159 = vst [vmem:[#allocation3 + $0x30] sm:$0xf] %v7158
    %7160 = vst.msk [vmem:[#allocation3 + $0x34] sm:$0xf] %vm2363, %v6968
    %v7161 = vld [vmem:[#allocation3 + $0x38] sm:$0xf]
    %v7162 = vsel %vm2359, %v6970, %v7161
    %7163 = vst [vmem:[#allocation3 + $0x38] sm:$0xf] %v7162
    %7164 = vst.msk [vmem:[#allocation3 + $0x3c] sm:$0xf] %vm2363, %v6972
    %v7165 = vld [vmem:[#allocation3 + $0x40] sm:$0xf]
    %v7166 = vsel %vm2359, %v6974, %v7165
    %7167 = vst [vmem:[#allocation3 + $0x40] sm:$0xf] %v7166
    %7168 = vst.msk [vmem:[#allocation3 + $0x44] sm:$0xf] %vm2363, %v6976
    %v7169 = vld [vmem:[#allocation3 + $0x48] sm:$0xf]
    %v7170 = vsel %vm2359, %v6978, %v7169
    %7171 = vst [vmem:[#allocation3 + $0x48] sm:$0xf] %v7170
    %7172 = vst.msk [vmem:[#allocation3 + $0x4c] sm:$0xf] %vm2363, %v6980
    %v7173 = vld [vmem:[#allocation3 + $0x50] sm:$0xf]
    %v7174 = vsel %vm2359, %v6982, %v7173
    %7175 = vst [vmem:[#allocation3 + $0x50] sm:$0xf] %v7174
    %7176 = vst.msk [vmem:[#allocation3 + $0x54] sm:$0xf] %vm2363, %v6984
    %v7177 = vld [vmem:[#allocation3 + $0x58] sm:$0xf]
    %v7178 = vsel %vm2359, %v6986, %v7177
    %7179 = vst [vmem:[#allocation3 + $0x58] sm:$0xf] %v7178
    %7180 = vst.msk [vmem:[#allocation3 + $0x5c] sm:$0xf] %vm2363, %v6988
    %v7181 = vld [vmem:[#allocation3 + $0x60] sm:$0xf]
    %v7182 = vsel %vm2359, %v6990, %v7181
    %7183 = vst [vmem:[#allocation3 + $0x60] sm:$0xf] %v7182
    %7184 = vst.msk [vmem:[#allocation3 + $0x64] sm:$0xf] %vm2363, %v6992
    %v7185 = vld [vmem:[#allocation3 + $0x68] sm:$0xf]
    %v7186 = vsel %vm2359, %v6994, %v7185
    %7187 = vst [vmem:[#allocation3 + $0x68] sm:$0xf] %v7186
    %7188 = vst.msk [vmem:[#allocation3 + $0x6c] sm:$0xf] %vm2363, %v6996
    %v7189 = vld [vmem:[#allocation3 + $0x70] sm:$0xf]
    %v7190 = vsel %vm2359, %v6998, %v7189
    %7191 = vst [vmem:[#allocation3 + $0x70] sm:$0xf] %v7190
    %7192 = vst.msk [vmem:[#allocation3 + $0x74] sm:$0xf] %vm2363, %v7000
    %v7193 = vld [vmem:[#allocation3 + $0x78] sm:$0xf]
    %v7194 = vsel %vm2359, %v7002, %v7193
    %7195 = vst [vmem:[#allocation3 + $0x78] sm:$0xf] %v7194
    %7196 = vst.msk [vmem:[#allocation3 + $0x7c] sm:$0xf] %vm2363, %v7004
    %v7197 = vld [vmem:[#allocation3 + $0x80] sm:$0xf]
    %v7198 = vsel %vm2359, %v7006, %v7197
    %7199 = vst [vmem:[#allocation3 + $0x80] sm:$0xf] %v7198
    %7200 = vst.msk [vmem:[#allocation3 + $0x84] sm:$0xf] %vm2363, %v7008
    %v7201 = vld [vmem:[#allocation3 + $0x88] sm:$0xf]
    %v7202 = vsel %vm2359, %v7010, %v7201
    %7203 = vst [vmem:[#allocation3 + $0x88] sm:$0xf] %v7202
    %7204 = vst.msk [vmem:[#allocation3 + $0x8c] sm:$0xf] %vm2363, %v7012
    %v7205 = vld [vmem:[#allocation3 + $0x90] sm:$0xf]
    %v7206 = vsel %vm2359, %v7014, %v7205
    %7207 = vst [vmem:[#allocation3 + $0x90] sm:$0xf] %v7206
    %7208 = vst.msk [vmem:[#allocation3 + $0x94] sm:$0xf] %vm2363, %v7016
    %v7209 = vld [vmem:[#allocation3 + $0x98] sm:$0xf]
    %v7210 = vsel %vm2359, %v7018, %v7209
    %7211 = vst [vmem:[#allocation3 + $0x98] sm:$0xf] %v7210
    %7212 = vst.msk [vmem:[#allocation3 + $0x9c] sm:$0xf] %vm2363, %v7020
    %v7213 = vld [vmem:[#allocation3 + $0xa0] sm:$0xf]
    %v7214 = vsel %vm2359, %v7022, %v7213
    %7215 = vst [vmem:[#allocation3 + $0xa0] sm:$0xf] %v7214
    %7216 = vst.msk [vmem:[#allocation3 + $0xa4] sm:$0xf] %vm2363, %v7024
    %v7217 = vld [vmem:[#allocation3 + $0xa8] sm:$0xf]
    %v7218 = vsel %vm2359, %v7026, %v7217
    %7219 = vst [vmem:[#allocation3 + $0xa8] sm:$0xf] %v7218
    %7220 = vst.msk [vmem:[#allocation3 + $0xac] sm:$0xf] %vm2363, %v7028
    %v7221 = vld [vmem:[#allocation3 + $0xb0] sm:$0xf]
    %v7222 = vsel %vm2359, %v7030, %v7221
    %7223 = vst [vmem:[#allocation3 + $0xb0] sm:$0xf] %v7222
    %7224 = vst.msk [vmem:[#allocation3 + $0xb4] sm:$0xf] %vm2363, %v7032
    %v7225 = vld [vmem:[#allocation3 + $0xb8] sm:$0xf]
    %v7226 = vsel %vm2359, %v7034, %v7225
    %7227 = vst [vmem:[#allocation3 + $0xb8] sm:$0xf] %v7226
    %7228 = vst.msk [vmem:[#allocation3 + $0xbc] sm:$0xf] %vm2363, %v7036
    %v7229 = vld [vmem:[#allocation3 + $0xc0] sm:$0xf]
    %v7230 = vsel %vm2359, %v7038, %v7229
    %7231 = vst [vmem:[#allocation3 + $0xc0] sm:$0xf] %v7230
    %7232 = vst.msk [vmem:[#allocation3 + $0xc4] sm:$0xf] %vm2363, %v7040
    %v7233 = vld [vmem:[#allocation3 + $0xc8] sm:$0xf]
    %v7234 = vsel %vm2359, %v7042, %v7233
    %7235 = vst [vmem:[#allocation3 + $0xc8] sm:$0xf] %v7234
    %7236 = vst.msk [vmem:[#allocation3 + $0xcc] sm:$0xf] %vm2363, %v7044
    %v7237 = vld [vmem:[#allocation3 + $0xd0] sm:$0xf]
    %v7238 = vsel %vm2359, %v7046, %v7237
    %7239 = vst [vmem:[#allocation3 + $0xd0] sm:$0xf] %v7238
    %7240 = vst.msk [vmem:[#allocation3 + $0xd4] sm:$0xf] %vm2363, %v7048
    %v7241 = vld [vmem:[#allocation3 + $0xd8] sm:$0xf]
    %v7242 = vsel %vm2359, %v7050, %v7241
    %7243 = vst [vmem:[#allocation3 + $0xd8] sm:$0xf] %v7242
    %7244 = vst.msk [vmem:[#allocation3 + $0xdc] sm:$0xf] %vm2363, %v7052
    %v7245 = vld [vmem:[#allocation3 + $0xe0] sm:$0xf]
    %v7246 = vsel %vm2359, %v7054, %v7245
    %7247 = vst [vmem:[#allocation3 + $0xe0] sm:$0xf] %v7246
    %7248 = vst.msk [vmem:[#allocation3 + $0xe4] sm:$0xf] %vm2363, %v7056
    %v7249 = vld [vmem:[#allocation3 + $0xe8] sm:$0xf]
    %v7250 = vsel %vm2359, %v7058, %v7249
    %7251 = vst [vmem:[#allocation3 + $0xe8] sm:$0xf] %v7250
    %7252 = vst.msk [vmem:[#allocation3 + $0xec] sm:$0xf] %vm2363, %v7060
    %v7253 = vld [vmem:[#allocation3 + $0xf0] sm:$0xf]
    %v7254 = vsel %vm2359, %v7062, %v7253
    %7255 = vst [vmem:[#allocation3 + $0xf0] sm:$0xf] %v7254
    %7256 = vst.msk [vmem:[#allocation3 + $0xf4] sm:$0xf] %vm2363, %v7064
    %v7257 = vld [vmem:[#allocation3 + $0xf8] sm:$0xf]
    %v7258 = vsel %vm2359, %v7066, %v7257
    %7259 = vst [vmem:[#allocation3 + $0xf8] sm:$0xf] %v7258
    %7260 = vst.msk [vmem:[#allocation3 + $0xfc] sm:$0xf] %vm2363, %v7068
    %7261 = vrot.lane.b32.xlu0 %v5168, 16
    %v7262 = vpop.permute.xlu0 %7261
    %7263 = vrot.lane.b32.xlu0 %v5169, 16
    %v7264 = vpop.permute.xlu0 %7263
    %7265 = vrot.lane.b32.xlu0 %v5170, 16
    %v7266 = vpop.permute.xlu0 %7265
    %7267 = vrot.lane.b32.xlu0 %v5171, 16
    %v7268 = vpop.permute.xlu0 %7267
    %7269 = vrot.lane.b32.xlu0 %v5172, 16
    %v7270 = vpop.permute.xlu0 %7269
    %7271 = vrot.lane.b32.xlu0 %v5173, 16
    %v7272 = vpop.permute.xlu0 %7271
    %7273 = vrot.lane.b32.xlu0 %v5174, 16
    %v7274 = vpop.permute.xlu0 %7273
    %7275 = vrot.lane.b32.xlu0 %v5175, 16
    %v7276 = vpop.permute.xlu0 %7275
    %7277 = vrot.lane.b32.xlu0 %v5176, 16
    %v7278 = vpop.permute.xlu0 %7277
    %7279 = vrot.lane.b32.xlu0 %v5177, 16
    %v7280 = vpop.permute.xlu0 %7279
    %7281 = vrot.lane.b32.xlu0 %v5178, 16
    %v7282 = vpop.permute.xlu0 %7281
    %7283 = vrot.lane.b32.xlu0 %v5179, 16
    %v7284 = vpop.permute.xlu0 %7283
    %7285 = vrot.lane.b32.xlu0 %v5180, 16
    %v7286 = vpop.permute.xlu0 %7285
    %7287 = vrot.lane.b32.xlu0 %v5181, 16
    %v7288 = vpop.permute.xlu0 %7287
    %7289 = vrot.lane.b32.xlu0 %v5182, 16
    %v7290 = vpop.permute.xlu0 %7289
    %7291 = vrot.lane.b32.xlu0 %v5183, 16
    %v7292 = vpop.permute.xlu0 %7291
    %7293 = vrot.lane.b32.xlu0 %v5184, 16
    %v7294 = vpop.permute.xlu0 %7293
    %7295 = vrot.lane.b32.xlu0 %v5185, 16
    %v7296 = vpop.permute.xlu0 %7295
    %7297 = vrot.lane.b32.xlu0 %v5186, 16
    %v7298 = vpop.permute.xlu0 %7297
    %7299 = vrot.lane.b32.xlu0 %v5187, 16
    %v7300 = vpop.permute.xlu0 %7299
    %7301 = vrot.lane.b32.xlu0 %v5188, 16
    %v7302 = vpop.permute.xlu0 %7301
    %7303 = vrot.lane.b32.xlu0 %v5189, 16
    %v7304 = vpop.permute.xlu0 %7303
    %7305 = vrot.lane.b32.xlu0 %v5190, 16
    %v7306 = vpop.permute.xlu0 %7305
    %7307 = vrot.lane.b32.xlu0 %v5191, 16
    %v7308 = vpop.permute.xlu0 %7307
    %7309 = vrot.lane.b32.xlu0 %v5192, 16
    %v7310 = vpop.permute.xlu0 %7309
    %7311 = vrot.lane.b32.xlu0 %v5193, 16
    %v7312 = vpop.permute.xlu0 %7311
    %7313 = vrot.lane.b32.xlu0 %v5194, 16
    %v7314 = vpop.permute.xlu0 %7313
    %7315 = vrot.lane.b32.xlu0 %v5195, 16
    %v7316 = vpop.permute.xlu0 %7315
    %7317 = vrot.lane.b32.xlu0 %v5196, 16
    %v7318 = vpop.permute.xlu0 %7317
    %7319 = vrot.lane.b32.xlu0 %v5197, 16
    %v7320 = vpop.permute.xlu0 %7319
    %7321 = vrot.lane.b32.xlu0 %v6905, 16
    %v7322 = vpop.permute.xlu0 %7321
    %7323 = vrot.lane.b32.xlu0 %v6906, 16
    %v7324 = vpop.permute.xlu0 %7323
    %7325 = vrot.lane.b32.xlu0 %v5198, 16
    %v7326 = vpop.permute.xlu0 %7325
    %7327 = vrot.lane.b32.xlu0 %v5199, 16
    %v7328 = vpop.permute.xlu0 %7327
    %7329 = vrot.lane.b32.xlu0 %v5200, 16
    %v7330 = vpop.permute.xlu0 %7329
    %7331 = vrot.lane.b32.xlu0 %v5201, 16
    %v7332 = vpop.permute.xlu0 %7331
    %7333 = vrot.lane.b32.xlu0 %v5202, 16
    %v7334 = vpop.permute.xlu0 %7333
    %7335 = vrot.lane.b32.xlu0 %v5203, 16
    %v7336 = vpop.permute.xlu0 %7335
    %7337 = vrot.lane.b32.xlu0 %v5204, 16
    %v7338 = vpop.permute.xlu0 %7337
    %7339 = vrot.lane.b32.xlu0 %v5205, 16
    %v7340 = vpop.permute.xlu0 %7339
    %7341 = vrot.lane.b32.xlu0 %v5206, 16
    %v7342 = vpop.permute.xlu0 %7341
    %7343 = vrot.lane.b32.xlu0 %v5207, 16
    %v7344 = vpop.permute.xlu0 %7343
    %7345 = vrot.lane.b32.xlu0 %v5208, 16
    %v7346 = vpop.permute.xlu0 %7345
    %7347 = vrot.lane.b32.xlu0 %v5209, 16
    %v7348 = vpop.permute.xlu0 %7347
    %7349 = vrot.lane.b32.xlu0 %v5210, 16
    %v7350 = vpop.permute.xlu0 %7349
    %7351 = vrot.lane.b32.xlu0 %v5211, 16
    %v7352 = vpop.permute.xlu0 %7351
    %7353 = vrot.lane.b32.xlu0 %v5212, 16
    %v7354 = vpop.permute.xlu0 %7353
    %7355 = vrot.lane.b32.xlu0 %v5213, 16
    %v7356 = vpop.permute.xlu0 %7355
    %7357 = vrot.lane.b32.xlu0 %v5214, 16
    %v7358 = vpop.permute.xlu0 %7357
    %7359 = vrot.lane.b32.xlu0 %v5215, 16
    %v7360 = vpop.permute.xlu0 %7359
    %7361 = vrot.lane.b32.xlu0 %v5216, 16
    %v7362 = vpop.permute.xlu0 %7361
    %7363 = vrot.lane.b32.xlu0 %v5217, 16
    %v7364 = vpop.permute.xlu0 %7363
    %7365 = vrot.lane.b32.xlu0 %v5218, 16
    %v7366 = vpop.permute.xlu0 %7365
    %7367 = vrot.lane.b32.xlu0 %v5219, 16
    %v7368 = vpop.permute.xlu0 %7367
    %7369 = vrot.lane.b32.xlu0 %v5220, 16
    %v7370 = vpop.permute.xlu0 %7369
    %7371 = vrot.lane.b32.xlu0 %v5221, 16
    %v7372 = vpop.permute.xlu0 %7371
    %7373 = vrot.lane.b32.xlu0 %v5222, 16
    %v7374 = vpop.permute.xlu0 %7373
    %7375 = vrot.lane.b32.xlu0 %v5223, 16
    %v7376 = vpop.permute.xlu0 %7375
    %7377 = vrot.lane.b32.xlu0 %v5224, 16
    %v7378 = vpop.permute.xlu0 %7377
    %7379 = vrot.lane.b32.xlu0 %v5225, 16
    %v7380 = vpop.permute.xlu0 %7379
    %7381 = vrot.lane.b32.xlu0 %v5226, 16
    %v7382 = vpop.permute.xlu0 %7381
    %7383 = vrot.lane.b32.xlu0 %v5227, 16
    %v7384 = vpop.permute.xlu0 %7383
    %7385 = vrot.lane.b32.xlu0 %v6907, 16
    %v7386 = vpop.permute.xlu0 %7385
    %7387 = vrot.lane.b32.xlu0 %v6908, 16
    %v7388 = vpop.permute.xlu0 %7387
    %7453 = vst.msk [vmem:[#allocation3] sm:$0xf] %vm2681, %v7262
    %7454 = vst.msk [vmem:[#allocation3 + $0x4] sm:$0xf] %vm2681, %v7264
    %7455 = vst.msk [vmem:[#allocation3 + $0x8] sm:$0xf] %vm2681, %v7266
    %7456 = vst.msk [vmem:[#allocation3 + $0xc] sm:$0xf] %vm2681, %v7268
    %7457 = vst.msk [vmem:[#allocation3 + $0x10] sm:$0xf] %vm2681, %v7270
    %7458 = vst.msk [vmem:[#allocation3 + $0x14] sm:$0xf] %vm2681, %v7272
    %7459 = vst.msk [vmem:[#allocation3 + $0x18] sm:$0xf] %vm2681, %v7274
    %7460 = vst.msk [vmem:[#allocation3 + $0x1c] sm:$0xf] %vm2681, %v7276
    %7461 = vst.msk [vmem:[#allocation3 + $0x20] sm:$0xf] %vm2681, %v7278
    %7462 = vst.msk [vmem:[#allocation3 + $0x24] sm:$0xf] %vm2681, %v7280
    %7463 = vst.msk [vmem:[#allocation3 + $0x28] sm:$0xf] %vm2681, %v7282
    %7464 = vst.msk [vmem:[#allocation3 + $0x2c] sm:$0xf] %vm2681, %v7284
    %7465 = vst.msk [vmem:[#allocation3 + $0x30] sm:$0xf] %vm2681, %v7286
    %7466 = vst.msk [vmem:[#allocation3 + $0x34] sm:$0xf] %vm2681, %v7288
    %7467 = vst.msk [vmem:[#allocation3 + $0x38] sm:$0xf] %vm2681, %v7290
    %7468 = vst.msk [vmem:[#allocation3 + $0x3c] sm:$0xf] %vm2681, %v7292
    %7469 = vst.msk [vmem:[#allocation3 + $0x40] sm:$0xf] %vm2681, %v7294
    %7470 = vst.msk [vmem:[#allocation3 + $0x44] sm:$0xf] %vm2681, %v7296
    %7471 = vst.msk [vmem:[#allocation3 + $0x48] sm:$0xf] %vm2681, %v7298
    %7472 = vst.msk [vmem:[#allocation3 + $0x4c] sm:$0xf] %vm2681, %v7300
    %7473 = vst.msk [vmem:[#allocation3 + $0x50] sm:$0xf] %vm2681, %v7302
    %7474 = vst.msk [vmem:[#allocation3 + $0x54] sm:$0xf] %vm2681, %v7304
    %7475 = vst.msk [vmem:[#allocation3 + $0x58] sm:$0xf] %vm2681, %v7306
    %7476 = vst.msk [vmem:[#allocation3 + $0x5c] sm:$0xf] %vm2681, %v7308
    %7477 = vst.msk [vmem:[#allocation3 + $0x60] sm:$0xf] %vm2681, %v7310
    %7478 = vst.msk [vmem:[#allocation3 + $0x64] sm:$0xf] %vm2681, %v7312
    %7479 = vst.msk [vmem:[#allocation3 + $0x68] sm:$0xf] %vm2681, %v7314
    %7480 = vst.msk [vmem:[#allocation3 + $0x6c] sm:$0xf] %vm2681, %v7316
    %7481 = vst.msk [vmem:[#allocation3 + $0x70] sm:$0xf] %vm2681, %v7318
    %7482 = vst.msk [vmem:[#allocation3 + $0x74] sm:$0xf] %vm2681, %v7320
    %7483 = vst.msk [vmem:[#allocation3 + $0x78] sm:$0xf] %vm2681, %v7322
    %7484 = vst.msk [vmem:[#allocation3 + $0x7c] sm:$0xf] %vm2681, %v7324
    %7485 = vst.msk [vmem:[#allocation3 + $0x80] sm:$0xf] %vm2681, %v7326
    %7486 = vst.msk [vmem:[#allocation3 + $0x84] sm:$0xf] %vm2681, %v7328
    %7487 = vst.msk [vmem:[#allocation3 + $0x88] sm:$0xf] %vm2681, %v7330
    %7488 = vst.msk [vmem:[#allocation3 + $0x8c] sm:$0xf] %vm2681, %v7332
    %7489 = vst.msk [vmem:[#allocation3 + $0x90] sm:$0xf] %vm2681, %v7334
    %7490 = vst.msk [vmem:[#allocation3 + $0x94] sm:$0xf] %vm2681, %v7336
    %7491 = vst.msk [vmem:[#allocation3 + $0x98] sm:$0xf] %vm2681, %v7338
    %7492 = vst.msk [vmem:[#allocation3 + $0x9c] sm:$0xf] %vm2681, %v7340
    %7493 = vst.msk [vmem:[#allocation3 + $0xa0] sm:$0xf] %vm2681, %v7342
    %7494 = vst.msk [vmem:[#allocation3 + $0xa4] sm:$0xf] %vm2681, %v7344
    %7495 = vst.msk [vmem:[#allocation3 + $0xa8] sm:$0xf] %vm2681, %v7346
    %7496 = vst.msk [vmem:[#allocation3 + $0xac] sm:$0xf] %vm2681, %v7348
    %7497 = vst.msk [vmem:[#allocation3 + $0xb0] sm:$0xf] %vm2681, %v7350
    %7498 = vst.msk [vmem:[#allocation3 + $0xb4] sm:$0xf] %vm2681, %v7352
    %7499 = vst.msk [vmem:[#allocation3 + $0xb8] sm:$0xf] %vm2681, %v7354
    %7500 = vst.msk [vmem:[#allocation3 + $0xbc] sm:$0xf] %vm2681, %v7356
    %7501 = vst.msk [vmem:[#allocation3 + $0xc0] sm:$0xf] %vm2681, %v7358
    %7502 = vst.msk [vmem:[#allocation3 + $0xc4] sm:$0xf] %vm2681, %v7360
    %7503 = vst.msk [vmem:[#allocation3 + $0xc8] sm:$0xf] %vm2681, %v7362
    %7504 = vst.msk [vmem:[#allocation3 + $0xcc] sm:$0xf] %vm2681, %v7364
    %7505 = vst.msk [vmem:[#allocation3 + $0xd0] sm:$0xf] %vm2681, %v7366
    %7506 = vst.msk [vmem:[#allocation3 + $0xd4] sm:$0xf] %vm2681, %v7368
    %7507 = vst.msk [vmem:[#allocation3 + $0xd8] sm:$0xf] %vm2681, %v7370
    %7508 = vst.msk [vmem:[#allocation3 + $0xdc] sm:$0xf] %vm2681, %v7372
    %7509 = vst.msk [vmem:[#allocation3 + $0xe0] sm:$0xf] %vm2681, %v7374
    %7510 = vst.msk [vmem:[#allocation3 + $0xe4] sm:$0xf] %vm2681, %v7376
    %7511 = vst.msk [vmem:[#allocation3 + $0xe8] sm:$0xf] %vm2681, %v7378
    %7512 = vst.msk [vmem:[#allocation3 + $0xec] sm:$0xf] %vm2681, %v7380
    %7513 = vst.msk [vmem:[#allocation3 + $0xf0] sm:$0xf] %vm2681, %v7382
    %7514 = vst.msk [vmem:[#allocation3 + $0xf4] sm:$0xf] %vm2681, %v7384
    %7515 = vst.msk [vmem:[#allocation3 + $0xf8] sm:$0xf] %vm2681, %v7386
    %7516 = vst.msk [vmem:[#allocation3 + $0xfc] sm:$0xf] %vm2681, %v7388
    %v7517 = vld [vmem:[#allocation3 + $0x4] sm:$0x8]
    %v7518 = vsel %vm2747, 0, %v7517
    %7519 = vst [vmem:[#allocation3 + $0x4] sm:$0x8] %v7518
    %v7520 = vld [vmem:[#allocation3 + $0xc] sm:$0x8]
    %v7521 = vsel %vm2747, 0, %v7520
    %7522 = vst [vmem:[#allocation3 + $0xc] sm:$0x8] %v7521
    %v7523 = vld [vmem:[#allocation3 + $0x14] sm:$0x8]
    %v7524 = vsel %vm2747, 0, %v7523
    %7525 = vst [vmem:[#allocation3 + $0x14] sm:$0x8] %v7524
    %v7526 = vld [vmem:[#allocation3 + $0x1c] sm:$0x8]
    %v7527 = vsel %vm2747, 0, %v7526
    %7528 = vst [vmem:[#allocation3 + $0x1c] sm:$0x8] %v7527
    %v7529 = vld [vmem:[#allocation3 + $0x24] sm:$0x8]
    %v7530 = vsel %vm2747, 0, %v7529
    %7531 = vst [vmem:[#allocation3 + $0x24] sm:$0x8] %v7530
    %v7532 = vld [vmem:[#allocation3 + $0x2c] sm:$0x8]
    %v7533 = vsel %vm2747, 0, %v7532
    %7534 = vst [vmem:[#allocation3 + $0x2c] sm:$0x8] %v7533
    %v7535 = vld [vmem:[#allocation3 + $0x34] sm:$0x8]
    %v7536 = vsel %vm2747, 0, %v7535
    %7537 = vst [vmem:[#allocation3 + $0x34] sm:$0x8] %v7536
    %v7538 = vld [vmem:[#allocation3 + $0x3c] sm:$0x8]
    %v7539 = vsel %vm2747, 0, %v7538
    %7540 = vst [vmem:[#allocation3 + $0x3c] sm:$0x8] %v7539
    %v7541 = vld [vmem:[#allocation3 + $0x44] sm:$0x8]
    %v7542 = vsel %vm2747, 0, %v7541
    %7543 = vst [vmem:[#allocation3 + $0x44] sm:$0x8] %v7542
    %v7544 = vld [vmem:[#allocation3 + $0x4c] sm:$0x8]
    %v7545 = vsel %vm2747, 0, %v7544
    %7546 = vst [vmem:[#allocation3 + $0x4c] sm:$0x8] %v7545
    %v7547 = vld [vmem:[#allocation3 + $0x54] sm:$0x8]
    %v7548 = vsel %vm2747, 0, %v7547
    %7549 = vst [vmem:[#allocation3 + $0x54] sm:$0x8] %v7548
    %v7550 = vld [vmem:[#allocation3 + $0x5c] sm:$0x8]
    %v7551 = vsel %vm2747, 0, %v7550
    %7552 = vst [vmem:[#allocation3 + $0x5c] sm:$0x8] %v7551
    %v7553 = vld [vmem:[#allocation3 + $0x64] sm:$0x8]
    %v7554 = vsel %vm2747, 0, %v7553
    %7555 = vst [vmem:[#allocation3 + $0x64] sm:$0x8] %v7554
    %v7556 = vld [vmem:[#allocation3 + $0x6c] sm:$0x8]
    %v7557 = vsel %vm2747, 0, %v7556
    %7558 = vst [vmem:[#allocation3 + $0x6c] sm:$0x8] %v7557
    %v7559 = vld [vmem:[#allocation3 + $0x74] sm:$0x8]
    %v7560 = vsel %vm2747, 0, %v7559
    %7561 = vst [vmem:[#allocation3 + $0x74] sm:$0x8] %v7560
    %v7562 = vld [vmem:[#allocation3 + $0x7c] sm:$0x8]
    %v7563 = vsel %vm2747, 0, %v7562
    %7564 = vst [vmem:[#allocation3 + $0x7c] sm:$0x8] %v7563
    %v7565 = vld [vmem:[#allocation3 + $0x84] sm:$0x8]
    %v7566 = vsel %vm2747, 0, %v7565
    %7567 = vst [vmem:[#allocation3 + $0x84] sm:$0x8] %v7566
    %v7568 = vld [vmem:[#allocation3 + $0x8c] sm:$0x8]
    %v7569 = vsel %vm2747, 0, %v7568
    %7570 = vst [vmem:[#allocation3 + $0x8c] sm:$0x8] %v7569
    %v7571 = vld [vmem:[#allocation3 + $0x94] sm:$0x8]
    %v7572 = vsel %vm2747, 0, %v7571
    %7573 = vst [vmem:[#allocation3 + $0x94] sm:$0x8] %v7572
    %v7574 = vld [vmem:[#allocation3 + $0x9c] sm:$0x8]
    %v7575 = vsel %vm2747, 0, %v7574
    %7576 = vst [vmem:[#allocation3 + $0x9c] sm:$0x8] %v7575
    %v7577 = vld [vmem:[#allocation3 + $0xa4] sm:$0x8]
    %v7578 = vsel %vm2747, 0, %v7577
    %7579 = vst [vmem:[#allocation3 + $0xa4] sm:$0x8] %v7578
    %v7580 = vld [vmem:[#allocation3 + $0xac] sm:$0x8]
    %v7581 = vsel %vm2747, 0, %v7580
    %7582 = vst [vmem:[#allocation3 + $0xac] sm:$0x8] %v7581
    %v7583 = vld [vmem:[#allocation3 + $0xb4] sm:$0x8]
    %v7584 = vsel %vm2747, 0, %v7583
    %7585 = vst [vmem:[#allocation3 + $0xb4] sm:$0x8] %v7584
    %v7586 = vld [vmem:[#allocation3 + $0xbc] sm:$0x8]
    %v7587 = vsel %vm2747, 0, %v7586
    %7588 = vst [vmem:[#allocation3 + $0xbc] sm:$0x8] %v7587
    %v7589 = vld [vmem:[#allocation3 + $0xc4] sm:$0x8]
    %v7590 = vsel %vm2747, 0, %v7589
    %7591 = vst [vmem:[#allocation3 + $0xc4] sm:$0x8] %v7590
    %v7592 = vld [vmem:[#allocation3 + $0xcc] sm:$0x8]
    %v7593 = vsel %vm2747, 0, %v7592
    %7594 = vst [vmem:[#allocation3 + $0xcc] sm:$0x8] %v7593
    %v7595 = vld [vmem:[#allocation3 + $0xd4] sm:$0x8]
    %v7596 = vsel %vm2747, 0, %v7595
    %7597 = vst [vmem:[#allocation3 + $0xd4] sm:$0x8] %v7596
    %v7598 = vld [vmem:[#allocation3 + $0xdc] sm:$0x8]
    %v7599 = vsel %vm2747, 0, %v7598
    %7600 = vst [vmem:[#allocation3 + $0xdc] sm:$0x8] %v7599
    %v7601 = vld [vmem:[#allocation3 + $0xe4] sm:$0x8]
    %v7602 = vsel %vm2747, 0, %v7601
    %7603 = vst [vmem:[#allocation3 + $0xe4] sm:$0x8] %v7602
    %v7604 = vld [vmem:[#allocation3 + $0xec] sm:$0x8]
    %v7605 = vsel %vm2747, 0, %v7604
    %7606 = vst [vmem:[#allocation3 + $0xec] sm:$0x8] %v7605
    %v7607 = vld [vmem:[#allocation3 + $0xf4] sm:$0x8]
    %v7608 = vsel %vm2747, 0, %v7607
    %7609 = vst [vmem:[#allocation3 + $0xf4] sm:$0x8] %v7608
    %v7610 = vld [vmem:[#allocation3 + $0xfc] sm:$0x8]
    %v7611 = vsel %vm2747, 0, %v7610
    %7612 = vst [vmem:[#allocation3 + $0xfc] sm:$0x8] %v7611
    %v7613 = vrot.slane %v6910, 4
    %v7614 = vrot.slane %v6913, 5
    %v7615 = vor.u32 %v7613, %v7614
    %v7616 = vrot.slane %v7615, 4
    %v7617 = vrot.slane %v6921, 5
    %v7618 = vsel %vm1453, %v7616, %v7617
    %v7619 = vrot.slane %v6918, 4
    %v7620 = vor.u32 %v7619, %v7617
    %v7621 = vrot.slane %v7620, 4
    %v7622 = vrot.slane %v6926, 4
    %v7623 = vrot.slane %v6929, 5
    %v7624 = vor.u32 %v7622, %v7623
    %v7625 = vrot.slane %v7624, 4
    %v7626 = vrot.slane %v6937, 5
    %v7627 = vsel %vm1453, %v7625, %v7626
    %v7628 = vrot.slane %v6934, 4
    %v7629 = vor.u32 %v7628, %v7626
    %v7630 = vrot.slane %v7629, 4
    %7631 = vrot.lane.b32.xlu0 %v6238, 20
    %v7632 = vpop.permute.xlu0 %7631
    %7633 = vrot.lane.b32.xlu0 %v6241, 20
    %v7634 = vpop.permute.xlu0 %7633
    %7635 = vrot.lane.b32.xlu0 %v6247, 20
    %v7636 = vpop.permute.xlu0 %7635
    %7637 = vrot.lane.b32.xlu0 %v6250, 20
    %v7638 = vpop.permute.xlu0 %7637
    %7639 = vrot.lane.b32.xlu0 %v6256, 20
    %v7640 = vpop.permute.xlu0 %7639
    %7641 = vrot.lane.b32.xlu0 %v6259, 20
    %v7642 = vpop.permute.xlu0 %7641
    %7643 = vrot.lane.b32.xlu0 %v6265, 20
    %v7644 = vpop.permute.xlu0 %7643
    %7645 = vrot.lane.b32.xlu0 %v6268, 20
    %v7646 = vpop.permute.xlu0 %7645
    %7647 = vrot.lane.b32.xlu0 %v6274, 20
    %v7648 = vpop.permute.xlu0 %7647
    %7649 = vrot.lane.b32.xlu0 %v6277, 20
    %v7650 = vpop.permute.xlu0 %7649
    %7651 = vrot.lane.b32.xlu0 %v6283, 20
    %v7652 = vpop.permute.xlu0 %7651
    %7653 = vrot.lane.b32.xlu0 %v6286, 20
    %v7654 = vpop.permute.xlu0 %7653
    %7655 = vrot.lane.b32.xlu0 %v6292, 20
    %v7656 = vpop.permute.xlu0 %7655
    %7657 = vrot.lane.b32.xlu0 %v6295, 20
    %v7658 = vpop.permute.xlu0 %7657
    %7659 = vrot.lane.b32.xlu0 %v6301, 20
    %v7660 = vpop.permute.xlu0 %7659
    %7661 = vrot.lane.b32.xlu0 %v6304, 20
    %v7662 = vpop.permute.xlu0 %7661
    %7663 = vrot.lane.b32.xlu0 %v6310, 20
    %v7664 = vpop.permute.xlu0 %7663
    %7665 = vrot.lane.b32.xlu0 %v6313, 20
    %v7666 = vpop.permute.xlu0 %7665
    %7667 = vrot.lane.b32.xlu0 %v6319, 20
    %v7668 = vpop.permute.xlu0 %7667
    %7669 = vrot.lane.b32.xlu0 %v6322, 20
    %v7670 = vpop.permute.xlu0 %7669
    %7671 = vrot.lane.b32.xlu0 %v6328, 20
    %v7672 = vpop.permute.xlu0 %7671
    %7673 = vrot.lane.b32.xlu0 %v6331, 20
    %v7674 = vpop.permute.xlu0 %7673
    %7675 = vrot.lane.b32.xlu0 %v6337, 20
    %v7676 = vpop.permute.xlu0 %7675
    %7677 = vrot.lane.b32.xlu0 %v6340, 20
    %v7678 = vpop.permute.xlu0 %7677
    %7679 = vrot.lane.b32.xlu0 %v6346, 20
    %v7680 = vpop.permute.xlu0 %7679
    %7681 = vrot.lane.b32.xlu0 %v6349, 20
    %v7682 = vpop.permute.xlu0 %7681
    %7683 = vrot.lane.b32.xlu0 %v6355, 20
    %v7684 = vpop.permute.xlu0 %7683
    %7685 = vrot.lane.b32.xlu0 %v6358, 20
    %v7686 = vpop.permute.xlu0 %7685
    %7687 = vrot.lane.b32.xlu0 %v6364, 20
    %v7688 = vpop.permute.xlu0 %7687
    %7689 = vrot.lane.b32.xlu0 %v6367, 20
    %v7690 = vpop.permute.xlu0 %7689
    %7691 = vrot.lane.b32.xlu0 %v7618, 20
    %v7692 = vpop.permute.xlu0 %7691
    %7693 = vrot.lane.b32.xlu0 %v7621, 20
    %v7694 = vpop.permute.xlu0 %7693
    %7695 = vrot.lane.b32.xlu0 %v6373, 20
    %v7696 = vpop.permute.xlu0 %7695
    %7697 = vrot.lane.b32.xlu0 %v6376, 20
    %v7698 = vpop.permute.xlu0 %7697
    %7699 = vrot.lane.b32.xlu0 %v6382, 20
    %v7700 = vpop.permute.xlu0 %7699
    %7701 = vrot.lane.b32.xlu0 %v6385, 20
    %v7702 = vpop.permute.xlu0 %7701
    %7703 = vrot.lane.b32.xlu0 %v6391, 20
    %v7704 = vpop.permute.xlu0 %7703
    %7705 = vrot.lane.b32.xlu0 %v6394, 20
    %v7706 = vpop.permute.xlu0 %7705
    %7707 = vrot.lane.b32.xlu0 %v6400, 20
    %v7708 = vpop.permute.xlu0 %7707
    %7709 = vrot.lane.b32.xlu0 %v6403, 20
    %v7710 = vpop.permute.xlu0 %7709
    %7711 = vrot.lane.b32.xlu0 %v6409, 20
    %v7712 = vpop.permute.xlu0 %7711
    %7713 = vrot.lane.b32.xlu0 %v6412, 20
    %v7714 = vpop.permute.xlu0 %7713
    %7715 = vrot.lane.b32.xlu0 %v6418, 20
    %v7716 = vpop.permute.xlu0 %7715
    %7717 = vrot.lane.b32.xlu0 %v6421, 20
    %v7718 = vpop.permute.xlu0 %7717
    %7719 = vrot.lane.b32.xlu0 %v6427, 20
    %v7720 = vpop.permute.xlu0 %7719
    %7721 = vrot.lane.b32.xlu0 %v6430, 20
    %v7722 = vpop.permute.xlu0 %7721
    %7723 = vrot.lane.b32.xlu0 %v6436, 20
    %v7724 = vpop.permute.xlu0 %7723
    %7725 = vrot.lane.b32.xlu0 %v6439, 20
    %v7726 = vpop.permute.xlu0 %7725
    %7727 = vrot.lane.b32.xlu0 %v6445, 20
    %v7728 = vpop.permute.xlu0 %7727
    %7729 = vrot.lane.b32.xlu0 %v6448, 20
    %v7730 = vpop.permute.xlu0 %7729
    %7731 = vrot.lane.b32.xlu0 %v6454, 20
    %v7732 = vpop.permute.xlu0 %7731
    %7733 = vrot.lane.b32.xlu0 %v6457, 20
    %v7734 = vpop.permute.xlu0 %7733
    %7735 = vrot.lane.b32.xlu0 %v6463, 20
    %v7736 = vpop.permute.xlu0 %7735
    %7737 = vrot.lane.b32.xlu0 %v6466, 20
    %v7738 = vpop.permute.xlu0 %7737
    %7739 = vrot.lane.b32.xlu0 %v6472, 20
    %v7740 = vpop.permute.xlu0 %7739
    %7741 = vrot.lane.b32.xlu0 %v6475, 20
    %v7742 = vpop.permute.xlu0 %7741
    %7743 = vrot.lane.b32.xlu0 %v6481, 20
    %v7744 = vpop.permute.xlu0 %7743
    %7745 = vrot.lane.b32.xlu0 %v6484, 20
    %v7746 = vpop.permute.xlu0 %7745
    %7747 = vrot.lane.b32.xlu0 %v6490, 20
    %v7748 = vpop.permute.xlu0 %7747
    %7749 = vrot.lane.b32.xlu0 %v6493, 20
    %v7750 = vpop.permute.xlu0 %7749
    %7751 = vrot.lane.b32.xlu0 %v6499, 20
    %v7752 = vpop.permute.xlu0 %7751
    %7753 = vrot.lane.b32.xlu0 %v6502, 20
    %v7754 = vpop.permute.xlu0 %7753
    %7755 = vrot.lane.b32.xlu0 %v7627, 20
    %v7756 = vpop.permute.xlu0 %7755
    %7757 = vrot.lane.b32.xlu0 %v7630, 20
    %v7758 = vpop.permute.xlu0 %7757
    %7823 = vst.msk [vmem:[#allocation3] sm:$0xf] %vm3054, %v7632
    %v7824 = vld [vmem:[#allocation3 + $0x4] sm:$0xf]
    %v7825 = vsel %vm3057, %v7634, %v7824
    %7826 = vst [vmem:[#allocation3 + $0x4] sm:$0xf] %v7825
    %7827 = vst.msk [vmem:[#allocation3 + $0x8] sm:$0xf] %vm3054, %v7636
    %v7828 = vld [vmem:[#allocation3 + $0xc] sm:$0xf]
    %v7829 = vsel %vm3057, %v7638, %v7828
    %7830 = vst [vmem:[#allocation3 + $0xc] sm:$0xf] %v7829
    %7831 = vst.msk [vmem:[#allocation3 + $0x10] sm:$0xf] %vm3054, %v7640
    %v7832 = vld [vmem:[#allocation3 + $0x14] sm:$0xf]
    %v7833 = vsel %vm3057, %v7642, %v7832
    %7834 = vst [vmem:[#allocation3 + $0x14] sm:$0xf] %v7833
    %7835 = vst.msk [vmem:[#allocation3 + $0x18] sm:$0xf] %vm3054, %v7644
    %v7836 = vld [vmem:[#allocation3 + $0x1c] sm:$0xf]
    %v7837 = vsel %vm3057, %v7646, %v7836
    %7838 = vst [vmem:[#allocation3 + $0x1c] sm:$0xf] %v7837
    %7839 = vst.msk [vmem:[#allocation3 + $0x20] sm:$0xf] %vm3054, %v7648
    %v7840 = vld [vmem:[#allocation3 + $0x24] sm:$0xf]
    %v7841 = vsel %vm3057, %v7650, %v7840
    %7842 = vst [vmem:[#allocation3 + $0x24] sm:$0xf] %v7841
    %7843 = vst.msk [vmem:[#allocation3 + $0x28] sm:$0xf] %vm3054, %v7652
    %v7844 = vld [vmem:[#allocation3 + $0x2c] sm:$0xf]
    %v7845 = vsel %vm3057, %v7654, %v7844
    %7846 = vst [vmem:[#allocation3 + $0x2c] sm:$0xf] %v7845
    %7847 = vst.msk [vmem:[#allocation3 + $0x30] sm:$0xf] %vm3054, %v7656
    %v7848 = vld [vmem:[#allocation3 + $0x34] sm:$0xf]
    %v7849 = vsel %vm3057, %v7658, %v7848
    %7850 = vst [vmem:[#allocation3 + $0x34] sm:$0xf] %v7849
    %7851 = vst.msk [vmem:[#allocation3 + $0x38] sm:$0xf] %vm3054, %v7660
    %v7852 = vld [vmem:[#allocation3 + $0x3c] sm:$0xf]
    %v7853 = vsel %vm3057, %v7662, %v7852
    %7854 = vst [vmem:[#allocation3 + $0x3c] sm:$0xf] %v7853
    %7855 = vst.msk [vmem:[#allocation3 + $0x40] sm:$0xf] %vm3054, %v7664
    %v7856 = vld [vmem:[#allocation3 + $0x44] sm:$0xf]
    %v7857 = vsel %vm3057, %v7666, %v7856
    %7858 = vst [vmem:[#allocation3 + $0x44] sm:$0xf] %v7857
    %7859 = vst.msk [vmem:[#allocation3 + $0x48] sm:$0xf] %vm3054, %v7668
    %v7860 = vld [vmem:[#allocation3 + $0x4c] sm:$0xf]
    %v7861 = vsel %vm3057, %v7670, %v7860
    %7862 = vst [vmem:[#allocation3 + $0x4c] sm:$0xf] %v7861
    %7863 = vst.msk [vmem:[#allocation3 + $0x50] sm:$0xf] %vm3054, %v7672
    %v7864 = vld [vmem:[#allocation3 + $0x54] sm:$0xf]
    %v7865 = vsel %vm3057, %v7674, %v7864
    %7866 = vst [vmem:[#allocation3 + $0x54] sm:$0xf] %v7865
    %7867 = vst.msk [vmem:[#allocation3 + $0x58] sm:$0xf] %vm3054, %v7676
    %v7868 = vld [vmem:[#allocation3 + $0x5c] sm:$0xf]
    %v7869 = vsel %vm3057, %v7678, %v7868
    %7870 = vst [vmem:[#allocation3 + $0x5c] sm:$0xf] %v7869
    %7871 = vst.msk [vmem:[#allocation3 + $0x60] sm:$0xf] %vm3054, %v7680
    %v7872 = vld [vmem:[#allocation3 + $0x64] sm:$0xf]
    %v7873 = vsel %vm3057, %v7682, %v7872
    %7874 = vst [vmem:[#allocation3 + $0x64] sm:$0xf] %v7873
    %7875 = vst.msk [vmem:[#allocation3 + $0x68] sm:$0xf] %vm3054, %v7684
    %v7876 = vld [vmem:[#allocation3 + $0x6c] sm:$0xf]
    %v7877 = vsel %vm3057, %v7686, %v7876
    %7878 = vst [vmem:[#allocation3 + $0x6c] sm:$0xf] %v7877
    %7879 = vst.msk [vmem:[#allocation3 + $0x70] sm:$0xf] %vm3054, %v7688
    %v7880 = vld [vmem:[#allocation3 + $0x74] sm:$0xf]
    %v7881 = vsel %vm3057, %v7690, %v7880
    %7882 = vst [vmem:[#allocation3 + $0x74] sm:$0xf] %v7881
    %7883 = vst.msk [vmem:[#allocation3 + $0x78] sm:$0xf] %vm3054, %v7692
    %v7884 = vld [vmem:[#allocation3 + $0x7c] sm:$0xf]
    %v7885 = vsel %vm3057, %v7694, %v7884
    %7886 = vst [vmem:[#allocation3 + $0x7c] sm:$0xf] %v7885
    %7887 = vst.msk [vmem:[#allocation3 + $0x80] sm:$0xf] %vm3054, %v7696
    %v7888 = vld [vmem:[#allocation3 + $0x84] sm:$0xf]
    %v7889 = vsel %vm3057, %v7698, %v7888
    %7890 = vst [vmem:[#allocation3 + $0x84] sm:$0xf] %v7889
    %7891 = vst.msk [vmem:[#allocation3 + $0x88] sm:$0xf] %vm3054, %v7700
    %v7892 = vld [vmem:[#allocation3 + $0x8c] sm:$0xf]
    %v7893 = vsel %vm3057, %v7702, %v7892
    %7894 = vst [vmem:[#allocation3 + $0x8c] sm:$0xf] %v7893
    %7895 = vst.msk [vmem:[#allocation3 + $0x90] sm:$0xf] %vm3054, %v7704
    %v7896 = vld [vmem:[#allocation3 + $0x94] sm:$0xf]
    %v7897 = vsel %vm3057, %v7706, %v7896
    %7898 = vst [vmem:[#allocation3 + $0x94] sm:$0xf] %v7897
    %7899 = vst.msk [vmem:[#allocation3 + $0x98] sm:$0xf] %vm3054, %v7708
    %v7900 = vld [vmem:[#allocation3 + $0x9c] sm:$0xf]
    %v7901 = vsel %vm3057, %v7710, %v7900
    %7902 = vst [vmem:[#allocation3 + $0x9c] sm:$0xf] %v7901
    %7903 = vst.msk [vmem:[#allocation3 + $0xa0] sm:$0xf] %vm3054, %v7712
    %v7904 = vld [vmem:[#allocation3 + $0xa4] sm:$0xf]
    %v7905 = vsel %vm3057, %v7714, %v7904
    %7906 = vst [vmem:[#allocation3 + $0xa4] sm:$0xf] %v7905
    %7907 = vst.msk [vmem:[#allocation3 + $0xa8] sm:$0xf] %vm3054, %v7716
    %v7908 = vld [vmem:[#allocation3 + $0xac] sm:$0xf]
    %v7909 = vsel %vm3057, %v7718, %v7908
    %7910 = vst [vmem:[#allocation3 + $0xac] sm:$0xf] %v7909
    %7911 = vst.msk [vmem:[#allocation3 + $0xb0] sm:$0xf] %vm3054, %v7720
    %v7912 = vld [vmem:[#allocation3 + $0xb4] sm:$0xf]
    %v7913 = vsel %vm3057, %v7722, %v7912
    %7914 = vst [vmem:[#allocation3 + $0xb4] sm:$0xf] %v7913
    %7915 = vst.msk [vmem:[#allocation3 + $0xb8] sm:$0xf] %vm3054, %v7724
    %v7916 = vld [vmem:[#allocation3 + $0xbc] sm:$0xf]
    %v7917 = vsel %vm3057, %v7726, %v7916
    %7918 = vst [vmem:[#allocation3 + $0xbc] sm:$0xf] %v7917
    %7919 = vst.msk [vmem:[#allocation3 + $0xc0] sm:$0xf] %vm3054, %v7728
    %v7920 = vld [vmem:[#allocation3 + $0xc4] sm:$0xf]
    %v7921 = vsel %vm3057, %v7730, %v7920
    %7922 = vst [vmem:[#allocation3 + $0xc4] sm:$0xf] %v7921
    %7923 = vst.msk [vmem:[#allocation3 + $0xc8] sm:$0xf] %vm3054, %v7732
    %v7924 = vld [vmem:[#allocation3 + $0xcc] sm:$0xf]
    %v7925 = vsel %vm3057, %v7734, %v7924
    %7926 = vst [vmem:[#allocation3 + $0xcc] sm:$0xf] %v7925
    %7927 = vst.msk [vmem:[#allocation3 + $0xd0] sm:$0xf] %vm3054, %v7736
    %v7928 = vld [vmem:[#allocation3 + $0xd4] sm:$0xf]
    %v7929 = vsel %vm3057, %v7738, %v7928
    %7930 = vst [vmem:[#allocation3 + $0xd4] sm:$0xf] %v7929
    %7931 = vst.msk [vmem:[#allocation3 + $0xd8] sm:$0xf] %vm3054, %v7740
    %v7932 = vld [vmem:[#allocation3 + $0xdc] sm:$0xf]
    %v7933 = vsel %vm3057, %v7742, %v7932
    %7934 = vst [vmem:[#allocation3 + $0xdc] sm:$0xf] %v7933
    %7935 = vst.msk [vmem:[#allocation3 + $0xe0] sm:$0xf] %vm3054, %v7744
    %v7936 = vld [vmem:[#allocation3 + $0xe4] sm:$0xf]
    %v7937 = vsel %vm3057, %v7746, %v7936
    %7938 = vst [vmem:[#allocation3 + $0xe4] sm:$0xf] %v7937
    %7939 = vst.msk [vmem:[#allocation3 + $0xe8] sm:$0xf] %vm3054, %v7748
    %v7940 = vld [vmem:[#allocation3 + $0xec] sm:$0xf]
    %v7941 = vsel %vm3057, %v7750, %v7940
    %7942 = vst [vmem:[#allocation3 + $0xec] sm:$0xf] %v7941
    %7943 = vst.msk [vmem:[#allocation3 + $0xf0] sm:$0xf] %vm3054, %v7752
    %v7944 = vld [vmem:[#allocation3 + $0xf4] sm:$0xf]
    %v7945 = vsel %vm3057, %v7754, %v7944
    %7946 = vst [vmem:[#allocation3 + $0xf4] sm:$0xf] %v7945
    %7947 = vst.msk [vmem:[#allocation3 + $0xf8] sm:$0xf] %vm3054, %v7756
    %v7948 = vld [vmem:[#allocation3 + $0xfc] sm:$0xf]
    %v7949 = vsel %vm3057, %v7758, %v7948
    %7950 = vst [vmem:[#allocation3 + $0xfc] sm:$0xf] %v7949
    %s7951 = scalar_lea.vmem [#allocation3], 120
    %7952 = vst.msk [vmem:[%s7951] sm:$0xf] %vm3186, 0
    %7953 = vst.msk [vmem:[%s7951 + $0x4] sm:$0xf] %vm3186, 0
    %7954 = vst.msk [vmem:[%s7951 + $0x80] sm:$0xf] %vm3186, 0
    %7955 = vst.msk [vmem:[%s7951 + $0x84] sm:$0xf] %vm3186, 0
    %v7956 = vld [vmem:[#allocation3] sm:$0x1]
    %v7957 = vsel %vm3192, 0, %v7956
    %7958 = vst [vmem:[#allocation3] sm:$0x1] %v7957
    %v7959 = vld [vmem:[#allocation3 + $0x8] sm:$0x1]
    %v7960 = vsel %vm3192, 0, %v7959
    %7961 = vst [vmem:[#allocation3 + $0x8] sm:$0x1] %v7960
    %v7962 = vld [vmem:[#allocation3 + $0x10] sm:$0x1]
    %v7963 = vsel %vm3192, 0, %v7962
    %7964 = vst [vmem:[#allocation3 + $0x10] sm:$0x1] %v7963
    %v7965 = vld [vmem:[#allocation3 + $0x18] sm:$0x1]
    %v7966 = vsel %vm3192, 0, %v7965
    %7967 = vst [vmem:[#allocation3 + $0x18] sm:$0x1] %v7966
    %v7968 = vld [vmem:[#allocation3 + $0x20] sm:$0x1]
    %v7969 = vsel %vm3192, 0, %v7968
    %7970 = vst [vmem:[#allocation3 + $0x20] sm:$0x1] %v7969
    %v7971 = vld [vmem:[#allocation3 + $0x28] sm:$0x1]
    %v7972 = vsel %vm3192, 0, %v7971
    %7973 = vst [vmem:[#allocation3 + $0x28] sm:$0x1] %v7972
    %v7974 = vld [vmem:[#allocation3 + $0x30] sm:$0x1]
    %v7975 = vsel %vm3192, 0, %v7974
    %7976 = vst [vmem:[#allocation3 + $0x30] sm:$0x1] %v7975
    %v7977 = vld [vmem:[#allocation3 + $0x38] sm:$0x1]
    %v7978 = vsel %vm3192, 0, %v7977
    %7979 = vst [vmem:[#allocation3 + $0x38] sm:$0x1] %v7978
    %v7980 = vld [vmem:[#allocation3 + $0x40] sm:$0x1]
    %v7981 = vsel %vm3192, 0, %v7980
    %7982 = vst [vmem:[#allocation3 + $0x40] sm:$0x1] %v7981
    %v7983 = vld [vmem:[#allocation3 + $0x48] sm:$0x1]
    %v7984 = vsel %vm3192, 0, %v7983
    %7985 = vst [vmem:[#allocation3 + $0x48] sm:$0x1] %v7984
    %v7986 = vld [vmem:[#allocation3 + $0x50] sm:$0x1]
    %v7987 = vsel %vm3192, 0, %v7986
    %7988 = vst [vmem:[#allocation3 + $0x50] sm:$0x1] %v7987
    %v7989 = vld [vmem:[#allocation3 + $0x58] sm:$0x1]
    %v7990 = vsel %vm3192, 0, %v7989
    %7991 = vst [vmem:[#allocation3 + $0x58] sm:$0x1] %v7990
    %v7992 = vld [vmem:[#allocation3 + $0x60] sm:$0x1]
    %v7993 = vsel %vm3192, 0, %v7992
    %7994 = vst [vmem:[#allocation3 + $0x60] sm:$0x1] %v7993
    %v7995 = vld [vmem:[#allocation3 + $0x68] sm:$0x1]
    %v7996 = vsel %vm3192, 0, %v7995
    %7997 = vst [vmem:[#allocation3 + $0x68] sm:$0x1] %v7996
    %v7998 = vld [vmem:[#allocation3 + $0x70] sm:$0x1]
    %v7999 = vsel %vm3192, 0, %v7998
    %8000 = vst [vmem:[#allocation3 + $0x70] sm:$0x1] %v7999
    %v8001 = vld [vmem:[#allocation3 + $0x78] sm:$0x1]
    %v8002 = vsel %vm3192, 0, %v8001
    %8003 = vst [vmem:[#allocation3 + $0x78] sm:$0x1] %v8002
    %v8004 = vld [vmem:[#allocation3 + $0x80] sm:$0x1]
    %v8005 = vsel %vm3192, 0, %v8004
    %8006 = vst [vmem:[#allocation3 + $0x80] sm:$0x1] %v8005
    %v8007 = vld [vmem:[#allocation3 + $0x88] sm:$0x1]
    %v8008 = vsel %vm3192, 0, %v8007
    %8009 = vst [vmem:[#allocation3 + $0x88] sm:$0x1] %v8008
    %v8010 = vld [vmem:[#allocation3 + $0x90] sm:$0x1]
    %v8011 = vsel %vm3192, 0, %v8010
    %8012 = vst [vmem:[#allocation3 + $0x90] sm:$0x1] %v8011
    %v8013 = vld [vmem:[#allocation3 + $0x98] sm:$0x1]
    %v8014 = vsel %vm3192, 0, %v8013
    %8015 = vst [vmem:[#allocation3 + $0x98] sm:$0x1] %v8014
    %v8016 = vld [vmem:[#allocation3 + $0xa0] sm:$0x1]
    %v8017 = vsel %vm3192, 0, %v8016
    %8018 = vst [vmem:[#allocation3 + $0xa0] sm:$0x1] %v8017
    %v8019 = vld [vmem:[#allocation3 + $0xa8] sm:$0x1]
    %v8020 = vsel %vm3192, 0, %v8019
    %8021 = vst [vmem:[#allocation3 + $0xa8] sm:$0x1] %v8020
    %v8022 = vld [vmem:[#allocation3 + $0xb0] sm:$0x1]
    %v8023 = vsel %vm3192, 0, %v8022
    %8024 = vst [vmem:[#allocation3 + $0xb0] sm:$0x1] %v8023
    %v8025 = vld [vmem:[#allocation3 + $0xb8] sm:$0x1]
    %v8026 = vsel %vm3192, 0, %v8025
    %8027 = vst [vmem:[#allocation3 + $0xb8] sm:$0x1] %v8026
    %v8028 = vld [vmem:[#allocation3 + $0xc0] sm:$0x1]
    %v8029 = vsel %vm3192, 0, %v8028
    %8030 = vst [vmem:[#allocation3 + $0xc0] sm:$0x1] %v8029
    %v8031 = vld [vmem:[#allocation3 + $0xc8] sm:$0x1]
    %v8032 = vsel %vm3192, 0, %v8031
    %8033 = vst [vmem:[#allocation3 + $0xc8] sm:$0x1] %v8032
    %v8034 = vld [vmem:[#allocation3 + $0xd0] sm:$0x1]
    %v8035 = vsel %vm3192, 0, %v8034
    %8036 = vst [vmem:[#allocation3 + $0xd0] sm:$0x1] %v8035
    %v8037 = vld [vmem:[#allocation3 + $0xd8] sm:$0x1]
    %v8038 = vsel %vm3192, 0, %v8037
    %8039 = vst [vmem:[#allocation3 + $0xd8] sm:$0x1] %v8038
    %v8040 = vld [vmem:[#allocation3 + $0xe0] sm:$0x1]
    %v8041 = vsel %vm3192, 0, %v8040
    %8042 = vst [vmem:[#allocation3 + $0xe0] sm:$0x1] %v8041
    %v8043 = vld [vmem:[#allocation3 + $0xe8] sm:$0x1]
    %v8044 = vsel %vm3192, 0, %v8043
    %8045 = vst [vmem:[#allocation3 + $0xe8] sm:$0x1] %v8044
    %v8046 = vld [vmem:[#allocation3 + $0xf0] sm:$0x1]
    %v8047 = vsel %vm3192, 0, %v8046
    %8048 = vst [vmem:[#allocation3 + $0xf0] sm:$0x1] %v8047
    %v8049 = vld [vmem:[#allocation3 + $0xf8] sm:$0x1]
    %v8050 = vsel %vm3192, 0, %v8049
    %8051 = vst [vmem:[#allocation3 + $0xf8] sm:$0x1] %v8050
    %8052 = vrot.lane.b32.xlu0 %v5250, 24
    %v8053 = vpop.permute.xlu0 %8052
    %8054 = vrot.lane.b32.xlu0 %v5259, 24
    %v8055 = vpop.permute.xlu0 %8054
    %8056 = vrot.lane.b32.xlu0 %v5266, 24
    %v8057 = vpop.permute.xlu0 %8056
    %8058 = vrot.lane.b32.xlu0 %v5275, 24
    %v8059 = vpop.permute.xlu0 %8058
    %8060 = vrot.lane.b32.xlu0 %v5282, 24
    %v8061 = vpop.permute.xlu0 %8060
    %8062 = vrot.lane.b32.xlu0 %v5291, 24
    %v8063 = vpop.permute.xlu0 %8062
    %8064 = vrot.lane.b32.xlu0 %v5298, 24
    %v8065 = vpop.permute.xlu0 %8064
    %8066 = vrot.lane.b32.xlu0 %v5307, 24
    %v8067 = vpop.permute.xlu0 %8066
    %8068 = vrot.lane.b32.xlu0 %v5314, 24
    %v8069 = vpop.permute.xlu0 %8068
    %8070 = vrot.lane.b32.xlu0 %v5323, 24
    %v8071 = vpop.permute.xlu0 %8070
    %8072 = vrot.lane.b32.xlu0 %v5330, 24
    %v8073 = vpop.permute.xlu0 %8072
    %8074 = vrot.lane.b32.xlu0 %v5339, 24
    %v8075 = vpop.permute.xlu0 %8074
    %8076 = vrot.lane.b32.xlu0 %v5346, 24
    %v8077 = vpop.permute.xlu0 %8076
    %8078 = vrot.lane.b32.xlu0 %v5355, 24
    %v8079 = vpop.permute.xlu0 %8078
    %8080 = vrot.lane.b32.xlu0 %v5362, 24
    %v8081 = vpop.permute.xlu0 %8080
    %8082 = vrot.lane.b32.xlu0 %v5371, 24
    %v8083 = vpop.permute.xlu0 %8082
    %8084 = vrot.lane.b32.xlu0 %v5378, 24
    %v8085 = vpop.permute.xlu0 %8084
    %8086 = vrot.lane.b32.xlu0 %v5387, 24
    %v8087 = vpop.permute.xlu0 %8086
    %8088 = vrot.lane.b32.xlu0 %v5394, 24
    %v8089 = vpop.permute.xlu0 %8088
    %8090 = vrot.lane.b32.xlu0 %v5403, 24
    %v8091 = vpop.permute.xlu0 %8090
    %8092 = vrot.lane.b32.xlu0 %v5410, 24
    %v8093 = vpop.permute.xlu0 %8092
    %8094 = vrot.lane.b32.xlu0 %v5419, 24
    %v8095 = vpop.permute.xlu0 %8094
    %8096 = vrot.lane.b32.xlu0 %v5426, 24
    %v8097 = vpop.permute.xlu0 %8096
    %8098 = vrot.lane.b32.xlu0 %v5435, 24
    %v8099 = vpop.permute.xlu0 %8098
    %8100 = vrot.lane.b32.xlu0 %v5442, 24
    %v8101 = vpop.permute.xlu0 %8100
    %8102 = vrot.lane.b32.xlu0 %v5451, 24
    %v8103 = vpop.permute.xlu0 %8102
    %8104 = vrot.lane.b32.xlu0 %v5458, 24
    %v8105 = vpop.permute.xlu0 %8104
    %8106 = vrot.lane.b32.xlu0 %v5467, 24
    %v8107 = vpop.permute.xlu0 %8106
    %8108 = vrot.lane.b32.xlu0 %v6915, 24
    %v8109 = vpop.permute.xlu0 %8108
    %8110 = vrot.lane.b32.xlu0 %v6924, 24
    %v8111 = vpop.permute.xlu0 %8110
    %8112 = vrot.lane.b32.xlu0 %v5490, 24
    %v8113 = vpop.permute.xlu0 %8112
    %8114 = vrot.lane.b32.xlu0 %v5499, 24
    %v8115 = vpop.permute.xlu0 %8114
    %8116 = vrot.lane.b32.xlu0 %v5506, 24
    %v8117 = vpop.permute.xlu0 %8116
    %8118 = vrot.lane.b32.xlu0 %v5515, 24
    %v8119 = vpop.permute.xlu0 %8118
    %8120 = vrot.lane.b32.xlu0 %v5522, 24
    %v8121 = vpop.permute.xlu0 %8120
    %8122 = vrot.lane.b32.xlu0 %v5531, 24
    %v8123 = vpop.permute.xlu0 %8122
    %8124 = vrot.lane.b32.xlu0 %v5538, 24
    %v8125 = vpop.permute.xlu0 %8124
    %8126 = vrot.lane.b32.xlu0 %v5547, 24
    %v8127 = vpop.permute.xlu0 %8126
    %8128 = vrot.lane.b32.xlu0 %v5554, 24
    %v8129 = vpop.permute.xlu0 %8128
    %8130 = vrot.lane.b32.xlu0 %v5563, 24
    %v8131 = vpop.permute.xlu0 %8130
    %8132 = vrot.lane.b32.xlu0 %v5570, 24
    %v8133 = vpop.permute.xlu0 %8132
    %8134 = vrot.lane.b32.xlu0 %v5579, 24
    %v8135 = vpop.permute.xlu0 %8134
    %8136 = vrot.lane.b32.xlu0 %v5586, 24
    %v8137 = vpop.permute.xlu0 %8136
    %8138 = vrot.lane.b32.xlu0 %v5595, 24
    %v8139 = vpop.permute.xlu0 %8138
    %8140 = vrot.lane.b32.xlu0 %v5602, 24
    %v8141 = vpop.permute.xlu0 %8140
    %8142 = vrot.lane.b32.xlu0 %v5611, 24
    %v8143 = vpop.permute.xlu0 %8142
    %8144 = vrot.lane.b32.xlu0 %v5618, 24
    %v8145 = vpop.permute.xlu0 %8144
    %8146 = vrot.lane.b32.xlu0 %v5627, 24
    %v8147 = vpop.permute.xlu0 %8146
    %8148 = vrot.lane.b32.xlu0 %v5634, 24
    %v8149 = vpop.permute.xlu0 %8148
    %8150 = vrot.lane.b32.xlu0 %v5643, 24
    %v8151 = vpop.permute.xlu0 %8150
    %8152 = vrot.lane.b32.xlu0 %v5650, 24
    %v8153 = vpop.permute.xlu0 %8152
    %8154 = vrot.lane.b32.xlu0 %v5659, 24
    %v8155 = vpop.permute.xlu0 %8154
    %8156 = vrot.lane.b32.xlu0 %v5666, 24
    %v8157 = vpop.permute.xlu0 %8156
    %8158 = vrot.lane.b32.xlu0 %v5675, 24
    %v8159 = vpop.permute.xlu0 %8158
    %8160 = vrot.lane.b32.xlu0 %v5682, 24
    %v8161 = vpop.permute.xlu0 %8160
    %8162 = vrot.lane.b32.xlu0 %v5691, 24
    %v8163 = vpop.permute.xlu0 %8162
    %8164 = vrot.lane.b32.xlu0 %v5698, 24
    %v8165 = vpop.permute.xlu0 %8164
    %8166 = vrot.lane.b32.xlu0 %v5707, 24
    %v8167 = vpop.permute.xlu0 %8166
    %8168 = vrot.lane.b32.xlu0 %v6931, 24
    %v8169 = vpop.permute.xlu0 %8168
    %8170 = vrot.lane.b32.xlu0 %v6940, 24
    %v8171 = vpop.permute.xlu0 %8170
    %v8232 = vld [vmem:[#allocation3] sm:$0xf]
    %v8233 = vsel %vm3470, %v8053, %v8232
    %8234 = vst [vmem:[#allocation3] sm:$0xf] %v8233
    %8235 = vst.msk [vmem:[#allocation3 + $0x4] sm:$0xf] %vm3186, %v8055
    %v8236 = vld [vmem:[#allocation3 + $0x8] sm:$0xf]
    %v8237 = vsel %vm3470, %v8057, %v8236
    %8238 = vst [vmem:[#allocation3 + $0x8] sm:$0xf] %v8237
    %8239 = vst.msk [vmem:[#allocation3 + $0xc] sm:$0xf] %vm3186, %v8059
    %v8240 = vld [vmem:[#allocation3 + $0x10] sm:$0xf]
    %v8241 = vsel %vm3470, %v8061, %v8240
    %8242 = vst [vmem:[#allocation3 + $0x10] sm:$0xf] %v8241
    %8243 = vst.msk [vmem:[#allocation3 + $0x14] sm:$0xf] %vm3186, %v8063
    %v8244 = vld [vmem:[#allocation3 + $0x18] sm:$0xf]
    %v8245 = vsel %vm3470, %v8065, %v8244
    %8246 = vst [vmem:[#allocation3 + $0x18] sm:$0xf] %v8245
    %8247 = vst.msk [vmem:[#allocation3 + $0x1c] sm:$0xf] %vm3186, %v8067
    %v8248 = vld [vmem:[#allocation3 + $0x20] sm:$0xf]
    %v8249 = vsel %vm3470, %v8069, %v8248
    %8250 = vst [vmem:[#allocation3 + $0x20] sm:$0xf] %v8249
    %8251 = vst.msk [vmem:[#allocation3 + $0x24] sm:$0xf] %vm3186, %v8071
    %v8252 = vld [vmem:[#allocation3 + $0x28] sm:$0xf]
    %v8253 = vsel %vm3470, %v8073, %v8252
    %8254 = vst [vmem:[#allocation3 + $0x28] sm:$0xf] %v8253
    %8255 = vst.msk [vmem:[#allocation3 + $0x2c] sm:$0xf] %vm3186, %v8075
    %v8256 = vld [vmem:[#allocation3 + $0x30] sm:$0xf]
    %v8257 = vsel %vm3470, %v8077, %v8256
    %8258 = vst [vmem:[#allocation3 + $0x30] sm:$0xf] %v8257
    %8259 = vst.msk [vmem:[#allocation3 + $0x34] sm:$0xf] %vm3186, %v8079
    %v8260 = vld [vmem:[#allocation3 + $0x38] sm:$0xf]
    %v8261 = vsel %vm3470, %v8081, %v8260
    %8262 = vst [vmem:[#allocation3 + $0x38] sm:$0xf] %v8261
    %8263 = vst.msk [vmem:[#allocation3 + $0x3c] sm:$0xf] %vm3186, %v8083
    %v8264 = vld [vmem:[#allocation3 + $0x40] sm:$0xf]
    %v8265 = vsel %vm3470, %v8085, %v8264
    %8266 = vst [vmem:[#allocation3 + $0x40] sm:$0xf] %v8265
    %8267 = vst.msk [vmem:[#allocation3 + $0x44] sm:$0xf] %vm3186, %v8087
    %v8268 = vld [vmem:[#allocation3 + $0x48] sm:$0xf]
    %v8269 = vsel %vm3470, %v8089, %v8268
    %8270 = vst [vmem:[#allocation3 + $0x48] sm:$0xf] %v8269
    %8271 = vst.msk [vmem:[#allocation3 + $0x4c] sm:$0xf] %vm3186, %v8091
    %v8272 = vld [vmem:[#allocation3 + $0x50] sm:$0xf]
    %v8273 = vsel %vm3470, %v8093, %v8272
    %8274 = vst [vmem:[#allocation3 + $0x50] sm:$0xf] %v8273
    %8275 = vst.msk [vmem:[#allocation3 + $0x54] sm:$0xf] %vm3186, %v8095
    %v8276 = vld [vmem:[#allocation3 + $0x58] sm:$0xf]
    %v8277 = vsel %vm3470, %v8097, %v8276
    %8278 = vst [vmem:[#allocation3 + $0x58] sm:$0xf] %v8277
    %8279 = vst.msk [vmem:[#allocation3 + $0x5c] sm:$0xf] %vm3186, %v8099
    %v8280 = vld [vmem:[#allocation3 + $0x60] sm:$0xf]
    %v8281 = vsel %vm3470, %v8101, %v8280
    %8282 = vst [vmem:[#allocation3 + $0x60] sm:$0xf] %v8281
    %8283 = vst.msk [vmem:[#allocation3 + $0x64] sm:$0xf] %vm3186, %v8103
    %v8284 = vld [vmem:[#allocation3 + $0x68] sm:$0xf]
    %v8285 = vsel %vm3470, %v8105, %v8284
    %8286 = vst [vmem:[#allocation3 + $0x68] sm:$0xf] %v8285
    %8287 = vst.msk [vmem:[#allocation3 + $0x6c] sm:$0xf] %vm3186, %v8107
    %v8288 = vld [vmem:[#allocation3 + $0x70] sm:$0xf]
    %v8289 = vsel %vm3470, %v8109, %v8288
    %8290 = vst [vmem:[#allocation3 + $0x70] sm:$0xf] %v8289
    %8291 = vst.msk [vmem:[#allocation3 + $0x74] sm:$0xf] %vm3186, %v8111
    %v8292 = vld [vmem:[#allocation3 + $0x80] sm:$0xf]
    %v8293 = vsel %vm3470, %v8113, %v8292
    %8294 = vst [vmem:[#allocation3 + $0x80] sm:$0xf] %v8293
    %8295 = vst.msk [vmem:[#allocation3 + $0x84] sm:$0xf] %vm3186, %v8115
    %v8296 = vld [vmem:[#allocation3 + $0x88] sm:$0xf]
    %v8297 = vsel %vm3470, %v8117, %v8296
    %8298 = vst [vmem:[#allocation3 + $0x88] sm:$0xf] %v8297
    %8299 = vst.msk [vmem:[#allocation3 + $0x8c] sm:$0xf] %vm3186, %v8119
    %v8300 = vld [vmem:[#allocation3 + $0x90] sm:$0xf]
    %v8301 = vsel %vm3470, %v8121, %v8300
    %8302 = vst [vmem:[#allocation3 + $0x90] sm:$0xf] %v8301
    %8303 = vst.msk [vmem:[#allocation3 + $0x94] sm:$0xf] %vm3186, %v8123
    %v8304 = vld [vmem:[#allocation3 + $0x98] sm:$0xf]
    %v8305 = vsel %vm3470, %v8125, %v8304
    %8306 = vst [vmem:[#allocation3 + $0x98] sm:$0xf] %v8305
    %8307 = vst.msk [vmem:[#allocation3 + $0x9c] sm:$0xf] %vm3186, %v8127
    %v8308 = vld [vmem:[#allocation3 + $0xa0] sm:$0xf]
    %v8309 = vsel %vm3470, %v8129, %v8308
    %8310 = vst [vmem:[#allocation3 + $0xa0] sm:$0xf] %v8309
    %8311 = vst.msk [vmem:[#allocation3 + $0xa4] sm:$0xf] %vm3186, %v8131
    %v8312 = vld [vmem:[#allocation3 + $0xa8] sm:$0xf]
    %v8313 = vsel %vm3470, %v8133, %v8312
    %8314 = vst [vmem:[#allocation3 + $0xa8] sm:$0xf] %v8313
    %8315 = vst.msk [vmem:[#allocation3 + $0xac] sm:$0xf] %vm3186, %v8135
    %v8316 = vld [vmem:[#allocation3 + $0xb0] sm:$0xf]
    %v8317 = vsel %vm3470, %v8137, %v8316
    %8318 = vst [vmem:[#allocation3 + $0xb0] sm:$0xf] %v8317
    %8319 = vst.msk [vmem:[#allocation3 + $0xb4] sm:$0xf] %vm3186, %v8139
    %v8320 = vld [vmem:[#allocation3 + $0xb8] sm:$0xf]
    %v8321 = vsel %vm3470, %v8141, %v8320
    %8322 = vst [vmem:[#allocation3 + $0xb8] sm:$0xf] %v8321
    %8323 = vst.msk [vmem:[#allocation3 + $0xbc] sm:$0xf] %vm3186, %v8143
    %v8324 = vld [vmem:[#allocation3 + $0xc0] sm:$0xf]
    %v8325 = vsel %vm3470, %v8145, %v8324
    %8326 = vst [vmem:[#allocation3 + $0xc0] sm:$0xf] %v8325
    %8327 = vst.msk [vmem:[#allocation3 + $0xc4] sm:$0xf] %vm3186, %v8147
    %v8328 = vld [vmem:[#allocation3 + $0xc8] sm:$0xf]
    %v8329 = vsel %vm3470, %v8149, %v8328
    %8330 = vst [vmem:[#allocation3 + $0xc8] sm:$0xf] %v8329
    %8331 = vst.msk [vmem:[#allocation3 + $0xcc] sm:$0xf] %vm3186, %v8151
    %v8332 = vld [vmem:[#allocation3 + $0xd0] sm:$0xf]
    %v8333 = vsel %vm3470, %v8153, %v8332
    %8334 = vst [vmem:[#allocation3 + $0xd0] sm:$0xf] %v8333
    %8335 = vst.msk [vmem:[#allocation3 + $0xd4] sm:$0xf] %vm3186, %v8155
    %v8336 = vld [vmem:[#allocation3 + $0xd8] sm:$0xf]
    %v8337 = vsel %vm3470, %v8157, %v8336
    %8338 = vst [vmem:[#allocation3 + $0xd8] sm:$0xf] %v8337
    %8339 = vst.msk [vmem:[#allocation3 + $0xdc] sm:$0xf] %vm3186, %v8159
    %v8340 = vld [vmem:[#allocation3 + $0xe0] sm:$0xf]
    %v8341 = vsel %vm3470, %v8161, %v8340
    %8342 = vst [vmem:[#allocation3 + $0xe0] sm:$0xf] %v8341
    %8343 = vst.msk [vmem:[#allocation3 + $0xe4] sm:$0xf] %vm3186, %v8163
    %v8344 = vld [vmem:[#allocation3 + $0xe8] sm:$0xf]
    %v8345 = vsel %vm3470, %v8165, %v8344
    %8346 = vst [vmem:[#allocation3 + $0xe8] sm:$0xf] %v8345
    %8347 = vst.msk [vmem:[#allocation3 + $0xec] sm:$0xf] %vm3186, %v8167
    %v8348 = vld [vmem:[#allocation3 + $0xf0] sm:$0xf]
    %v8349 = vsel %vm3470, %v8169, %v8348
    %8350 = vst [vmem:[#allocation3 + $0xf0] sm:$0xf] %v8349
    %8351 = vst.msk [vmem:[#allocation3 + $0xf4] sm:$0xf] %vm3186, %v8171
    %8352 = vst.msk [vmem:[%s7951] sm:$0xf] %vm3591, 0
    %8353 = vst.msk [vmem:[%s7951 + $0x4] sm:$0xf] %vm3591, 0
    %8354 = vst.msk [vmem:[%s7951 + $0x80] sm:$0xf] %vm3591, 0
    %8355 = vst.msk [vmem:[%s7951 + $0x84] sm:$0xf] %vm3591, 0
    %8356 = vrot.lane.b32.xlu0 %v5170, 28
    %v8357 = vpop.permute.xlu0 %8356
    %8358 = vrot.lane.b32.xlu0 %v5171, 28
    %v8359 = vpop.permute.xlu0 %8358
    %8360 = vrot.lane.b32.xlu0 %v5172, 28
    %v8361 = vpop.permute.xlu0 %8360
    %8362 = vrot.lane.b32.xlu0 %v5173, 28
    %v8363 = vpop.permute.xlu0 %8362
    %8364 = vrot.lane.b32.xlu0 %v5174, 28
    %v8365 = vpop.permute.xlu0 %8364
    %8366 = vrot.lane.b32.xlu0 %v5175, 28
    %v8367 = vpop.permute.xlu0 %8366
    %8368 = vrot.lane.b32.xlu0 %v5176, 28
    %v8369 = vpop.permute.xlu0 %8368
    %8370 = vrot.lane.b32.xlu0 %v5177, 28
    %v8371 = vpop.permute.xlu0 %8370
    %8372 = vrot.lane.b32.xlu0 %v5178, 28
    %v8373 = vpop.permute.xlu0 %8372
    %8374 = vrot.lane.b32.xlu0 %v5179, 28
    %v8375 = vpop.permute.xlu0 %8374
    %8376 = vrot.lane.b32.xlu0 %v5180, 28
    %v8377 = vpop.permute.xlu0 %8376
    %8378 = vrot.lane.b32.xlu0 %v5181, 28
    %v8379 = vpop.permute.xlu0 %8378
    %8380 = vrot.lane.b32.xlu0 %v5182, 28
    %v8381 = vpop.permute.xlu0 %8380
    %8382 = vrot.lane.b32.xlu0 %v5183, 28
    %v8383 = vpop.permute.xlu0 %8382
    %8384 = vrot.lane.b32.xlu0 %v5184, 28
    %v8385 = vpop.permute.xlu0 %8384
    %8386 = vrot.lane.b32.xlu0 %v5185, 28
    %v8387 = vpop.permute.xlu0 %8386
    %8388 = vrot.lane.b32.xlu0 %v5186, 28
    %v8389 = vpop.permute.xlu0 %8388
    %8390 = vrot.lane.b32.xlu0 %v5187, 28
    %v8391 = vpop.permute.xlu0 %8390
    %8392 = vrot.lane.b32.xlu0 %v5188, 28
    %v8393 = vpop.permute.xlu0 %8392
    %8394 = vrot.lane.b32.xlu0 %v5189, 28
    %v8395 = vpop.permute.xlu0 %8394
    %8396 = vrot.lane.b32.xlu0 %v5190, 28
    %v8397 = vpop.permute.xlu0 %8396
    %8398 = vrot.lane.b32.xlu0 %v5191, 28
    %v8399 = vpop.permute.xlu0 %8398
    %8400 = vrot.lane.b32.xlu0 %v5192, 28
    %v8401 = vpop.permute.xlu0 %8400
    %8402 = vrot.lane.b32.xlu0 %v5193, 28
    %v8403 = vpop.permute.xlu0 %8402
    %8404 = vrot.lane.b32.xlu0 %v5194, 28
    %v8405 = vpop.permute.xlu0 %8404
    %8406 = vrot.lane.b32.xlu0 %v5195, 28
    %v8407 = vpop.permute.xlu0 %8406
    %8408 = vrot.lane.b32.xlu0 %v5196, 28
    %v8409 = vpop.permute.xlu0 %8408
    %8410 = vrot.lane.b32.xlu0 %v5197, 28
    %v8411 = vpop.permute.xlu0 %8410
    %8412 = vrot.lane.b32.xlu0 %v6905, 28
    %v8413 = vpop.permute.xlu0 %8412
    %8414 = vrot.lane.b32.xlu0 %v6906, 28
    %v8415 = vpop.permute.xlu0 %8414
    %8416 = vrot.lane.b32.xlu0 %v5200, 28
    %v8417 = vpop.permute.xlu0 %8416
    %8418 = vrot.lane.b32.xlu0 %v5201, 28
    %v8419 = vpop.permute.xlu0 %8418
    %8420 = vrot.lane.b32.xlu0 %v5202, 28
    %v8421 = vpop.permute.xlu0 %8420
    %8422 = vrot.lane.b32.xlu0 %v5203, 28
    %v8423 = vpop.permute.xlu0 %8422
    %8424 = vrot.lane.b32.xlu0 %v5204, 28
    %v8425 = vpop.permute.xlu0 %8424
    %8426 = vrot.lane.b32.xlu0 %v5205, 28
    %v8427 = vpop.permute.xlu0 %8426
    %8428 = vrot.lane.b32.xlu0 %v5206, 28
    %v8429 = vpop.permute.xlu0 %8428
    %8430 = vrot.lane.b32.xlu0 %v5207, 28
    %v8431 = vpop.permute.xlu0 %8430
    %8432 = vrot.lane.b32.xlu0 %v5208, 28
    %v8433 = vpop.permute.xlu0 %8432
    %8434 = vrot.lane.b32.xlu0 %v5209, 28
    %v8435 = vpop.permute.xlu0 %8434
    %8436 = vrot.lane.b32.xlu0 %v5210, 28
    %v8437 = vpop.permute.xlu0 %8436
    %8438 = vrot.lane.b32.xlu0 %v5211, 28
    %v8439 = vpop.permute.xlu0 %8438
    %8440 = vrot.lane.b32.xlu0 %v5212, 28
    %v8441 = vpop.permute.xlu0 %8440
    %8442 = vrot.lane.b32.xlu0 %v5213, 28
    %v8443 = vpop.permute.xlu0 %8442
    %8444 = vrot.lane.b32.xlu0 %v5214, 28
    %v8445 = vpop.permute.xlu0 %8444
    %8446 = vrot.lane.b32.xlu0 %v5215, 28
    %v8447 = vpop.permute.xlu0 %8446
    %8448 = vrot.lane.b32.xlu0 %v5216, 28
    %v8449 = vpop.permute.xlu0 %8448
    %8450 = vrot.lane.b32.xlu0 %v5217, 28
    %v8451 = vpop.permute.xlu0 %8450
    %8452 = vrot.lane.b32.xlu0 %v5218, 28
    %v8453 = vpop.permute.xlu0 %8452
    %8454 = vrot.lane.b32.xlu0 %v5219, 28
    %v8455 = vpop.permute.xlu0 %8454
    %8456 = vrot.lane.b32.xlu0 %v5220, 28
    %v8457 = vpop.permute.xlu0 %8456
    %8458 = vrot.lane.b32.xlu0 %v5221, 28
    %v8459 = vpop.permute.xlu0 %8458
    %8460 = vrot.lane.b32.xlu0 %v5222, 28
    %v8461 = vpop.permute.xlu0 %8460
    %8462 = vrot.lane.b32.xlu0 %v5223, 28
    %v8463 = vpop.permute.xlu0 %8462
    %8464 = vrot.lane.b32.xlu0 %v5224, 28
    %v8465 = vpop.permute.xlu0 %8464
    %8466 = vrot.lane.b32.xlu0 %v5225, 28
    %v8467 = vpop.permute.xlu0 %8466
    %8468 = vrot.lane.b32.xlu0 %v5226, 28
    %v8469 = vpop.permute.xlu0 %8468
    %8470 = vrot.lane.b32.xlu0 %v5227, 28
    %v8471 = vpop.permute.xlu0 %8470
    %8472 = vrot.lane.b32.xlu0 %v6907, 28
    %v8473 = vpop.permute.xlu0 %8472
    %8474 = vrot.lane.b32.xlu0 %v6908, 28
    %v8475 = vpop.permute.xlu0 %8474
    %8536 = vst.msk [vmem:[#allocation3] sm:$0xf] %vm3591, %v8357
    %8537 = vst.msk [vmem:[#allocation3 + $0x4] sm:$0xf] %vm3591, %v8359
    %8538 = vst.msk [vmem:[#allocation3 + $0x8] sm:$0xf] %vm3591, %v8361
    %8539 = vst.msk [vmem:[#allocation3 + $0xc] sm:$0xf] %vm3591, %v8363
    %8540 = vst.msk [vmem:[#allocation3 + $0x10] sm:$0xf] %vm3591, %v8365
    %8541 = vst.msk [vmem:[#allocation3 + $0x14] sm:$0xf] %vm3591, %v8367
    %8542 = vst.msk [vmem:[#allocation3 + $0x18] sm:$0xf] %vm3591, %v8369
    %8543 = vst.msk [vmem:[#allocation3 + $0x1c] sm:$0xf] %vm3591, %v8371
    %8544 = vst.msk [vmem:[#allocation3 + $0x20] sm:$0xf] %vm3591, %v8373
    %8545 = vst.msk [vmem:[#allocation3 + $0x24] sm:$0xf] %vm3591, %v8375
    %8546 = vst.msk [vmem:[#allocation3 + $0x28] sm:$0xf] %vm3591, %v8377
    %8547 = vst.msk [vmem:[#allocation3 + $0x2c] sm:$0xf] %vm3591, %v8379
    %8548 = vst.msk [vmem:[#allocation3 + $0x30] sm:$0xf] %vm3591, %v8381
    %8549 = vst.msk [vmem:[#allocation3 + $0x34] sm:$0xf] %vm3591, %v8383
    %8550 = vst.msk [vmem:[#allocation3 + $0x38] sm:$0xf] %vm3591, %v8385
    %8551 = vst.msk [vmem:[#allocation3 + $0x3c] sm:$0xf] %vm3591, %v8387
    %8552 = vst.msk [vmem:[#allocation3 + $0x40] sm:$0xf] %vm3591, %v8389
    %8553 = vst.msk [vmem:[#allocation3 + $0x44] sm:$0xf] %vm3591, %v8391
    %8554 = vst.msk [vmem:[#allocation3 + $0x48] sm:$0xf] %vm3591, %v8393
    %8555 = vst.msk [vmem:[#allocation3 + $0x4c] sm:$0xf] %vm3591, %v8395
    %8556 = vst.msk [vmem:[#allocation3 + $0x50] sm:$0xf] %vm3591, %v8397
    %8557 = vst.msk [vmem:[#allocation3 + $0x54] sm:$0xf] %vm3591, %v8399
    %8558 = vst.msk [vmem:[#allocation3 + $0x58] sm:$0xf] %vm3591, %v8401
    %8559 = vst.msk [vmem:[#allocation3 + $0x5c] sm:$0xf] %vm3591, %v8403
    %8560 = vst.msk [vmem:[#allocation3 + $0x60] sm:$0xf] %vm3591, %v8405
    %8561 = vst.msk [vmem:[#allocation3 + $0x64] sm:$0xf] %vm3591, %v8407
    %8562 = vst.msk [vmem:[#allocation3 + $0x68] sm:$0xf] %vm3591, %v8409
    %8563 = vst.msk [vmem:[#allocation3 + $0x6c] sm:$0xf] %vm3591, %v8411
    %8564 = vst.msk [vmem:[#allocation3 + $0x70] sm:$0xf] %vm3591, %v8413
    %8565 = vst.msk [vmem:[#allocation3 + $0x74] sm:$0xf] %vm3591, %v8415
    %8566 = vst.msk [vmem:[#allocation3 + $0x80] sm:$0xf] %vm3591, %v8417
    %8567 = vst.msk [vmem:[#allocation3 + $0x84] sm:$0xf] %vm3591, %v8419
    %8568 = vst.msk [vmem:[#allocation3 + $0x88] sm:$0xf] %vm3591, %v8421
    %8569 = vst.msk [vmem:[#allocation3 + $0x8c] sm:$0xf] %vm3591, %v8423
    %8570 = vst.msk [vmem:[#allocation3 + $0x90] sm:$0xf] %vm3591, %v8425
    %8571 = vst.msk [vmem:[#allocation3 + $0x94] sm:$0xf] %vm3591, %v8427
    %8572 = vst.msk [vmem:[#allocation3 + $0x98] sm:$0xf] %vm3591, %v8429
    %8573 = vst.msk [vmem:[#allocation3 + $0x9c] sm:$0xf] %vm3591, %v8431
    %8574 = vst.msk [vmem:[#allocation3 + $0xa0] sm:$0xf] %vm3591, %v8433
    %8575 = vst.msk [vmem:[#allocation3 + $0xa4] sm:$0xf] %vm3591, %v8435
    %8576 = vst.msk [vmem:[#allocation3 + $0xa8] sm:$0xf] %vm3591, %v8437
    %8577 = vst.msk [vmem:[#allocation3 + $0xac] sm:$0xf] %vm3591, %v8439
    %8578 = vst.msk [vmem:[#allocation3 + $0xb0] sm:$0xf] %vm3591, %v8441
    %8579 = vst.msk [vmem:[#allocation3 + $0xb4] sm:$0xf] %vm3591, %v8443
    %8580 = vst.msk [vmem:[#allocation3 + $0xb8] sm:$0xf] %vm3591, %v8445
    %8581 = vst.msk [vmem:[#allocation3 + $0xbc] sm:$0xf] %vm3591, %v8447
    %8582 = vst.msk [vmem:[#allocation3 + $0xc0] sm:$0xf] %vm3591, %v8449
    %8583 = vst.msk [vmem:[#allocation3 + $0xc4] sm:$0xf] %vm3591, %v8451
    %8584 = vst.msk [vmem:[#allocation3 + $0xc8] sm:$0xf] %vm3591, %v8453
    %8585 = vst.msk [vmem:[#allocation3 + $0xcc] sm:$0xf] %vm3591, %v8455
    %8586 = vst.msk [vmem:[#allocation3 + $0xd0] sm:$0xf] %vm3591, %v8457
    %8587 = vst.msk [vmem:[#allocation3 + $0xd4] sm:$0xf] %vm3591, %v8459
    %8588 = vst.msk [vmem:[#allocation3 + $0xd8] sm:$0xf] %vm3591, %v8461
    %8589 = vst.msk [vmem:[#allocation3 + $0xdc] sm:$0xf] %vm3591, %v8463
    %8590 = vst.msk [vmem:[#allocation3 + $0xe0] sm:$0xf] %vm3591, %v8465
    %8591 = vst.msk [vmem:[#allocation3 + $0xe4] sm:$0xf] %vm3591, %v8467
    %8592 = vst.msk [vmem:[#allocation3 + $0xe8] sm:$0xf] %vm3591, %v8469
    %8593 = vst.msk [vmem:[#allocation3 + $0xec] sm:$0xf] %vm3591, %v8471
    %8594 = vst.msk [vmem:[#allocation3 + $0xf0] sm:$0xf] %vm3591, %v8473
    %8595 = vst.msk [vmem:[#allocation3 + $0xf4] sm:$0xf] %vm3591, %v8475
    %8596 = vst.msk [vmem:[%s7951] sm:$0xf] %vm3836, 0
    %8597 = vst.msk [vmem:[%s7951 + $0x4] sm:$0xf] %vm3836, 0
    %8598 = vst.msk [vmem:[%s7951 + $0x80] sm:$0xf] %vm3836, 0
    %8599 = vst.msk [vmem:[%s7951 + $0x84] sm:$0xf] %vm3836, 0
    %v8600 = vld [vmem:[#allocation3 + $0x4] sm:$0x8]
    %v8601 = vsel %vm3842, 0, %v8600
    %8602 = vst [vmem:[#allocation3 + $0x4] sm:$0x8] %v8601
    %v8603 = vld [vmem:[#allocation3 + $0xc] sm:$0x8]
    %v8604 = vsel %vm3842, 0, %v8603
    %8605 = vst [vmem:[#allocation3 + $0xc] sm:$0x8] %v8604
    %v8606 = vld [vmem:[#allocation3 + $0x14] sm:$0x8]
    %v8607 = vsel %vm3842, 0, %v8606
    %8608 = vst [vmem:[#allocation3 + $0x14] sm:$0x8] %v8607
    %v8609 = vld [vmem:[#allocation3 + $0x1c] sm:$0x8]
    %v8610 = vsel %vm3842, 0, %v8609
    %8611 = vst [vmem:[#allocation3 + $0x1c] sm:$0x8] %v8610
    %v8612 = vld [vmem:[#allocation3 + $0x24] sm:$0x8]
    %v8613 = vsel %vm3842, 0, %v8612
    %8614 = vst [vmem:[#allocation3 + $0x24] sm:$0x8] %v8613
    %v8615 = vld [vmem:[#allocation3 + $0x2c] sm:$0x8]
    %v8616 = vsel %vm3842, 0, %v8615
    %8617 = vst [vmem:[#allocation3 + $0x2c] sm:$0x8] %v8616
    %v8618 = vld [vmem:[#allocation3 + $0x34] sm:$0x8]
    %v8619 = vsel %vm3842, 0, %v8618
    %8620 = vst [vmem:[#allocation3 + $0x34] sm:$0x8] %v8619
    %v8621 = vld [vmem:[#allocation3 + $0x3c] sm:$0x8]
    %v8622 = vsel %vm3842, 0, %v8621
    %8623 = vst [vmem:[#allocation3 + $0x3c] sm:$0x8] %v8622
    %v8624 = vld [vmem:[#allocation3 + $0x44] sm:$0x8]
    %v8625 = vsel %vm3842, 0, %v8624
    %8626 = vst [vmem:[#allocation3 + $0x44] sm:$0x8] %v8625
    %v8627 = vld [vmem:[#allocation3 + $0x4c] sm:$0x8]
    %v8628 = vsel %vm3842, 0, %v8627
    %8629 = vst [vmem:[#allocation3 + $0x4c] sm:$0x8] %v8628
    %v8630 = vld [vmem:[#allocation3 + $0x54] sm:$0x8]
    %v8631 = vsel %vm3842, 0, %v8630
    %8632 = vst [vmem:[#allocation3 + $0x54] sm:$0x8] %v8631
    %v8633 = vld [vmem:[#allocation3 + $0x5c] sm:$0x8]
    %v8634 = vsel %vm3842, 0, %v8633
    %8635 = vst [vmem:[#allocation3 + $0x5c] sm:$0x8] %v8634
    %v8636 = vld [vmem:[#allocation3 + $0x64] sm:$0x8]
    %v8637 = vsel %vm3842, 0, %v8636
    %8638 = vst [vmem:[#allocation3 + $0x64] sm:$0x8] %v8637
    %v8639 = vld [vmem:[#allocation3 + $0x6c] sm:$0x8]
    %v8640 = vsel %vm3842, 0, %v8639
    %8641 = vst [vmem:[#allocation3 + $0x6c] sm:$0x8] %v8640
    %v8642 = vld [vmem:[#allocation3 + $0x74] sm:$0x8]
    %v8643 = vsel %vm3842, 0, %v8642
    %8644 = vst [vmem:[#allocation3 + $0x74] sm:$0x8] %v8643
    %v8645 = vld [vmem:[#allocation3 + $0x7c] sm:$0x8]
    %v8646 = vsel %vm3842, 0, %v8645
    %8647 = vst [vmem:[#allocation3 + $0x7c] sm:$0x8] %v8646
    %v8648 = vld [vmem:[#allocation3 + $0x84] sm:$0x8]
    %v8649 = vsel %vm3842, 0, %v8648
    %8650 = vst [vmem:[#allocation3 + $0x84] sm:$0x8] %v8649
    %v8651 = vld [vmem:[#allocation3 + $0x8c] sm:$0x8]
    %v8652 = vsel %vm3842, 0, %v8651
    %8653 = vst [vmem:[#allocation3 + $0x8c] sm:$0x8] %v8652
    %v8654 = vld [vmem:[#allocation3 + $0x94] sm:$0x8]
    %v8655 = vsel %vm3842, 0, %v8654
    %8656 = vst [vmem:[#allocation3 + $0x94] sm:$0x8] %v8655
    %v8657 = vld [vmem:[#allocation3 + $0x9c] sm:$0x8]
    %v8658 = vsel %vm3842, 0, %v8657
    %8659 = vst [vmem:[#allocation3 + $0x9c] sm:$0x8] %v8658
    %v8660 = vld [vmem:[#allocation3 + $0xa4] sm:$0x8]
    %v8661 = vsel %vm3842, 0, %v8660
    %8662 = vst [vmem:[#allocation3 + $0xa4] sm:$0x8] %v8661
    %v8663 = vld [vmem:[#allocation3 + $0xac] sm:$0x8]
    %v8664 = vsel %vm3842, 0, %v8663
    %8665 = vst [vmem:[#allocation3 + $0xac] sm:$0x8] %v8664
    %v8666 = vld [vmem:[#allocation3 + $0xb4] sm:$0x8]
    %v8667 = vsel %vm3842, 0, %v8666
    %8668 = vst [vmem:[#allocation3 + $0xb4] sm:$0x8] %v8667
    %v8669 = vld [vmem:[#allocation3 + $0xbc] sm:$0x8]
    %v8670 = vsel %vm3842, 0, %v8669
    %8671 = vst [vmem:[#allocation3 + $0xbc] sm:$0x8] %v8670
    %v8672 = vld [vmem:[#allocation3 + $0xc4] sm:$0x8]
    %v8673 = vsel %vm3842, 0, %v8672
    %8674 = vst [vmem:[#allocation3 + $0xc4] sm:$0x8] %v8673
    %v8675 = vld [vmem:[#allocation3 + $0xcc] sm:$0x8]
    %v8676 = vsel %vm3842, 0, %v8675
    %8677 = vst [vmem:[#allocation3 + $0xcc] sm:$0x8] %v8676
    %v8678 = vld [vmem:[#allocation3 + $0xd4] sm:$0x8]
    %v8679 = vsel %vm3842, 0, %v8678
    %8680 = vst [vmem:[#allocation3 + $0xd4] sm:$0x8] %v8679
    %v8681 = vld [vmem:[#allocation3 + $0xdc] sm:$0x8]
    %v8682 = vsel %vm3842, 0, %v8681
    %8683 = vst [vmem:[#allocation3 + $0xdc] sm:$0x8] %v8682
    %v8684 = vld [vmem:[#allocation3 + $0xe4] sm:$0x8]
    %v8685 = vsel %vm3842, 0, %v8684
    %8686 = vst [vmem:[#allocation3 + $0xe4] sm:$0x8] %v8685
    %v8687 = vld [vmem:[#allocation3 + $0xec] sm:$0x8]
    %v8688 = vsel %vm3842, 0, %v8687
    %8689 = vst [vmem:[#allocation3 + $0xec] sm:$0x8] %v8688
    %v8690 = vld [vmem:[#allocation3 + $0xf4] sm:$0x8]
    %v8691 = vsel %vm3842, 0, %v8690
    %8692 = vst [vmem:[#allocation3 + $0xf4] sm:$0x8] %v8691
    %v8693 = vld [vmem:[#allocation3 + $0xfc] sm:$0x8]
    %v8694 = vsel %vm3842, 0, %v8693
    %8695 = vst [vmem:[#allocation3 + $0xfc] sm:$0x8] %v8694
    %8696 = vrot.lane.b32.xlu0 %v6247, 32
    %v8697 = vpop.permute.xlu0 %8696
    %8698 = vrot.lane.b32.xlu0 %v6250, 32
    %v8699 = vpop.permute.xlu0 %8698
    %8700 = vrot.lane.b32.xlu0 %v6256, 32
    %v8701 = vpop.permute.xlu0 %8700
    %8702 = vrot.lane.b32.xlu0 %v6259, 32
    %v8703 = vpop.permute.xlu0 %8702
    %8704 = vrot.lane.b32.xlu0 %v6265, 32
    %v8705 = vpop.permute.xlu0 %8704
    %8706 = vrot.lane.b32.xlu0 %v6268, 32
    %v8707 = vpop.permute.xlu0 %8706
    %8708 = vrot.lane.b32.xlu0 %v6274, 32
    %v8709 = vpop.permute.xlu0 %8708
    %8710 = vrot.lane.b32.xlu0 %v6277, 32
    %v8711 = vpop.permute.xlu0 %8710
    %8712 = vrot.lane.b32.xlu0 %v6283, 32
    %v8713 = vpop.permute.xlu0 %8712
    %8714 = vrot.lane.b32.xlu0 %v6286, 32
    %v8715 = vpop.permute.xlu0 %8714
    %8716 = vrot.lane.b32.xlu0 %v6292, 32
    %v8717 = vpop.permute.xlu0 %8716
    %8718 = vrot.lane.b32.xlu0 %v6295, 32
    %v8719 = vpop.permute.xlu0 %8718
    %8720 = vrot.lane.b32.xlu0 %v6301, 32
    %v8721 = vpop.permute.xlu0 %8720
    %8722 = vrot.lane.b32.xlu0 %v6304, 32
    %v8723 = vpop.permute.xlu0 %8722
    %8724 = vrot.lane.b32.xlu0 %v6310, 32
    %v8725 = vpop.permute.xlu0 %8724
    %8726 = vrot.lane.b32.xlu0 %v6313, 32
    %v8727 = vpop.permute.xlu0 %8726
    %8728 = vrot.lane.b32.xlu0 %v6319, 32
    %v8729 = vpop.permute.xlu0 %8728
    %8730 = vrot.lane.b32.xlu0 %v6322, 32
    %v8731 = vpop.permute.xlu0 %8730
    %8732 = vrot.lane.b32.xlu0 %v6328, 32
    %v8733 = vpop.permute.xlu0 %8732
    %8734 = vrot.lane.b32.xlu0 %v6331, 32
    %v8735 = vpop.permute.xlu0 %8734
    %8736 = vrot.lane.b32.xlu0 %v6337, 32
    %v8737 = vpop.permute.xlu0 %8736
    %8738 = vrot.lane.b32.xlu0 %v6340, 32
    %v8739 = vpop.permute.xlu0 %8738
    %8740 = vrot.lane.b32.xlu0 %v6346, 32
    %v8741 = vpop.permute.xlu0 %8740
    %8742 = vrot.lane.b32.xlu0 %v6349, 32
    %v8743 = vpop.permute.xlu0 %8742
    %8744 = vrot.lane.b32.xlu0 %v6355, 32
    %v8745 = vpop.permute.xlu0 %8744
    %8746 = vrot.lane.b32.xlu0 %v6358, 32
    %v8747 = vpop.permute.xlu0 %8746
    %8748 = vrot.lane.b32.xlu0 %v6364, 32
    %v8749 = vpop.permute.xlu0 %8748
    %8750 = vrot.lane.b32.xlu0 %v6367, 32
    %v8751 = vpop.permute.xlu0 %8750
    %8752 = vrot.lane.b32.xlu0 %v7618, 32
    %v8753 = vpop.permute.xlu0 %8752
    %8754 = vrot.lane.b32.xlu0 %v7621, 32
    %v8755 = vpop.permute.xlu0 %8754
    %8756 = vrot.lane.b32.xlu0 %v6382, 32
    %v8757 = vpop.permute.xlu0 %8756
    %8758 = vrot.lane.b32.xlu0 %v6385, 32
    %v8759 = vpop.permute.xlu0 %8758
    %8760 = vrot.lane.b32.xlu0 %v6391, 32
    %v8761 = vpop.permute.xlu0 %8760
    %8762 = vrot.lane.b32.xlu0 %v6394, 32
    %v8763 = vpop.permute.xlu0 %8762
    %8764 = vrot.lane.b32.xlu0 %v6400, 32
    %v8765 = vpop.permute.xlu0 %8764
    %8766 = vrot.lane.b32.xlu0 %v6403, 32
    %v8767 = vpop.permute.xlu0 %8766
    %8768 = vrot.lane.b32.xlu0 %v6409, 32
    %v8769 = vpop.permute.xlu0 %8768
    %8770 = vrot.lane.b32.xlu0 %v6412, 32
    %v8771 = vpop.permute.xlu0 %8770
    %8772 = vrot.lane.b32.xlu0 %v6418, 32
    %v8773 = vpop.permute.xlu0 %8772
    %8774 = vrot.lane.b32.xlu0 %v6421, 32
    %v8775 = vpop.permute.xlu0 %8774
    %8776 = vrot.lane.b32.xlu0 %v6427, 32
    %v8777 = vpop.permute.xlu0 %8776
    %8778 = vrot.lane.b32.xlu0 %v6430, 32
    %v8779 = vpop.permute.xlu0 %8778
    %8780 = vrot.lane.b32.xlu0 %v6436, 32
    %v8781 = vpop.permute.xlu0 %8780
    %8782 = vrot.lane.b32.xlu0 %v6439, 32
    %v8783 = vpop.permute.xlu0 %8782
    %8784 = vrot.lane.b32.xlu0 %v6445, 32
    %v8785 = vpop.permute.xlu0 %8784
    %8786 = vrot.lane.b32.xlu0 %v6448, 32
    %v8787 = vpop.permute.xlu0 %8786
    %8788 = vrot.lane.b32.xlu0 %v6454, 32
    %v8789 = vpop.permute.xlu0 %8788
    %8790 = vrot.lane.b32.xlu0 %v6457, 32
    %v8791 = vpop.permute.xlu0 %8790
    %8792 = vrot.lane.b32.xlu0 %v6463, 32
    %v8793 = vpop.permute.xlu0 %8792
    %8794 = vrot.lane.b32.xlu0 %v6466, 32
    %v8795 = vpop.permute.xlu0 %8794
    %8796 = vrot.lane.b32.xlu0 %v6472, 32
    %v8797 = vpop.permute.xlu0 %8796
    %8798 = vrot.lane.b32.xlu0 %v6475, 32
    %v8799 = vpop.permute.xlu0 %8798
    %8800 = vrot.lane.b32.xlu0 %v6481, 32
    %v8801 = vpop.permute.xlu0 %8800
    %8802 = vrot.lane.b32.xlu0 %v6484, 32
    %v8803 = vpop.permute.xlu0 %8802
    %8804 = vrot.lane.b32.xlu0 %v6490, 32
    %v8805 = vpop.permute.xlu0 %8804
    %8806 = vrot.lane.b32.xlu0 %v6493, 32
    %v8807 = vpop.permute.xlu0 %8806
    %8808 = vrot.lane.b32.xlu0 %v6499, 32
    %v8809 = vpop.permute.xlu0 %8808
    %8810 = vrot.lane.b32.xlu0 %v6502, 32
    %v8811 = vpop.permute.xlu0 %8810
    %8812 = vrot.lane.b32.xlu0 %v7627, 32
    %v8813 = vpop.permute.xlu0 %8812
    %8814 = vrot.lane.b32.xlu0 %v7630, 32
    %v8815 = vpop.permute.xlu0 %8814
    %8876 = vst.msk [vmem:[#allocation3] sm:$0xf] %vm3836, %v8697
    %v8877 = vld [vmem:[#allocation3 + $0x4] sm:$0xf]
    %v8878 = vsel %vm4121, %v8699, %v8877
    %8879 = vst [vmem:[#allocation3 + $0x4] sm:$0xf] %v8878
    %8880 = vst.msk [vmem:[#allocation3 + $0x8] sm:$0xf] %vm3836, %v8701
    %v8881 = vld [vmem:[#allocation3 + $0xc] sm:$0xf]
    %v8882 = vsel %vm4121, %v8703, %v8881
    %8883 = vst [vmem:[#allocation3 + $0xc] sm:$0xf] %v8882
    %8884 = vst.msk [vmem:[#allocation3 + $0x10] sm:$0xf] %vm3836, %v8705
    %v8885 = vld [vmem:[#allocation3 + $0x14] sm:$0xf]
    %v8886 = vsel %vm4121, %v8707, %v8885
    %8887 = vst [vmem:[#allocation3 + $0x14] sm:$0xf] %v8886
    %8888 = vst.msk [vmem:[#allocation3 + $0x18] sm:$0xf] %vm3836, %v8709
    %v8889 = vld [vmem:[#allocation3 + $0x1c] sm:$0xf]
    %v8890 = vsel %vm4121, %v8711, %v8889
    %8891 = vst [vmem:[#allocation3 + $0x1c] sm:$0xf] %v8890
    %8892 = vst.msk [vmem:[#allocation3 + $0x20] sm:$0xf] %vm3836, %v8713
    %v8893 = vld [vmem:[#allocation3 + $0x24] sm:$0xf]
    %v8894 = vsel %vm4121, %v8715, %v8893
    %8895 = vst [vmem:[#allocation3 + $0x24] sm:$0xf] %v8894
    %8896 = vst.msk [vmem:[#allocation3 + $0x28] sm:$0xf] %vm3836, %v8717
    %v8897 = vld [vmem:[#allocation3 + $0x2c] sm:$0xf]
    %v8898 = vsel %vm4121, %v8719, %v8897
    %8899 = vst [vmem:[#allocation3 + $0x2c] sm:$0xf] %v8898
    %8900 = vst.msk [vmem:[#allocation3 + $0x30] sm:$0xf] %vm3836, %v8721
    %v8901 = vld [vmem:[#allocation3 + $0x34] sm:$0xf]
    %v8902 = vsel %vm4121, %v8723, %v8901
    %8903 = vst [vmem:[#allocation3 + $0x34] sm:$0xf] %v8902
    %8904 = vst.msk [vmem:[#allocation3 + $0x38] sm:$0xf] %vm3836, %v8725
    %v8905 = vld [vmem:[#allocation3 + $0x3c] sm:$0xf]
    %v8906 = vsel %vm4121, %v8727, %v8905
    %8907 = vst [vmem:[#allocation3 + $0x3c] sm:$0xf] %v8906
    %8908 = vst.msk [vmem:[#allocation3 + $0x40] sm:$0xf] %vm3836, %v8729
    %v8909 = vld [vmem:[#allocation3 + $0x44] sm:$0xf]
    %v8910 = vsel %vm4121, %v8731, %v8909
    %8911 = vst [vmem:[#allocation3 + $0x44] sm:$0xf] %v8910
    %8912 = vst.msk [vmem:[#allocation3 + $0x48] sm:$0xf] %vm3836, %v8733
    %v8913 = vld [vmem:[#allocation3 + $0x4c] sm:$0xf]
    %v8914 = vsel %vm4121, %v8735, %v8913
    %8915 = vst [vmem:[#allocation3 + $0x4c] sm:$0xf] %v8914
    %8916 = vst.msk [vmem:[#allocation3 + $0x50] sm:$0xf] %vm3836, %v8737
    %v8917 = vld [vmem:[#allocation3 + $0x54] sm:$0xf]
    %v8918 = vsel %vm4121, %v8739, %v8917
    %8919 = vst [vmem:[#allocation3 + $0x54] sm:$0xf] %v8918
    %8920 = vst.msk [vmem:[#allocation3 + $0x58] sm:$0xf] %vm3836, %v8741
    %v8921 = vld [vmem:[#allocation3 + $0x5c] sm:$0xf]
    %v8922 = vsel %vm4121, %v8743, %v8921
    %8923 = vst [vmem:[#allocation3 + $0x5c] sm:$0xf] %v8922
    %8924 = vst.msk [vmem:[#allocation3 + $0x60] sm:$0xf] %vm3836, %v8745
    %v8925 = vld [vmem:[#allocation3 + $0x64] sm:$0xf]
    %v8926 = vsel %vm4121, %v8747, %v8925
    %8927 = vst [vmem:[#allocation3 + $0x64] sm:$0xf] %v8926
    %8928 = vst.msk [vmem:[#allocation3 + $0x68] sm:$0xf] %vm3836, %v8749
    %v8929 = vld [vmem:[#allocation3 + $0x6c] sm:$0xf]
    %v8930 = vsel %vm4121, %v8751, %v8929
    %8931 = vst [vmem:[#allocation3 + $0x6c] sm:$0xf] %v8930
    %8932 = vst.msk [vmem:[#allocation3 + $0x70] sm:$0xf] %vm3836, %v8753
    %v8933 = vld [vmem:[#allocation3 + $0x74] sm:$0xf]
    %v8934 = vsel %vm4121, %v8755, %v8933
    %8935 = vst [vmem:[#allocation3 + $0x74] sm:$0xf] %v8934
    %8936 = vst.msk [vmem:[#allocation3 + $0x80] sm:$0xf] %vm3836, %v8757
    %v8937 = vld [vmem:[#allocation3 + $0x84] sm:$0xf]
    %v8938 = vsel %vm4121, %v8759, %v8937
    %8939 = vst [vmem:[#allocation3 + $0x84] sm:$0xf] %v8938
    %8940 = vst.msk [vmem:[#allocation3 + $0x88] sm:$0xf] %vm3836, %v8761
    %v8941 = vld [vmem:[#allocation3 + $0x8c] sm:$0xf]
    %v8942 = vsel %vm4121, %v8763, %v8941
    %8943 = vst [vmem:[#allocation3 + $0x8c] sm:$0xf] %v8942
    %8944 = vst.msk [vmem:[#allocation3 + $0x90] sm:$0xf] %vm3836, %v8765
    %v8945 = vld [vmem:[#allocation3 + $0x94] sm:$0xf]
    %v8946 = vsel %vm4121, %v8767, %v8945
    %8947 = vst [vmem:[#allocation3 + $0x94] sm:$0xf] %v8946
    %8948 = vst.msk [vmem:[#allocation3 + $0x98] sm:$0xf] %vm3836, %v8769
    %v8949 = vld [vmem:[#allocation3 + $0x9c] sm:$0xf]
    %v8950 = vsel %vm4121, %v8771, %v8949
    %8951 = vst [vmem:[#allocation3 + $0x9c] sm:$0xf] %v8950
    %8952 = vst.msk [vmem:[#allocation3 + $0xa0] sm:$0xf] %vm3836, %v8773
    %v8953 = vld [vmem:[#allocation3 + $0xa4] sm:$0xf]
    %v8954 = vsel %vm4121, %v8775, %v8953
    %8955 = vst [vmem:[#allocation3 + $0xa4] sm:$0xf] %v8954
    %8956 = vst.msk [vmem:[#allocation3 + $0xa8] sm:$0xf] %vm3836, %v8777
    %v8957 = vld [vmem:[#allocation3 + $0xac] sm:$0xf]
    %v8958 = vsel %vm4121, %v8779, %v8957
    %8959 = vst [vmem:[#allocation3 + $0xac] sm:$0xf] %v8958
    %8960 = vst.msk [vmem:[#allocation3 + $0xb0] sm:$0xf] %vm3836, %v8781
    %v8961 = vld [vmem:[#allocation3 + $0xb4] sm:$0xf]
    %v8962 = vsel %vm4121, %v8783, %v8961
    %8963 = vst [vmem:[#allocation3 + $0xb4] sm:$0xf] %v8962
    %8964 = vst.msk [vmem:[#allocation3 + $0xb8] sm:$0xf] %vm3836, %v8785
    %v8965 = vld [vmem:[#allocation3 + $0xbc] sm:$0xf]
    %v8966 = vsel %vm4121, %v8787, %v8965
    %8967 = vst [vmem:[#allocation3 + $0xbc] sm:$0xf] %v8966
    %8968 = vst.msk [vmem:[#allocation3 + $0xc0] sm:$0xf] %vm3836, %v8789
    %v8969 = vld [vmem:[#allocation3 + $0xc4] sm:$0xf]
    %v8970 = vsel %vm4121, %v8791, %v8969
    %8971 = vst [vmem:[#allocation3 + $0xc4] sm:$0xf] %v8970
    %8972 = vst.msk [vmem:[#allocation3 + $0xc8] sm:$0xf] %vm3836, %v8793
    %v8973 = vld [vmem:[#allocation3 + $0xcc] sm:$0xf]
    %v8974 = vsel %vm4121, %v8795, %v8973
    %8975 = vst [vmem:[#allocation3 + $0xcc] sm:$0xf] %v8974
    %8976 = vst.msk [vmem:[#allocation3 + $0xd0] sm:$0xf] %vm3836, %v8797
    %v8977 = vld [vmem:[#allocation3 + $0xd4] sm:$0xf]
    %v8978 = vsel %vm4121, %v8799, %v8977
    %8979 = vst [vmem:[#allocation3 + $0xd4] sm:$0xf] %v8978
    %8980 = vst.msk [vmem:[#allocation3 + $0xd8] sm:$0xf] %vm3836, %v8801
    %v8981 = vld [vmem:[#allocation3 + $0xdc] sm:$0xf]
    %v8982 = vsel %vm4121, %v8803, %v8981
    %8983 = vst [vmem:[#allocation3 + $0xdc] sm:$0xf] %v8982
    %8984 = vst.msk [vmem:[#allocation3 + $0xe0] sm:$0xf] %vm3836, %v8805
    %v8985 = vld [vmem:[#allocation3 + $0xe4] sm:$0xf]
    %v8986 = vsel %vm4121, %v8807, %v8985
    %8987 = vst [vmem:[#allocation3 + $0xe4] sm:$0xf] %v8986
    %8988 = vst.msk [vmem:[#allocation3 + $0xe8] sm:$0xf] %vm3836, %v8809
    %v8989 = vld [vmem:[#allocation3 + $0xec] sm:$0xf]
    %v8990 = vsel %vm4121, %v8811, %v8989
    %8991 = vst [vmem:[#allocation3 + $0xec] sm:$0xf] %v8990
    %8992 = vst.msk [vmem:[#allocation3 + $0xf0] sm:$0xf] %vm3836, %v8813
    %v8993 = vld [vmem:[#allocation3 + $0xf4] sm:$0xf]
    %v8994 = vsel %vm4121, %v8815, %v8993
    %8995 = vst [vmem:[#allocation3 + $0xf4] sm:$0xf] %v8994
    %v8996 = vld [vmem:[#allocation3] sm:$0xf]
    %v8997 = vld [vmem:[#allocation3 + $0x4] sm:$0xf]
    %v8998 = vld [vmem:[#allocation3 + $0x8] sm:$0xf]
    %v8999 = vld [vmem:[#allocation3 + $0xc] sm:$0xf]
    %v9000 = vld [vmem:[#allocation3 + $0x10] sm:$0xf]
    %v9001 = vld [vmem:[#allocation3 + $0x14] sm:$0xf]
    %v9002 = vld [vmem:[#allocation3 + $0x18] sm:$0xf]
    %v9003 = vld [vmem:[#allocation3 + $0x1c] sm:$0xf]
    %v9004 = vld [vmem:[#allocation3 + $0x20] sm:$0xf]
    %v9005 = vld [vmem:[#allocation3 + $0x24] sm:$0xf]
    %v9006 = vld [vmem:[#allocation3 + $0x28] sm:$0xf]
    %v9007 = vld [vmem:[#allocation3 + $0x2c] sm:$0xf]
    %v9008 = vld [vmem:[#allocation3 + $0x30] sm:$0xf]
    %v9009 = vld [vmem:[#allocation3 + $0x34] sm:$0xf]
    %v9010 = vld [vmem:[#allocation3 + $0x38] sm:$0xf]
    %v9011 = vld [vmem:[#allocation3 + $0x3c] sm:$0xf]
    %v9012 = vld [vmem:[#allocation3 + $0x40] sm:$0xf]
    %v9013 = vld [vmem:[#allocation3 + $0x44] sm:$0xf]
    %v9014 = vld [vmem:[#allocation3 + $0x48] sm:$0xf]
    %v9015 = vld [vmem:[#allocation3 + $0x4c] sm:$0xf]
    %v9016 = vld [vmem:[#allocation3 + $0x50] sm:$0xf]
    %v9017 = vld [vmem:[#allocation3 + $0x54] sm:$0xf]
    %v9018 = vld [vmem:[#allocation3 + $0x58] sm:$0xf]
    %v9019 = vld [vmem:[#allocation3 + $0x5c] sm:$0xf]
    %v9020 = vld [vmem:[#allocation3 + $0x60] sm:$0xf]
    %v9021 = vld [vmem:[#allocation3 + $0x64] sm:$0xf]
    %v9022 = vld [vmem:[#allocation3 + $0x68] sm:$0xf]
    %v9023 = vld [vmem:[#allocation3 + $0x6c] sm:$0xf]
    %v9024 = vld [vmem:[#allocation3 + $0x70] sm:$0xf]
    %v9025 = vld [vmem:[#allocation3 + $0x74] sm:$0xf]
    %v9026 = vld [vmem:[#allocation3 + $0x78] sm:$0xf]
    %v9027 = vld [vmem:[#allocation3 + $0x7c] sm:$0xf]
    %v9028 = vld [vmem:[#allocation3 + $0x80] sm:$0xf]
    %v9029 = vld [vmem:[#allocation3 + $0x84] sm:$0xf]
    %v9030 = vld [vmem:[#allocation3 + $0x88] sm:$0xf]
    %v9031 = vld [vmem:[#allocation3 + $0x8c] sm:$0xf]
    %v9032 = vld [vmem:[#allocation3 + $0x90] sm:$0xf]
    %v9033 = vld [vmem:[#allocation3 + $0x94] sm:$0xf]
    %v9034 = vld [vmem:[#allocation3 + $0x98] sm:$0xf]
    %v9035 = vld [vmem:[#allocation3 + $0x9c] sm:$0xf]
    %v9036 = vld [vmem:[#allocation3 + $0xa0] sm:$0xf]
    %v9037 = vld [vmem:[#allocation3 + $0xa4] sm:$0xf]
    %v9038 = vld [vmem:[#allocation3 + $0xa8] sm:$0xf]
    %v9039 = vld [vmem:[#allocation3 + $0xac] sm:$0xf]
    %v9040 = vld [vmem:[#allocation3 + $0xb0] sm:$0xf]
    %v9041 = vld [vmem:[#allocation3 + $0xb4] sm:$0xf]
    %v9042 = vld [vmem:[#allocation3 + $0xb8] sm:$0xf]
    %v9043 = vld [vmem:[#allocation3 + $0xbc] sm:$0xf]
    %v9044 = vld [vmem:[#allocation3 + $0xc0] sm:$0xf]
    %v9045 = vld [vmem:[#allocation3 + $0xc4] sm:$0xf]
    %v9046 = vld [vmem:[#allocation3 + $0xc8] sm:$0xf]
    %v9047 = vld [vmem:[#allocation3 + $0xcc] sm:$0xf]
    %v9048 = vld [vmem:[#allocation3 + $0xd0] sm:$0xf]
    %v9049 = vld [vmem:[#allocation3 + $0xd4] sm:$0xf]
    %v9050 = vld [vmem:[#allocation3 + $0xd8] sm:$0xf]
    %v9051 = vld [vmem:[#allocation3 + $0xdc] sm:$0xf]
    %v9052 = vld [vmem:[#allocation3 + $0xe0] sm:$0xf]
    %v9053 = vld [vmem:[#allocation3 + $0xe4] sm:$0xf]
    %v9054 = vld [vmem:[#allocation3 + $0xe8] sm:$0xf]
    %v9055 = vld [vmem:[#allocation3 + $0xec] sm:$0xf]
    %v9056 = vld [vmem:[#allocation3 + $0xf0] sm:$0xf]
    %v9057 = vld [vmem:[#allocation3 + $0xf4] sm:$0xf]
    %v9058 = vld [vmem:[#allocation3 + $0xf8] sm:$0xf]
    %v9059 = vld [vmem:[#allocation3 + $0xfc] sm:$0xf]
    %v9060 = vld [vmem:[%s3] sm:$0xf]
    %v9061 = vld [vmem:[%s3 + $0x4] sm:$0xf]
    %v9062 = vld [vmem:[%s3 + $0x8] sm:$0xf]
    %v9063 = vld [vmem:[%s3 + $0xc] sm:$0xf]
    %v9064 = vld [vmem:[%s3 + $0x10] sm:$0x3]
    %v9065 = vld [vmem:[%s4] sm:$0x1]
    %v9067 = vlaneseq
    %v9068 = vshrl.u32 %v9067, 7
    %v9069 = vsub.s32 0, %v9068
    %v9070 = vrot.slane %v9065, %v9069
    %v9136 = vunpack.c.l.b16 %v8996
    %v9137 = vunpack.c.l.b16 %v8997
    %v9138 = vunpack.c.l.b16 %v8998
    %v9139 = vunpack.c.l.b16 %v8999
    %v9140 = vunpack.c.l.b16 %v9000
    %v9141 = vunpack.c.l.b16 %v9001
    %v9142 = vunpack.c.l.b16 %v9002
    %v9143 = vunpack.c.l.b16 %v9003
    %v9144 = vunpack.c.l.b16 %v9004
    %v9145 = vunpack.c.l.b16 %v9005
    %v9146 = vunpack.c.l.b16 %v9006
    %v9147 = vunpack.c.l.b16 %v9007
    %v9148 = vunpack.c.l.b16 %v9008
    %v9149 = vunpack.c.l.b16 %v9009
    %v9150 = vunpack.c.l.b16 %v9010
    %v9151 = vunpack.c.l.b16 %v9011
    %v9152 = vunpack.c.l.b16 %v9012
    %v9153 = vunpack.c.l.b16 %v9013
    %v9154 = vunpack.c.l.b16 %v9014
    %v9155 = vunpack.c.l.b16 %v9015
    %v9156 = vunpack.c.l.b16 %v9016
    %v9157 = vunpack.c.l.b16 %v9017
    %v9158 = vunpack.c.l.b16 %v9018
    %v9159 = vunpack.c.l.b16 %v9019
    %v9160 = vunpack.c.l.b16 %v9020
    %v9161 = vunpack.c.l.b16 %v9021
    %v9162 = vunpack.c.l.b16 %v9022
    %v9163 = vunpack.c.l.b16 %v9023
    %v9164 = vunpack.c.l.b16 %v9024
    %v9165 = vunpack.c.l.b16 %v9025
    %v9166 = vunpack.c.l.b16 %v9026
    %v9167 = vunpack.c.l.b16 %v9027
    %v9168 = vunpack.c.l.b16 %v9028
    %v9169 = vunpack.c.l.b16 %v9029
    %v9170 = vunpack.c.l.b16 %v9030
    %v9171 = vunpack.c.l.b16 %v9031
    %v9172 = vunpack.c.l.b16 %v9032
    %v9173 = vunpack.c.l.b16 %v9033
    %v9174 = vunpack.c.l.b16 %v9034
    %v9175 = vunpack.c.l.b16 %v9035
    %v9176 = vunpack.c.l.b16 %v9036
    %v9177 = vunpack.c.l.b16 %v9037
    %v9178 = vunpack.c.l.b16 %v9038
    %v9179 = vunpack.c.l.b16 %v9039
    %v9180 = vunpack.c.l.b16 %v9040
    %v9181 = vunpack.c.l.b16 %v9041
    %v9182 = vunpack.c.l.b16 %v9042
    %v9183 = vunpack.c.l.b16 %v9043
    %v9184 = vunpack.c.l.b16 %v9044
    %v9185 = vunpack.c.l.b16 %v9045
    %v9186 = vunpack.c.l.b16 %v9046
    %v9187 = vunpack.c.l.b16 %v9047
    %v9188 = vunpack.c.l.b16 %v9048
    %v9189 = vunpack.c.l.b16 %v9049
    %v9190 = vunpack.c.l.b16 %v9050
    %v9191 = vunpack.c.l.b16 %v9051
    %v9192 = vunpack.c.l.b16 %v9052
    %v9193 = vunpack.c.l.b16 %v9053
    %v9194 = vunpack.c.l.b16 %v9054
    %v9195 = vunpack.c.l.b16 %v9055
    %v9196 = vunpack.c.l.b16 %v9056
    %v9197 = vunpack.c.l.b16 %v9057
    %v9198 = vunpack.c.l.b16 %v9058
    %v9199 = vunpack.c.l.b16 %v9059
    %v9200 = vpack.c.b16 %v9137, %v9136
    %v9201 = vpack.c.b16 %v9139, %v9138
    %v9202 = vpack.c.b16 %v9141, %v9140
    %v9203 = vpack.c.b16 %v9143, %v9142
    %v9204 = vpack.c.b16 %v9145, %v9144
    %v9205 = vpack.c.b16 %v9147, %v9146
    %v9206 = vpack.c.b16 %v9149, %v9148
    %v9207 = vpack.c.b16 %v9151, %v9150
    %v9208 = vpack.c.b16 %v9153, %v9152
    %v9209 = vpack.c.b16 %v9155, %v9154
    %v9210 = vpack.c.b16 %v9157, %v9156
    %v9211 = vpack.c.b16 %v9159, %v9158
    %v9212 = vpack.c.b16 %v9161, %v9160
    %v9213 = vpack.c.b16 %v9163, %v9162
    %v9214 = vpack.c.b16 %v9165, %v9164
    %v9215 = vpack.c.b16 %v9167, %v9166
    %v9216 = vpack.c.b16 %v9169, %v9168
    %v9217 = vpack.c.b16 %v9171, %v9170
    %v9218 = vpack.c.b16 %v9173, %v9172
    %v9219 = vpack.c.b16 %v9175, %v9174
    %v9220 = vpack.c.b16 %v9177, %v9176
    %v9221 = vpack.c.b16 %v9179, %v9178
    %v9222 = vpack.c.b16 %v9181, %v9180
    %v9223 = vpack.c.b16 %v9183, %v9182
    %v9224 = vpack.c.b16 %v9185, %v9184
    %v9225 = vpack.c.b16 %v9187, %v9186
    %v9226 = vpack.c.b16 %v9189, %v9188
    %v9227 = vpack.c.b16 %v9191, %v9190
    %v9228 = vpack.c.b16 %v9193, %v9192
    %v9229 = vpack.c.b16 %v9195, %v9194
    %v9230 = vpack.c.b16 %v9197, %v9196
    %v9231 = vpack.c.b16 %v9199, %v9198
    %v9237 = vunpack.c.l.b16 %v9060
    %v9238 = vunpack.c.l.b16 %v9061
    %v9239 = vunpack.c.l.b16 %v9062
    %v9240 = vunpack.c.l.b16 %v9063
    %v9241 = vunpack.c.l.b16 %v9064
    %v9242 = vpack.c.b16 %v9238, %v9237
    %v9243 = vpack.c.b16 %v9240, %v9239
    %v9244 = vpack.c.b16 %v9241, %v9241
    %v9248 = vsel %vm4492, %v9200, 0
    %v9251 = vsel %vm4492, %v9201, 0
    %v9254 = vsel %vm4492, %v9202, 0
    %v9257 = vsel %vm4492, %v9203, 0
    %v9260 = vsel %vm4492, %v9204, 0
    %v9263 = vsel %vm4492, %v9205, 0
    %v9266 = vsel %vm4492, %v9206, 0
    %v9269 = vsel %vm4492, %v9207, 0
    %v9272 = vsel %vm4492, %v9208, 0
    %v9275 = vsel %vm4492, %v9209, 0
    %v9278 = vsel %vm4492, %v9210, 0
    %v9281 = vsel %vm4492, %v9211, 0
    %v9284 = vsel %vm4492, %v9212, 0
    %v9287 = vsel %vm4492, %v9213, 0
    %v9290 = vsel %vm4492, %v9214, 0
    %v9293 = vsel %vm4492, %v9215, 0
    %v9296 = vsel %vm4492, %v9216, 0
    %v9299 = vsel %vm4492, %v9217, 0
    %v9302 = vsel %vm4492, %v9218, 0
    %v9305 = vsel %vm4492, %v9219, 0
    %v9308 = vsel %vm4492, %v9220, 0
    %v9311 = vsel %vm4492, %v9221, 0
    %v9314 = vsel %vm4492, %v9222, 0
    %v9317 = vsel %vm4492, %v9223, 0
    %v9320 = vsel %vm4492, %v9224, 0
    %v9323 = vsel %vm4492, %v9225, 0
    %v9326 = vsel %vm4492, %v9226, 0
    %v9329 = vsel %vm4492, %v9227, 0
    %v9332 = vsel %vm4492, %v9228, 0
    %v9335 = vsel %vm4492, %v9229, 0
    %v9338 = vsel %vm4492, %v9230, 0
    %v9341 = vsel %vm4492, %v9231, 0
    %v9344 = vsel %vm4589, %v9244, 0
    %9346 = vmatprep.subr.bf16.mxu0 0
    %9347 = vmatpush1.bf16.msra.mxu0 0
    %9348 = vmatprep.subr.bf16.mxu0 0
    %9349 = vmatpush1.bf16.msra.mxu0 0
    %9350 = vmatprep.subr.bf16.mxu0 0
    %9351 = vmatpush1.bf16.msra.mxu0 0
    %9352 = vmatprep.subr.bf16.mxu0 0
    %9353 = vmatpush1.bf16.msra.mxu0 0
    %9354 = vmatprep.subr.bf16.mxu0 0
    %9355 = vmatpush1.bf16.msra.mxu0 0
    %9356 = vmatprep.subr.bf16.mxu0 0
    %9357 = vmatpush1.bf16.msra.mxu0 %v9344
    %9358 = vmatprep.subr.bf16.mxu0 0
    %9359 = vmatpush1.bf16.msra.mxu0 %v9243
    %9360 = vmatprep.subr.bf16.mxu0 0
    %9361 = vmatpush1.bf16.msra.mxu0 %v9242
    %9362 = vmatprep.subr.bf16.mxu0 0
    %9363 = vmatpush2.bf16.msra.mxu0 0
    %9364 = vmatprep.subr.bf16.mxu0 0
    %9365 = vmatpush2.bf16.msra.mxu0 0
    %9366 = vmatprep.subr.bf16.mxu0 0
    %9367 = vmatpush2.bf16.msra.mxu0 0
    %9368 = vmatprep.subr.bf16.mxu0 0
    %9369 = vmatpush2.bf16.msra.mxu0 0
    %9370 = vmatprep.subr.bf16.mxu0 0
    %9371 = vmatpush2.bf16.msra.mxu0 0
    %9372 = vmatprep.subr.bf16.mxu0 0
    %9373 = vmatpush2.bf16.msra.mxu0 0
    %9374 = vmatprep.subr.bf16.mxu0 0
    %9375 = vmatpush2.bf16.msra.mxu0 0
    %9376 = vmatprep.subr.bf16.mxu0 0
    %9377 = vmatpush2.bf16.msra.mxu0 0
    %9378 = vmatprep.mubr.bf16.mxu0 0
    %9379 = vmatmul.mubr.bf16.gmra.mxu0 %v9248
    %v9380 = vpop.f32.mrf.mxu0
    %v9381 = vadd.f32 %v9070, %v9380
    %v9382 = vpop.f32.mrf.mxu0
    %v9383 = vpop.f32.mrf.mxu0
    %v9384 = vadd.f32 %v9070, %v9383
    %v9385 = vpop.f32.mrf.mxu0
    %9386 = vmatprep.mubr.bf16.mxu0 0
    %9387 = vmatmul.mubr.bf16.gmra.mxu0 %v9251
    %v9388 = vpop.f32.mrf.mxu0
    %v9389 = vadd.f32 %v9070, %v9388
    %v9390 = vpop.f32.mrf.mxu0
    %v9391 = vpop.f32.mrf.mxu0
    %v9392 = vadd.f32 %v9070, %v9391
    %v9393 = vpop.f32.mrf.mxu0
    %9394 = vmatprep.mubr.bf16.mxu0 0
    %9395 = vmatmul.mubr.bf16.gmra.mxu0 %v9254
    %v9396 = vpop.f32.mrf.mxu0
    %v9397 = vadd.f32 %v9070, %v9396
    %v9398 = vpop.f32.mrf.mxu0
    %v9399 = vpop.f32.mrf.mxu0
    %v9400 = vadd.f32 %v9070, %v9399
    %v9401 = vpop.f32.mrf.mxu0
    %9402 = vmatprep.mubr.bf16.mxu0 0
    %9403 = vmatmul.mubr.bf16.gmra.mxu0 %v9257
    %v9404 = vpop.f32.mrf.mxu0
    %v9405 = vadd.f32 %v9070, %v9404
    %v9406 = vpop.f32.mrf.mxu0
    %v9407 = vpop.f32.mrf.mxu0
    %v9408 = vadd.f32 %v9070, %v9407
    %v9409 = vpop.f32.mrf.mxu0
    %9410 = vmatprep.mubr.bf16.mxu0 0
    %9411 = vmatmul.mubr.bf16.gmra.mxu0 %v9260
    %v9412 = vpop.f32.mrf.mxu0
    %v9413 = vadd.f32 %v9070, %v9412
    %v9414 = vpop.f32.mrf.mxu0
    %v9415 = vpop.f32.mrf.mxu0
    %v9416 = vadd.f32 %v9070, %v9415
    %v9417 = vpop.f32.mrf.mxu0
    %9418 = vmatprep.mubr.bf16.mxu0 0
    %9419 = vmatmul.mubr.bf16.gmra.mxu0 %v9263
    %v9420 = vpop.f32.mrf.mxu0
    %v9421 = vadd.f32 %v9070, %v9420
    %v9422 = vpop.f32.mrf.mxu0
    %v9423 = vpop.f32.mrf.mxu0
    %v9424 = vadd.f32 %v9070, %v9423
    %v9425 = vpop.f32.mrf.mxu0
    %9426 = vmatprep.mubr.bf16.mxu0 0
    %9427 = vmatmul.mubr.bf16.gmra.mxu0 %v9266
    %v9428 = vpop.f32.mrf.mxu0
    %v9429 = vadd.f32 %v9070, %v9428
    %v9430 = vpop.f32.mrf.mxu0
    %v9431 = vpop.f32.mrf.mxu0
    %v9432 = vadd.f32 %v9070, %v9431
    %v9433 = vpop.f32.mrf.mxu0
    %9434 = vmatprep.mubr.bf16.mxu0 0
    %9435 = vmatmul.mubr.bf16.gmra.mxu0 %v9269
    %v9436 = vpop.f32.mrf.mxu0
    %v9437 = vadd.f32 %v9070, %v9436
    %v9438 = vpop.f32.mrf.mxu0
    %v9439 = vpop.f32.mrf.mxu0
    %v9440 = vadd.f32 %v9070, %v9439
    %v9441 = vpop.f32.mrf.mxu0
    %9442 = vmatprep.mubr.bf16.mxu0 0
    %9443 = vmatmul.mubr.bf16.gmra.mxu0 %v9272
    %v9444 = vpop.f32.mrf.mxu0
    %v9445 = vadd.f32 %v9070, %v9444
    %v9446 = vpop.f32.mrf.mxu0
    %v9447 = vpop.f32.mrf.mxu0
    %v9448 = vadd.f32 %v9070, %v9447
    %v9449 = vpop.f32.mrf.mxu0
    %9450 = vmatprep.mubr.bf16.mxu0 0
    %9451 = vmatmul.mubr.bf16.gmra.mxu0 %v9275
    %v9452 = vpop.f32.mrf.mxu0
    %v9453 = vadd.f32 %v9070, %v9452
    %v9454 = vpop.f32.mrf.mxu0
    %v9455 = vpop.f32.mrf.mxu0
    %v9456 = vadd.f32 %v9070, %v9455
    %v9457 = vpop.f32.mrf.mxu0
    %9458 = vmatprep.mubr.bf16.mxu0 0
    %9459 = vmatmul.mubr.bf16.gmra.mxu0 %v9278
    %v9460 = vpop.f32.mrf.mxu0
    %v9461 = vadd.f32 %v9070, %v9460
    %v9462 = vpop.f32.mrf.mxu0
    %v9463 = vpop.f32.mrf.mxu0
    %v9464 = vadd.f32 %v9070, %v9463
    %v9465 = vpop.f32.mrf.mxu0
    %9466 = vmatprep.mubr.bf16.mxu0 0
    %9467 = vmatmul.mubr.bf16.gmra.mxu0 %v9281
    %v9468 = vpop.f32.mrf.mxu0
    %v9469 = vadd.f32 %v9070, %v9468
    %v9470 = vpop.f32.mrf.mxu0
    %v9471 = vpop.f32.mrf.mxu0
    %v9472 = vadd.f32 %v9070, %v9471
    %v9473 = vpop.f32.mrf.mxu0
    %9474 = vmatprep.mubr.bf16.mxu0 0
    %9475 = vmatmul.mubr.bf16.gmra.mxu0 %v9284
    %v9476 = vpop.f32.mrf.mxu0
    %v9477 = vadd.f32 %v9070, %v9476
    %v9478 = vpop.f32.mrf.mxu0
    %v9479 = vpop.f32.mrf.mxu0
    %v9480 = vadd.f32 %v9070, %v9479
    %v9481 = vpop.f32.mrf.mxu0
    %9482 = vmatprep.mubr.bf16.mxu0 0
    %9483 = vmatmul.mubr.bf16.gmra.mxu0 %v9287
    %v9484 = vpop.f32.mrf.mxu0
    %v9485 = vadd.f32 %v9070, %v9484
    %v9486 = vpop.f32.mrf.mxu0
    %v9487 = vpop.f32.mrf.mxu0
    %v9488 = vadd.f32 %v9070, %v9487
    %v9489 = vpop.f32.mrf.mxu0
    %9490 = vmatprep.mubr.bf16.mxu0 0
    %9491 = vmatmul.mubr.bf16.gmra.mxu0 %v9290
    %v9492 = vpop.f32.mrf.mxu0
    %v9493 = vadd.f32 %v9070, %v9492
    %v9494 = vpop.f32.mrf.mxu0
    %v9495 = vpop.f32.mrf.mxu0
    %v9496 = vadd.f32 %v9070, %v9495
    %v9497 = vpop.f32.mrf.mxu0
    %9498 = vmatprep.mubr.bf16.mxu0 0
    %9499 = vmatmul.mubr.bf16.gmra.mxu0 %v9293
    %v9500 = vpop.f32.mrf.mxu0
    %v9501 = vadd.f32 %v9070, %v9500
    %v9502 = vpop.f32.mrf.mxu0
    %v9503 = vpop.f32.mrf.mxu0
    %v9504 = vadd.f32 %v9070, %v9503
    %v9505 = vpop.f32.mrf.mxu0
    %9506 = vmatprep.mubr.bf16.mxu0 0
    %9507 = vmatmul.mubr.bf16.gmra.mxu0 %v9296
    %v9508 = vpop.f32.mrf.mxu0
    %v9509 = vadd.f32 %v9070, %v9508
    %v9510 = vpop.f32.mrf.mxu0
    %v9511 = vpop.f32.mrf.mxu0
    %v9512 = vadd.f32 %v9070, %v9511
    %v9513 = vpop.f32.mrf.mxu0
    %9514 = vmatprep.mubr.bf16.mxu0 0
    %9515 = vmatmul.mubr.bf16.gmra.mxu0 %v9299
    %v9516 = vpop.f32.mrf.mxu0
    %v9517 = vadd.f32 %v9070, %v9516
    %v9518 = vpop.f32.mrf.mxu0
    %v9519 = vpop.f32.mrf.mxu0
    %v9520 = vadd.f32 %v9070, %v9519
    %v9521 = vpop.f32.mrf.mxu0
    %9522 = vmatprep.mubr.bf16.mxu0 0
    %9523 = vmatmul.mubr.bf16.gmra.mxu0 %v9302
    %v9524 = vpop.f32.mrf.mxu0
    %v9525 = vadd.f32 %v9070, %v9524
    %v9526 = vpop.f32.mrf.mxu0
    %v9527 = vpop.f32.mrf.mxu0
    %v9528 = vadd.f32 %v9070, %v9527
    %v9529 = vpop.f32.mrf.mxu0
    %9530 = vmatprep.mubr.bf16.mxu0 0
    %9531 = vmatmul.mubr.bf16.gmra.mxu0 %v9305
    %v9532 = vpop.f32.mrf.mxu0
    %v9533 = vadd.f32 %v9070, %v9532
    %v9534 = vpop.f32.mrf.mxu0
    %v9535 = vpop.f32.mrf.mxu0
    %v9536 = vadd.f32 %v9070, %v9535
    %v9537 = vpop.f32.mrf.mxu0
    %9538 = vmatprep.mubr.bf16.mxu0 0
    %9539 = vmatmul.mubr.bf16.gmra.mxu0 %v9308
    %v9540 = vpop.f32.mrf.mxu0
    %v9541 = vadd.f32 %v9070, %v9540
    %v9542 = vpop.f32.mrf.mxu0
    %v9543 = vpop.f32.mrf.mxu0
    %v9544 = vadd.f32 %v9070, %v9543
    %v9545 = vpop.f32.mrf.mxu0
    %9546 = vmatprep.mubr.bf16.mxu0 0
    %9547 = vmatmul.mubr.bf16.gmra.mxu0 %v9311
    %v9548 = vpop.f32.mrf.mxu0
    %v9549 = vadd.f32 %v9070, %v9548
    %v9550 = vpop.f32.mrf.mxu0
    %v9551 = vpop.f32.mrf.mxu0
    %v9552 = vadd.f32 %v9070, %v9551
    %v9553 = vpop.f32.mrf.mxu0
    %9554 = vmatprep.mubr.bf16.mxu0 0
    %9555 = vmatmul.mubr.bf16.gmra.mxu0 %v9314
    %v9556 = vpop.f32.mrf.mxu0
    %v9557 = vadd.f32 %v9070, %v9556
    %v9558 = vpop.f32.mrf.mxu0
    %v9559 = vpop.f32.mrf.mxu0
    %v9560 = vadd.f32 %v9070, %v9559
    %v9561 = vpop.f32.mrf.mxu0
    %9562 = vmatprep.mubr.bf16.mxu0 0
    %9563 = vmatmul.mubr.bf16.gmra.mxu0 %v9317
    %v9564 = vpop.f32.mrf.mxu0
    %v9565 = vadd.f32 %v9070, %v9564
    %v9566 = vpop.f32.mrf.mxu0
    %v9567 = vpop.f32.mrf.mxu0
    %v9568 = vadd.f32 %v9070, %v9567
    %v9569 = vpop.f32.mrf.mxu0
    %9570 = vmatprep.mubr.bf16.mxu0 0
    %9571 = vmatmul.mubr.bf16.gmra.mxu0 %v9320
    %v9572 = vpop.f32.mrf.mxu0
    %v9573 = vadd.f32 %v9070, %v9572
    %v9574 = vpop.f32.mrf.mxu0
    %v9575 = vpop.f32.mrf.mxu0
    %v9576 = vadd.f32 %v9070, %v9575
    %v9577 = vpop.f32.mrf.mxu0
    %9578 = vmatprep.mubr.bf16.mxu0 0
    %9579 = vmatmul.mubr.bf16.gmra.mxu0 %v9323
    %v9580 = vpop.f32.mrf.mxu0
    %v9581 = vadd.f32 %v9070, %v9580
    %v9582 = vpop.f32.mrf.mxu0
    %v9583 = vpop.f32.mrf.mxu0
    %v9584 = vadd.f32 %v9070, %v9583
    %v9585 = vpop.f32.mrf.mxu0
    %9586 = vmatprep.mubr.bf16.mxu0 0
    %9587 = vmatmul.mubr.bf16.gmra.mxu0 %v9326
    %v9588 = vpop.f32.mrf.mxu0
    %v9589 = vadd.f32 %v9070, %v9588
    %v9590 = vpop.f32.mrf.mxu0
    %v9591 = vpop.f32.mrf.mxu0
    %v9592 = vadd.f32 %v9070, %v9591
    %v9593 = vpop.f32.mrf.mxu0
    %9594 = vmatprep.mubr.bf16.mxu0 0
    %9595 = vmatmul.mubr.bf16.gmra.mxu0 %v9329
    %v9596 = vpop.f32.mrf.mxu0
    %v9597 = vadd.f32 %v9070, %v9596
    %v9598 = vpop.f32.mrf.mxu0
    %v9599 = vpop.f32.mrf.mxu0
    %v9600 = vadd.f32 %v9070, %v9599
    %v9601 = vpop.f32.mrf.mxu0
    %9602 = vmatprep.mubr.bf16.mxu0 0
    %9603 = vmatmul.mubr.bf16.gmra.mxu0 %v9332
    %v9604 = vpop.f32.mrf.mxu0
    %v9605 = vadd.f32 %v9070, %v9604
    %v9606 = vpop.f32.mrf.mxu0
    %v9607 = vpop.f32.mrf.mxu0
    %v9608 = vadd.f32 %v9070, %v9607
    %v9609 = vpop.f32.mrf.mxu0
    %9610 = vmatprep.mubr.bf16.mxu0 0
    %9611 = vmatmul.mubr.bf16.gmra.mxu0 %v9335
    %v9612 = vpop.f32.mrf.mxu0
    %v9613 = vadd.f32 %v9070, %v9612
    %v9614 = vpop.f32.mrf.mxu0
    %v9615 = vpop.f32.mrf.mxu0
    %v9616 = vadd.f32 %v9070, %v9615
    %v9617 = vpop.f32.mrf.mxu0
    %9618 = vmatprep.mubr.bf16.mxu0 0
    %9619 = vmatmul.mubr.bf16.gmra.mxu0 %v9338
    %v9620 = vpop.f32.mrf.mxu0
    %v9621 = vadd.f32 %v9070, %v9620
    %v9622 = vpop.f32.mrf.mxu0
    %v9623 = vpop.f32.mrf.mxu0
    %v9624 = vadd.f32 %v9070, %v9623
    %v9625 = vpop.f32.mrf.mxu0
    %9626 = vmatprep.mubr.bf16.mxu0 0
    %9627 = vmatmul.mubr.bf16.gmra.mxu0 %v9341
    %v9628 = vpop.f32.mrf.mxu0
    %v9629 = vadd.f32 %v9070, %v9628
    %v9630 = vpop.f32.mrf.mxu0
    %v9631 = vpop.f32.mrf.mxu0
    %v9632 = vadd.f32 %v9070, %v9631
    %v9633 = vpop.f32.mrf.mxu0
    %9634 = vdwg.mxu0
    %v9635 = vadd.f32 %v9381, %v86
    %v9636 = vadd.f32 %v9384, %v87
    %v9637 = vadd.f32 %v9389, %v88
    %v9638 = vadd.f32 %v9392, %v89
    %v9639 = vadd.f32 %v9397, %v90
    %v9640 = vadd.f32 %v9400, %v91
    %v9641 = vadd.f32 %v9405, %v92
    %v9642 = vadd.f32 %v9408, %v93
    %v9643 = vadd.f32 %v9413, %v94
    %v9644 = vadd.f32 %v9416, %v95
    %v9645 = vadd.f32 %v9421, %v96
    %v9646 = vadd.f32 %v9424, %v97
    %v9647 = vadd.f32 %v9429, %v98
    %v9648 = vadd.f32 %v9432, %v99
    %v9649 = vadd.f32 %v9437, %v100
    %v9650 = vadd.f32 %v9440, %v101
    %v9651 = vadd.f32 %v9445, %v102
    %v9652 = vadd.f32 %v9448, %v103
    %v9653 = vadd.f32 %v9453, %v104
    %v9654 = vadd.f32 %v9456, %v105
    %v9655 = vadd.f32 %v9461, %v106
    %v9656 = vadd.f32 %v9464, %v107
    %v9657 = vadd.f32 %v9469, %v108
    %v9658 = vadd.f32 %v9472, %v109
    %v9659 = vadd.f32 %v9477, %v110
    %v9660 = vadd.f32 %v9480, %v111
    %v9661 = vadd.f32 %v9485, %v112
    %v9662 = vadd.f32 %v9488, %v113
    %v9663 = vadd.f32 %v9493, %v114
    %v9664 = vadd.f32 %v9496, %v115
    %v9665 = vadd.f32 %v9501, %v116
    %v9666 = vadd.f32 %v9504, %v117
    %v9667 = vadd.f32 %v9509, %v118
    %v9668 = vadd.f32 %v9512, %v119
    %v9669 = vadd.f32 %v9517, %v120
    %v9670 = vadd.f32 %v9520, %v121
    %v9671 = vadd.f32 %v9525, %v122
    %v9672 = vadd.f32 %v9528, %v123
    %v9673 = vadd.f32 %v9533, %v124
    %v9674 = vadd.f32 %v9536, %v125
    %v9675 = vadd.f32 %v9541, %v126
    %v9676 = vadd.f32 %v9544, %v127
    %v9677 = vadd.f32 %v9549, %v128
    %v9678 = vadd.f32 %v9552, %v129
    %v9679 = vadd.f32 %v9557, %v130
    %v9680 = vadd.f32 %v9560, %v131
    %v9681 = vadd.f32 %v9565, %v132
    %v9682 = vadd.f32 %v9568, %v133
    %v9683 = vadd.f32 %v9573, %v134
    %v9684 = vadd.f32 %v9576, %v135
    %v9685 = vadd.f32 %v9581, %v136
    %v9686 = vadd.f32 %v9584, %v137
    %v9687 = vadd.f32 %v9589, %v138
    %v9688 = vadd.f32 %v9592, %v139
    %v9689 = vadd.f32 %v9597, %v140
    %v9690 = vadd.f32 %v9600, %v141
    %v9691 = vadd.f32 %v9605, %v142
    %v9692 = vadd.f32 %v9608, %v143
    %v9693 = vadd.f32 %v9613, %v144
    %v9694 = vadd.f32 %v9616, %v145
    %v9695 = vadd.f32 %v9621, %v146
    %v9696 = vadd.f32 %v9624, %v147
    %v9697 = vadd.f32 %v9629, %v148
    %v9698 = vadd.f32 %v9632, %v149
    %9699 = vxpose.xlu0.b32.start [1/16] %v9635, 128
    %9700 = vxpose.xlu0.b32.cont [2/16] %v9636, 128
    %9701 = vxpose.xlu0.b32.cont [3/16] %v9637, 128
    %9702 = vxpose.xlu0.b32.cont [4/16] %v9638, 128
    %9703 = vxpose.xlu0.b32.cont [5/16] %v9639, 128
    %9704 = vxpose.xlu0.b32.cont [6/16] %v9640, 128
    %9705 = vxpose.xlu0.b32.cont [7/16] %v9641, 128
    %9706 = vxpose.xlu0.b32.cont [8/16] %v9642, 128
    %9707 = vxpose.xlu0.b32.cont [9/16] %v9643, 128
    %9708 = vxpose.xlu0.b32.cont [10/16] %v9644, 128
    %9709 = vxpose.xlu0.b32.cont [11/16] %v9645, 128
    %9710 = vxpose.xlu0.b32.cont [12/16] %v9646, 128
    %9711 = vxpose.xlu0.b32.cont [13/16] %v9647, 128
    %9712 = vxpose.xlu0.b32.cont [14/16] %v9648, 128
    %9713 = vxpose.xlu0.b32.cont [15/16] %v9649, 128
    %9714 = vxpose.xlu0.b32.end [16/16] %v9650, 128
    %v9715 = vpop.trf.xlu0
    %v9716 = vpop.trf.xlu0
    %v9717 = vpop.trf.xlu0
    %v9718 = vpop.trf.xlu0
    %v9719 = vpop.trf.xlu0
    %v9720 = vpop.trf.xlu0
    %v9721 = vpop.trf.xlu0
    %v9722 = vpop.trf.xlu0
    %v9723 = vpop.trf.xlu0
    %v9724 = vpop.trf.xlu0
    %v9725 = vpop.trf.xlu0
    %v9726 = vpop.trf.xlu0
    %v9727 = vpop.trf.xlu0
    %v9728 = vpop.trf.xlu0
    %v9729 = vpop.trf.xlu0
    %v9730 = vpop.trf.xlu0
    %9731 = vxpose.xlu0.b32.start [1/16] %v9651, 128
    %9732 = vxpose.xlu0.b32.cont [2/16] %v9652, 128
    %9733 = vxpose.xlu0.b32.cont [3/16] %v9653, 128
    %9734 = vxpose.xlu0.b32.cont [4/16] %v9654, 128
    %9735 = vxpose.xlu0.b32.cont [5/16] %v9655, 128
    %9736 = vxpose.xlu0.b32.cont [6/16] %v9656, 128
    %9737 = vxpose.xlu0.b32.cont [7/16] %v9657, 128
    %9738 = vxpose.xlu0.b32.cont [8/16] %v9658, 128
    %9739 = vxpose.xlu0.b32.cont [9/16] %v9659, 128
    %9740 = vxpose.xlu0.b32.cont [10/16] %v9660, 128
    %9741 = vxpose.xlu0.b32.cont [11/16] %v9661, 128
    %9742 = vxpose.xlu0.b32.cont [12/16] %v9662, 128
    %9743 = vxpose.xlu0.b32.cont [13/16] %v9663, 128
    %9744 = vxpose.xlu0.b32.cont [14/16] %v9664, 128
    %9745 = vxpose.xlu0.b32.cont [15/16] %v9665, 128
    %9746 = vxpose.xlu0.b32.end [16/16] %v9666, 128
    %v9747 = vpop.trf.xlu0
    %v9748 = vpop.trf.xlu0
    %v9749 = vpop.trf.xlu0
    %v9750 = vpop.trf.xlu0
    %v9751 = vpop.trf.xlu0
    %v9752 = vpop.trf.xlu0
    %v9753 = vpop.trf.xlu0
    %v9754 = vpop.trf.xlu0
    %v9755 = vpop.trf.xlu0
    %v9756 = vpop.trf.xlu0
    %v9757 = vpop.trf.xlu0
    %v9758 = vpop.trf.xlu0
    %v9759 = vpop.trf.xlu0
    %v9760 = vpop.trf.xlu0
    %v9761 = vpop.trf.xlu0
    %v9762 = vpop.trf.xlu0
    %v9765 = vcombine.low %v9715, %v9747
    %9767 = vst [vmem:[#allocation4] sm:$0xff] %v9765
    %9768 = vxpose.xlu0.b32.start [1/16] %v9667, 128
    %9769 = vxpose.xlu0.b32.cont [2/16] %v9668, 128
    %9770 = vxpose.xlu0.b32.cont [3/16] %v9669, 128
    %9771 = vxpose.xlu0.b32.cont [4/16] %v9670, 128
    %9772 = vxpose.xlu0.b32.cont [5/16] %v9671, 128
    %9773 = vxpose.xlu0.b32.cont [6/16] %v9672, 128
    %9774 = vxpose.xlu0.b32.cont [7/16] %v9673, 128
    %9775 = vxpose.xlu0.b32.cont [8/16] %v9674, 128
    %9776 = vxpose.xlu0.b32.cont [9/16] %v9675, 128
    %9777 = vxpose.xlu0.b32.cont [10/16] %v9676, 128
    %9778 = vxpose.xlu0.b32.cont [11/16] %v9677, 128
    %9779 = vxpose.xlu0.b32.cont [12/16] %v9678, 128
    %9780 = vxpose.xlu0.b32.cont [13/16] %v9679, 128
    %9781 = vxpose.xlu0.b32.cont [14/16] %v9680, 128
    %9782 = vxpose.xlu0.b32.cont [15/16] %v9681, 128
    %9783 = vxpose.xlu0.b32.end [16/16] %v9682, 128
    %v9784 = vpop.trf.xlu0
    %v9785 = vpop.trf.xlu0
    %v9786 = vpop.trf.xlu0
    %v9787 = vpop.trf.xlu0
    %v9788 = vpop.trf.xlu0
    %v9789 = vpop.trf.xlu0
    %v9790 = vpop.trf.xlu0
    %v9791 = vpop.trf.xlu0
    %v9792 = vpop.trf.xlu0
    %v9793 = vpop.trf.xlu0
    %v9794 = vpop.trf.xlu0
    %v9795 = vpop.trf.xlu0
    %v9796 = vpop.trf.xlu0
    %v9797 = vpop.trf.xlu0
    %v9798 = vpop.trf.xlu0
    %v9799 = vpop.trf.xlu0
    %9800 = vxpose.xlu0.b32.start [1/16] %v9683, 128
    %9801 = vxpose.xlu0.b32.cont [2/16] %v9684, 128
    %9802 = vxpose.xlu0.b32.cont [3/16] %v9685, 128
    %9803 = vxpose.xlu0.b32.cont [4/16] %v9686, 128
    %9804 = vxpose.xlu0.b32.cont [5/16] %v9687, 128
    %9805 = vxpose.xlu0.b32.cont [6/16] %v9688, 128
    %9806 = vxpose.xlu0.b32.cont [7/16] %v9689, 128
    %9807 = vxpose.xlu0.b32.cont [8/16] %v9690, 128
    %9808 = vxpose.xlu0.b32.cont [9/16] %v9691, 128
    %9809 = vxpose.xlu0.b32.cont [10/16] %v9692, 128
    %9810 = vxpose.xlu0.b32.cont [11/16] %v9693, 128
    %9811 = vxpose.xlu0.b32.cont [12/16] %v9694, 128
    %9812 = vxpose.xlu0.b32.cont [13/16] %v9695, 128
    %9813 = vxpose.xlu0.b32.cont [14/16] %v9696, 128
    %9814 = vxpose.xlu0.b32.cont [15/16] %v9697, 128
    %9815 = vxpose.xlu0.b32.end [16/16] %v9698, 128
    %v9816 = vpop.trf.xlu0
    %v9817 = vpop.trf.xlu0
    %v9818 = vpop.trf.xlu0
    %v9819 = vpop.trf.xlu0
    %v9820 = vpop.trf.xlu0
    %v9821 = vpop.trf.xlu0
    %v9822 = vpop.trf.xlu0
    %v9823 = vpop.trf.xlu0
    %v9824 = vpop.trf.xlu0
    %v9825 = vpop.trf.xlu0
    %v9826 = vpop.trf.xlu0
    %v9827 = vpop.trf.xlu0
    %v9828 = vpop.trf.xlu0
    %v9829 = vpop.trf.xlu0
    %v9830 = vpop.trf.xlu0
    %v9831 = vpop.trf.xlu0
    %v9834 = vcombine.low %v9784, %v9816
    %s9836 = scalar_lea.vmem [#allocation4], 8
    %9837 = vst [vmem:[%s9836] sm:$0xff] %v9834
    // Predicated region
    $region22: #{tpu_custom_call.1} parent=1 // pred_check
      _
    $region23: #{tpu_custom_call.1} parent=1 // pred_check_branch
      %9839 = sbr.rel (0) target = $region25
    $region24: #{tpu_custom_call.1} parent=1 // pred_region
      %s9841 = ssub.s32 256, 256
      %9842 = vsyncadd [#allocation5], %s9841
      %s9843 = sshll.u32 [#allocation4], 4
      %s9844 = int_to_ptr.vmem [resolvable:$true] %s9843
      %9849 = dma.vmem_to_hbm [thread:$0]  %s9844, 256, %s5, [#allocation5], 128, 128, 8
    $region25: #{tpu_custom_call.1} parent=1 // pred_fallthru
      _
    // Predicated region
    $region26: #{tpu_custom_call.1} parent=1 // pred_check
      _
    $region27: #{tpu_custom_call.1} parent=1 // pred_check_branch
      %9851 = sbr.rel (0) target = $region29
    $region28: #{tpu_custom_call.1} parent=1 // pred_region
      %9852 = dma.done [#allocation5], 256
    $region29: #{tpu_custom_call.1} parent=1 // pred_fallthru
      _
    %9853 = vsyncpa [#allocation5], 1

</llo_original>
